<compile_context>
chip_gen: v7x
topology: tpu7x:2x2x1
jax: 0.10.0
libtpu: 0.0.40
codegen_flags: <defaults>
</compile_context>

<pallas_src>
import functools

import jax
import jax.numpy as jnp
from jax import lax
from jax.experimental import pallas as pl
from jax.experimental.pallas import tpu as pltpu

NEG_SLOPE = 0.01   # nn.LeakyReLU(0.01)
COUT_PAD = 128     # last-layer Cout padded to a full 128-lane width


def _encoder_kernel(x_ref, w1_ref, b1_ref, w2_ref, b2_ref, w3_ref, b3_ref,
                    w4_ref, b4_ref, o_ref, buf2, buf3, buf4, *, H, W):
    """Fused conv1..conv4 forward for ONE batch image (grid over N).

    Each activation buffer holds the zero-padded input of the next layer,
    flattened over the padded (row, col) raster with channels last:
        buf[h_pad * W_raster + w_pad, c]
    A 3x3 conv with stride s then becomes, for each tap (ky, kx):
        acc[q, :] += buf[s * q + ky * W_raster + kx, :] @ W_tap
    where q indexes output positions on the *input* raster.  Rows of `acc`
    whose raster column lands in the padding are garbage and are simply never
    copied out (the per-row scatter below only copies the valid rows).
    """
    f32, bf16 = jnp.float32, jnp.bfloat16

    C1 = w1_ref.shape[1]             # 32
    C2 = w2_ref.shape[2]             # 64
    C3 = w3_ref.shape[2]             # 64
    C4 = w4_ref.shape[2]             # 128 (zero-padded from 64)

    H1, W1 = H, W                    # conv1 out (stride 1)
    H2, W2 = H1 // 2, W1 // 2        # conv2 out (stride 2)
    H3, W3 = H2 // 2, W2 // 2        # conv3 out (stride 2)
    H4, W4 = H3, W3                  # conv4 out (stride 1)

    Wr1, Wr2, Wr3, Wr4 = W + 2, W1 + 2, W2 + 2, W3 + 2   # padded raster widths
    Q1 = (H1 - 1) * Wr1 + W1
    Q2 = (H2 - 1) * Wr2 + W2
    Q3 = (H3 - 1) * Wr3 + W3
    Q4 = (H4 - 1) * Wr4 + W4

    # Padding borders of the activation buffers must read as zero.
    buf2[...] = jnp.zeros(buf2.shape, buf2.dtype)
    buf3[...] = jnp.zeros(buf3.shape, buf3.dtype)
    buf4[...] = jnp.zeros(buf4.shape, buf4.dtype)

    def leaky(v):
        return jnp.where(v >= 0, v, NEG_SLOPE * v)

    # ---- conv1: 1 -> 32, stride 1.  Cin=1, so 9 VPU broadcast MACs. ----
    acc = jnp.zeros((Q1, C1), f32)
    for ky in range(3):
        for kx in range(3):
            t = ky * 3 + kx
            d = ky * Wr1 + kx
            acc = acc + x_ref[0, d:d + Q1, :] * w1_ref[t:t + 1, :]
    acc = leaky(acc + b1_ref[...])
    for ho in range(H1):             # scatter valid rows into padded buf2
        buf2[(ho + 1) * Wr2 + 1:(ho + 1) * Wr2 + 1 + W1, :] = (
            acc[ho * Wr1:ho * Wr1 + W1, :])

    # ---- conv2: 32 -> 64, stride 2 (bf16 MXU, f32 accumulation). ----
    acc = jnp.zeros((Q2, C2), f32)
    for ky in range(3):
        for kx in range(3):
            t = ky * 3 + kx
            d = ky * Wr2 + kx
            lhs = buf2[pl.ds(d, Q2, stride=2), :].astype(bf16)
            acc = acc + jnp.dot(lhs, w2_ref[t], preferred_element_type=f32)
    acc = leaky(acc + b2_ref[...])
    for ho in range(H2):
        buf3[(ho + 1) * Wr3 + 1:(ho + 1) * Wr3 + 1 + W2, :] = (
            acc[ho * Wr2:ho * Wr2 + W2, :])

    # ---- conv3: 64 -> 64, stride 2. ----
    acc = jnp.zeros((Q3, C3), f32)
    for ky in range(3):
        for kx in range(3):
            t = ky * 3 + kx
            d = ky * Wr3 + kx
            lhs = buf3[pl.ds(d, Q3, stride=2), :].astype(bf16)
            acc = acc + jnp.dot(lhs, w3_ref[t], preferred_element_type=f32)
    acc = leaky(acc + b3_ref[...])
    for ho in range(H3):
        buf4[(ho + 1) * Wr4 + 1:(ho + 1) * Wr4 + 1 + W3, :] = (
            acc[ho * Wr3:ho * Wr3 + W3, :])

    # ---- conv4: 64 -> 64 (Cout padded to 128 lanes), stride 1, no ReLU. ----
    acc = jnp.zeros((Q4, C4), f32)
    for ky in range(3):
        for kx in range(3):
            t = ky * 3 + kx
            d = ky * Wr4 + kx
            lhs = buf4[d:d + Q4, :].astype(bf16)
            acc = acc + jnp.dot(lhs, w4_ref[t], preferred_element_type=f32)
    acc = acc + b4_ref[...]
    for ho in range(H4):             # lane-dense (128-wide) output stores
        o_ref[0, ho * W4:(ho + 1) * W4, :] = acc[ho * Wr4:ho * Wr4 + W4, :]


def init_params(key):
    """Raw parameters in PyTorch Conv2d layout (OIHW weights, 1-D biases)."""
    ks = jax.random.split(key, 8)

    def conv_init(kw, kb, cout, cin):
        fan_in = cin * 9
        w = jax.random.normal(kw, (cout, cin, 3, 3), jnp.float32) / jnp.sqrt(fan_in)
        b = jax.random.normal(kb, (cout,), jnp.float32) * 0.01
        return w, b

    w1, b1 = conv_init(ks[0], ks[1], 32, 1)
    w2, b2 = conv_init(ks[2], ks[3], 64, 32)
    w3, b3 = conv_init(ks[4], ks[5], 64, 64)
    w4, b4 = conv_init(ks[6], ks[7], 64, 64)
    return dict(w1=w1, b1=b1, w2=w2, b2=b2, w3=w3, b3=b3, w4=w4, b4=b4)


def pack_params(params):
    """One-time weight repacking for the fused kernel (hoisted out of forward)."""
    def taps(w):   # (Cout, Cin, 3, 3) -> (9, Cin, Cout), tap index = ky*3+kx
        cout, cin = w.shape[0], w.shape[1]
        return jnp.transpose(w, (2, 3, 1, 0)).reshape(9, cin, cout)

    w1 = taps(params["w1"])[:, 0, :].astype(jnp.float32)     # (9, 32) VPU layer
    w2 = taps(params["w2"]).astype(jnp.bfloat16)             # (9, 32, 64)
    w3 = taps(params["w3"]).astype(jnp.bfloat16)             # (9, 64, 64)
    w4 = taps(params["w4"]).astype(jnp.bfloat16)
    w4 = jnp.pad(w4, ((0, 0), (0, 0), (0, COUT_PAD - w4.shape[2])))  # (9, 64, 128)

    b1 = params["b1"].reshape(1, -1).astype(jnp.float32)
    b2 = params["b2"].reshape(1, -1).astype(jnp.float32)
    b3 = params["b3"].reshape(1, -1).astype(jnp.float32)
    b4 = params["b4"].reshape(1, -1).astype(jnp.float32)
    b4 = jnp.pad(b4, ((0, 0), (0, COUT_PAD - b4.shape[1])))
    return dict(w1=w1, b1=b1, w2=w2, b2=b2, w3=w3, b3=b3, w4=w4, b4=b4)


def encoder_forward(kparams, x_nchw):
    N, Cin, H, W = x_nchw.shape
    assert Cin == 1 and H % 4 == 0 and W % 4 == 0

    # NCHW -> NHWC, zero-pad, flatten the padded (h, w) raster (channels last).
    x = jnp.transpose(x_nchw, (0, 2, 3, 1)).astype(jnp.float32)
    xp = jnp.pad(x, ((0, 0), (1, 1), (1, 1), (0, 0)))
    P1 = (H + 2) * (W + 2)
    x_flat = xp.reshape(N, P1, Cin)

    H4, W4 = H // 4, W // 4
    M4 = H4 * W4
    C_out = 64

    out = pl.pallas_call(
        functools.partial(_encoder_kernel, H=H, W=W),
        grid=(N,),
        in_specs=[
            pl.BlockSpec((1, P1, Cin), lambda n: (n, 0, 0)),
            pl.BlockSpec(kparams["w1"].shape, lambda n: (0, 0)),
            pl.BlockSpec(kparams["b1"].shape, lambda n: (0, 0)),
            pl.BlockSpec(kparams["w2"].shape, lambda n: (0, 0, 0)),
            pl.BlockSpec(kparams["b2"].shape, lambda n: (0, 0)),
            pl.BlockSpec(kparams["w3"].shape, lambda n: (0, 0, 0)),
            pl.BlockSpec(kparams["b3"].shape, lambda n: (0, 0)),
            pl.BlockSpec(kparams["w4"].shape, lambda n: (0, 0, 0)),
            pl.BlockSpec(kparams["b4"].shape, lambda n: (0, 0)),
        ],
        out_specs=pl.BlockSpec((1, M4, COUT_PAD), lambda n: (n, 0, 0)),
        out_shape=jax.ShapeDtypeStruct((N, M4, COUT_PAD), jnp.float32),
        scratch_shapes=[
            pltpu.VMEM(((H + 2) * (W + 2), 32), jnp.float32),          # conv2 in
            pltpu.VMEM(((H // 2 + 2) * (W // 2 + 2), 64), jnp.float32),  # conv3 in
            pltpu.VMEM(((H // 4 + 2) * (W // 4 + 2), 64), jnp.float32),  # conv4 in
        ],
        compiler_params=pltpu.CompilerParams(
            dimension_semantics=("parallel",),
            vmem_limit_bytes=32 * 1024 * 1024,
        ),
    )(x_flat, kparams["w1"], kparams["b1"], kparams["w2"], kparams["b2"],
      kparams["w3"], kparams["b3"], kparams["w4"], kparams["b4"])

    # Drop the lane padding, then flatten in PyTorch NCHW element order.
    # TODO(synk): the PyTorch forward does `x = nn.Flatten(x)`, which (as
    # written) returns a Module; we implement the clearly intended
    # `nn.Flatten()(x)` == flatten(start_dim=1) in NCHW element order.
    out = out[:, :, :C_out].reshape(N, H4, W4, C_out)
    out = jnp.transpose(out, (0, 3, 1, 2))
    return out.reshape(N, -1)


def encoder_reference(params, x_nchw):
    """Pure-JAX reference (lax.conv, f32 HIGHEST) for correctness checking."""
    def conv(x, w, b, s):
        y = lax.conv_general_dilated(
            x, w, (s, s), ((1, 1), (1, 1)),
            dimension_numbers=("NCHW", "OIHW", "NCHW"),
            precision=lax.Precision.HIGHEST)
        return y + b.reshape(1, -1, 1, 1)

    def lrelu(v):
        return jnp.where(v >= 0, v, NEG_SLOPE * v)

    x = lrelu(conv(x_nchw, params["w1"], params["b1"], 1))
    x = lrelu(conv(x, params["w2"], params["b2"], 2))
    x = lrelu(conv(x, params["w3"], params["b3"], 2))
    x = conv(x, params["w4"], params["b4"], 1)
    return x.reshape(x.shape[0], -1)


if __name__ == "__main__":
    key = jax.random.PRNGKey(0)
    k_param, k_x = jax.random.split(key)

    params = init_params(k_param)
    kparams = pack_params(params)

    # MNIST-like toy input consistent with Conv2d(1, 32, ...): N=2, C=1, 16x16.
    x = jax.random.normal(k_x, (2, 1, 16, 16), jnp.float32)

    fwd = jax.jit(encoder_forward)
    out = jax.block_until_ready(fwd(kparams, x))

    ref = jax.block_until_ready(encoder_reference(params, x))
    assert out.shape == ref.shape == (2, 64 * 4 * 4), out.shape
    max_err = float(jnp.max(jnp.abs(out - ref)))
    assert jnp.allclose(out, ref, rtol=5e-2, atol=5e-2), max_err

    print("KERNEL_OK")
</pallas_src>

<mosaic_0001>
module attributes {stable_mosaic.version = 11 : i64} {
  func.func @_encoder_kernel(%arg0: i32, %arg1: memref<1x324x1xf32, #tpu.memory_space<vmem>>, %arg2: memref<9x32xf32, #tpu.memory_space<vmem>>, %arg3: memref<1x32xf32, #tpu.memory_space<vmem>>, %arg4: memref<9x32x64xbf16, #tpu.memory_space<vmem>>, %arg5: memref<1x64xf32, #tpu.memory_space<vmem>>, %arg6: memref<9x64x64xbf16, #tpu.memory_space<vmem>>, %arg7: memref<1x64xf32, #tpu.memory_space<vmem>>, %arg8: memref<9x64x128xbf16, #tpu.memory_space<vmem>>, %arg9: memref<1x128xf32, #tpu.memory_space<vmem>>, %arg10: memref<1x16x128xf32, #tpu.memory_space<vmem>>, %arg11: memref<324x32xf32, #tpu.memory_space<vmem>>, %arg12: memref<100x64xf32, #tpu.memory_space<vmem>>, %arg13: memref<36x64xf32, #tpu.memory_space<vmem>>) attributes {dimension_semantics = [#tpu.dimension_semantics<parallel>], iteration_bounds = array<i64: 2>, scalar_prefetch = 0 : i64, scratch_operands = 3 : i64, tpu.core_type = #tpu.core_type<tc>, window_params = [{transform_indices = @transform_0, window_bounds = array<i64: 1, 324, 1>}, {pipeline_mode = #tpu.pipeline_mode<synchronous>, transform_indices = @transform_1, window_bounds = array<i64: 9, 32>}, {pipeline_mode = #tpu.pipeline_mode<synchronous>, transform_indices = @transform_2, window_bounds = array<i64: 1, 32>}, {pipeline_mode = #tpu.pipeline_mode<synchronous>, transform_indices = @transform_3, window_bounds = array<i64: 9, 32, 64>}, {pipeline_mode = #tpu.pipeline_mode<synchronous>, transform_indices = @transform_4, window_bounds = array<i64: 1, 64>}, {pipeline_mode = #tpu.pipeline_mode<synchronous>, transform_indices = @transform_5, window_bounds = array<i64: 9, 64, 64>}, {pipeline_mode = #tpu.pipeline_mode<synchronous>, transform_indices = @transform_6, window_bounds = array<i64: 1, 64>}, {pipeline_mode = #tpu.pipeline_mode<synchronous>, transform_indices = @transform_7, window_bounds = array<i64: 9, 64, 128>}, {pipeline_mode = #tpu.pipeline_mode<synchronous>, transform_indices = @transform_8, window_bounds = array<i64: 1, 128>}, {transform_indices = @transform_9, window_bounds = array<i64: 1, 16, 128>}]} {
    %cst = arith.constant 0.000000e+00 : f32
    %0 = vector.broadcast %cst : f32 to vector<324x32xf32>
    %c0 = arith.constant 0 : index
    %c0_0 = arith.constant 0 : index
    %1 = vector.load %arg11[%c0, %c0_0] : memref<324x32xf32, #tpu.memory_space<vmem>>, vector<324x32xf32>
    tpu.vector_store %arg11[%c0, %c0_0], %0 {strides = array<i32>} : memref<324x32xf32, #tpu.memory_space<vmem>>, vector<324x32xf32>,
    %cst_1 = arith.constant 0.000000e+00 : f32
    %2 = vector.broadcast %cst_1 : f32 to vector<100x64xf32>
    %c0_2 = arith.constant 0 : index
    %c0_3 = arith.constant 0 : index
    %3 = vector.load %arg12[%c0_2, %c0_3] : memref<100x64xf32, #tpu.memory_space<vmem>>, vector<100x64xf32>
    tpu.vector_store %arg12[%c0_2, %c0_3], %2 {strides = array<i32>} : memref<100x64xf32, #tpu.memory_space<vmem>>, vector<100x64xf32>,
    %cst_4 = arith.constant 0.000000e+00 : f32
    %4 = vector.broadcast %cst_4 : f32 to vector<36x64xf32>
    %c0_5 = arith.constant 0 : index
    %c0_6 = arith.constant 0 : index
    %5 = vector.load %arg13[%c0_5, %c0_6] : memref<36x64xf32, #tpu.memory_space<vmem>>, vector<36x64xf32>
    tpu.vector_store %arg13[%c0_5, %c0_6], %4 {strides = array<i32>} : memref<36x64xf32, #tpu.memory_space<vmem>>, vector<36x64xf32>,
    %cst_7 = arith.constant 0.000000e+00 : f32
    %6 = vector.broadcast %cst_7 : f32 to vector<286x32xf32>
    %c0_8 = arith.constant 0 : index
    %c0_9 = arith.constant 0 : index
    %c0_10 = arith.constant 0 : index
    %7 = vector.load %arg1[%c0_8, %c0_9, %c0_10] : memref<1x324x1xf32, #tpu.memory_space<vmem>>, vector<1x286x1xf32>
    %8 = vector.shape_cast %7 : vector<1x286x1xf32> to vector<286x1xf32>
    %c0_11 = arith.constant 0 : index
    %c0_12 = arith.constant 0 : index
    %9 = vector.load %arg2[%c0_11, %c0_12] : memref<9x32xf32, #tpu.memory_space<vmem>>, vector<1x32xf32>
    %10 = vector.broadcast %8 : vector<286x1xf32> to vector<286x32xf32>
    %11 = vector.broadcast %9 : vector<1x32xf32> to vector<286x32xf32>
    %12 = arith.mulf %10, %11 : vector<286x32xf32>
    %13 = arith.addf %6, %12 : vector<286x32xf32>
    %c0_13 = arith.constant 0 : index
    %c1 = arith.constant 1 : index
    %c0_14 = arith.constant 0 : index
    %14 = vector.load %arg1[%c0_13, %c1, %c0_14] : memref<1x324x1xf32, #tpu.memory_space<vmem>>, vector<1x286x1xf32>
    %15 = vector.shape_cast %14 : vector<1x286x1xf32> to vector<286x1xf32>
    %c1_15 = arith.constant 1 : index
    %c0_16 = arith.constant 0 : index
    %16 = vector.load %arg2[%c1_15, %c0_16] : memref<9x32xf32, #tpu.memory_space<vmem>>, vector<1x32xf32>
    %17 = vector.broadcast %15 : vector<286x1xf32> to vector<286x32xf32>
    %18 = vector.broadcast %16 : vector<1x32xf32> to vector<286x32xf32>
    %19 = arith.mulf %17, %18 : vector<286x32xf32>
    %20 = arith.addf %13, %19 : vector<286x32xf32>
    %c0_17 = arith.constant 0 : index
    %c2 = arith.constant 2 : index
    %c0_18 = arith.constant 0 : index
    %21 = vector.load %arg1[%c0_17, %c2, %c0_18] : memref<1x324x1xf32, #tpu.memory_space<vmem>>, vector<1x286x1xf32>
    %22 = vector.shape_cast %21 : vector<1x286x1xf32> to vector<286x1xf32>
    %c2_19 = arith.constant 2 : index
    %c0_20 = arith.constant 0 : index
    %23 = vector.load %arg2[%c2_19, %c0_20] : memref<9x32xf32, #tpu.memory_space<vmem>>, vector<1x32xf32>
    %24 = vector.broadcast %22 : vector<286x1xf32> to vector<286x32xf32>
    %25 = vector.broadcast %23 : vector<1x32xf32> to vector<286x32xf32>
    %26 = arith.mulf %24, %25 : vector<286x32xf32>
    %27 = arith.addf %20, %26 : vector<286x32xf32>
    %c0_21 = arith.constant 0 : index
    %c18 = arith.constant 18 : index
    %c0_22 = arith.constant 0 : index
    %28 = vector.load %arg1[%c0_21, %c18, %c0_22] : memref<1x324x1xf32, #tpu.memory_space<vmem>>, vector<1x286x1xf32>
    %29 = vector.shape_cast %28 : vector<1x286x1xf32> to vector<286x1xf32>
    %c3 = arith.constant 3 : index
    %c0_23 = arith.constant 0 : index
    %30 = vector.load %arg2[%c3, %c0_23] : memref<9x32xf32, #tpu.memory_space<vmem>>, vector<1x32xf32>
    %31 = vector.broadcast %29 : vector<286x1xf32> to vector<286x32xf32>
    %32 = vector.broadcast %30 : vector<1x32xf32> to vector<286x32xf32>
    %33 = arith.mulf %31, %32 : vector<286x32xf32>
    %34 = arith.addf %27, %33 : vector<286x32xf32>
    %c0_24 = arith.constant 0 : index
    %c19 = arith.constant 19 : index
    %c0_25 = arith.constant 0 : index
    %35 = vector.load %arg1[%c0_24, %c19, %c0_25] : memref<1x324x1xf32, #tpu.memory_space<vmem>>, vector<1x286x1xf32>
    %36 = vector.shape_cast %35 : vector<1x286x1xf32> to vector<286x1xf32>
    %c4 = arith.constant 4 : index
    %c0_26 = arith.constant 0 : index
    %37 = vector.load %arg2[%c4, %c0_26] : memref<9x32xf32, #tpu.memory_space<vmem>>, vector<1x32xf32>
    %38 = vector.broadcast %36 : vector<286x1xf32> to vector<286x32xf32>
    %39 = vector.broadcast %37 : vector<1x32xf32> to vector<286x32xf32>
    %40 = arith.mulf %38, %39 : vector<286x32xf32>
    %41 = arith.addf %34, %40 : vector<286x32xf32>
    %c0_27 = arith.constant 0 : index
    %c20 = arith.constant 20 : index
    %c0_28 = arith.constant 0 : index
    %42 = vector.load %arg1[%c0_27, %c20, %c0_28] : memref<1x324x1xf32, #tpu.memory_space<vmem>>, vector<1x286x1xf32>
    %43 = vector.shape_cast %42 : vector<1x286x1xf32> to vector<286x1xf32>
    %c5 = arith.constant 5 : index
    %c0_29 = arith.constant 0 : index
    %44 = vector.load %arg2[%c5, %c0_29] : memref<9x32xf32, #tpu.memory_space<vmem>>, vector<1x32xf32>
    %45 = vector.broadcast %43 : vector<286x1xf32> to vector<286x32xf32>
    %46 = vector.broadcast %44 : vector<1x32xf32> to vector<286x32xf32>
    %47 = arith.mulf %45, %46 : vector<286x32xf32>
    %48 = arith.addf %41, %47 : vector<286x32xf32>
    %c0_30 = arith.constant 0 : index
    %c36 = arith.constant 36 : index
    %c0_31 = arith.constant 0 : index
    %49 = vector.load %arg1[%c0_30, %c36, %c0_31] : memref<1x324x1xf32, #tpu.memory_space<vmem>>, vector<1x286x1xf32>
    %50 = vector.shape_cast %49 : vector<1x286x1xf32> to vector<286x1xf32>
    %c6 = arith.constant 6 : index
    %c0_32 = arith.constant 0 : index
    %51 = vector.load %arg2[%c6, %c0_32] : memref<9x32xf32, #tpu.memory_space<vmem>>, vector<1x32xf32>
    %52 = vector.broadcast %50 : vector<286x1xf32> to vector<286x32xf32>
    %53 = vector.broadcast %51 : vector<1x32xf32> to vector<286x32xf32>
    %54 = arith.mulf %52, %53 : vector<286x32xf32>
    %55 = arith.addf %48, %54 : vector<286x32xf32>
    %c0_33 = arith.constant 0 : index
    %c37 = arith.constant 37 : index
    %c0_34 = arith.constant 0 : index
    %56 = vector.load %arg1[%c0_33, %c37, %c0_34] : memref<1x324x1xf32, #tpu.memory_space<vmem>>, vector<1x286x1xf32>
    %57 = vector.shape_cast %56 : vector<1x286x1xf32> to vector<286x1xf32>
    %c7 = arith.constant 7 : index
    %c0_35 = arith.constant 0 : index
    %58 = vector.load %arg2[%c7, %c0_35] : memref<9x32xf32, #tpu.memory_space<vmem>>, vector<1x32xf32>
    %59 = vector.broadcast %57 : vector<286x1xf32> to vector<286x32xf32>
    %60 = vector.broadcast %58 : vector<1x32xf32> to vector<286x32xf32>
    %61 = arith.mulf %59, %60 : vector<286x32xf32>
    %62 = arith.addf %55, %61 : vector<286x32xf32>
    %c0_36 = arith.constant 0 : index
    %c38 = arith.constant 38 : index
    %c0_37 = arith.constant 0 : index
    %63 = vector.load %arg1[%c0_36, %c38, %c0_37] : memref<1x324x1xf32, #tpu.memory_space<vmem>>, vector<1x286x1xf32>
    %64 = vector.shape_cast %63 : vector<1x286x1xf32> to vector<286x1xf32>
    %c8 = arith.constant 8 : index
    %c0_38 = arith.constant 0 : index
    %65 = vector.load %arg2[%c8, %c0_38] : memref<9x32xf32, #tpu.memory_space<vmem>>, vector<1x32xf32>
    %66 = vector.broadcast %64 : vector<286x1xf32> to vector<286x32xf32>
    %67 = vector.broadcast %65 : vector<1x32xf32> to vector<286x32xf32>
    %68 = arith.mulf %66, %67 : vector<286x32xf32>
    %69 = arith.addf %62, %68 : vector<286x32xf32>
    %c0_39 = arith.constant 0 : index
    %c0_40 = arith.constant 0 : index
    %70 = vector.load %arg3[%c0_39, %c0_40] : memref<1x32xf32, #tpu.memory_space<vmem>>, vector<1x32xf32>
    %71 = vector.broadcast %70 : vector<1x32xf32> to vector<286x32xf32>
    %72 = arith.addf %69, %71 : vector<286x32xf32>
    %cst_41 = arith.constant 0.000000e+00 : f32
    %73 = vector.broadcast %cst_41 : f32 to vector<286x32xf32>
    %74 = arith.cmpf oge, %72, %73 : vector<286x32xf32>
    %cst_42 = arith.constant 0.00999999977 : f32
    %75 = vector.broadcast %cst_42 : f32 to vector<286x32xf32>
    %76 = arith.mulf %75, %72 : vector<286x32xf32>
    %77 = arith.select %74, %72, %76 : vector<286x32xi1>, vector<286x32xf32>
    %78 = vector.extract_strided_slice %77 {offsets = [0, 0], sizes = [16, 32], strides = [1, 1]} : vector<286x32xf32> to vector<16x32xf32>
    %c19_43 = arith.constant 19 : index
    %c0_44 = arith.constant 0 : index
    %79 = vector.load %arg11[%c19_43, %c0_44] : memref<324x32xf32, #tpu.memory_space<vmem>>, vector<16x32xf32>
    tpu.vector_store %arg11[%c19_43, %c0_44], %78 {strides = array<i32>} : memref<324x32xf32, #tpu.memory_space<vmem>>, vector<16x32xf32>,
    %80 = vector.extract_strided_slice %77 {offsets = [18, 0], sizes = [16, 32], strides = [1, 1]} : vector<286x32xf32> to vector<16x32xf32>
    %c37_45 = arith.constant 37 : index
    %c0_46 = arith.constant 0 : index
    %81 = vector.load %arg11[%c37_45, %c0_46] : memref<324x32xf32, #tpu.memory_space<vmem>>, vector<16x32xf32>
    tpu.vector_store %arg11[%c37_45, %c0_46], %80 {strides = array<i32>} : memref<324x32xf32, #tpu.memory_space<vmem>>, vector<16x32xf32>,
    %82 = vector.extract_strided_slice %77 {offsets = [36, 0], sizes = [16, 32], strides = [1, 1]} : vector<286x32xf32> to vector<16x32xf32>
    %c55 = arith.constant 55 : index
    %c0_47 = arith.constant 0 : index
    %83 = vector.load %arg11[%c55, %c0_47] : memref<324x32xf32, #tpu.memory_space<vmem>>, vector<16x32xf32>
    tpu.vector_store %arg11[%c55, %c0_47], %82 {strides = array<i32>} : memref<324x32xf32, #tpu.memory_space<vmem>>, vector<16x32xf32>,
    %84 = vector.extract_strided_slice %77 {offsets = [54, 0], sizes = [16, 32], strides = [1, 1]} : vector<286x32xf32> to vector<16x32xf32>
    %c73 = arith.constant 73 : index
    %c0_48 = arith.constant 0 : index
    %85 = vector.load %arg11[%c73, %c0_48] : memref<324x32xf32, #tpu.memory_space<vmem>>, vector<16x32xf32>
    tpu.vector_store %arg11[%c73, %c0_48], %84 {strides = array<i32>} : memref<324x32xf32, #tpu.memory_space<vmem>>, vector<16x32xf32>,
    %86 = vector.extract_strided_slice %77 {offsets = [72, 0], sizes = [16, 32], strides = [1, 1]} : vector<286x32xf32> to vector<16x32xf32>
    %c91 = arith.constant 91 : index
    %c0_49 = arith.constant 0 : index
    %87 = vector.load %arg11[%c91, %c0_49] : memref<324x32xf32, #tpu.memory_space<vmem>>, vector<16x32xf32>
    tpu.vector_store %arg11[%c91, %c0_49], %86 {strides = array<i32>} : memref<324x32xf32, #tpu.memory_space<vmem>>, vector<16x32xf32>,
    %88 = vector.extract_strided_slice %77 {offsets = [90, 0], sizes = [16, 32], strides = [1, 1]} : vector<286x32xf32> to vector<16x32xf32>
    %c109 = arith.constant 109 : index
    %c0_50 = arith.constant 0 : index
    %89 = vector.load %arg11[%c109, %c0_50] : memref<324x32xf32, #tpu.memory_space<vmem>>, vector<16x32xf32>
    tpu.vector_store %arg11[%c109, %c0_50], %88 {strides = array<i32>} : memref<324x32xf32, #tpu.memory_space<vmem>>, vector<16x32xf32>,
    %90 = vector.extract_strided_slice %77 {offsets = [108, 0], sizes = [16, 32], strides = [1, 1]} : vector<286x32xf32> to vector<16x32xf32>
    %c127 = arith.constant 127 : index
    %c0_51 = arith.constant 0 : index
    %91 = vector.load %arg11[%c127, %c0_51] : memref<324x32xf32, #tpu.memory_space<vmem>>, vector<16x32xf32>
    tpu.vector_store %arg11[%c127, %c0_51], %90 {strides = array<i32>} : memref<324x32xf32, #tpu.memory_space<vmem>>, vector<16x32xf32>,
    %92 = vector.extract_strided_slice %77 {offsets = [126, 0], sizes = [16, 32], strides = [1, 1]} : vector<286x32xf32> to vector<16x32xf32>
    %c145 = arith.constant 145 : index
    %c0_52 = arith.constant 0 : index
    %93 = vector.load %arg11[%c145, %c0_52] : memref<324x32xf32, #tpu.memory_space<vmem>>, vector<16x32xf32>
    tpu.vector_store %arg11[%c145, %c0_52], %92 {strides = array<i32>} : memref<324x32xf32, #tpu.memory_space<vmem>>, vector<16x32xf32>,
    %94 = vector.extract_strided_slice %77 {offsets = [144, 0], sizes = [16, 32], strides = [1, 1]} : vector<286x32xf32> to vector<16x32xf32>
    %c163 = arith.constant 163 : index
    %c0_53 = arith.constant 0 : index
    %95 = vector.load %arg11[%c163, %c0_53] : memref<324x32xf32, #tpu.memory_space<vmem>>, vector<16x32xf32>
    tpu.vector_store %arg11[%c163, %c0_53], %94 {strides = array<i32>} : memref<324x32xf32, #tpu.memory_space<vmem>>, vector<16x32xf32>,
    %96 = vector.extract_strided_slice %77 {offsets = [162, 0], sizes = [16, 32], strides = [1, 1]} : vector<286x32xf32> to vector<16x32xf32>
    %c181 = arith.constant 181 : index
    %c0_54 = arith.constant 0 : index
    %97 = vector.load %arg11[%c181, %c0_54] : memref<324x32xf32, #tpu.memory_space<vmem>>, vector<16x32xf32>
    tpu.vector_store %arg11[%c181, %c0_54], %96 {strides = array<i32>} : memref<324x32xf32, #tpu.memory_space<vmem>>, vector<16x32xf32>,
    %98 = vector.extract_strided_slice %77 {offsets = [180, 0], sizes = [16, 32], strides = [1, 1]} : vector<286x32xf32> to vector<16x32xf32>
    %c199 = arith.constant 199 : index
    %c0_55 = arith.constant 0 : index
    %99 = vector.load %arg11[%c199, %c0_55] : memref<324x32xf32, #tpu.memory_space<vmem>>, vector<16x32xf32>
    tpu.vector_store %arg11[%c199, %c0_55], %98 {strides = array<i32>} : memref<324x32xf32, #tpu.memory_space<vmem>>, vector<16x32xf32>,
    %100 = vector.extract_strided_slice %77 {offsets = [198, 0], sizes = [16, 32], strides = [1, 1]} : vector<286x32xf32> to vector<16x32xf32>
    %c217 = arith.constant 217 : index
    %c0_56 = arith.constant 0 : index
    %101 = vector.load %arg11[%c217, %c0_56] : memref<324x32xf32, #tpu.memory_space<vmem>>, vector<16x32xf32>
    tpu.vector_store %arg11[%c217, %c0_56], %100 {strides = array<i32>} : memref<324x32xf32, #tpu.memory_space<vmem>>, vector<16x32xf32>,
    %102 = vector.extract_strided_slice %77 {offsets = [216, 0], sizes = [16, 32], strides = [1, 1]} : vector<286x32xf32> to vector<16x32xf32>
    %c235 = arith.constant 235 : index
    %c0_57 = arith.constant 0 : index
    %103 = vector.load %arg11[%c235, %c0_57] : memref<324x32xf32, #tpu.memory_space<vmem>>, vector<16x32xf32>
    tpu.vector_store %arg11[%c235, %c0_57], %102 {strides = array<i32>} : memref<324x32xf32, #tpu.memory_space<vmem>>, vector<16x32xf32>,
    %104 = vector.extract_strided_slice %77 {offsets = [234, 0], sizes = [16, 32], strides = [1, 1]} : vector<286x32xf32> to vector<16x32xf32>
    %c253 = arith.constant 253 : index
    %c0_58 = arith.constant 0 : index
    %105 = vector.load %arg11[%c253, %c0_58] : memref<324x32xf32, #tpu.memory_space<vmem>>, vector<16x32xf32>
    tpu.vector_store %arg11[%c253, %c0_58], %104 {strides = array<i32>} : memref<324x32xf32, #tpu.memory_space<vmem>>, vector<16x32xf32>,
    %106 = vector.extract_strided_slice %77 {offsets = [252, 0], sizes = [16, 32], strides = [1, 1]} : vector<286x32xf32> to vector<16x32xf32>
    %c271 = arith.constant 271 : index
    %c0_59 = arith.constant 0 : index
    %107 = vector.load %arg11[%c271, %c0_59] : memref<324x32xf32, #tpu.memory_space<vmem>>, vector<16x32xf32>
    tpu.vector_store %arg11[%c271, %c0_59], %106 {strides = array<i32>} : memref<324x32xf32, #tpu.memory_space<vmem>>, vector<16x32xf32>,
    %108 = vector.extract_strided_slice %77 {offsets = [270, 0], sizes = [16, 32], strides = [1, 1]} : vector<286x32xf32> to vector<16x32xf32>
    %c289 = arith.constant 289 : index
    %c0_60 = arith.constant 0 : index
    %109 = vector.load %arg11[%c289, %c0_60] : memref<324x32xf32, #tpu.memory_space<vmem>>, vector<16x32xf32>
    tpu.vector_store %arg11[%c289, %c0_60], %108 {strides = array<i32>} : memref<324x32xf32, #tpu.memory_space<vmem>>, vector<16x32xf32>,
    %cst_61 = arith.constant 0.000000e+00 : f32
    %110 = vector.broadcast %cst_61 : f32 to vector<134x64xf32>
    %c0_62 = arith.constant 0 : index
    %c0_63 = arith.constant 0 : index
    %111 = tpu.strided_load %arg11[%c0_62, %c0_63] {strides = array<i32: 2, 1>} : memref<324x32xf32, #tpu.memory_space<vmem>>, vector<134x32xf32>
    %112 = arith.truncf %111 : vector<134x32xf32> to vector<134x32xbf16>
    %c0_64 = arith.constant 0 : index
    %c0_65 = arith.constant 0 : index
    %c0_66 = arith.constant 0 : index
    %113 = vector.load %arg4[%c0_64, %c0_65, %c0_66] : memref<9x32x64xbf16, #tpu.memory_space<vmem>>, vector<1x32x64xbf16>
    %114 = vector.shape_cast %113 : vector<1x32x64xbf16> to vector<32x64xbf16>
    %cst_67 = arith.constant dense<0.000000e+00> : vector<134x64xf32>
    %115 = tpu.matmul %112, %114, %cst_67 {dimension_numbers = #tpu.dot_dimension_numbers<[1], [0], [0], [1], [0, 0, 1, 1], [], []>} : vector<134x32xbf16>, vector<32x64xbf16>, vector<134x64xf32> -> vector<134x64xf32>
    %116 = arith.addf %110, %115 : vector<134x64xf32>
    %c1_68 = arith.constant 1 : index
    %c0_69 = arith.constant 0 : index
    %117 = tpu.strided_load %arg11[%c1_68, %c0_69] {strides = array<i32: 2, 1>} : memref<324x32xf32, #tpu.memory_space<vmem>>, vector<134x32xf32>
    %118 = arith.truncf %117 : vector<134x32xf32> to vector<134x32xbf16>
    %c1_70 = arith.constant 1 : index
    %c0_71 = arith.constant 0 : index
    %c0_72 = arith.constant 0 : index
    %119 = vector.load %arg4[%c1_70, %c0_71, %c0_72] : memref<9x32x64xbf16, #tpu.memory_space<vmem>>, vector<1x32x64xbf16>
    %120 = vector.shape_cast %119 : vector<1x32x64xbf16> to vector<32x64xbf16>
    %cst_73 = arith.constant dense<0.000000e+00> : vector<134x64xf32>
    %121 = tpu.matmul %118, %120, %cst_73 {dimension_numbers = #tpu.dot_dimension_numbers<[1], [0], [0], [1], [0, 0, 1, 1], [], []>} : vector<134x32xbf16>, vector<32x64xbf16>, vector<134x64xf32> -> vector<134x64xf32>
    %122 = arith.addf %116, %121 : vector<134x64xf32>
    %c2_74 = arith.constant 2 : index
    %c0_75 = arith.constant 0 : index
    %123 = tpu.strided_load %arg11[%c2_74, %c0_75] {strides = array<i32: 2, 1>} : memref<324x32xf32, #tpu.memory_space<vmem>>, vector<134x32xf32>
    %124 = arith.truncf %123 : vector<134x32xf32> to vector<134x32xbf16>
    %c2_76 = arith.constant 2 : index
    %c0_77 = arith.constant 0 : index
    %c0_78 = arith.constant 0 : index
    %125 = vector.load %arg4[%c2_76, %c0_77, %c0_78] : memref<9x32x64xbf16, #tpu.memory_space<vmem>>, vector<1x32x64xbf16>
    %126 = vector.shape_cast %125 : vector<1x32x64xbf16> to vector<32x64xbf16>
    %cst_79 = arith.constant dense<0.000000e+00> : vector<134x64xf32>
    %127 = tpu.matmul %124, %126, %cst_79 {dimension_numbers = #tpu.dot_dimension_numbers<[1], [0], [0], [1], [0, 0, 1, 1], [], []>} : vector<134x32xbf16>, vector<32x64xbf16>, vector<134x64xf32> -> vector<134x64xf32>
    %128 = arith.addf %122, %127 : vector<134x64xf32>
    %c18_80 = arith.constant 18 : index
    %c0_81 = arith.constant 0 : index
    %129 = tpu.strided_load %arg11[%c18_80, %c0_81] {strides = array<i32: 2, 1>} : memref<324x32xf32, #tpu.memory_space<vmem>>, vector<134x32xf32>
    %130 = arith.truncf %129 : vector<134x32xf32> to vector<134x32xbf16>
    %c3_82 = arith.constant 3 : index
    %c0_83 = arith.constant 0 : index
    %c0_84 = arith.constant 0 : index
    %131 = vector.load %arg4[%c3_82, %c0_83, %c0_84] : memref<9x32x64xbf16, #tpu.memory_space<vmem>>, vector<1x32x64xbf16>
    %132 = vector.shape_cast %131 : vector<1x32x64xbf16> to vector<32x64xbf16>
    %cst_85 = arith.constant dense<0.000000e+00> : vector<134x64xf32>
    %133 = tpu.matmul %130, %132, %cst_85 {dimension_numbers = #tpu.dot_dimension_numbers<[1], [0], [0], [1], [0, 0, 1, 1], [], []>} : vector<134x32xbf16>, vector<32x64xbf16>, vector<134x64xf32> -> vector<134x64xf32>
    %134 = arith.addf %128, %133 : vector<134x64xf32>
    %c19_86 = arith.constant 19 : index
    %c0_87 = arith.constant 0 : index
    %135 = tpu.strided_load %arg11[%c19_86, %c0_87] {strides = array<i32: 2, 1>} : memref<324x32xf32, #tpu.memory_space<vmem>>, vector<134x32xf32>
    %136 = arith.truncf %135 : vector<134x32xf32> to vector<134x32xbf16>
    %c4_88 = arith.constant 4 : index
    %c0_89 = arith.constant 0 : index
    %c0_90 = arith.constant 0 : index
    %137 = vector.load %arg4[%c4_88, %c0_89, %c0_90] : memref<9x32x64xbf16, #tpu.memory_space<vmem>>, vector<1x32x64xbf16>
    %138 = vector.shape_cast %137 : vector<1x32x64xbf16> to vector<32x64xbf16>
    %cst_91 = arith.constant dense<0.000000e+00> : vector<134x64xf32>
    %139 = tpu.matmul %136, %138, %cst_91 {dimension_numbers = #tpu.dot_dimension_numbers<[1], [0], [0], [1], [0, 0, 1, 1], [], []>} : vector<134x32xbf16>, vector<32x64xbf16>, vector<134x64xf32> -> vector<134x64xf32>
    %140 = arith.addf %134, %139 : vector<134x64xf32>
    %c20_92 = arith.constant 20 : index
    %c0_93 = arith.constant 0 : index
    %141 = tpu.strided_load %arg11[%c20_92, %c0_93] {strides = array<i32: 2, 1>} : memref<324x32xf32, #tpu.memory_space<vmem>>, vector<134x32xf32>
    %142 = arith.truncf %141 : vector<134x32xf32> to vector<134x32xbf16>
    %c5_94 = arith.constant 5 : index
    %c0_95 = arith.constant 0 : index
    %c0_96 = arith.constant 0 : index
    %143 = vector.load %arg4[%c5_94, %c0_95, %c0_96] : memref<9x32x64xbf16, #tpu.memory_space<vmem>>, vector<1x32x64xbf16>
    %144 = vector.shape_cast %143 : vector<1x32x64xbf16> to vector<32x64xbf16>
    %cst_97 = arith.constant dense<0.000000e+00> : vector<134x64xf32>
    %145 = tpu.matmul %142, %144, %cst_97 {dimension_numbers = #tpu.dot_dimension_numbers<[1], [0], [0], [1], [0, 0, 1, 1], [], []>} : vector<134x32xbf16>, vector<32x64xbf16>, vector<134x64xf32> -> vector<134x64xf32>
    %146 = arith.addf %140, %145 : vector<134x64xf32>
    %c36_98 = arith.constant 36 : index
    %c0_99 = arith.constant 0 : index
    %147 = tpu.strided_load %arg11[%c36_98, %c0_99] {strides = array<i32: 2, 1>} : memref<324x32xf32, #tpu.memory_space<vmem>>, vector<134x32xf32>
    %148 = arith.truncf %147 : vector<134x32xf32> to vector<134x32xbf16>
    %c6_100 = arith.constant 6 : index
    %c0_101 = arith.constant 0 : index
    %c0_102 = arith.constant 0 : index
    %149 = vector.load %arg4[%c6_100, %c0_101, %c0_102] : memref<9x32x64xbf16, #tpu.memory_space<vmem>>, vector<1x32x64xbf16>
    %150 = vector.shape_cast %149 : vector<1x32x64xbf16> to vector<32x64xbf16>
    %cst_103 = arith.constant dense<0.000000e+00> : vector<134x64xf32>
    %151 = tpu.matmul %148, %150, %cst_103 {dimension_numbers = #tpu.dot_dimension_numbers<[1], [0], [0], [1], [0, 0, 1, 1], [], []>} : vector<134x32xbf16>, vector<32x64xbf16>, vector<134x64xf32> -> vector<134x64xf32>
    %152 = arith.addf %146, %151 : vector<134x64xf32>
    %c37_104 = arith.constant 37 : index
    %c0_105 = arith.constant 0 : index
    %153 = tpu.strided_load %arg11[%c37_104, %c0_105] {strides = array<i32: 2, 1>} : memref<324x32xf32, #tpu.memory_space<vmem>>, vector<134x32xf32>
    %154 = arith.truncf %153 : vector<134x32xf32> to vector<134x32xbf16>
    %c7_106 = arith.constant 7 : index
    %c0_107 = arith.constant 0 : index
    %c0_108 = arith.constant 0 : index
    %155 = vector.load %arg4[%c7_106, %c0_107, %c0_108] : memref<9x32x64xbf16, #tpu.memory_space<vmem>>, vector<1x32x64xbf16>
    %156 = vector.shape_cast %155 : vector<1x32x64xbf16> to vector<32x64xbf16>
    %cst_109 = arith.constant dense<0.000000e+00> : vector<134x64xf32>
    %157 = tpu.matmul %154, %156, %cst_109 {dimension_numbers = #tpu.dot_dimension_numbers<[1], [0], [0], [1], [0, 0, 1, 1], [], []>} : vector<134x32xbf16>, vector<32x64xbf16>, vector<134x64xf32> -> vector<134x64xf32>
    %158 = arith.addf %152, %157 : vector<134x64xf32>
    %c38_110 = arith.constant 38 : index
    %c0_111 = arith.constant 0 : index
    %159 = tpu.strided_load %arg11[%c38_110, %c0_111] {strides = array<i32: 2, 1>} : memref<324x32xf32, #tpu.memory_space<vmem>>, vector<134x32xf32>
    %160 = arith.truncf %159 : vector<134x32xf32> to vector<134x32xbf16>
    %c8_112 = arith.constant 8 : index
    %c0_113 = arith.constant 0 : index
    %c0_114 = arith.constant 0 : index
    %161 = vector.load %arg4[%c8_112, %c0_113, %c0_114] : memref<9x32x64xbf16, #tpu.memory_space<vmem>>, vector<1x32x64xbf16>
    %162 = vector.shape_cast %161 : vector<1x32x64xbf16> to vector<32x64xbf16>
    %cst_115 = arith.constant dense<0.000000e+00> : vector<134x64xf32>
    %163 = tpu.matmul %160, %162, %cst_115 {dimension_numbers = #tpu.dot_dimension_numbers<[1], [0], [0], [1], [0, 0, 1, 1], [], []>} : vector<134x32xbf16>, vector<32x64xbf16>, vector<134x64xf32> -> vector<134x64xf32>
    %164 = arith.addf %158, %163 : vector<134x64xf32>
    %c0_116 = arith.constant 0 : index
    %c0_117 = arith.constant 0 : index
    %165 = vector.load %arg5[%c0_116, %c0_117] : memref<1x64xf32, #tpu.memory_space<vmem>>, vector<1x64xf32>
    %166 = vector.broadcast %165 : vector<1x64xf32> to vector<134x64xf32>
    %167 = arith.addf %164, %166 : vector<134x64xf32>
    %cst_118 = arith.constant 0.000000e+00 : f32
    %168 = vector.broadcast %cst_118 : f32 to vector<134x64xf32>
    %169 = arith.cmpf oge, %167, %168 : vector<134x64xf32>
    %cst_119 = arith.constant 0.00999999977 : f32
    %170 = vector.broadcast %cst_119 : f32 to vector<134x64xf32>
    %171 = arith.mulf %170, %167 : vector<134x64xf32>
    %172 = arith.select %169, %167, %171 : vector<134x64xi1>, vector<134x64xf32>
    %173 = vector.extract_strided_slice %172 {offsets = [0, 0], sizes = [8, 64], strides = [1, 1]} : vector<134x64xf32> to vector<8x64xf32>
    %c11 = arith.constant 11 : index
    %c0_120 = arith.constant 0 : index
    %174 = vector.load %arg12[%c11, %c0_120] : memref<100x64xf32, #tpu.memory_space<vmem>>, vector<8x64xf32>
    tpu.vector_store %arg12[%c11, %c0_120], %173 {strides = array<i32>} : memref<100x64xf32, #tpu.memory_space<vmem>>, vector<8x64xf32>,
    %175 = vector.extract_strided_slice %172 {offsets = [18, 0], sizes = [8, 64], strides = [1, 1]} : vector<134x64xf32> to vector<8x64xf32>
    %c21 = arith.constant 21 : index
    %c0_121 = arith.constant 0 : index
    %176 = vector.load %arg12[%c21, %c0_121] : memref<100x64xf32, #tpu.memory_space<vmem>>, vector<8x64xf32>
    tpu.vector_store %arg12[%c21, %c0_121], %175 {strides = array<i32>} : memref<100x64xf32, #tpu.memory_space<vmem>>, vector<8x64xf32>,
    %177 = vector.extract_strided_slice %172 {offsets = [36, 0], sizes = [8, 64], strides = [1, 1]} : vector<134x64xf32> to vector<8x64xf32>
    %c31 = arith.constant 31 : index
    %c0_122 = arith.constant 0 : index
    %178 = vector.load %arg12[%c31, %c0_122] : memref<100x64xf32, #tpu.memory_space<vmem>>, vector<8x64xf32>
    tpu.vector_store %arg12[%c31, %c0_122], %177 {strides = array<i32>} : memref<100x64xf32, #tpu.memory_space<vmem>>, vector<8x64xf32>,
    %179 = vector.extract_strided_slice %172 {offsets = [54, 0], sizes = [8, 64], strides = [1, 1]} : vector<134x64xf32> to vector<8x64xf32>
    %c41 = arith.constant 41 : index
    %c0_123 = arith.constant 0 : index
    %180 = vector.load %arg12[%c41, %c0_123] : memref<100x64xf32, #tpu.memory_space<vmem>>, vector<8x64xf32>
    tpu.vector_store %arg12[%c41, %c0_123], %179 {strides = array<i32>} : memref<100x64xf32, #tpu.memory_space<vmem>>, vector<8x64xf32>,
    %181 = vector.extract_strided_slice %172 {offsets = [72, 0], sizes = [8, 64], strides = [1, 1]} : vector<134x64xf32> to vector<8x64xf32>
    %c51 = arith.constant 51 : index
    %c0_124 = arith.constant 0 : index
    %182 = vector.load %arg12[%c51, %c0_124] : memref<100x64xf32, #tpu.memory_space<vmem>>, vector<8x64xf32>
    tpu.vector_store %arg12[%c51, %c0_124], %181 {strides = array<i32>} : memref<100x64xf32, #tpu.memory_space<vmem>>, vector<8x64xf32>,
    %183 = vector.extract_strided_slice %172 {offsets = [90, 0], sizes = [8, 64], strides = [1, 1]} : vector<134x64xf32> to vector<8x64xf32>
    %c61 = arith.constant 61 : index
    %c0_125 = arith.constant 0 : index
    %184 = vector.load %arg12[%c61, %c0_125] : memref<100x64xf32, #tpu.memory_space<vmem>>, vector<8x64xf32>
    tpu.vector_store %arg12[%c61, %c0_125], %183 {strides = array<i32>} : memref<100x64xf32, #tpu.memory_space<vmem>>, vector<8x64xf32>,
    %185 = vector.extract_strided_slice %172 {offsets = [108, 0], sizes = [8, 64], strides = [1, 1]} : vector<134x64xf32> to vector<8x64xf32>
    %c71 = arith.constant 71 : index
    %c0_126 = arith.constant 0 : index
    %186 = vector.load %arg12[%c71, %c0_126] : memref<100x64xf32, #tpu.memory_space<vmem>>, vector<8x64xf32>
    tpu.vector_store %arg12[%c71, %c0_126], %185 {strides = array<i32>} : memref<100x64xf32, #tpu.memory_space<vmem>>, vector<8x64xf32>,
    %187 = vector.extract_strided_slice %172 {offsets = [126, 0], sizes = [8, 64], strides = [1, 1]} : vector<134x64xf32> to vector<8x64xf32>
    %c81 = arith.constant 81 : index
    %c0_127 = arith.constant 0 : index
    %188 = vector.load %arg12[%c81, %c0_127] : memref<100x64xf32, #tpu.memory_space<vmem>>, vector<8x64xf32>
    tpu.vector_store %arg12[%c81, %c0_127], %187 {strides = array<i32>} : memref<100x64xf32, #tpu.memory_space<vmem>>, vector<8x64xf32>,
    %cst_128 = arith.constant 0.000000e+00 : f32
    %189 = vector.broadcast %cst_128 : f32 to vector<34x64xf32>
    %c0_129 = arith.constant 0 : index
    %c0_130 = arith.constant 0 : index
    %190 = tpu.strided_load %arg12[%c0_129, %c0_130] {strides = array<i32: 2, 1>} : memref<100x64xf32, #tpu.memory_space<vmem>>, vector<34x64xf32>
    %191 = arith.truncf %190 : vector<34x64xf32> to vector<34x64xbf16>
    %c0_131 = arith.constant 0 : index
    %c0_132 = arith.constant 0 : index
    %c0_133 = arith.constant 0 : index
    %192 = vector.load %arg6[%c0_131, %c0_132, %c0_133] : memref<9x64x64xbf16, #tpu.memory_space<vmem>>, vector<1x64x64xbf16>
    %193 = vector.shape_cast %192 : vector<1x64x64xbf16> to vector<64x64xbf16>
    %cst_134 = arith.constant dense<0.000000e+00> : vector<34x64xf32>
    %194 = tpu.matmul %191, %193, %cst_134 {dimension_numbers = #tpu.dot_dimension_numbers<[1], [0], [0], [1], [0, 0, 1, 1], [], []>} : vector<34x64xbf16>, vector<64x64xbf16>, vector<34x64xf32> -> vector<34x64xf32>
    %195 = arith.addf %189, %194 : vector<34x64xf32>
    %c1_135 = arith.constant 1 : index
    %c0_136 = arith.constant 0 : index
    %196 = tpu.strided_load %arg12[%c1_135, %c0_136] {strides = array<i32: 2, 1>} : memref<100x64xf32, #tpu.memory_space<vmem>>, vector<34x64xf32>
    %197 = arith.truncf %196 : vector<34x64xf32> to vector<34x64xbf16>
    %c1_137 = arith.constant 1 : index
    %c0_138 = arith.constant 0 : index
    %c0_139 = arith.constant 0 : index
    %198 = vector.load %arg6[%c1_137, %c0_138, %c0_139] : memref<9x64x64xbf16, #tpu.memory_space<vmem>>, vector<1x64x64xbf16>
    %199 = vector.shape_cast %198 : vector<1x64x64xbf16> to vector<64x64xbf16>
    %cst_140 = arith.constant dense<0.000000e+00> : vector<34x64xf32>
    %200 = tpu.matmul %197, %199, %cst_140 {dimension_numbers = #tpu.dot_dimension_numbers<[1], [0], [0], [1], [0, 0, 1, 1], [], []>} : vector<34x64xbf16>, vector<64x64xbf16>, vector<34x64xf32> -> vector<34x64xf32>
    %201 = arith.addf %195, %200 : vector<34x64xf32>
    %c2_141 = arith.constant 2 : index
    %c0_142 = arith.constant 0 : index
    %202 = tpu.strided_load %arg12[%c2_141, %c0_142] {strides = array<i32: 2, 1>} : memref<100x64xf32, #tpu.memory_space<vmem>>, vector<34x64xf32>
    %203 = arith.truncf %202 : vector<34x64xf32> to vector<34x64xbf16>
    %c2_143 = arith.constant 2 : index
    %c0_144 = arith.constant 0 : index
    %c0_145 = arith.constant 0 : index
    %204 = vector.load %arg6[%c2_143, %c0_144, %c0_145] : memref<9x64x64xbf16, #tpu.memory_space<vmem>>, vector<1x64x64xbf16>
    %205 = vector.shape_cast %204 : vector<1x64x64xbf16> to vector<64x64xbf16>
    %cst_146 = arith.constant dense<0.000000e+00> : vector<34x64xf32>
    %206 = tpu.matmul %203, %205, %cst_146 {dimension_numbers = #tpu.dot_dimension_numbers<[1], [0], [0], [1], [0, 0, 1, 1], [], []>} : vector<34x64xbf16>, vector<64x64xbf16>, vector<34x64xf32> -> vector<34x64xf32>
    %207 = arith.addf %201, %206 : vector<34x64xf32>
    %c10 = arith.constant 10 : index
    %c0_147 = arith.constant 0 : index
    %208 = tpu.strided_load %arg12[%c10, %c0_147] {strides = array<i32: 2, 1>} : memref<100x64xf32, #tpu.memory_space<vmem>>, vector<34x64xf32>
    %209 = arith.truncf %208 : vector<34x64xf32> to vector<34x64xbf16>
    %c3_148 = arith.constant 3 : index
    %c0_149 = arith.constant 0 : index
    %c0_150 = arith.constant 0 : index
    %210 = vector.load %arg6[%c3_148, %c0_149, %c0_150] : memref<9x64x64xbf16, #tpu.memory_space<vmem>>, vector<1x64x64xbf16>
    %211 = vector.shape_cast %210 : vector<1x64x64xbf16> to vector<64x64xbf16>
    %cst_151 = arith.constant dense<0.000000e+00> : vector<34x64xf32>
    %212 = tpu.matmul %209, %211, %cst_151 {dimension_numbers = #tpu.dot_dimension_numbers<[1], [0], [0], [1], [0, 0, 1, 1], [], []>} : vector<34x64xbf16>, vector<64x64xbf16>, vector<34x64xf32> -> vector<34x64xf32>
    %213 = arith.addf %207, %212 : vector<34x64xf32>
    %c11_152 = arith.constant 11 : index
    %c0_153 = arith.constant 0 : index
    %214 = tpu.strided_load %arg12[%c11_152, %c0_153] {strides = array<i32: 2, 1>} : memref<100x64xf32, #tpu.memory_space<vmem>>, vector<34x64xf32>
    %215 = arith.truncf %214 : vector<34x64xf32> to vector<34x64xbf16>
    %c4_154 = arith.constant 4 : index
    %c0_155 = arith.constant 0 : index
    %c0_156 = arith.constant 0 : index
    %216 = vector.load %arg6[%c4_154, %c0_155, %c0_156] : memref<9x64x64xbf16, #tpu.memory_space<vmem>>, vector<1x64x64xbf16>
    %217 = vector.shape_cast %216 : vector<1x64x64xbf16> to vector<64x64xbf16>
    %cst_157 = arith.constant dense<0.000000e+00> : vector<34x64xf32>
    %218 = tpu.matmul %215, %217, %cst_157 {dimension_numbers = #tpu.dot_dimension_numbers<[1], [0], [0], [1], [0, 0, 1, 1], [], []>} : vector<34x64xbf16>, vector<64x64xbf16>, vector<34x64xf32> -> vector<34x64xf32>
    %219 = arith.addf %213, %218 : vector<34x64xf32>
    %c12 = arith.constant 12 : index
    %c0_158 = arith.constant 0 : index
    %220 = tpu.strided_load %arg12[%c12, %c0_158] {strides = array<i32: 2, 1>} : memref<100x64xf32, #tpu.memory_space<vmem>>, vector<34x64xf32>
    %221 = arith.truncf %220 : vector<34x64xf32> to vector<34x64xbf16>
    %c5_159 = arith.constant 5 : index
    %c0_160 = arith.constant 0 : index
    %c0_161 = arith.constant 0 : index
    %222 = vector.load %arg6[%c5_159, %c0_160, %c0_161] : memref<9x64x64xbf16, #tpu.memory_space<vmem>>, vector<1x64x64xbf16>
    %223 = vector.shape_cast %222 : vector<1x64x64xbf16> to vector<64x64xbf16>
    %cst_162 = arith.constant dense<0.000000e+00> : vector<34x64xf32>
    %224 = tpu.matmul %221, %223, %cst_162 {dimension_numbers = #tpu.dot_dimension_numbers<[1], [0], [0], [1], [0, 0, 1, 1], [], []>} : vector<34x64xbf16>, vector<64x64xbf16>, vector<34x64xf32> -> vector<34x64xf32>
    %225 = arith.addf %219, %224 : vector<34x64xf32>
    %c20_163 = arith.constant 20 : index
    %c0_164 = arith.constant 0 : index
    %226 = tpu.strided_load %arg12[%c20_163, %c0_164] {strides = array<i32: 2, 1>} : memref<100x64xf32, #tpu.memory_space<vmem>>, vector<34x64xf32>
    %227 = arith.truncf %226 : vector<34x64xf32> to vector<34x64xbf16>
    %c6_165 = arith.constant 6 : index
    %c0_166 = arith.constant 0 : index
    %c0_167 = arith.constant 0 : index
    %228 = vector.load %arg6[%c6_165, %c0_166, %c0_167] : memref<9x64x64xbf16, #tpu.memory_space<vmem>>, vector<1x64x64xbf16>
    %229 = vector.shape_cast %228 : vector<1x64x64xbf16> to vector<64x64xbf16>
    %cst_168 = arith.constant dense<0.000000e+00> : vector<34x64xf32>
    %230 = tpu.matmul %227, %229, %cst_168 {dimension_numbers = #tpu.dot_dimension_numbers<[1], [0], [0], [1], [0, 0, 1, 1], [], []>} : vector<34x64xbf16>, vector<64x64xbf16>, vector<34x64xf32> -> vector<34x64xf32>
    %231 = arith.addf %225, %230 : vector<34x64xf32>
    %c21_169 = arith.constant 21 : index
    %c0_170 = arith.constant 0 : index
    %232 = tpu.strided_load %arg12[%c21_169, %c0_170] {strides = array<i32: 2, 1>} : memref<100x64xf32, #tpu.memory_space<vmem>>, vector<34x64xf32>
    %233 = arith.truncf %232 : vector<34x64xf32> to vector<34x64xbf16>
    %c7_171 = arith.constant 7 : index
    %c0_172 = arith.constant 0 : index
    %c0_173 = arith.constant 0 : index
    %234 = vector.load %arg6[%c7_171, %c0_172, %c0_173] : memref<9x64x64xbf16, #tpu.memory_space<vmem>>, vector<1x64x64xbf16>
    %235 = vector.shape_cast %234 : vector<1x64x64xbf16> to vector<64x64xbf16>
    %cst_174 = arith.constant dense<0.000000e+00> : vector<34x64xf32>
    %236 = tpu.matmul %233, %235, %cst_174 {dimension_numbers = #tpu.dot_dimension_numbers<[1], [0], [0], [1], [0, 0, 1, 1], [], []>} : vector<34x64xbf16>, vector<64x64xbf16>, vector<34x64xf32> -> vector<34x64xf32>
    %237 = arith.addf %231, %236 : vector<34x64xf32>
    %c22 = arith.constant 22 : index
    %c0_175 = arith.constant 0 : index
    %238 = tpu.strided_load %arg12[%c22, %c0_175] {strides = array<i32: 2, 1>} : memref<100x64xf32, #tpu.memory_space<vmem>>, vector<34x64xf32>
    %239 = arith.truncf %238 : vector<34x64xf32> to vector<34x64xbf16>
    %c8_176 = arith.constant 8 : index
    %c0_177 = arith.constant 0 : index
    %c0_178 = arith.constant 0 : index
    %240 = vector.load %arg6[%c8_176, %c0_177, %c0_178] : memref<9x64x64xbf16, #tpu.memory_space<vmem>>, vector<1x64x64xbf16>
    %241 = vector.shape_cast %240 : vector<1x64x64xbf16> to vector<64x64xbf16>
    %cst_179 = arith.constant dense<0.000000e+00> : vector<34x64xf32>
    %242 = tpu.matmul %239, %241, %cst_179 {dimension_numbers = #tpu.dot_dimension_numbers<[1], [0], [0], [1], [0, 0, 1, 1], [], []>} : vector<34x64xbf16>, vector<64x64xbf16>, vector<34x64xf32> -> vector<34x64xf32>
    %243 = arith.addf %237, %242 : vector<34x64xf32>
    %c0_180 = arith.constant 0 : index
    %c0_181 = arith.constant 0 : index
    %244 = vector.load %arg7[%c0_180, %c0_181] : memref<1x64xf32, #tpu.memory_space<vmem>>, vector<1x64xf32>
    %245 = vector.broadcast %244 : vector<1x64xf32> to vector<34x64xf32>
    %246 = arith.addf %243, %245 : vector<34x64xf32>
    %cst_182 = arith.constant 0.000000e+00 : f32
    %247 = vector.broadcast %cst_182 : f32 to vector<34x64xf32>
    %248 = arith.cmpf oge, %246, %247 : vector<34x64xf32>
    %cst_183 = arith.constant 0.00999999977 : f32
    %249 = vector.broadcast %cst_183 : f32 to vector<34x64xf32>
    %250 = arith.mulf %249, %246 : vector<34x64xf32>
    %251 = arith.select %248, %246, %250 : vector<34x64xi1>, vector<34x64xf32>
    %252 = vector.extract_strided_slice %251 {offsets = [0, 0], sizes = [4, 64], strides = [1, 1]} : vector<34x64xf32> to vector<4x64xf32>
    %c7_184 = arith.constant 7 : index
    %c0_185 = arith.constant 0 : index
    %253 = vector.load %arg13[%c7_184, %c0_185] : memref<36x64xf32, #tpu.memory_space<vmem>>, vector<4x64xf32>
    tpu.vector_store %arg13[%c7_184, %c0_185], %252 {strides = array<i32>} : memref<36x64xf32, #tpu.memory_space<vmem>>, vector<4x64xf32>,
    %254 = vector.extract_strided_slice %251 {offsets = [10, 0], sizes = [4, 64], strides = [1, 1]} : vector<34x64xf32> to vector<4x64xf32>
    %c13 = arith.constant 13 : index
    %c0_186 = arith.constant 0 : index
    %255 = vector.load %arg13[%c13, %c0_186] : memref<36x64xf32, #tpu.memory_space<vmem>>, vector<4x64xf32>
    tpu.vector_store %arg13[%c13, %c0_186], %254 {strides = array<i32>} : memref<36x64xf32, #tpu.memory_space<vmem>>, vector<4x64xf32>,
    %256 = vector.extract_strided_slice %251 {offsets = [20, 0], sizes = [4, 64], strides = [1, 1]} : vector<34x64xf32> to vector<4x64xf32>
    %c19_187 = arith.constant 19 : index
    %c0_188 = arith.constant 0 : index
    %257 = vector.load %arg13[%c19_187, %c0_188] : memref<36x64xf32, #tpu.memory_space<vmem>>, vector<4x64xf32>
    tpu.vector_store %arg13[%c19_187, %c0_188], %256 {strides = array<i32>} : memref<36x64xf32, #tpu.memory_space<vmem>>, vector<4x64xf32>,
    %258 = vector.extract_strided_slice %251 {offsets = [30, 0], sizes = [4, 64], strides = [1, 1]} : vector<34x64xf32> to vector<4x64xf32>
    %c25 = arith.constant 25 : index
    %c0_189 = arith.constant 0 : index
    %259 = vector.load %arg13[%c25, %c0_189] : memref<36x64xf32, #tpu.memory_space<vmem>>, vector<4x64xf32>
    tpu.vector_store %arg13[%c25, %c0_189], %258 {strides = array<i32>} : memref<36x64xf32, #tpu.memory_space<vmem>>, vector<4x64xf32>,
    %cst_190 = arith.constant 0.000000e+00 : f32
    %260 = vector.broadcast %cst_190 : f32 to vector<22x128xf32>
    %c0_191 = arith.constant 0 : index
    %c0_192 = arith.constant 0 : index
    %261 = vector.load %arg13[%c0_191, %c0_192] : memref<36x64xf32, #tpu.memory_space<vmem>>, vector<22x64xf32>
    %262 = arith.truncf %261 : vector<22x64xf32> to vector<22x64xbf16>
    %c0_193 = arith.constant 0 : index
    %c0_194 = arith.constant 0 : index
    %c0_195 = arith.constant 0 : index
    %263 = vector.load %arg8[%c0_193, %c0_194, %c0_195] : memref<9x64x128xbf16, #tpu.memory_space<vmem>>, vector<1x64x128xbf16>
    %264 = vector.shape_cast %263 : vector<1x64x128xbf16> to vector<64x128xbf16>
    %cst_196 = arith.constant dense<0.000000e+00> : vector<22x128xf32>
    %265 = tpu.matmul %262, %264, %cst_196 {dimension_numbers = #tpu.dot_dimension_numbers<[1], [0], [0], [1], [0, 0, 1, 1], [], []>} : vector<22x64xbf16>, vector<64x128xbf16>, vector<22x128xf32> -> vector<22x128xf32>
    %266 = arith.addf %260, %265 : vector<22x128xf32>
    %c1_197 = arith.constant 1 : index
    %c0_198 = arith.constant 0 : index
    %267 = vector.load %arg13[%c1_197, %c0_198] : memref<36x64xf32, #tpu.memory_space<vmem>>, vector<22x64xf32>
    %268 = arith.truncf %267 : vector<22x64xf32> to vector<22x64xbf16>
    %c1_199 = arith.constant 1 : index
    %c0_200 = arith.constant 0 : index
    %c0_201 = arith.constant 0 : index
    %269 = vector.load %arg8[%c1_199, %c0_200, %c0_201] : memref<9x64x128xbf16, #tpu.memory_space<vmem>>, vector<1x64x128xbf16>
    %270 = vector.shape_cast %269 : vector<1x64x128xbf16> to vector<64x128xbf16>
    %cst_202 = arith.constant dense<0.000000e+00> : vector<22x128xf32>
    %271 = tpu.matmul %268, %270, %cst_202 {dimension_numbers = #tpu.dot_dimension_numbers<[1], [0], [0], [1], [0, 0, 1, 1], [], []>} : vector<22x64xbf16>, vector<64x128xbf16>, vector<22x128xf32> -> vector<22x128xf32>
    %272 = arith.addf %266, %271 : vector<22x128xf32>
    %c2_203 = arith.constant 2 : index
    %c0_204 = arith.constant 0 : index
    %273 = vector.load %arg13[%c2_203, %c0_204] : memref<36x64xf32, #tpu.memory_space<vmem>>, vector<22x64xf32>
    %274 = arith.truncf %273 : vector<22x64xf32> to vector<22x64xbf16>
    %c2_205 = arith.constant 2 : index
    %c0_206 = arith.constant 0 : index
    %c0_207 = arith.constant 0 : index
    %275 = vector.load %arg8[%c2_205, %c0_206, %c0_207] : memref<9x64x128xbf16, #tpu.memory_space<vmem>>, vector<1x64x128xbf16>
    %276 = vector.shape_cast %275 : vector<1x64x128xbf16> to vector<64x128xbf16>
    %cst_208 = arith.constant dense<0.000000e+00> : vector<22x128xf32>
    %277 = tpu.matmul %274, %276, %cst_208 {dimension_numbers = #tpu.dot_dimension_numbers<[1], [0], [0], [1], [0, 0, 1, 1], [], []>} : vector<22x64xbf16>, vector<64x128xbf16>, vector<22x128xf32> -> vector<22x128xf32>
    %278 = arith.addf %272, %277 : vector<22x128xf32>
    %c6_209 = arith.constant 6 : index
    %c0_210 = arith.constant 0 : index
    %279 = vector.load %arg13[%c6_209, %c0_210] : memref<36x64xf32, #tpu.memory_space<vmem>>, vector<22x64xf32>
    %280 = arith.truncf %279 : vector<22x64xf32> to vector<22x64xbf16>
    %c3_211 = arith.constant 3 : index
    %c0_212 = arith.constant 0 : index
    %c0_213 = arith.constant 0 : index
    %281 = vector.load %arg8[%c3_211, %c0_212, %c0_213] : memref<9x64x128xbf16, #tpu.memory_space<vmem>>, vector<1x64x128xbf16>
    %282 = vector.shape_cast %281 : vector<1x64x128xbf16> to vector<64x128xbf16>
    %cst_214 = arith.constant dense<0.000000e+00> : vector<22x128xf32>
    %283 = tpu.matmul %280, %282, %cst_214 {dimension_numbers = #tpu.dot_dimension_numbers<[1], [0], [0], [1], [0, 0, 1, 1], [], []>} : vector<22x64xbf16>, vector<64x128xbf16>, vector<22x128xf32> -> vector<22x128xf32>
    %284 = arith.addf %278, %283 : vector<22x128xf32>
    %c7_215 = arith.constant 7 : index
    %c0_216 = arith.constant 0 : index
    %285 = vector.load %arg13[%c7_215, %c0_216] : memref<36x64xf32, #tpu.memory_space<vmem>>, vector<22x64xf32>
    %286 = arith.truncf %285 : vector<22x64xf32> to vector<22x64xbf16>
    %c4_217 = arith.constant 4 : index
    %c0_218 = arith.constant 0 : index
    %c0_219 = arith.constant 0 : index
    %287 = vector.load %arg8[%c4_217, %c0_218, %c0_219] : memref<9x64x128xbf16, #tpu.memory_space<vmem>>, vector<1x64x128xbf16>
    %288 = vector.shape_cast %287 : vector<1x64x128xbf16> to vector<64x128xbf16>
    %cst_220 = arith.constant dense<0.000000e+00> : vector<22x128xf32>
    %289 = tpu.matmul %286, %288, %cst_220 {dimension_numbers = #tpu.dot_dimension_numbers<[1], [0], [0], [1], [0, 0, 1, 1], [], []>} : vector<22x64xbf16>, vector<64x128xbf16>, vector<22x128xf32> -> vector<22x128xf32>
    %290 = arith.addf %284, %289 : vector<22x128xf32>
    %c8_221 = arith.constant 8 : index
    %c0_222 = arith.constant 0 : index
    %291 = vector.load %arg13[%c8_221, %c0_222] : memref<36x64xf32, #tpu.memory_space<vmem>>, vector<22x64xf32>
    %292 = arith.truncf %291 : vector<22x64xf32> to vector<22x64xbf16>
    %c5_223 = arith.constant 5 : index
    %c0_224 = arith.constant 0 : index
    %c0_225 = arith.constant 0 : index
    %293 = vector.load %arg8[%c5_223, %c0_224, %c0_225] : memref<9x64x128xbf16, #tpu.memory_space<vmem>>, vector<1x64x128xbf16>
    %294 = vector.shape_cast %293 : vector<1x64x128xbf16> to vector<64x128xbf16>
    %cst_226 = arith.constant dense<0.000000e+00> : vector<22x128xf32>
    %295 = tpu.matmul %292, %294, %cst_226 {dimension_numbers = #tpu.dot_dimension_numbers<[1], [0], [0], [1], [0, 0, 1, 1], [], []>} : vector<22x64xbf16>, vector<64x128xbf16>, vector<22x128xf32> -> vector<22x128xf32>
    %296 = arith.addf %290, %295 : vector<22x128xf32>
    %c12_227 = arith.constant 12 : index
    %c0_228 = arith.constant 0 : index
    %297 = vector.load %arg13[%c12_227, %c0_228] : memref<36x64xf32, #tpu.memory_space<vmem>>, vector<22x64xf32>
    %298 = arith.truncf %297 : vector<22x64xf32> to vector<22x64xbf16>
    %c6_229 = arith.constant 6 : index
    %c0_230 = arith.constant 0 : index
    %c0_231 = arith.constant 0 : index
    %299 = vector.load %arg8[%c6_229, %c0_230, %c0_231] : memref<9x64x128xbf16, #tpu.memory_space<vmem>>, vector<1x64x128xbf16>
    %300 = vector.shape_cast %299 : vector<1x64x128xbf16> to vector<64x128xbf16>
    %cst_232 = arith.constant dense<0.000000e+00> : vector<22x128xf32>
    %301 = tpu.matmul %298, %300, %cst_232 {dimension_numbers = #tpu.dot_dimension_numbers<[1], [0], [0], [1], [0, 0, 1, 1], [], []>} : vector<22x64xbf16>, vector<64x128xbf16>, vector<22x128xf32> -> vector<22x128xf32>
    %302 = arith.addf %296, %301 : vector<22x128xf32>
    %c13_233 = arith.constant 13 : index
    %c0_234 = arith.constant 0 : index
    %303 = vector.load %arg13[%c13_233, %c0_234] : memref<36x64xf32, #tpu.memory_space<vmem>>, vector<22x64xf32>
    %304 = arith.truncf %303 : vector<22x64xf32> to vector<22x64xbf16>
    %c7_235 = arith.constant 7 : index
    %c0_236 = arith.constant 0 : index
    %c0_237 = arith.constant 0 : index
    %305 = vector.load %arg8[%c7_235, %c0_236, %c0_237] : memref<9x64x128xbf16, #tpu.memory_space<vmem>>, vector<1x64x128xbf16>
    %306 = vector.shape_cast %305 : vector<1x64x128xbf16> to vector<64x128xbf16>
    %cst_238 = arith.constant dense<0.000000e+00> : vector<22x128xf32>
    %307 = tpu.matmul %304, %306, %cst_238 {dimension_numbers = #tpu.dot_dimension_numbers<[1], [0], [0], [1], [0, 0, 1, 1], [], []>} : vector<22x64xbf16>, vector<64x128xbf16>, vector<22x128xf32> -> vector<22x128xf32>
    %308 = arith.addf %302, %307 : vector<22x128xf32>
    %c14 = arith.constant 14 : index
    %c0_239 = arith.constant 0 : index
    %309 = vector.load %arg13[%c14, %c0_239] : memref<36x64xf32, #tpu.memory_space<vmem>>, vector<22x64xf32>
    %310 = arith.truncf %309 : vector<22x64xf32> to vector<22x64xbf16>
    %c8_240 = arith.constant 8 : index
    %c0_241 = arith.constant 0 : index
    %c0_242 = arith.constant 0 : index
    %311 = vector.load %arg8[%c8_240, %c0_241, %c0_242] : memref<9x64x128xbf16, #tpu.memory_space<vmem>>, vector<1x64x128xbf16>
    %312 = vector.shape_cast %311 : vector<1x64x128xbf16> to vector<64x128xbf16>
    %cst_243 = arith.constant dense<0.000000e+00> : vector<22x128xf32>
    %313 = tpu.matmul %310, %312, %cst_243 {dimension_numbers = #tpu.dot_dimension_numbers<[1], [0], [0], [1], [0, 0, 1, 1], [], []>} : vector<22x64xbf16>, vector<64x128xbf16>, vector<22x128xf32> -> vector<22x128xf32>
    %314 = arith.addf %308, %313 : vector<22x128xf32>
    %c0_244 = arith.constant 0 : index
    %c0_245 = arith.constant 0 : index
    %315 = vector.load %arg9[%c0_244, %c0_245] : memref<1x128xf32, #tpu.memory_space<vmem>>, vector<1x128xf32>
    %316 = vector.broadcast %315 : vector<1x128xf32> to vector<22x128xf32>
    %317 = arith.addf %314, %316 : vector<22x128xf32>
    %318 = vector.extract_strided_slice %317 {offsets = [0, 0], sizes = [4, 128], strides = [1, 1]} : vector<22x128xf32> to vector<4x128xf32>
    %c0_246 = arith.constant 0 : index
    %c0_247 = arith.constant 0 : index
    %c0_248 = arith.constant 0 : index
    %319 = vector.load %arg10[%c0_246, %c0_247, %c0_248] : memref<1x16x128xf32, #tpu.memory_space<vmem>>, vector<1x4x128xf32>
    %320 = vector.shape_cast %319 : vector<1x4x128xf32> to vector<4x128xf32>
    %321 = vector.shape_cast %318 : vector<4x128xf32> to vector<1x4x128xf32>
    tpu.vector_store %arg10[%c0_246, %c0_247, %c0_248], %321 {strides = array<i32>} : memref<1x16x128xf32, #tpu.memory_space<vmem>>, vector<1x4x128xf32>,
    %322 = vector.extract_strided_slice %317 {offsets = [6, 0], sizes = [4, 128], strides = [1, 1]} : vector<22x128xf32> to vector<4x128xf32>
    %c0_249 = arith.constant 0 : index
    %c4_250 = arith.constant 4 : index
    %c0_251 = arith.constant 0 : index
    %323 = vector.load %arg10[%c0_249, %c4_250, %c0_251] : memref<1x16x128xf32, #tpu.memory_space<vmem>>, vector<1x4x128xf32>
    %324 = vector.shape_cast %323 : vector<1x4x128xf32> to vector<4x128xf32>
    %325 = vector.shape_cast %322 : vector<4x128xf32> to vector<1x4x128xf32>
    tpu.vector_store %arg10[%c0_249, %c4_250, %c0_251], %325 {strides = array<i32>} : memref<1x16x128xf32, #tpu.memory_space<vmem>>, vector<1x4x128xf32>,
    %326 = vector.extract_strided_slice %317 {offsets = [12, 0], sizes = [4, 128], strides = [1, 1]} : vector<22x128xf32> to vector<4x128xf32>
    %c0_252 = arith.constant 0 : index
    %c8_253 = arith.constant 8 : index
    %c0_254 = arith.constant 0 : index
    %327 = vector.load %arg10[%c0_252, %c8_253, %c0_254] : memref<1x16x128xf32, #tpu.memory_space<vmem>>, vector<1x4x128xf32>
    %328 = vector.shape_cast %327 : vector<1x4x128xf32> to vector<4x128xf32>
    %329 = vector.shape_cast %326 : vector<4x128xf32> to vector<1x4x128xf32>
    tpu.vector_store %arg10[%c0_252, %c8_253, %c0_254], %329 {strides = array<i32>} : memref<1x16x128xf32, #tpu.memory_space<vmem>>, vector<1x4x128xf32>,
    %330 = vector.extract_strided_slice %317 {offsets = [18, 0], sizes = [4, 128], strides = [1, 1]} : vector<22x128xf32> to vector<4x128xf32>
    %c0_255 = arith.constant 0 : index
    %c12_256 = arith.constant 12 : index
    %c0_257 = arith.constant 0 : index
    %331 = vector.load %arg10[%c0_255, %c12_256, %c0_257] : memref<1x16x128xf32, #tpu.memory_space<vmem>>, vector<1x4x128xf32>
    %332 = vector.shape_cast %331 : vector<1x4x128xf32> to vector<4x128xf32>
    %333 = vector.shape_cast %330 : vector<4x128xf32> to vector<1x4x128xf32>
    tpu.vector_store %arg10[%c0_255, %c12_256, %c0_257], %333 {strides = array<i32>} : memref<1x16x128xf32, #tpu.memory_space<vmem>>, vector<1x4x128xf32>,
    return
  }
  func.func @transform_0(%arg0: i32) -> (i32, i32, i32) {
    %c0_i32 = arith.constant 0 : i32
    %c0_i32_0 = arith.constant 0 : i32
    %c0_i32_1 = arith.constant 0 : i32
    return %arg0, %c0_i32, %c0_i32_0 : i32, i32, i32
  }
  func.func @transform_1(%arg0: i32) -> (i32, i32) {
    %c0_i32 = arith.constant 0 : i32
    %c0_i32_0 = arith.constant 0 : i32
    %c0_i32_1 = arith.constant 0 : i32
    return %c0_i32, %c0_i32_0 : i32, i32
  }
  func.func @transform_2(%arg0: i32) -> (i32, i32) {
    %c0_i32 = arith.constant 0 : i32
    %c0_i32_0 = arith.constant 0 : i32
    %c0_i32_1 = arith.constant 0 : i32
    return %c0_i32, %c0_i32_0 : i32, i32
  }
  func.func @transform_3(%arg0: i32) -> (i32, i32, i32) {
    %c0_i32 = arith.constant 0 : i32
    %c0_i32_0 = arith.constant 0 : i32
    %c0_i32_1 = arith.constant 0 : i32
    %c0_i32_2 = arith.constant 0 : i32
    return %c0_i32, %c0_i32_0, %c0_i32_1 : i32, i32, i32
  }
  func.func @transform_4(%arg0: i32) -> (i32, i32) {
    %c0_i32 = arith.constant 0 : i32
    %c0_i32_0 = arith.constant 0 : i32
    %c0_i32_1 = arith.constant 0 : i32
    return %c0_i32, %c0_i32_0 : i32, i32
  }
  func.func @transform_5(%arg0: i32) -> (i32, i32, i32) {
    %c0_i32 = arith.constant 0 : i32
    %c0_i32_0 = arith.constant 0 : i32
    %c0_i32_1 = arith.constant 0 : i32
    %c0_i32_2 = arith.constant 0 : i32
    return %c0_i32, %c0_i32_0, %c0_i32_1 : i32, i32, i32
  }
  func.func @transform_6(%arg0: i32) -> (i32, i32) {
    %c0_i32 = arith.constant 0 : i32
    %c0_i32_0 = arith.constant 0 : i32
    %c0_i32_1 = arith.constant 0 : i32
    return %c0_i32, %c0_i32_0 : i32, i32
  }
  func.func @transform_7(%arg0: i32) -> (i32, i32, i32) {
    %c0_i32 = arith.constant 0 : i32
    %c0_i32_0 = arith.constant 0 : i32
    %c0_i32_1 = arith.constant 0 : i32
    %c0_i32_2 = arith.constant 0 : i32
    return %c0_i32, %c0_i32_0, %c0_i32_1 : i32, i32, i32
  }
  func.func @transform_8(%arg0: i32) -> (i32, i32) {
    %c0_i32 = arith.constant 0 : i32
    %c0_i32_0 = arith.constant 0 : i32
    %c0_i32_1 = arith.constant 0 : i32
    return %c0_i32, %c0_i32_0 : i32, i32
  }
  func.func @transform_9(%arg0: i32) -> (i32, i32, i32) {
    %c0_i32 = arith.constant 0 : i32
    %c0_i32_0 = arith.constant 0 : i32
    %c0_i32_1 = arith.constant 0 : i32
    return %arg0, %c0_i32, %c0_i32_0 : i32, i32, i32
  }
}

</mosaic_0001>

<llo_original>
// kernel: encoder_forward.1
$region0: #{encoder_forward.1}
  #allocation0 [shape = 'u32[]', space=smem, size = 0x4, offset = 0x4, fixed_abs, tag = 'smem constant byte address 0x4 - core index']
  #allocation1 [shape = 'u32[144,128]{1,0:T(1,128)}', space=vmem, size = 0x12000, scoped, tag = 'internal scratch']
  #allocation2 [shape = 'f32[324,32]{1,0:T(8,128)}', space=vmem, size = 0x29000, scoped, tag = 'scratch operand']
  #allocation3 [shape = 'f32[100,64]{1,0:T(8,128)}', space=vmem, size = 0xd000, scoped, tag = 'scratch operand']
  #allocation4 [shape = 'f32[36,64]{1,0:T(8,128)}', space=vmem, size = 0x5000, scoped, tag = 'scratch operand']
  %s0 = inlined_call_operand.vmem [shape: f32[2,324,1], index: 0, kind: input, shape index: {}]
  %s1 = inlined_call_operand.vmem [shape: f32[9,32], index: 1, kind: input, shape index: {}]
  %s2 = inlined_call_operand.vmem [shape: f32[1,32], index: 2, kind: input, shape index: {}]
  %s3 = inlined_call_operand.vmem [shape: bf16[9,32,64], index: 3, kind: input, shape index: {}]
  %s4 = inlined_call_operand.vmem [shape: f32[1,64], index: 4, kind: input, shape index: {}]
  %s5 = inlined_call_operand.vmem [shape: bf16[9,64,64], index: 5, kind: input, shape index: {}]
  %s6 = inlined_call_operand.vmem [shape: f32[1,64], index: 6, kind: input, shape index: {}]
  %s7 = inlined_call_operand.vmem [shape: bf16[9,64,128], index: 7, kind: input, shape index: {}]
  %s8 = inlined_call_operand.vmem [shape: f32[1,128], index: 8, kind: input, shape index: {}]
  %s9 = inlined_call_operand.vmem [shape: f32[2,16,128], index: 9, kind: output, shape index: {}]
  %s10 = sld [smem:[#allocation0]]
  $region69: #{encoder_forward.1} parent=0
    _
  %s12 = ssub.s32 1, %s10
  %s13 = scalar_select 0, %s12, %s10
  loop: start=0, step=1, limit=4
  $region2: #{encoder_forward.1} parent=0 // loop_pre_header
    _
  $region3: #{encoder_forward.1} parent=0 // loop_header
    %s15 = sphi 0, %s19
    %p16 = scmp.ge.s32.totalorder %s15, 4
    %s25 = sphi 0, %s27
    %s28 = sphi 0, %s25
    %s29 = sphi 0, %s28
    %s45 = sphi 0, %s29
    %s49 = sphi 0, %s49
    %s51 = sphi 0, %s49
    %s52 = sphi 0, %s51
    %s66 = sphi 0, %s52
    %s70 = sphi 0, %s70
    %s72 = sphi 0, %s70
    %s73 = sphi 0, %s72
    %s87 = sphi 0, %s73
    %s91 = sphi 0, %s91
    %s93 = sphi 0, %s91
    %s94 = sphi 0, %s93
    %s108 = sphi 0, %s94
    %s112 = sphi 0, %s112
    %s114 = sphi 0, %s112
    %s115 = sphi 0, %s114
    %s129 = sphi 0, %s115
    %s133 = sphi 0, %s133
    %s135 = sphi 0, %s133
    %s136 = sphi 0, %s135
    %s150 = sphi 0, %s136
    %s154 = sphi 0, %s154
    %s156 = sphi 0, %s154
    %s157 = sphi 0, %s156
    %s171 = sphi 0, %s157
    %s175 = sphi 0, %s175
    %s177 = sphi 0, %s175
    %s178 = sphi 0, %s177
    %s192 = sphi 0, %s178
    %s196 = sphi 0, %s196
    %s198 = sphi 0, %s196
    %s199 = sphi 0, %s198
    %s213 = sphi 0, %s199
    %s219 = sphi 0, %s221
    %s222 = sphi 0, %s219
    %s223 = sphi 0, %s222
    %s239 = sphi 0, %s223
  $region4: #{encoder_forward.1} parent=0 // loop_header_branch
    %18 = sbr.rel (%p16) target = $region8
  $region5: #{encoder_forward.1} parent=0 // loop_body
    %s20 = ssub.s32 %s15, 1
    %s21 = ssub.s32 %s15, 2
    %s22 = sadd.s32 %s15, 1
    %s23 = ssub.s32 %s15, %s22
    %p24 = scmp.eq.s32.totalorder %s23, 0
    %s26 = sadd.s32 %s25, 1
    %s27 = scalar_select %p24, %s25, %s26
    %p30 = pneg %p24
    %p31 = scmp.eq.s32.totalorder %s15, 1
    %p32 = por %p30, %p31
    %p33 = scmp.ne.s32.totalorder %s25, %s28
    %p34 = scmp.eq.s32.totalorder %s15, 0
    %p35 = por %p33, %p34
    %p36 = scmp.ne.s32.totalorder %s25, %s28
    %p37 = scmp.eq.s32.totalorder %s20, 1
    %p38 = por %p36, %p37
    %p39 = scmp.ne.s32.totalorder %s28, %s29
    %p40 = scmp.eq.s32.totalorder %s20, 0
    %p41 = por %p39, %p40
    %p42 = scmp.ne.s32.totalorder %s28, %s29
    %p43 = scmp.eq.s32.totalorder %s21, 1
    %p44 = por %p42, %p43
    %p46 = scmp.ne.s32.totalorder %s29, %s45
    %p47 = scmp.eq.s32.totalorder %s21, 0
    %p48 = por %p46, %p47
    %s50 = sadd.s32 %s49, 1
    %p53 = scmp.eq.s32.totalorder %s15, 1
    %p54 = scmp.ne.s32.totalorder %s49, %s51
    %p55 = scmp.eq.s32.totalorder %s15, 0
    %p56 = por %p54, %p55
    %p57 = scmp.ne.s32.totalorder %s49, %s51
    %p58 = scmp.eq.s32.totalorder %s20, 1
    %p59 = por %p57, %p58
    %p60 = scmp.ne.s32.totalorder %s51, %s52
    %p61 = scmp.eq.s32.totalorder %s20, 0
    %p62 = por %p60, %p61
    %p63 = scmp.ne.s32.totalorder %s51, %s52
    %p64 = scmp.eq.s32.totalorder %s21, 1
    %p65 = por %p63, %p64
    %p67 = scmp.ne.s32.totalorder %s52, %s66
    %p68 = scmp.eq.s32.totalorder %s21, 0
    %p69 = por %p67, %p68
    %s71 = sadd.s32 %s70, 1
    %p74 = scmp.eq.s32.totalorder %s15, 1
    %p75 = scmp.ne.s32.totalorder %s70, %s72
    %p76 = scmp.eq.s32.totalorder %s15, 0
    %p77 = por %p75, %p76
    %p78 = scmp.ne.s32.totalorder %s70, %s72
    %p79 = scmp.eq.s32.totalorder %s20, 1
    %p80 = por %p78, %p79
    %p81 = scmp.ne.s32.totalorder %s72, %s73
    %p82 = scmp.eq.s32.totalorder %s20, 0
    %p83 = por %p81, %p82
    %p84 = scmp.ne.s32.totalorder %s72, %s73
    %p85 = scmp.eq.s32.totalorder %s21, 1
    %p86 = por %p84, %p85
    %p88 = scmp.ne.s32.totalorder %s73, %s87
    %p89 = scmp.eq.s32.totalorder %s21, 0
    %p90 = por %p88, %p89
    %s92 = sadd.s32 %s91, 1
    %p95 = scmp.eq.s32.totalorder %s15, 1
    %p96 = scmp.ne.s32.totalorder %s91, %s93
    %p97 = scmp.eq.s32.totalorder %s15, 0
    %p98 = por %p96, %p97
    %p99 = scmp.ne.s32.totalorder %s91, %s93
    %p100 = scmp.eq.s32.totalorder %s20, 1
    %p101 = por %p99, %p100
    %p102 = scmp.ne.s32.totalorder %s93, %s94
    %p103 = scmp.eq.s32.totalorder %s20, 0
    %p104 = por %p102, %p103
    %p105 = scmp.ne.s32.totalorder %s93, %s94
    %p106 = scmp.eq.s32.totalorder %s21, 1
    %p107 = por %p105, %p106
    %p109 = scmp.ne.s32.totalorder %s94, %s108
    %p110 = scmp.eq.s32.totalorder %s21, 0
    %p111 = por %p109, %p110
    %s113 = sadd.s32 %s112, 1
    %p116 = scmp.eq.s32.totalorder %s15, 1
    %p117 = scmp.ne.s32.totalorder %s112, %s114
    %p118 = scmp.eq.s32.totalorder %s15, 0
    %p119 = por %p117, %p118
    %p120 = scmp.ne.s32.totalorder %s112, %s114
    %p121 = scmp.eq.s32.totalorder %s20, 1
    %p122 = por %p120, %p121
    %p123 = scmp.ne.s32.totalorder %s114, %s115
    %p124 = scmp.eq.s32.totalorder %s20, 0
    %p125 = por %p123, %p124
    %p126 = scmp.ne.s32.totalorder %s114, %s115
    %p127 = scmp.eq.s32.totalorder %s21, 1
    %p128 = por %p126, %p127
    %p130 = scmp.ne.s32.totalorder %s115, %s129
    %p131 = scmp.eq.s32.totalorder %s21, 0
    %p132 = por %p130, %p131
    %s134 = sadd.s32 %s133, 1
    %p137 = scmp.eq.s32.totalorder %s15, 1
    %p138 = scmp.ne.s32.totalorder %s133, %s135
    %p139 = scmp.eq.s32.totalorder %s15, 0
    %p140 = por %p138, %p139
    %p141 = scmp.ne.s32.totalorder %s133, %s135
    %p142 = scmp.eq.s32.totalorder %s20, 1
    %p143 = por %p141, %p142
    %p144 = scmp.ne.s32.totalorder %s135, %s136
    %p145 = scmp.eq.s32.totalorder %s20, 0
    %p146 = por %p144, %p145
    %p147 = scmp.ne.s32.totalorder %s135, %s136
    %p148 = scmp.eq.s32.totalorder %s21, 1
    %p149 = por %p147, %p148
    %p151 = scmp.ne.s32.totalorder %s136, %s150
    %p152 = scmp.eq.s32.totalorder %s21, 0
    %p153 = por %p151, %p152
    %s155 = sadd.s32 %s154, 1
    %p158 = scmp.eq.s32.totalorder %s15, 1
    %p159 = scmp.ne.s32.totalorder %s154, %s156
    %p160 = scmp.eq.s32.totalorder %s15, 0
    %p161 = por %p159, %p160
    %p162 = scmp.ne.s32.totalorder %s154, %s156
    %p163 = scmp.eq.s32.totalorder %s20, 1
    %p164 = por %p162, %p163
    %p165 = scmp.ne.s32.totalorder %s156, %s157
    %p166 = scmp.eq.s32.totalorder %s20, 0
    %p167 = por %p165, %p166
    %p168 = scmp.ne.s32.totalorder %s156, %s157
    %p169 = scmp.eq.s32.totalorder %s21, 1
    %p170 = por %p168, %p169
    %p172 = scmp.ne.s32.totalorder %s157, %s171
    %p173 = scmp.eq.s32.totalorder %s21, 0
    %p174 = por %p172, %p173
    %s176 = sadd.s32 %s175, 1
    %p179 = scmp.eq.s32.totalorder %s15, 1
    %p180 = scmp.ne.s32.totalorder %s175, %s177
    %p181 = scmp.eq.s32.totalorder %s15, 0
    %p182 = por %p180, %p181
    %p183 = scmp.ne.s32.totalorder %s175, %s177
    %p184 = scmp.eq.s32.totalorder %s20, 1
    %p185 = por %p183, %p184
    %p186 = scmp.ne.s32.totalorder %s177, %s178
    %p187 = scmp.eq.s32.totalorder %s20, 0
    %p188 = por %p186, %p187
    %p189 = scmp.ne.s32.totalorder %s177, %s178
    %p190 = scmp.eq.s32.totalorder %s21, 1
    %p191 = por %p189, %p190
    %p193 = scmp.ne.s32.totalorder %s178, %s192
    %p194 = scmp.eq.s32.totalorder %s21, 0
    %p195 = por %p193, %p194
    %s197 = sadd.s32 %s196, 1
    %p200 = scmp.eq.s32.totalorder %s15, 1
    %p201 = scmp.ne.s32.totalorder %s196, %s198
    %p202 = scmp.eq.s32.totalorder %s15, 0
    %p203 = por %p201, %p202
    %p204 = scmp.ne.s32.totalorder %s196, %s198
    %p205 = scmp.eq.s32.totalorder %s20, 1
    %p206 = por %p204, %p205
    %p207 = scmp.ne.s32.totalorder %s198, %s199
    %p208 = scmp.eq.s32.totalorder %s20, 0
    %p209 = por %p207, %p208
    %p210 = scmp.ne.s32.totalorder %s198, %s199
    %p211 = scmp.eq.s32.totalorder %s21, 1
    %p212 = por %p210, %p211
    %p214 = scmp.ne.s32.totalorder %s199, %s213
    %p215 = scmp.eq.s32.totalorder %s21, 0
    %p216 = por %p214, %p215
    %s217 = ssub.s32 %s15, %s22
    %p218 = scmp.eq.s32.totalorder %s217, 0
    %s220 = sadd.s32 %s219, 1
    %s221 = scalar_select %p218, %s219, %s220
    %p224 = pneg %p218
    %p225 = scmp.eq.s32.totalorder %s15, 1
    %p226 = por %p224, %p225
    %p227 = scmp.ne.s32.totalorder %s219, %s222
    %p228 = scmp.eq.s32.totalorder %s15, 0
    %p229 = por %p227, %p228
    %p230 = scmp.ne.s32.totalorder %s219, %s222
    %p231 = scmp.eq.s32.totalorder %s20, 1
    %p232 = por %p230, %p231
    %p233 = scmp.ne.s32.totalorder %s222, %s223
    %p234 = scmp.eq.s32.totalorder %s20, 0
    %p235 = por %p233, %p234
    %p236 = scmp.ne.s32.totalorder %s222, %s223
    %p237 = scmp.eq.s32.totalorder %s21, 1
    %p238 = por %p236, %p237
    %p240 = scmp.ne.s32.totalorder %s223, %s239
    %p241 = scmp.eq.s32.totalorder %s21, 0
    %p242 = por %p240, %p241
    %p243 = scmp.le.s32.totalorder 1, %s15
    %p244 = scmp.lt.s32.totalorder %s15, 3
    %p245 = pnand %p243, %p244
    %p246 = pneg %p245
    // Predicated region
    $region9: #{encoder_forward.1} parent=5 // pred_check
      _
    $region10: #{encoder_forward.1} parent=5 // pred_check_branch
      %248 = sbr.rel (%p245) target = $region12
    $region11: #{encoder_forward.1} parent=5 // pred_region
      %s249 = ssub.s32 %s15, 1
      // Predicated region
      $region13: #{encoder_forward.1} parent=11 // pred_check
        %p250 = pneg %p62
      $region14: #{encoder_forward.1} parent=11 // pred_check_branch
        %252 = sbr.rel (%p250) target = $region16
      $region15: #{encoder_forward.1} parent=11 // pred_region
        _
      $region16: #{encoder_forward.1} parent=11 // pred_fallthru
        _
      // Predicated region
      $region17: #{encoder_forward.1} parent=11 // pred_check
        %p253 = pneg %p83
      $region18: #{encoder_forward.1} parent=11 // pred_check_branch
        %255 = sbr.rel (%p253) target = $region20
      $region19: #{encoder_forward.1} parent=11 // pred_region
        _
      $region20: #{encoder_forward.1} parent=11 // pred_fallthru
        _
      // Predicated region
      $region21: #{encoder_forward.1} parent=11 // pred_check
        %p256 = pneg %p104
      $region22: #{encoder_forward.1} parent=11 // pred_check_branch
        %258 = sbr.rel (%p256) target = $region24
      $region23: #{encoder_forward.1} parent=11 // pred_region
        _
      $region24: #{encoder_forward.1} parent=11 // pred_fallthru
        _
      // Predicated region
      $region25: #{encoder_forward.1} parent=11 // pred_check
        %p259 = pneg %p125
      $region26: #{encoder_forward.1} parent=11 // pred_check_branch
        %261 = sbr.rel (%p259) target = $region28
      $region27: #{encoder_forward.1} parent=11 // pred_region
        _
      $region28: #{encoder_forward.1} parent=11 // pred_fallthru
        _
      // Predicated region
      $region29: #{encoder_forward.1} parent=11 // pred_check
        %p262 = pneg %p146
      $region30: #{encoder_forward.1} parent=11 // pred_check_branch
        %264 = sbr.rel (%p262) target = $region32
      $region31: #{encoder_forward.1} parent=11 // pred_region
        _
      $region32: #{encoder_forward.1} parent=11 // pred_fallthru
        _
      // Predicated region
      $region33: #{encoder_forward.1} parent=11 // pred_check
        %p265 = pneg %p167
      $region34: #{encoder_forward.1} parent=11 // pred_check_branch
        %267 = sbr.rel (%p265) target = $region36
      $region35: #{encoder_forward.1} parent=11 // pred_region
        _
      $region36: #{encoder_forward.1} parent=11 // pred_fallthru
        _
      // Predicated region
      $region37: #{encoder_forward.1} parent=11 // pred_check
        %p268 = pneg %p188
      $region38: #{encoder_forward.1} parent=11 // pred_check_branch
        %270 = sbr.rel (%p268) target = $region40
      $region39: #{encoder_forward.1} parent=11 // pred_region
        _
      $region40: #{encoder_forward.1} parent=11 // pred_fallthru
        _
      // Predicated region
      $region41: #{encoder_forward.1} parent=11 // pred_check
        %p271 = pneg %p209
      $region42: #{encoder_forward.1} parent=11 // pred_check_branch
        %273 = sbr.rel (%p271) target = $region44
      $region43: #{encoder_forward.1} parent=11 // pred_region
        _
      $region44: #{encoder_forward.1} parent=11 // pred_fallthru
        _
    $region12: #{encoder_forward.1} parent=5 // pred_fallthru
      _
    %p274 = scmp.lt.s32.totalorder %s15, 2
    // Predicated region
    $region45: #{encoder_forward.1} parent=5 // pred_check
      %p275 = pneg %p274
    $region46: #{encoder_forward.1} parent=5 // pred_check_branch
      %277 = sbr.rel (%p275) target = $region48
    $region47: #{encoder_forward.1} parent=5 // pred_region
      // Predicated region
      $region49: #{encoder_forward.1} parent=47 // pred_check
        %p278 = pneg %p35
      $region50: #{encoder_forward.1} parent=47 // pred_check_branch
        %280 = sbr.rel (%p278) target = $region52
      $region51: #{encoder_forward.1} parent=47 // pred_region
        %p281 = scmp.lt.s32.totalorder %s15, 1
        %s282 = scalar_select %p281, %s15, 1
        %s283 = smul.addr %s282, 41
        %s284 = smul.addr %s283, 8
        %s285 = scalar_lea.vmem %s0, %s284
      $region52: #{encoder_forward.1} parent=47 // pred_fallthru
        _
    $region48: #{encoder_forward.1} parent=5 // pred_fallthru
      _
    %p286 = scmp.le.s32.totalorder 1, %s15
    %p287 = scmp.lt.s32.totalorder %s15, 3
    %p288 = pnand %p286, %p287
    %p289 = pneg %p288
    // Predicated region
    $region53: #{encoder_forward.1} parent=5 // pred_check
      _
    $region54: #{encoder_forward.1} parent=5 // pred_check_branch
      %291 = sbr.rel (%p288) target = $region56
    $region55: #{encoder_forward.1} parent=5 // pred_region
      %s292 = ssub.s32 %s15, 1
      %p293 = scmp.lt.s32.totalorder %s20, 1
      %s294 = scalar_select %p293, %s20, 1
      %s295 = smul.addr %s294, 41
      %s296 = smul.addr %s295, 8
      %s297 = scalar_lea.vmem %s0, %s296
      %p298 = pneg %p41
      %p299 = pneg %p38
      %p300 = pneg %p62
      %p301 = pneg %p59
      %p302 = pneg %p83
      %p303 = pneg %p80
      %p304 = pneg %p104
      %p305 = pneg %p101
      %p306 = pneg %p125
      %p307 = pneg %p122
      %p308 = pneg %p146
      %p309 = pneg %p143
      %p310 = pneg %p167
      %p311 = pneg %p164
      %p312 = pneg %p188
      %p313 = pneg %p185
      %p314 = pneg %p209
      %p315 = pneg %p206
      %p316 = pneg %p235
      %p317 = pneg %p232
      %p318 = scmp.lt.s32.totalorder %s20, 1
      %s319 = scalar_select %p318, %s20, 1
      %s320 = smul.addr %s319, 2
      %s321 = smul.addr %s320, 8
      %s322 = scalar_lea.vmem %s9, %s321
      %p323 = scmp.lt.s32.totalorder %s20, 1
      %s324 = scalar_select %p323, %s20, 1
      %s325 = smul.addr %s324, 41
      %s326 = smul.addr %s325, 8
      %s327 = scalar_lea.vmem %s0, %s326
      %p328 = scmp.lt.s32.totalorder %s20, 1
      %s329 = scalar_select %p328, %s20, 1
      %s330 = smul.addr %s329, 2
      %s331 = smul.addr %s330, 8
      %s332 = scalar_lea.vmem %s9, %s331
      %vm334 = vcmask 261120
      %335 = vst.msk [vmem:[#allocation2] sm:$0xff] %vm334, 0.0
      %336 = vst.msk [vmem:[#allocation2 + $0x8] sm:$0xff] %vm334, 0.0
      %337 = vst.msk [vmem:[#allocation2 + $0x10] sm:$0xff] %vm334, 0.0
      %338 = vst.msk [vmem:[#allocation2 + $0x18] sm:$0xff] %vm334, 0.0
      %339 = vst.msk [vmem:[#allocation2 + $0x20] sm:$0xff] %vm334, 0.0
      %340 = vst.msk [vmem:[#allocation2 + $0x28] sm:$0xff] %vm334, 0.0
      %341 = vst.msk [vmem:[#allocation2 + $0x30] sm:$0xff] %vm334, 0.0
      %342 = vst.msk [vmem:[#allocation2 + $0x38] sm:$0xff] %vm334, 0.0
      %343 = vst.msk [vmem:[#allocation2 + $0x40] sm:$0xff] %vm334, 0.0
      %344 = vst.msk [vmem:[#allocation2 + $0x48] sm:$0xff] %vm334, 0.0
      %345 = vst.msk [vmem:[#allocation2 + $0x50] sm:$0xff] %vm334, 0.0
      %346 = vst.msk [vmem:[#allocation2 + $0x58] sm:$0xff] %vm334, 0.0
      %347 = vst.msk [vmem:[#allocation2 + $0x60] sm:$0xff] %vm334, 0.0
      %348 = vst.msk [vmem:[#allocation2 + $0x68] sm:$0xff] %vm334, 0.0
      %349 = vst.msk [vmem:[#allocation2 + $0x70] sm:$0xff] %vm334, 0.0
      %350 = vst.msk [vmem:[#allocation2 + $0x78] sm:$0xff] %vm334, 0.0
      %351 = vst.msk [vmem:[#allocation2 + $0x80] sm:$0xff] %vm334, 0.0
      %352 = vst.msk [vmem:[#allocation2 + $0x88] sm:$0xff] %vm334, 0.0
      %353 = vst.msk [vmem:[#allocation2 + $0x90] sm:$0xff] %vm334, 0.0
      %354 = vst.msk [vmem:[#allocation2 + $0x98] sm:$0xff] %vm334, 0.0
      %355 = vst.msk [vmem:[#allocation2 + $0xa0] sm:$0xff] %vm334, 0.0
      %356 = vst.msk [vmem:[#allocation2 + $0xa8] sm:$0xff] %vm334, 0.0
      %357 = vst.msk [vmem:[#allocation2 + $0xb0] sm:$0xff] %vm334, 0.0
      %358 = vst.msk [vmem:[#allocation2 + $0xb8] sm:$0xff] %vm334, 0.0
      %359 = vst.msk [vmem:[#allocation2 + $0xc0] sm:$0xff] %vm334, 0.0
      %360 = vst.msk [vmem:[#allocation2 + $0xc8] sm:$0xff] %vm334, 0.0
      %361 = vst.msk [vmem:[#allocation2 + $0xd0] sm:$0xff] %vm334, 0.0
      %362 = vst.msk [vmem:[#allocation2 + $0xd8] sm:$0xff] %vm334, 0.0
      %363 = vst.msk [vmem:[#allocation2 + $0xe0] sm:$0xff] %vm334, 0.0
      %364 = vst.msk [vmem:[#allocation2 + $0xe8] sm:$0xff] %vm334, 0.0
      %365 = vst.msk [vmem:[#allocation2 + $0xf0] sm:$0xff] %vm334, 0.0
      %366 = vst.msk [vmem:[#allocation2 + $0xf8] sm:$0xff] %vm334, 0.0
      %367 = vst.msk [vmem:[#allocation2 + $0x100] sm:$0xff] %vm334, 0.0
      %368 = vst.msk [vmem:[#allocation2 + $0x108] sm:$0xff] %vm334, 0.0
      %369 = vst.msk [vmem:[#allocation2 + $0x110] sm:$0xff] %vm334, 0.0
      %370 = vst.msk [vmem:[#allocation2 + $0x118] sm:$0xff] %vm334, 0.0
      %371 = vst.msk [vmem:[#allocation2 + $0x120] sm:$0xff] %vm334, 0.0
      %372 = vst.msk [vmem:[#allocation2 + $0x128] sm:$0xff] %vm334, 0.0
      %373 = vst.msk [vmem:[#allocation2 + $0x130] sm:$0xff] %vm334, 0.0
      %374 = vst.msk [vmem:[#allocation2 + $0x138] sm:$0xff] %vm334, 0.0
      %vm375 = vcmask 257024
      %376 = vst.msk [vmem:[#allocation2 + $0x140] sm:$0xf] %vm375, 0.0
      %vm377 = vcmask 523264
      %378 = vst.msk [vmem:[#allocation3] sm:$0xff] %vm377, 0.0
      %379 = vst.msk [vmem:[#allocation3 + $0x8] sm:$0xff] %vm377, 0.0
      %380 = vst.msk [vmem:[#allocation3 + $0x10] sm:$0xff] %vm377, 0.0
      %381 = vst.msk [vmem:[#allocation3 + $0x18] sm:$0xff] %vm377, 0.0
      %382 = vst.msk [vmem:[#allocation3 + $0x20] sm:$0xff] %vm377, 0.0
      %383 = vst.msk [vmem:[#allocation3 + $0x28] sm:$0xff] %vm377, 0.0
      %384 = vst.msk [vmem:[#allocation3 + $0x30] sm:$0xff] %vm377, 0.0
      %385 = vst.msk [vmem:[#allocation3 + $0x38] sm:$0xff] %vm377, 0.0
      %386 = vst.msk [vmem:[#allocation3 + $0x40] sm:$0xff] %vm377, 0.0
      %387 = vst.msk [vmem:[#allocation3 + $0x48] sm:$0xff] %vm377, 0.0
      %388 = vst.msk [vmem:[#allocation3 + $0x50] sm:$0xff] %vm377, 0.0
      %389 = vst.msk [vmem:[#allocation3 + $0x58] sm:$0xff] %vm377, 0.0
      %vm390 = vcmask 519168
      %391 = vst.msk [vmem:[#allocation3 + $0x60] sm:$0xf] %vm390, 0.0
      %392 = vst.msk [vmem:[#allocation4] sm:$0xff] %vm377, 0.0
      %393 = vst.msk [vmem:[#allocation4 + $0x8] sm:$0xff] %vm377, 0.0
      %394 = vst.msk [vmem:[#allocation4 + $0x10] sm:$0xff] %vm377, 0.0
      %395 = vst.msk [vmem:[#allocation4 + $0x18] sm:$0xff] %vm377, 0.0
      %396 = vst.msk [vmem:[#allocation4 + $0x20] sm:$0xf] %vm390, 0.0
      %v397 = vld [vmem:[%s327] sm:$0xff]
      %v398 = vld [vmem:[%s327 + $0x8] sm:$0xff]
      %v399 = vld [vmem:[%s327 + $0x10] sm:$0xff]
      %v400 = vld [vmem:[%s327 + $0x18] sm:$0xff]
      %v401 = vld [vmem:[%s327 + $0x20] sm:$0xff]
      %v402 = vld [vmem:[%s327 + $0x28] sm:$0xff]
      %v403 = vld [vmem:[%s327 + $0x30] sm:$0xff]
      %v404 = vld [vmem:[%s327 + $0x38] sm:$0xff]
      %v405 = vld [vmem:[%s327 + $0x40] sm:$0xff]
      %v406 = vld [vmem:[%s327 + $0x48] sm:$0xff]
      %v407 = vld [vmem:[%s327 + $0x50] sm:$0xff]
      %v408 = vld [vmem:[%s327 + $0x58] sm:$0xff]
      %v409 = vld [vmem:[%s327 + $0x60] sm:$0xff]
      %v410 = vld [vmem:[%s327 + $0x68] sm:$0xff]
      %v411 = vld [vmem:[%s327 + $0x70] sm:$0xff]
      %v412 = vld [vmem:[%s327 + $0x78] sm:$0xff]
      %v413 = vld [vmem:[%s327 + $0x80] sm:$0xff]
      %v414 = vld [vmem:[%s327 + $0x88] sm:$0xff]
      %v415 = vld [vmem:[%s327 + $0x90] sm:$0xff]
      %v416 = vld [vmem:[%s327 + $0x98] sm:$0xff]
      %v417 = vld [vmem:[%s327 + $0xa0] sm:$0xff]
      %v418 = vld [vmem:[%s327 + $0xa8] sm:$0xff]
      %v419 = vld [vmem:[%s327 + $0xb0] sm:$0xff]
      %v420 = vld [vmem:[%s327 + $0xb8] sm:$0xff]
      %v421 = vld [vmem:[%s327 + $0xc0] sm:$0xff]
      %v422 = vld [vmem:[%s327 + $0xc8] sm:$0xff]
      %v423 = vld [vmem:[%s327 + $0xd0] sm:$0xff]
      %v424 = vld [vmem:[%s327 + $0xd8] sm:$0xff]
      %v425 = vld [vmem:[%s327 + $0xe0] sm:$0xff]
      %v426 = vld [vmem:[%s327 + $0xe8] sm:$0xff]
      %v427 = vld [vmem:[%s327 + $0xf0] sm:$0xff]
      %v428 = vld [vmem:[%s327 + $0xf8] sm:$0xff]
      %v429 = vld [vmem:[%s327 + $0x100] sm:$0xff]
      %v430 = vld [vmem:[%s327 + $0x108] sm:$0xff]
      %v431 = vld [vmem:[%s327 + $0x110] sm:$0xff]
      %v432 = vld [vmem:[%s327 + $0x118] sm:$0x3f]
      %v433 = vld [vmem:[%s1] sm:$0x1]
      %435 = vset.pattern.permute.xlu0 0
      %436 = vperm.xlu0 %435, %v397
      %v437 = vpop.permute.xlu0 %436
      %440 = vset.pattern.permute.xlu0 0
      %441 = vperm.xlu0 %440, %v398
      %v442 = vpop.permute.xlu0 %441
      %445 = vset.pattern.permute.xlu0 0
      %446 = vperm.xlu0 %445, %v399
      %v447 = vpop.permute.xlu0 %446
      %450 = vset.pattern.permute.xlu0 0
      %451 = vperm.xlu0 %450, %v400
      %v452 = vpop.permute.xlu0 %451
      %455 = vset.pattern.permute.xlu0 0
      %456 = vperm.xlu0 %455, %v401
      %v457 = vpop.permute.xlu0 %456
      %460 = vset.pattern.permute.xlu0 0
      %461 = vperm.xlu0 %460, %v402
      %v462 = vpop.permute.xlu0 %461
      %465 = vset.pattern.permute.xlu0 0
      %466 = vperm.xlu0 %465, %v403
      %v467 = vpop.permute.xlu0 %466
      %470 = vset.pattern.permute.xlu0 0
      %471 = vperm.xlu0 %470, %v404
      %v472 = vpop.permute.xlu0 %471
      %475 = vset.pattern.permute.xlu0 0
      %476 = vperm.xlu0 %475, %v405
      %v477 = vpop.permute.xlu0 %476
      %480 = vset.pattern.permute.xlu0 0
      %481 = vperm.xlu0 %480, %v406
      %v482 = vpop.permute.xlu0 %481
      %485 = vset.pattern.permute.xlu0 0
      %486 = vperm.xlu0 %485, %v407
      %v487 = vpop.permute.xlu0 %486
      %490 = vset.pattern.permute.xlu0 0
      %491 = vperm.xlu0 %490, %v408
      %v492 = vpop.permute.xlu0 %491
      %495 = vset.pattern.permute.xlu0 0
      %496 = vperm.xlu0 %495, %v409
      %v497 = vpop.permute.xlu0 %496
      %500 = vset.pattern.permute.xlu0 0
      %501 = vperm.xlu0 %500, %v410
      %v502 = vpop.permute.xlu0 %501
      %505 = vset.pattern.permute.xlu0 0
      %506 = vperm.xlu0 %505, %v411
      %v507 = vpop.permute.xlu0 %506
      %510 = vset.pattern.permute.xlu0 0
      %511 = vperm.xlu0 %510, %v412
      %v512 = vpop.permute.xlu0 %511
      %515 = vset.pattern.permute.xlu0 0
      %516 = vperm.xlu0 %515, %v413
      %v517 = vpop.permute.xlu0 %516
      %520 = vset.pattern.permute.xlu0 0
      %521 = vperm.xlu0 %520, %v414
      %v522 = vpop.permute.xlu0 %521
      %525 = vset.pattern.permute.xlu0 0
      %526 = vperm.xlu0 %525, %v415
      %v527 = vpop.permute.xlu0 %526
      %530 = vset.pattern.permute.xlu0 0
      %531 = vperm.xlu0 %530, %v416
      %v532 = vpop.permute.xlu0 %531
      %535 = vset.pattern.permute.xlu0 0
      %536 = vperm.xlu0 %535, %v417
      %v537 = vpop.permute.xlu0 %536
      %540 = vset.pattern.permute.xlu0 0
      %541 = vperm.xlu0 %540, %v418
      %v542 = vpop.permute.xlu0 %541
      %545 = vset.pattern.permute.xlu0 0
      %546 = vperm.xlu0 %545, %v419
      %v547 = vpop.permute.xlu0 %546
      %550 = vset.pattern.permute.xlu0 0
      %551 = vperm.xlu0 %550, %v420
      %v552 = vpop.permute.xlu0 %551
      %555 = vset.pattern.permute.xlu0 0
      %556 = vperm.xlu0 %555, %v421
      %v557 = vpop.permute.xlu0 %556
      %560 = vset.pattern.permute.xlu0 0
      %561 = vperm.xlu0 %560, %v422
      %v562 = vpop.permute.xlu0 %561
      %565 = vset.pattern.permute.xlu0 0
      %566 = vperm.xlu0 %565, %v423
      %v567 = vpop.permute.xlu0 %566
      %570 = vset.pattern.permute.xlu0 0
      %571 = vperm.xlu0 %570, %v424
      %v572 = vpop.permute.xlu0 %571
      %575 = vset.pattern.permute.xlu0 0
      %576 = vperm.xlu0 %575, %v425
      %v577 = vpop.permute.xlu0 %576
      %580 = vset.pattern.permute.xlu0 0
      %581 = vperm.xlu0 %580, %v426
      %v582 = vpop.permute.xlu0 %581
      %585 = vset.pattern.permute.xlu0 0
      %586 = vperm.xlu0 %585, %v427
      %v587 = vpop.permute.xlu0 %586
      %590 = vset.pattern.permute.xlu0 0
      %591 = vperm.xlu0 %590, %v428
      %v592 = vpop.permute.xlu0 %591
      %595 = vset.pattern.permute.xlu0 0
      %596 = vperm.xlu0 %595, %v429
      %v597 = vpop.permute.xlu0 %596
      %600 = vset.pattern.permute.xlu0 0
      %601 = vperm.xlu0 %600, %v430
      %v602 = vpop.permute.xlu0 %601
      %605 = vset.pattern.permute.xlu0 0
      %606 = vperm.xlu0 %605, %v431
      %v607 = vpop.permute.xlu0 %606
      %610 = vset.pattern.permute.xlu0 0
      %611 = vperm.xlu0 %610, %v432
      %v612 = vpop.permute.xlu0 %611
      %v614 = vlaneseq
      %v615 = vshrl.u32 %v614, 7
      %v616 = vsub.s32 0, %v615
      %v617 = vrot.slane %v433, %v616
      %v618 = vmul.f32 %v437, %v617
      %v619 = vmul.f32 %v442, %v617
      %v620 = vmul.f32 %v447, %v617
      %v621 = vmul.f32 %v452, %v617
      %v622 = vmul.f32 %v457, %v617
      %v623 = vmul.f32 %v462, %v617
      %v624 = vmul.f32 %v467, %v617
      %v625 = vmul.f32 %v472, %v617
      %v626 = vmul.f32 %v477, %v617
      %v627 = vmul.f32 %v482, %v617
      %v628 = vmul.f32 %v487, %v617
      %v629 = vmul.f32 %v492, %v617
      %v630 = vmul.f32 %v497, %v617
      %v631 = vmul.f32 %v502, %v617
      %v632 = vmul.f32 %v507, %v617
      %v633 = vmul.f32 %v512, %v617
      %v634 = vmul.f32 %v517, %v617
      %v635 = vmul.f32 %v522, %v617
      %v636 = vmul.f32 %v527, %v617
      %v637 = vmul.f32 %v532, %v617
      %v638 = vmul.f32 %v537, %v617
      %v639 = vmul.f32 %v542, %v617
      %v640 = vmul.f32 %v547, %v617
      %v641 = vmul.f32 %v552, %v617
      %v642 = vmul.f32 %v557, %v617
      %v643 = vmul.f32 %v562, %v617
      %v644 = vmul.f32 %v567, %v617
      %v645 = vmul.f32 %v572, %v617
      %v646 = vmul.f32 %v577, %v617
      %v647 = vmul.f32 %v582, %v617
      %v648 = vmul.f32 %v587, %v617
      %v649 = vmul.f32 %v592, %v617
      %v650 = vmul.f32 %v597, %v617
      %v651 = vmul.f32 %v602, %v617
      %v652 = vmul.f32 %v607, %v617
      %v653 = vmul.f32 %v612, %v617
      %v654 = vadd.f32 %v618, 0.0
      %v655 = vadd.f32 %v619, 0.0
      %v656 = vadd.f32 %v620, 0.0
      %v657 = vadd.f32 %v621, 0.0
      %v658 = vadd.f32 %v622, 0.0
      %v659 = vadd.f32 %v623, 0.0
      %v660 = vadd.f32 %v624, 0.0
      %v661 = vadd.f32 %v625, 0.0
      %v662 = vadd.f32 %v626, 0.0
      %v663 = vadd.f32 %v627, 0.0
      %v664 = vadd.f32 %v628, 0.0
      %v665 = vadd.f32 %v629, 0.0
      %v666 = vadd.f32 %v630, 0.0
      %v667 = vadd.f32 %v631, 0.0
      %v668 = vadd.f32 %v632, 0.0
      %v669 = vadd.f32 %v633, 0.0
      %v670 = vadd.f32 %v634, 0.0
      %v671 = vadd.f32 %v635, 0.0
      %v672 = vadd.f32 %v636, 0.0
      %v673 = vadd.f32 %v637, 0.0
      %v674 = vadd.f32 %v638, 0.0
      %v675 = vadd.f32 %v639, 0.0
      %v676 = vadd.f32 %v640, 0.0
      %v677 = vadd.f32 %v641, 0.0
      %v678 = vadd.f32 %v642, 0.0
      %v679 = vadd.f32 %v643, 0.0
      %v680 = vadd.f32 %v644, 0.0
      %v681 = vadd.f32 %v645, 0.0
      %v682 = vadd.f32 %v646, 0.0
      %v683 = vadd.f32 %v647, 0.0
      %v684 = vadd.f32 %v648, 0.0
      %v685 = vadd.f32 %v649, 0.0
      %v686 = vadd.f32 %v650, 0.0
      %v687 = vadd.f32 %v651, 0.0
      %v688 = vadd.f32 %v652, 0.0
      %v689 = vadd.f32 %v653, 0.0
      %v690 = vld [vmem:[%s327 + $0x1] sm:$0xff]
      %v691 = vld [vmem:[%s327 + $0x9] sm:$0xff]
      %v692 = vld [vmem:[%s327 + $0x11] sm:$0xff]
      %v693 = vld [vmem:[%s327 + $0x19] sm:$0xff]
      %v694 = vld [vmem:[%s327 + $0x21] sm:$0xff]
      %v695 = vld [vmem:[%s327 + $0x29] sm:$0xff]
      %v696 = vld [vmem:[%s327 + $0x31] sm:$0xff]
      %v697 = vld [vmem:[%s327 + $0x39] sm:$0xff]
      %v698 = vld [vmem:[%s327 + $0x41] sm:$0xff]
      %v699 = vld [vmem:[%s327 + $0x49] sm:$0xff]
      %v700 = vld [vmem:[%s327 + $0x51] sm:$0xff]
      %v701 = vld [vmem:[%s327 + $0x59] sm:$0xff]
      %v702 = vld [vmem:[%s327 + $0x61] sm:$0xff]
      %v703 = vld [vmem:[%s327 + $0x69] sm:$0xff]
      %v704 = vld [vmem:[%s327 + $0x71] sm:$0xff]
      %v705 = vld [vmem:[%s327 + $0x79] sm:$0xff]
      %v706 = vld [vmem:[%s327 + $0x81] sm:$0xff]
      %v707 = vld [vmem:[%s327 + $0x89] sm:$0xff]
      %v708 = vld [vmem:[%s327 + $0x91] sm:$0xff]
      %v709 = vld [vmem:[%s327 + $0x99] sm:$0xff]
      %v710 = vld [vmem:[%s327 + $0xa1] sm:$0xff]
      %v711 = vld [vmem:[%s327 + $0xa9] sm:$0xff]
      %v712 = vld [vmem:[%s327 + $0xb1] sm:$0xff]
      %v713 = vld [vmem:[%s327 + $0xb9] sm:$0xff]
      %v714 = vld [vmem:[%s327 + $0xc1] sm:$0xff]
      %v715 = vld [vmem:[%s327 + $0xc9] sm:$0xff]
      %v716 = vld [vmem:[%s327 + $0xd1] sm:$0xff]
      %v717 = vld [vmem:[%s327 + $0xd9] sm:$0xff]
      %v718 = vld [vmem:[%s327 + $0xe1] sm:$0xff]
      %v719 = vld [vmem:[%s327 + $0xe9] sm:$0xff]
      %v720 = vld [vmem:[%s327 + $0xf1] sm:$0xff]
      %v721 = vld [vmem:[%s327 + $0xf9] sm:$0xff]
      %v722 = vld [vmem:[%s327 + $0x101] sm:$0xff]
      %v723 = vld [vmem:[%s327 + $0x109] sm:$0xff]
      %v724 = vld [vmem:[%s327 + $0x111] sm:$0xff]
      %v725 = vld [vmem:[%s327 + $0x119] sm:$0x3f]
      %v726 = vld [vmem:[%s1 + $0x1] sm:$0x1]
      %728 = vset.pattern.permute.xlu0 0
      %729 = vperm.xlu0 %728, %v690
      %v730 = vpop.permute.xlu0 %729
      %733 = vset.pattern.permute.xlu0 0
      %734 = vperm.xlu0 %733, %v691
      %v735 = vpop.permute.xlu0 %734
      %738 = vset.pattern.permute.xlu0 0
      %739 = vperm.xlu0 %738, %v692
      %v740 = vpop.permute.xlu0 %739
      %743 = vset.pattern.permute.xlu0 0
      %744 = vperm.xlu0 %743, %v693
      %v745 = vpop.permute.xlu0 %744
      %748 = vset.pattern.permute.xlu0 0
      %749 = vperm.xlu0 %748, %v694
      %v750 = vpop.permute.xlu0 %749
      %753 = vset.pattern.permute.xlu0 0
      %754 = vperm.xlu0 %753, %v695
      %v755 = vpop.permute.xlu0 %754
      %758 = vset.pattern.permute.xlu0 0
      %759 = vperm.xlu0 %758, %v696
      %v760 = vpop.permute.xlu0 %759
      %763 = vset.pattern.permute.xlu0 0
      %764 = vperm.xlu0 %763, %v697
      %v765 = vpop.permute.xlu0 %764
      %768 = vset.pattern.permute.xlu0 0
      %769 = vperm.xlu0 %768, %v698
      %v770 = vpop.permute.xlu0 %769
      %773 = vset.pattern.permute.xlu0 0
      %774 = vperm.xlu0 %773, %v699
      %v775 = vpop.permute.xlu0 %774
      %778 = vset.pattern.permute.xlu0 0
      %779 = vperm.xlu0 %778, %v700
      %v780 = vpop.permute.xlu0 %779
      %783 = vset.pattern.permute.xlu0 0
      %784 = vperm.xlu0 %783, %v701
      %v785 = vpop.permute.xlu0 %784
      %788 = vset.pattern.permute.xlu0 0
      %789 = vperm.xlu0 %788, %v702
      %v790 = vpop.permute.xlu0 %789
      %793 = vset.pattern.permute.xlu0 0
      %794 = vperm.xlu0 %793, %v703
      %v795 = vpop.permute.xlu0 %794
      %798 = vset.pattern.permute.xlu0 0
      %799 = vperm.xlu0 %798, %v704
      %v800 = vpop.permute.xlu0 %799
      %803 = vset.pattern.permute.xlu0 0
      %804 = vperm.xlu0 %803, %v705
      %v805 = vpop.permute.xlu0 %804
      %808 = vset.pattern.permute.xlu0 0
      %809 = vperm.xlu0 %808, %v706
      %v810 = vpop.permute.xlu0 %809
      %813 = vset.pattern.permute.xlu0 0
      %814 = vperm.xlu0 %813, %v707
      %v815 = vpop.permute.xlu0 %814
      %818 = vset.pattern.permute.xlu0 0
      %819 = vperm.xlu0 %818, %v708
      %v820 = vpop.permute.xlu0 %819
      %823 = vset.pattern.permute.xlu0 0
      %824 = vperm.xlu0 %823, %v709
      %v825 = vpop.permute.xlu0 %824
      %828 = vset.pattern.permute.xlu0 0
      %829 = vperm.xlu0 %828, %v710
      %v830 = vpop.permute.xlu0 %829
      %833 = vset.pattern.permute.xlu0 0
      %834 = vperm.xlu0 %833, %v711
      %v835 = vpop.permute.xlu0 %834
      %838 = vset.pattern.permute.xlu0 0
      %839 = vperm.xlu0 %838, %v712
      %v840 = vpop.permute.xlu0 %839
      %843 = vset.pattern.permute.xlu0 0
      %844 = vperm.xlu0 %843, %v713
      %v845 = vpop.permute.xlu0 %844
      %848 = vset.pattern.permute.xlu0 0
      %849 = vperm.xlu0 %848, %v714
      %v850 = vpop.permute.xlu0 %849
      %853 = vset.pattern.permute.xlu0 0
      %854 = vperm.xlu0 %853, %v715
      %v855 = vpop.permute.xlu0 %854
      %858 = vset.pattern.permute.xlu0 0
      %859 = vperm.xlu0 %858, %v716
      %v860 = vpop.permute.xlu0 %859
      %863 = vset.pattern.permute.xlu0 0
      %864 = vperm.xlu0 %863, %v717
      %v865 = vpop.permute.xlu0 %864
      %868 = vset.pattern.permute.xlu0 0
      %869 = vperm.xlu0 %868, %v718
      %v870 = vpop.permute.xlu0 %869
      %873 = vset.pattern.permute.xlu0 0
      %874 = vperm.xlu0 %873, %v719
      %v875 = vpop.permute.xlu0 %874
      %878 = vset.pattern.permute.xlu0 0
      %879 = vperm.xlu0 %878, %v720
      %v880 = vpop.permute.xlu0 %879
      %883 = vset.pattern.permute.xlu0 0
      %884 = vperm.xlu0 %883, %v721
      %v885 = vpop.permute.xlu0 %884
      %888 = vset.pattern.permute.xlu0 0
      %889 = vperm.xlu0 %888, %v722
      %v890 = vpop.permute.xlu0 %889
      %893 = vset.pattern.permute.xlu0 0
      %894 = vperm.xlu0 %893, %v723
      %v895 = vpop.permute.xlu0 %894
      %898 = vset.pattern.permute.xlu0 0
      %899 = vperm.xlu0 %898, %v724
      %v900 = vpop.permute.xlu0 %899
      %903 = vset.pattern.permute.xlu0 0
      %904 = vperm.xlu0 %903, %v725
      %v905 = vpop.permute.xlu0 %904
      %v907 = vlaneseq
      %v908 = vshrl.u32 %v907, 7
      %v909 = vsub.s32 0, %v908
      %v910 = vrot.slane %v726, %v909
      %v911 = vmul.f32 %v730, %v910
      %v912 = vmul.f32 %v735, %v910
      %v913 = vmul.f32 %v740, %v910
      %v914 = vmul.f32 %v745, %v910
      %v915 = vmul.f32 %v750, %v910
      %v916 = vmul.f32 %v755, %v910
      %v917 = vmul.f32 %v760, %v910
      %v918 = vmul.f32 %v765, %v910
      %v919 = vmul.f32 %v770, %v910
      %v920 = vmul.f32 %v775, %v910
      %v921 = vmul.f32 %v780, %v910
      %v922 = vmul.f32 %v785, %v910
      %v923 = vmul.f32 %v790, %v910
      %v924 = vmul.f32 %v795, %v910
      %v925 = vmul.f32 %v800, %v910
      %v926 = vmul.f32 %v805, %v910
      %v927 = vmul.f32 %v810, %v910
      %v928 = vmul.f32 %v815, %v910
      %v929 = vmul.f32 %v820, %v910
      %v930 = vmul.f32 %v825, %v910
      %v931 = vmul.f32 %v830, %v910
      %v932 = vmul.f32 %v835, %v910
      %v933 = vmul.f32 %v840, %v910
      %v934 = vmul.f32 %v845, %v910
      %v935 = vmul.f32 %v850, %v910
      %v936 = vmul.f32 %v855, %v910
      %v937 = vmul.f32 %v860, %v910
      %v938 = vmul.f32 %v865, %v910
      %v939 = vmul.f32 %v870, %v910
      %v940 = vmul.f32 %v875, %v910
      %v941 = vmul.f32 %v880, %v910
      %v942 = vmul.f32 %v885, %v910
      %v943 = vmul.f32 %v890, %v910
      %v944 = vmul.f32 %v895, %v910
      %v945 = vmul.f32 %v900, %v910
      %v946 = vmul.f32 %v905, %v910
      %v947 = vadd.f32 %v654, %v911
      %v948 = vadd.f32 %v655, %v912
      %v949 = vadd.f32 %v656, %v913
      %v950 = vadd.f32 %v657, %v914
      %v951 = vadd.f32 %v658, %v915
      %v952 = vadd.f32 %v659, %v916
      %v953 = vadd.f32 %v660, %v917
      %v954 = vadd.f32 %v661, %v918
      %v955 = vadd.f32 %v662, %v919
      %v956 = vadd.f32 %v663, %v920
      %v957 = vadd.f32 %v664, %v921
      %v958 = vadd.f32 %v665, %v922
      %v959 = vadd.f32 %v666, %v923
      %v960 = vadd.f32 %v667, %v924
      %v961 = vadd.f32 %v668, %v925
      %v962 = vadd.f32 %v669, %v926
      %v963 = vadd.f32 %v670, %v927
      %v964 = vadd.f32 %v671, %v928
      %v965 = vadd.f32 %v672, %v929
      %v966 = vadd.f32 %v673, %v930
      %v967 = vadd.f32 %v674, %v931
      %v968 = vadd.f32 %v675, %v932
      %v969 = vadd.f32 %v676, %v933
      %v970 = vadd.f32 %v677, %v934
      %v971 = vadd.f32 %v678, %v935
      %v972 = vadd.f32 %v679, %v936
      %v973 = vadd.f32 %v680, %v937
      %v974 = vadd.f32 %v681, %v938
      %v975 = vadd.f32 %v682, %v939
      %v976 = vadd.f32 %v683, %v940
      %v977 = vadd.f32 %v684, %v941
      %v978 = vadd.f32 %v685, %v942
      %v979 = vadd.f32 %v686, %v943
      %v980 = vadd.f32 %v687, %v944
      %v981 = vadd.f32 %v688, %v945
      %v982 = vadd.f32 %v689, %v946
      %v983 = vld [vmem:[%s327 + $0x2] sm:$0xff]
      %v984 = vld [vmem:[%s327 + $0xa] sm:$0xff]
      %v985 = vld [vmem:[%s327 + $0x12] sm:$0xff]
      %v986 = vld [vmem:[%s327 + $0x1a] sm:$0xff]
      %v987 = vld [vmem:[%s327 + $0x22] sm:$0xff]
      %v988 = vld [vmem:[%s327 + $0x2a] sm:$0xff]
      %v989 = vld [vmem:[%s327 + $0x32] sm:$0xff]
      %v990 = vld [vmem:[%s327 + $0x3a] sm:$0xff]
      %v991 = vld [vmem:[%s327 + $0x42] sm:$0xff]
      %v992 = vld [vmem:[%s327 + $0x4a] sm:$0xff]
      %v993 = vld [vmem:[%s327 + $0x52] sm:$0xff]
      %v994 = vld [vmem:[%s327 + $0x5a] sm:$0xff]
      %v995 = vld [vmem:[%s327 + $0x62] sm:$0xff]
      %v996 = vld [vmem:[%s327 + $0x6a] sm:$0xff]
      %v997 = vld [vmem:[%s327 + $0x72] sm:$0xff]
      %v998 = vld [vmem:[%s327 + $0x7a] sm:$0xff]
      %v999 = vld [vmem:[%s327 + $0x82] sm:$0xff]
      %v1000 = vld [vmem:[%s327 + $0x8a] sm:$0xff]
      %v1001 = vld [vmem:[%s327 + $0x92] sm:$0xff]
      %v1002 = vld [vmem:[%s327 + $0x9a] sm:$0xff]
      %v1003 = vld [vmem:[%s327 + $0xa2] sm:$0xff]
      %v1004 = vld [vmem:[%s327 + $0xaa] sm:$0xff]
      %v1005 = vld [vmem:[%s327 + $0xb2] sm:$0xff]
      %v1006 = vld [vmem:[%s327 + $0xba] sm:$0xff]
      %v1007 = vld [vmem:[%s327 + $0xc2] sm:$0xff]
      %v1008 = vld [vmem:[%s327 + $0xca] sm:$0xff]
      %v1009 = vld [vmem:[%s327 + $0xd2] sm:$0xff]
      %v1010 = vld [vmem:[%s327 + $0xda] sm:$0xff]
      %v1011 = vld [vmem:[%s327 + $0xe2] sm:$0xff]
      %v1012 = vld [vmem:[%s327 + $0xea] sm:$0xff]
      %v1013 = vld [vmem:[%s327 + $0xf2] sm:$0xff]
      %v1014 = vld [vmem:[%s327 + $0xfa] sm:$0xff]
      %v1015 = vld [vmem:[%s327 + $0x102] sm:$0xff]
      %v1016 = vld [vmem:[%s327 + $0x10a] sm:$0xff]
      %v1017 = vld [vmem:[%s327 + $0x112] sm:$0xff]
      %v1018 = vld [vmem:[%s327 + $0x11a] sm:$0x3f]
      %v1019 = vld [vmem:[%s1 + $0x2] sm:$0x1]
      %1021 = vset.pattern.permute.xlu0 0
      %1022 = vperm.xlu0 %1021, %v983
      %v1023 = vpop.permute.xlu0 %1022
      %1026 = vset.pattern.permute.xlu0 0
      %1027 = vperm.xlu0 %1026, %v984
      %v1028 = vpop.permute.xlu0 %1027
      %1031 = vset.pattern.permute.xlu0 0
      %1032 = vperm.xlu0 %1031, %v985
      %v1033 = vpop.permute.xlu0 %1032
      %1036 = vset.pattern.permute.xlu0 0
      %1037 = vperm.xlu0 %1036, %v986
      %v1038 = vpop.permute.xlu0 %1037
      %1041 = vset.pattern.permute.xlu0 0
      %1042 = vperm.xlu0 %1041, %v987
      %v1043 = vpop.permute.xlu0 %1042
      %1046 = vset.pattern.permute.xlu0 0
      %1047 = vperm.xlu0 %1046, %v988
      %v1048 = vpop.permute.xlu0 %1047
      %1051 = vset.pattern.permute.xlu0 0
      %1052 = vperm.xlu0 %1051, %v989
      %v1053 = vpop.permute.xlu0 %1052
      %1056 = vset.pattern.permute.xlu0 0
      %1057 = vperm.xlu0 %1056, %v990
      %v1058 = vpop.permute.xlu0 %1057
      %1061 = vset.pattern.permute.xlu0 0
      %1062 = vperm.xlu0 %1061, %v991
      %v1063 = vpop.permute.xlu0 %1062
      %1066 = vset.pattern.permute.xlu0 0
      %1067 = vperm.xlu0 %1066, %v992
      %v1068 = vpop.permute.xlu0 %1067
      %1071 = vset.pattern.permute.xlu0 0
      %1072 = vperm.xlu0 %1071, %v993
      %v1073 = vpop.permute.xlu0 %1072
      %1076 = vset.pattern.permute.xlu0 0
      %1077 = vperm.xlu0 %1076, %v994
      %v1078 = vpop.permute.xlu0 %1077
      %1081 = vset.pattern.permute.xlu0 0
      %1082 = vperm.xlu0 %1081, %v995
      %v1083 = vpop.permute.xlu0 %1082
      %1086 = vset.pattern.permute.xlu0 0
      %1087 = vperm.xlu0 %1086, %v996
      %v1088 = vpop.permute.xlu0 %1087
      %1091 = vset.pattern.permute.xlu0 0
      %1092 = vperm.xlu0 %1091, %v997
      %v1093 = vpop.permute.xlu0 %1092
      %1096 = vset.pattern.permute.xlu0 0
      %1097 = vperm.xlu0 %1096, %v998
      %v1098 = vpop.permute.xlu0 %1097
      %1101 = vset.pattern.permute.xlu0 0
      %1102 = vperm.xlu0 %1101, %v999
      %v1103 = vpop.permute.xlu0 %1102
      %1106 = vset.pattern.permute.xlu0 0
      %1107 = vperm.xlu0 %1106, %v1000
      %v1108 = vpop.permute.xlu0 %1107
      %1111 = vset.pattern.permute.xlu0 0
      %1112 = vperm.xlu0 %1111, %v1001
      %v1113 = vpop.permute.xlu0 %1112
      %1116 = vset.pattern.permute.xlu0 0
      %1117 = vperm.xlu0 %1116, %v1002
      %v1118 = vpop.permute.xlu0 %1117
      %1121 = vset.pattern.permute.xlu0 0
      %1122 = vperm.xlu0 %1121, %v1003
      %v1123 = vpop.permute.xlu0 %1122
      %1126 = vset.pattern.permute.xlu0 0
      %1127 = vperm.xlu0 %1126, %v1004
      %v1128 = vpop.permute.xlu0 %1127
      %1131 = vset.pattern.permute.xlu0 0
      %1132 = vperm.xlu0 %1131, %v1005
      %v1133 = vpop.permute.xlu0 %1132
      %1136 = vset.pattern.permute.xlu0 0
      %1137 = vperm.xlu0 %1136, %v1006
      %v1138 = vpop.permute.xlu0 %1137
      %1141 = vset.pattern.permute.xlu0 0
      %1142 = vperm.xlu0 %1141, %v1007
      %v1143 = vpop.permute.xlu0 %1142
      %1146 = vset.pattern.permute.xlu0 0
      %1147 = vperm.xlu0 %1146, %v1008
      %v1148 = vpop.permute.xlu0 %1147
      %1151 = vset.pattern.permute.xlu0 0
      %1152 = vperm.xlu0 %1151, %v1009
      %v1153 = vpop.permute.xlu0 %1152
      %1156 = vset.pattern.permute.xlu0 0
      %1157 = vperm.xlu0 %1156, %v1010
      %v1158 = vpop.permute.xlu0 %1157
      %1161 = vset.pattern.permute.xlu0 0
      %1162 = vperm.xlu0 %1161, %v1011
      %v1163 = vpop.permute.xlu0 %1162
      %1166 = vset.pattern.permute.xlu0 0
      %1167 = vperm.xlu0 %1166, %v1012
      %v1168 = vpop.permute.xlu0 %1167
      %1171 = vset.pattern.permute.xlu0 0
      %1172 = vperm.xlu0 %1171, %v1013
      %v1173 = vpop.permute.xlu0 %1172
      %1176 = vset.pattern.permute.xlu0 0
      %1177 = vperm.xlu0 %1176, %v1014
      %v1178 = vpop.permute.xlu0 %1177
      %1181 = vset.pattern.permute.xlu0 0
      %1182 = vperm.xlu0 %1181, %v1015
      %v1183 = vpop.permute.xlu0 %1182
      %1186 = vset.pattern.permute.xlu0 0
      %1187 = vperm.xlu0 %1186, %v1016
      %v1188 = vpop.permute.xlu0 %1187
      %1191 = vset.pattern.permute.xlu0 0
      %1192 = vperm.xlu0 %1191, %v1017
      %v1193 = vpop.permute.xlu0 %1192
      %1196 = vset.pattern.permute.xlu0 0
      %1197 = vperm.xlu0 %1196, %v1018
      %v1198 = vpop.permute.xlu0 %1197
      %v1200 = vlaneseq
      %v1201 = vshrl.u32 %v1200, 7
      %v1202 = vsub.s32 0, %v1201
      %v1203 = vrot.slane %v1019, %v1202
      %v1204 = vmul.f32 %v1023, %v1203
      %v1205 = vmul.f32 %v1028, %v1203
      %v1206 = vmul.f32 %v1033, %v1203
      %v1207 = vmul.f32 %v1038, %v1203
      %v1208 = vmul.f32 %v1043, %v1203
      %v1209 = vmul.f32 %v1048, %v1203
      %v1210 = vmul.f32 %v1053, %v1203
      %v1211 = vmul.f32 %v1058, %v1203
      %v1212 = vmul.f32 %v1063, %v1203
      %v1213 = vmul.f32 %v1068, %v1203
      %v1214 = vmul.f32 %v1073, %v1203
      %v1215 = vmul.f32 %v1078, %v1203
      %v1216 = vmul.f32 %v1083, %v1203
      %v1217 = vmul.f32 %v1088, %v1203
      %v1218 = vmul.f32 %v1093, %v1203
      %v1219 = vmul.f32 %v1098, %v1203
      %v1220 = vmul.f32 %v1103, %v1203
      %v1221 = vmul.f32 %v1108, %v1203
      %v1222 = vmul.f32 %v1113, %v1203
      %v1223 = vmul.f32 %v1118, %v1203
      %v1224 = vmul.f32 %v1123, %v1203
      %v1225 = vmul.f32 %v1128, %v1203
      %v1226 = vmul.f32 %v1133, %v1203
      %v1227 = vmul.f32 %v1138, %v1203
      %v1228 = vmul.f32 %v1143, %v1203
      %v1229 = vmul.f32 %v1148, %v1203
      %v1230 = vmul.f32 %v1153, %v1203
      %v1231 = vmul.f32 %v1158, %v1203
      %v1232 = vmul.f32 %v1163, %v1203
      %v1233 = vmul.f32 %v1168, %v1203
      %v1234 = vmul.f32 %v1173, %v1203
      %v1235 = vmul.f32 %v1178, %v1203
      %v1236 = vmul.f32 %v1183, %v1203
      %v1237 = vmul.f32 %v1188, %v1203
      %v1238 = vmul.f32 %v1193, %v1203
      %v1239 = vmul.f32 %v1198, %v1203
      %v1240 = vadd.f32 %v947, %v1204
      %v1241 = vadd.f32 %v948, %v1205
      %v1242 = vadd.f32 %v949, %v1206
      %v1243 = vadd.f32 %v950, %v1207
      %v1244 = vadd.f32 %v951, %v1208
      %v1245 = vadd.f32 %v952, %v1209
      %v1246 = vadd.f32 %v953, %v1210
      %v1247 = vadd.f32 %v954, %v1211
      %v1248 = vadd.f32 %v955, %v1212
      %v1249 = vadd.f32 %v956, %v1213
      %v1250 = vadd.f32 %v957, %v1214
      %v1251 = vadd.f32 %v958, %v1215
      %v1252 = vadd.f32 %v959, %v1216
      %v1253 = vadd.f32 %v960, %v1217
      %v1254 = vadd.f32 %v961, %v1218
      %v1255 = vadd.f32 %v962, %v1219
      %v1256 = vadd.f32 %v963, %v1220
      %v1257 = vadd.f32 %v964, %v1221
      %v1258 = vadd.f32 %v965, %v1222
      %v1259 = vadd.f32 %v966, %v1223
      %v1260 = vadd.f32 %v967, %v1224
      %v1261 = vadd.f32 %v968, %v1225
      %v1262 = vadd.f32 %v969, %v1226
      %v1263 = vadd.f32 %v970, %v1227
      %v1264 = vadd.f32 %v971, %v1228
      %v1265 = vadd.f32 %v972, %v1229
      %v1266 = vadd.f32 %v973, %v1230
      %v1267 = vadd.f32 %v974, %v1231
      %v1268 = vadd.f32 %v975, %v1232
      %v1269 = vadd.f32 %v976, %v1233
      %v1270 = vadd.f32 %v977, %v1234
      %v1271 = vadd.f32 %v978, %v1235
      %v1272 = vadd.f32 %v979, %v1236
      %v1273 = vadd.f32 %v980, %v1237
      %v1274 = vadd.f32 %v981, %v1238
      %v1275 = vadd.f32 %v982, %v1239
      %v1276 = vld [vmem:[%s327 + $0x12] sm:$0xff]
      %v1277 = vld [vmem:[%s327 + $0x1a] sm:$0xff]
      %v1278 = vld [vmem:[%s327 + $0x22] sm:$0xff]
      %v1279 = vld [vmem:[%s327 + $0x2a] sm:$0xff]
      %v1280 = vld [vmem:[%s327 + $0x32] sm:$0xff]
      %v1281 = vld [vmem:[%s327 + $0x3a] sm:$0xff]
      %v1282 = vld [vmem:[%s327 + $0x42] sm:$0xff]
      %v1283 = vld [vmem:[%s327 + $0x4a] sm:$0xff]
      %v1284 = vld [vmem:[%s327 + $0x52] sm:$0xff]
      %v1285 = vld [vmem:[%s327 + $0x5a] sm:$0xff]
      %v1286 = vld [vmem:[%s327 + $0x62] sm:$0xff]
      %v1287 = vld [vmem:[%s327 + $0x6a] sm:$0xff]
      %v1288 = vld [vmem:[%s327 + $0x72] sm:$0xff]
      %v1289 = vld [vmem:[%s327 + $0x7a] sm:$0xff]
      %v1290 = vld [vmem:[%s327 + $0x82] sm:$0xff]
      %v1291 = vld [vmem:[%s327 + $0x8a] sm:$0xff]
      %v1292 = vld [vmem:[%s327 + $0x92] sm:$0xff]
      %v1293 = vld [vmem:[%s327 + $0x9a] sm:$0xff]
      %v1294 = vld [vmem:[%s327 + $0xa2] sm:$0xff]
      %v1295 = vld [vmem:[%s327 + $0xaa] sm:$0xff]
      %v1296 = vld [vmem:[%s327 + $0xb2] sm:$0xff]
      %v1297 = vld [vmem:[%s327 + $0xba] sm:$0xff]
      %v1298 = vld [vmem:[%s327 + $0xc2] sm:$0xff]
      %v1299 = vld [vmem:[%s327 + $0xca] sm:$0xff]
      %v1300 = vld [vmem:[%s327 + $0xd2] sm:$0xff]
      %v1301 = vld [vmem:[%s327 + $0xda] sm:$0xff]
      %v1302 = vld [vmem:[%s327 + $0xe2] sm:$0xff]
      %v1303 = vld [vmem:[%s327 + $0xea] sm:$0xff]
      %v1304 = vld [vmem:[%s327 + $0xf2] sm:$0xff]
      %v1305 = vld [vmem:[%s327 + $0xfa] sm:$0xff]
      %v1306 = vld [vmem:[%s327 + $0x102] sm:$0xff]
      %v1307 = vld [vmem:[%s327 + $0x10a] sm:$0xff]
      %v1308 = vld [vmem:[%s327 + $0x112] sm:$0xff]
      %v1309 = vld [vmem:[%s327 + $0x11a] sm:$0xff]
      %v1310 = vld [vmem:[%s327 + $0x122] sm:$0xff]
      %v1311 = vld [vmem:[%s327 + $0x12a] sm:$0x3f]
      %v1312 = vld [vmem:[%s1 + $0x3] sm:$0x1]
      %1314 = vset.pattern.permute.xlu0 0
      %1315 = vperm.xlu0 %1314, %v1276
      %v1316 = vpop.permute.xlu0 %1315
      %1319 = vset.pattern.permute.xlu0 0
      %1320 = vperm.xlu0 %1319, %v1277
      %v1321 = vpop.permute.xlu0 %1320
      %1324 = vset.pattern.permute.xlu0 0
      %1325 = vperm.xlu0 %1324, %v1278
      %v1326 = vpop.permute.xlu0 %1325
      %1329 = vset.pattern.permute.xlu0 0
      %1330 = vperm.xlu0 %1329, %v1279
      %v1331 = vpop.permute.xlu0 %1330
      %1334 = vset.pattern.permute.xlu0 0
      %1335 = vperm.xlu0 %1334, %v1280
      %v1336 = vpop.permute.xlu0 %1335
      %1339 = vset.pattern.permute.xlu0 0
      %1340 = vperm.xlu0 %1339, %v1281
      %v1341 = vpop.permute.xlu0 %1340
      %1344 = vset.pattern.permute.xlu0 0
      %1345 = vperm.xlu0 %1344, %v1282
      %v1346 = vpop.permute.xlu0 %1345
      %1349 = vset.pattern.permute.xlu0 0
      %1350 = vperm.xlu0 %1349, %v1283
      %v1351 = vpop.permute.xlu0 %1350
      %1354 = vset.pattern.permute.xlu0 0
      %1355 = vperm.xlu0 %1354, %v1284
      %v1356 = vpop.permute.xlu0 %1355
      %1359 = vset.pattern.permute.xlu0 0
      %1360 = vperm.xlu0 %1359, %v1285
      %v1361 = vpop.permute.xlu0 %1360
      %1364 = vset.pattern.permute.xlu0 0
      %1365 = vperm.xlu0 %1364, %v1286
      %v1366 = vpop.permute.xlu0 %1365
      %1369 = vset.pattern.permute.xlu0 0
      %1370 = vperm.xlu0 %1369, %v1287
      %v1371 = vpop.permute.xlu0 %1370
      %1374 = vset.pattern.permute.xlu0 0
      %1375 = vperm.xlu0 %1374, %v1288
      %v1376 = vpop.permute.xlu0 %1375
      %1379 = vset.pattern.permute.xlu0 0
      %1380 = vperm.xlu0 %1379, %v1289
      %v1381 = vpop.permute.xlu0 %1380
      %1384 = vset.pattern.permute.xlu0 0
      %1385 = vperm.xlu0 %1384, %v1290
      %v1386 = vpop.permute.xlu0 %1385
      %1389 = vset.pattern.permute.xlu0 0
      %1390 = vperm.xlu0 %1389, %v1291
      %v1391 = vpop.permute.xlu0 %1390
      %1394 = vset.pattern.permute.xlu0 0
      %1395 = vperm.xlu0 %1394, %v1292
      %v1396 = vpop.permute.xlu0 %1395
      %1399 = vset.pattern.permute.xlu0 0
      %1400 = vperm.xlu0 %1399, %v1293
      %v1401 = vpop.permute.xlu0 %1400
      %1404 = vset.pattern.permute.xlu0 0
      %1405 = vperm.xlu0 %1404, %v1294
      %v1406 = vpop.permute.xlu0 %1405
      %1409 = vset.pattern.permute.xlu0 0
      %1410 = vperm.xlu0 %1409, %v1295
      %v1411 = vpop.permute.xlu0 %1410
      %1414 = vset.pattern.permute.xlu0 0
      %1415 = vperm.xlu0 %1414, %v1296
      %v1416 = vpop.permute.xlu0 %1415
      %1419 = vset.pattern.permute.xlu0 0
      %1420 = vperm.xlu0 %1419, %v1297
      %v1421 = vpop.permute.xlu0 %1420
      %1424 = vset.pattern.permute.xlu0 0
      %1425 = vperm.xlu0 %1424, %v1298
      %v1426 = vpop.permute.xlu0 %1425
      %1429 = vset.pattern.permute.xlu0 0
      %1430 = vperm.xlu0 %1429, %v1299
      %v1431 = vpop.permute.xlu0 %1430
      %1434 = vset.pattern.permute.xlu0 0
      %1435 = vperm.xlu0 %1434, %v1300
      %v1436 = vpop.permute.xlu0 %1435
      %1439 = vset.pattern.permute.xlu0 0
      %1440 = vperm.xlu0 %1439, %v1301
      %v1441 = vpop.permute.xlu0 %1440
      %1444 = vset.pattern.permute.xlu0 0
      %1445 = vperm.xlu0 %1444, %v1302
      %v1446 = vpop.permute.xlu0 %1445
      %1449 = vset.pattern.permute.xlu0 0
      %1450 = vperm.xlu0 %1449, %v1303
      %v1451 = vpop.permute.xlu0 %1450
      %1454 = vset.pattern.permute.xlu0 0
      %1455 = vperm.xlu0 %1454, %v1304
      %v1456 = vpop.permute.xlu0 %1455
      %1459 = vset.pattern.permute.xlu0 0
      %1460 = vperm.xlu0 %1459, %v1305
      %v1461 = vpop.permute.xlu0 %1460
      %1464 = vset.pattern.permute.xlu0 0
      %1465 = vperm.xlu0 %1464, %v1306
      %v1466 = vpop.permute.xlu0 %1465
      %1469 = vset.pattern.permute.xlu0 0
      %1470 = vperm.xlu0 %1469, %v1307
      %v1471 = vpop.permute.xlu0 %1470
      %1474 = vset.pattern.permute.xlu0 0
      %1475 = vperm.xlu0 %1474, %v1308
      %v1476 = vpop.permute.xlu0 %1475
      %1479 = vset.pattern.permute.xlu0 0
      %1480 = vperm.xlu0 %1479, %v1309
      %v1481 = vpop.permute.xlu0 %1480
      %1484 = vset.pattern.permute.xlu0 0
      %1485 = vperm.xlu0 %1484, %v1310
      %v1486 = vpop.permute.xlu0 %1485
      %1489 = vset.pattern.permute.xlu0 0
      %1490 = vperm.xlu0 %1489, %v1311
      %v1491 = vpop.permute.xlu0 %1490
      %v1493 = vlaneseq
      %v1494 = vshrl.u32 %v1493, 7
      %v1495 = vsub.s32 0, %v1494
      %v1496 = vrot.slane %v1312, %v1495
      %v1497 = vmul.f32 %v1316, %v1496
      %v1498 = vmul.f32 %v1321, %v1496
      %v1499 = vmul.f32 %v1326, %v1496
      %v1500 = vmul.f32 %v1331, %v1496
      %v1501 = vmul.f32 %v1336, %v1496
      %v1502 = vmul.f32 %v1341, %v1496
      %v1503 = vmul.f32 %v1346, %v1496
      %v1504 = vmul.f32 %v1351, %v1496
      %v1505 = vmul.f32 %v1356, %v1496
      %v1506 = vmul.f32 %v1361, %v1496
      %v1507 = vmul.f32 %v1366, %v1496
      %v1508 = vmul.f32 %v1371, %v1496
      %v1509 = vmul.f32 %v1376, %v1496
      %v1510 = vmul.f32 %v1381, %v1496
      %v1511 = vmul.f32 %v1386, %v1496
      %v1512 = vmul.f32 %v1391, %v1496
      %v1513 = vmul.f32 %v1396, %v1496
      %v1514 = vmul.f32 %v1401, %v1496
      %v1515 = vmul.f32 %v1406, %v1496
      %v1516 = vmul.f32 %v1411, %v1496
      %v1517 = vmul.f32 %v1416, %v1496
      %v1518 = vmul.f32 %v1421, %v1496
      %v1519 = vmul.f32 %v1426, %v1496
      %v1520 = vmul.f32 %v1431, %v1496
      %v1521 = vmul.f32 %v1436, %v1496
      %v1522 = vmul.f32 %v1441, %v1496
      %v1523 = vmul.f32 %v1446, %v1496
      %v1524 = vmul.f32 %v1451, %v1496
      %v1525 = vmul.f32 %v1456, %v1496
      %v1526 = vmul.f32 %v1461, %v1496
      %v1527 = vmul.f32 %v1466, %v1496
      %v1528 = vmul.f32 %v1471, %v1496
      %v1529 = vmul.f32 %v1476, %v1496
      %v1530 = vmul.f32 %v1481, %v1496
      %v1531 = vmul.f32 %v1486, %v1496
      %v1532 = vmul.f32 %v1491, %v1496
      %v1533 = vadd.f32 %v1240, %v1497
      %v1534 = vadd.f32 %v1241, %v1498
      %v1535 = vadd.f32 %v1242, %v1499
      %v1536 = vadd.f32 %v1243, %v1500
      %v1537 = vadd.f32 %v1244, %v1501
      %v1538 = vadd.f32 %v1245, %v1502
      %v1539 = vadd.f32 %v1246, %v1503
      %v1540 = vadd.f32 %v1247, %v1504
      %v1541 = vadd.f32 %v1248, %v1505
      %v1542 = vadd.f32 %v1249, %v1506
      %v1543 = vadd.f32 %v1250, %v1507
      %v1544 = vadd.f32 %v1251, %v1508
      %v1545 = vadd.f32 %v1252, %v1509
      %v1546 = vadd.f32 %v1253, %v1510
      %v1547 = vadd.f32 %v1254, %v1511
      %v1548 = vadd.f32 %v1255, %v1512
      %v1549 = vadd.f32 %v1256, %v1513
      %v1550 = vadd.f32 %v1257, %v1514
      %v1551 = vadd.f32 %v1258, %v1515
      %v1552 = vadd.f32 %v1259, %v1516
      %v1553 = vadd.f32 %v1260, %v1517
      %v1554 = vadd.f32 %v1261, %v1518
      %v1555 = vadd.f32 %v1262, %v1519
      %v1556 = vadd.f32 %v1263, %v1520
      %v1557 = vadd.f32 %v1264, %v1521
      %v1558 = vadd.f32 %v1265, %v1522
      %v1559 = vadd.f32 %v1266, %v1523
      %v1560 = vadd.f32 %v1267, %v1524
      %v1561 = vadd.f32 %v1268, %v1525
      %v1562 = vadd.f32 %v1269, %v1526
      %v1563 = vadd.f32 %v1270, %v1527
      %v1564 = vadd.f32 %v1271, %v1528
      %v1565 = vadd.f32 %v1272, %v1529
      %v1566 = vadd.f32 %v1273, %v1530
      %v1567 = vadd.f32 %v1274, %v1531
      %v1568 = vadd.f32 %v1275, %v1532
      %v1569 = vld [vmem:[%s327 + $0x13] sm:$0xff]
      %v1570 = vld [vmem:[%s327 + $0x1b] sm:$0xff]
      %v1571 = vld [vmem:[%s327 + $0x23] sm:$0xff]
      %v1572 = vld [vmem:[%s327 + $0x2b] sm:$0xff]
      %v1573 = vld [vmem:[%s327 + $0x33] sm:$0xff]
      %v1574 = vld [vmem:[%s327 + $0x3b] sm:$0xff]
      %v1575 = vld [vmem:[%s327 + $0x43] sm:$0xff]
      %v1576 = vld [vmem:[%s327 + $0x4b] sm:$0xff]
      %v1577 = vld [vmem:[%s327 + $0x53] sm:$0xff]
      %v1578 = vld [vmem:[%s327 + $0x5b] sm:$0xff]
      %v1579 = vld [vmem:[%s327 + $0x63] sm:$0xff]
      %v1580 = vld [vmem:[%s327 + $0x6b] sm:$0xff]
      %v1581 = vld [vmem:[%s327 + $0x73] sm:$0xff]
      %v1582 = vld [vmem:[%s327 + $0x7b] sm:$0xff]
      %v1583 = vld [vmem:[%s327 + $0x83] sm:$0xff]
      %v1584 = vld [vmem:[%s327 + $0x8b] sm:$0xff]
      %v1585 = vld [vmem:[%s327 + $0x93] sm:$0xff]
      %v1586 = vld [vmem:[%s327 + $0x9b] sm:$0xff]
      %v1587 = vld [vmem:[%s327 + $0xa3] sm:$0xff]
      %v1588 = vld [vmem:[%s327 + $0xab] sm:$0xff]
      %v1589 = vld [vmem:[%s327 + $0xb3] sm:$0xff]
      %v1590 = vld [vmem:[%s327 + $0xbb] sm:$0xff]
      %v1591 = vld [vmem:[%s327 + $0xc3] sm:$0xff]
      %v1592 = vld [vmem:[%s327 + $0xcb] sm:$0xff]
      %v1593 = vld [vmem:[%s327 + $0xd3] sm:$0xff]
      %v1594 = vld [vmem:[%s327 + $0xdb] sm:$0xff]
      %v1595 = vld [vmem:[%s327 + $0xe3] sm:$0xff]
      %v1596 = vld [vmem:[%s327 + $0xeb] sm:$0xff]
      %v1597 = vld [vmem:[%s327 + $0xf3] sm:$0xff]
      %v1598 = vld [vmem:[%s327 + $0xfb] sm:$0xff]
      %v1599 = vld [vmem:[%s327 + $0x103] sm:$0xff]
      %v1600 = vld [vmem:[%s327 + $0x10b] sm:$0xff]
      %v1601 = vld [vmem:[%s327 + $0x113] sm:$0xff]
      %v1602 = vld [vmem:[%s327 + $0x11b] sm:$0xff]
      %v1603 = vld [vmem:[%s327 + $0x123] sm:$0xff]
      %v1604 = vld [vmem:[%s327 + $0x12b] sm:$0x3f]
      %v1605 = vld [vmem:[%s1 + $0x4] sm:$0x1]
      %1607 = vset.pattern.permute.xlu0 0
      %1608 = vperm.xlu0 %1607, %v1569
      %v1609 = vpop.permute.xlu0 %1608
      %1612 = vset.pattern.permute.xlu0 0
      %1613 = vperm.xlu0 %1612, %v1570
      %v1614 = vpop.permute.xlu0 %1613
      %1617 = vset.pattern.permute.xlu0 0
      %1618 = vperm.xlu0 %1617, %v1571
      %v1619 = vpop.permute.xlu0 %1618
      %1622 = vset.pattern.permute.xlu0 0
      %1623 = vperm.xlu0 %1622, %v1572
      %v1624 = vpop.permute.xlu0 %1623
      %1627 = vset.pattern.permute.xlu0 0
      %1628 = vperm.xlu0 %1627, %v1573
      %v1629 = vpop.permute.xlu0 %1628
      %1632 = vset.pattern.permute.xlu0 0
      %1633 = vperm.xlu0 %1632, %v1574
      %v1634 = vpop.permute.xlu0 %1633
      %1637 = vset.pattern.permute.xlu0 0
      %1638 = vperm.xlu0 %1637, %v1575
      %v1639 = vpop.permute.xlu0 %1638
      %1642 = vset.pattern.permute.xlu0 0
      %1643 = vperm.xlu0 %1642, %v1576
      %v1644 = vpop.permute.xlu0 %1643
      %1647 = vset.pattern.permute.xlu0 0
      %1648 = vperm.xlu0 %1647, %v1577
      %v1649 = vpop.permute.xlu0 %1648
      %1652 = vset.pattern.permute.xlu0 0
      %1653 = vperm.xlu0 %1652, %v1578
      %v1654 = vpop.permute.xlu0 %1653
      %1657 = vset.pattern.permute.xlu0 0
      %1658 = vperm.xlu0 %1657, %v1579
      %v1659 = vpop.permute.xlu0 %1658
      %1662 = vset.pattern.permute.xlu0 0
      %1663 = vperm.xlu0 %1662, %v1580
      %v1664 = vpop.permute.xlu0 %1663
      %1667 = vset.pattern.permute.xlu0 0
      %1668 = vperm.xlu0 %1667, %v1581
      %v1669 = vpop.permute.xlu0 %1668
      %1672 = vset.pattern.permute.xlu0 0
      %1673 = vperm.xlu0 %1672, %v1582
      %v1674 = vpop.permute.xlu0 %1673
      %1677 = vset.pattern.permute.xlu0 0
      %1678 = vperm.xlu0 %1677, %v1583
      %v1679 = vpop.permute.xlu0 %1678
      %1682 = vset.pattern.permute.xlu0 0
      %1683 = vperm.xlu0 %1682, %v1584
      %v1684 = vpop.permute.xlu0 %1683
      %1687 = vset.pattern.permute.xlu0 0
      %1688 = vperm.xlu0 %1687, %v1585
      %v1689 = vpop.permute.xlu0 %1688
      %1692 = vset.pattern.permute.xlu0 0
      %1693 = vperm.xlu0 %1692, %v1586
      %v1694 = vpop.permute.xlu0 %1693
      %1697 = vset.pattern.permute.xlu0 0
      %1698 = vperm.xlu0 %1697, %v1587
      %v1699 = vpop.permute.xlu0 %1698
      %1702 = vset.pattern.permute.xlu0 0
      %1703 = vperm.xlu0 %1702, %v1588
      %v1704 = vpop.permute.xlu0 %1703
      %1707 = vset.pattern.permute.xlu0 0
      %1708 = vperm.xlu0 %1707, %v1589
      %v1709 = vpop.permute.xlu0 %1708
      %1712 = vset.pattern.permute.xlu0 0
      %1713 = vperm.xlu0 %1712, %v1590
      %v1714 = vpop.permute.xlu0 %1713
      %1717 = vset.pattern.permute.xlu0 0
      %1718 = vperm.xlu0 %1717, %v1591
      %v1719 = vpop.permute.xlu0 %1718
      %1722 = vset.pattern.permute.xlu0 0
      %1723 = vperm.xlu0 %1722, %v1592
      %v1724 = vpop.permute.xlu0 %1723
      %1727 = vset.pattern.permute.xlu0 0
      %1728 = vperm.xlu0 %1727, %v1593
      %v1729 = vpop.permute.xlu0 %1728
      %1732 = vset.pattern.permute.xlu0 0
      %1733 = vperm.xlu0 %1732, %v1594
      %v1734 = vpop.permute.xlu0 %1733
      %1737 = vset.pattern.permute.xlu0 0
      %1738 = vperm.xlu0 %1737, %v1595
      %v1739 = vpop.permute.xlu0 %1738
      %1742 = vset.pattern.permute.xlu0 0
      %1743 = vperm.xlu0 %1742, %v1596
      %v1744 = vpop.permute.xlu0 %1743
      %1747 = vset.pattern.permute.xlu0 0
      %1748 = vperm.xlu0 %1747, %v1597
      %v1749 = vpop.permute.xlu0 %1748
      %1752 = vset.pattern.permute.xlu0 0
      %1753 = vperm.xlu0 %1752, %v1598
      %v1754 = vpop.permute.xlu0 %1753
      %1757 = vset.pattern.permute.xlu0 0
      %1758 = vperm.xlu0 %1757, %v1599
      %v1759 = vpop.permute.xlu0 %1758
      %1762 = vset.pattern.permute.xlu0 0
      %1763 = vperm.xlu0 %1762, %v1600
      %v1764 = vpop.permute.xlu0 %1763
      %1767 = vset.pattern.permute.xlu0 0
      %1768 = vperm.xlu0 %1767, %v1601
      %v1769 = vpop.permute.xlu0 %1768
      %1772 = vset.pattern.permute.xlu0 0
      %1773 = vperm.xlu0 %1772, %v1602
      %v1774 = vpop.permute.xlu0 %1773
      %1777 = vset.pattern.permute.xlu0 0
      %1778 = vperm.xlu0 %1777, %v1603
      %v1779 = vpop.permute.xlu0 %1778
      %1782 = vset.pattern.permute.xlu0 0
      %1783 = vperm.xlu0 %1782, %v1604
      %v1784 = vpop.permute.xlu0 %1783
      %v1786 = vlaneseq
      %v1787 = vshrl.u32 %v1786, 7
      %v1788 = vsub.s32 0, %v1787
      %v1789 = vrot.slane %v1605, %v1788
      %v1790 = vmul.f32 %v1609, %v1789
      %v1791 = vmul.f32 %v1614, %v1789
      %v1792 = vmul.f32 %v1619, %v1789
      %v1793 = vmul.f32 %v1624, %v1789
      %v1794 = vmul.f32 %v1629, %v1789
      %v1795 = vmul.f32 %v1634, %v1789
      %v1796 = vmul.f32 %v1639, %v1789
      %v1797 = vmul.f32 %v1644, %v1789
      %v1798 = vmul.f32 %v1649, %v1789
      %v1799 = vmul.f32 %v1654, %v1789
      %v1800 = vmul.f32 %v1659, %v1789
      %v1801 = vmul.f32 %v1664, %v1789
      %v1802 = vmul.f32 %v1669, %v1789
      %v1803 = vmul.f32 %v1674, %v1789
      %v1804 = vmul.f32 %v1679, %v1789
      %v1805 = vmul.f32 %v1684, %v1789
      %v1806 = vmul.f32 %v1689, %v1789
      %v1807 = vmul.f32 %v1694, %v1789
      %v1808 = vmul.f32 %v1699, %v1789
      %v1809 = vmul.f32 %v1704, %v1789
      %v1810 = vmul.f32 %v1709, %v1789
      %v1811 = vmul.f32 %v1714, %v1789
      %v1812 = vmul.f32 %v1719, %v1789
      %v1813 = vmul.f32 %v1724, %v1789
      %v1814 = vmul.f32 %v1729, %v1789
      %v1815 = vmul.f32 %v1734, %v1789
      %v1816 = vmul.f32 %v1739, %v1789
      %v1817 = vmul.f32 %v1744, %v1789
      %v1818 = vmul.f32 %v1749, %v1789
      %v1819 = vmul.f32 %v1754, %v1789
      %v1820 = vmul.f32 %v1759, %v1789
      %v1821 = vmul.f32 %v1764, %v1789
      %v1822 = vmul.f32 %v1769, %v1789
      %v1823 = vmul.f32 %v1774, %v1789
      %v1824 = vmul.f32 %v1779, %v1789
      %v1825 = vmul.f32 %v1784, %v1789
      %v1826 = vadd.f32 %v1533, %v1790
      %v1827 = vadd.f32 %v1534, %v1791
      %v1828 = vadd.f32 %v1535, %v1792
      %v1829 = vadd.f32 %v1536, %v1793
      %v1830 = vadd.f32 %v1537, %v1794
      %v1831 = vadd.f32 %v1538, %v1795
      %v1832 = vadd.f32 %v1539, %v1796
      %v1833 = vadd.f32 %v1540, %v1797
      %v1834 = vadd.f32 %v1541, %v1798
      %v1835 = vadd.f32 %v1542, %v1799
      %v1836 = vadd.f32 %v1543, %v1800
      %v1837 = vadd.f32 %v1544, %v1801
      %v1838 = vadd.f32 %v1545, %v1802
      %v1839 = vadd.f32 %v1546, %v1803
      %v1840 = vadd.f32 %v1547, %v1804
      %v1841 = vadd.f32 %v1548, %v1805
      %v1842 = vadd.f32 %v1549, %v1806
      %v1843 = vadd.f32 %v1550, %v1807
      %v1844 = vadd.f32 %v1551, %v1808
      %v1845 = vadd.f32 %v1552, %v1809
      %v1846 = vadd.f32 %v1553, %v1810
      %v1847 = vadd.f32 %v1554, %v1811
      %v1848 = vadd.f32 %v1555, %v1812
      %v1849 = vadd.f32 %v1556, %v1813
      %v1850 = vadd.f32 %v1557, %v1814
      %v1851 = vadd.f32 %v1558, %v1815
      %v1852 = vadd.f32 %v1559, %v1816
      %v1853 = vadd.f32 %v1560, %v1817
      %v1854 = vadd.f32 %v1561, %v1818
      %v1855 = vadd.f32 %v1562, %v1819
      %v1856 = vadd.f32 %v1563, %v1820
      %v1857 = vadd.f32 %v1564, %v1821
      %v1858 = vadd.f32 %v1565, %v1822
      %v1859 = vadd.f32 %v1566, %v1823
      %v1860 = vadd.f32 %v1567, %v1824
      %v1861 = vadd.f32 %v1568, %v1825
      %v1862 = vld [vmem:[%s327 + $0x14] sm:$0xff]
      %v1863 = vld [vmem:[%s327 + $0x1c] sm:$0xff]
      %v1864 = vld [vmem:[%s327 + $0x24] sm:$0xff]
      %v1865 = vld [vmem:[%s327 + $0x2c] sm:$0xff]
      %v1866 = vld [vmem:[%s327 + $0x34] sm:$0xff]
      %v1867 = vld [vmem:[%s327 + $0x3c] sm:$0xff]
      %v1868 = vld [vmem:[%s327 + $0x44] sm:$0xff]
      %v1869 = vld [vmem:[%s327 + $0x4c] sm:$0xff]
      %v1870 = vld [vmem:[%s327 + $0x54] sm:$0xff]
      %v1871 = vld [vmem:[%s327 + $0x5c] sm:$0xff]
      %v1872 = vld [vmem:[%s327 + $0x64] sm:$0xff]
      %v1873 = vld [vmem:[%s327 + $0x6c] sm:$0xff]
      %v1874 = vld [vmem:[%s327 + $0x74] sm:$0xff]
      %v1875 = vld [vmem:[%s327 + $0x7c] sm:$0xff]
      %v1876 = vld [vmem:[%s327 + $0x84] sm:$0xff]
      %v1877 = vld [vmem:[%s327 + $0x8c] sm:$0xff]
      %v1878 = vld [vmem:[%s327 + $0x94] sm:$0xff]
      %v1879 = vld [vmem:[%s327 + $0x9c] sm:$0xff]
      %v1880 = vld [vmem:[%s327 + $0xa4] sm:$0xff]
      %v1881 = vld [vmem:[%s327 + $0xac] sm:$0xff]
      %v1882 = vld [vmem:[%s327 + $0xb4] sm:$0xff]
      %v1883 = vld [vmem:[%s327 + $0xbc] sm:$0xff]
      %v1884 = vld [vmem:[%s327 + $0xc4] sm:$0xff]
      %v1885 = vld [vmem:[%s327 + $0xcc] sm:$0xff]
      %v1886 = vld [vmem:[%s327 + $0xd4] sm:$0xff]
      %v1887 = vld [vmem:[%s327 + $0xdc] sm:$0xff]
      %v1888 = vld [vmem:[%s327 + $0xe4] sm:$0xff]
      %v1889 = vld [vmem:[%s327 + $0xec] sm:$0xff]
      %v1890 = vld [vmem:[%s327 + $0xf4] sm:$0xff]
      %v1891 = vld [vmem:[%s327 + $0xfc] sm:$0xff]
      %v1892 = vld [vmem:[%s327 + $0x104] sm:$0xff]
      %v1893 = vld [vmem:[%s327 + $0x10c] sm:$0xff]
      %v1894 = vld [vmem:[%s327 + $0x114] sm:$0xff]
      %v1895 = vld [vmem:[%s327 + $0x11c] sm:$0xff]
      %v1896 = vld [vmem:[%s327 + $0x124] sm:$0xff]
      %v1897 = vld [vmem:[%s327 + $0x12c] sm:$0x3f]
      %v1898 = vld [vmem:[%s1 + $0x5] sm:$0x1]
      %1900 = vset.pattern.permute.xlu0 0
      %1901 = vperm.xlu0 %1900, %v1862
      %v1902 = vpop.permute.xlu0 %1901
      %1905 = vset.pattern.permute.xlu0 0
      %1906 = vperm.xlu0 %1905, %v1863
      %v1907 = vpop.permute.xlu0 %1906
      %1910 = vset.pattern.permute.xlu0 0
      %1911 = vperm.xlu0 %1910, %v1864
      %v1912 = vpop.permute.xlu0 %1911
      %1915 = vset.pattern.permute.xlu0 0
      %1916 = vperm.xlu0 %1915, %v1865
      %v1917 = vpop.permute.xlu0 %1916
      %1920 = vset.pattern.permute.xlu0 0
      %1921 = vperm.xlu0 %1920, %v1866
      %v1922 = vpop.permute.xlu0 %1921
      %1925 = vset.pattern.permute.xlu0 0
      %1926 = vperm.xlu0 %1925, %v1867
      %v1927 = vpop.permute.xlu0 %1926
      %1930 = vset.pattern.permute.xlu0 0
      %1931 = vperm.xlu0 %1930, %v1868
      %v1932 = vpop.permute.xlu0 %1931
      %1935 = vset.pattern.permute.xlu0 0
      %1936 = vperm.xlu0 %1935, %v1869
      %v1937 = vpop.permute.xlu0 %1936
      %1940 = vset.pattern.permute.xlu0 0
      %1941 = vperm.xlu0 %1940, %v1870
      %v1942 = vpop.permute.xlu0 %1941
      %1945 = vset.pattern.permute.xlu0 0
      %1946 = vperm.xlu0 %1945, %v1871
      %v1947 = vpop.permute.xlu0 %1946
      %1950 = vset.pattern.permute.xlu0 0
      %1951 = vperm.xlu0 %1950, %v1872
      %v1952 = vpop.permute.xlu0 %1951
      %1955 = vset.pattern.permute.xlu0 0
      %1956 = vperm.xlu0 %1955, %v1873
      %v1957 = vpop.permute.xlu0 %1956
      %1960 = vset.pattern.permute.xlu0 0
      %1961 = vperm.xlu0 %1960, %v1874
      %v1962 = vpop.permute.xlu0 %1961
      %1965 = vset.pattern.permute.xlu0 0
      %1966 = vperm.xlu0 %1965, %v1875
      %v1967 = vpop.permute.xlu0 %1966
      %1970 = vset.pattern.permute.xlu0 0
      %1971 = vperm.xlu0 %1970, %v1876
      %v1972 = vpop.permute.xlu0 %1971
      %1975 = vset.pattern.permute.xlu0 0
      %1976 = vperm.xlu0 %1975, %v1877
      %v1977 = vpop.permute.xlu0 %1976
      %1980 = vset.pattern.permute.xlu0 0
      %1981 = vperm.xlu0 %1980, %v1878
      %v1982 = vpop.permute.xlu0 %1981
      %1985 = vset.pattern.permute.xlu0 0
      %1986 = vperm.xlu0 %1985, %v1879
      %v1987 = vpop.permute.xlu0 %1986
      %1990 = vset.pattern.permute.xlu0 0
      %1991 = vperm.xlu0 %1990, %v1880
      %v1992 = vpop.permute.xlu0 %1991
      %1995 = vset.pattern.permute.xlu0 0
      %1996 = vperm.xlu0 %1995, %v1881
      %v1997 = vpop.permute.xlu0 %1996
      %2000 = vset.pattern.permute.xlu0 0
      %2001 = vperm.xlu0 %2000, %v1882
      %v2002 = vpop.permute.xlu0 %2001
      %2005 = vset.pattern.permute.xlu0 0
      %2006 = vperm.xlu0 %2005, %v1883
      %v2007 = vpop.permute.xlu0 %2006
      %2010 = vset.pattern.permute.xlu0 0
      %2011 = vperm.xlu0 %2010, %v1884
      %v2012 = vpop.permute.xlu0 %2011
      %2015 = vset.pattern.permute.xlu0 0
      %2016 = vperm.xlu0 %2015, %v1885
      %v2017 = vpop.permute.xlu0 %2016
      %2020 = vset.pattern.permute.xlu0 0
      %2021 = vperm.xlu0 %2020, %v1886
      %v2022 = vpop.permute.xlu0 %2021
      %2025 = vset.pattern.permute.xlu0 0
      %2026 = vperm.xlu0 %2025, %v1887
      %v2027 = vpop.permute.xlu0 %2026
      %2030 = vset.pattern.permute.xlu0 0
      %2031 = vperm.xlu0 %2030, %v1888
      %v2032 = vpop.permute.xlu0 %2031
      %2035 = vset.pattern.permute.xlu0 0
      %2036 = vperm.xlu0 %2035, %v1889
      %v2037 = vpop.permute.xlu0 %2036
      %2040 = vset.pattern.permute.xlu0 0
      %2041 = vperm.xlu0 %2040, %v1890
      %v2042 = vpop.permute.xlu0 %2041
      %2045 = vset.pattern.permute.xlu0 0
      %2046 = vperm.xlu0 %2045, %v1891
      %v2047 = vpop.permute.xlu0 %2046
      %2050 = vset.pattern.permute.xlu0 0
      %2051 = vperm.xlu0 %2050, %v1892
      %v2052 = vpop.permute.xlu0 %2051
      %2055 = vset.pattern.permute.xlu0 0
      %2056 = vperm.xlu0 %2055, %v1893
      %v2057 = vpop.permute.xlu0 %2056
      %2060 = vset.pattern.permute.xlu0 0
      %2061 = vperm.xlu0 %2060, %v1894
      %v2062 = vpop.permute.xlu0 %2061
      %2065 = vset.pattern.permute.xlu0 0
      %2066 = vperm.xlu0 %2065, %v1895
      %v2067 = vpop.permute.xlu0 %2066
      %2070 = vset.pattern.permute.xlu0 0
      %2071 = vperm.xlu0 %2070, %v1896
      %v2072 = vpop.permute.xlu0 %2071
      %2075 = vset.pattern.permute.xlu0 0
      %2076 = vperm.xlu0 %2075, %v1897
      %v2077 = vpop.permute.xlu0 %2076
      %v2079 = vlaneseq
      %v2080 = vshrl.u32 %v2079, 7
      %v2081 = vsub.s32 0, %v2080
      %v2082 = vrot.slane %v1898, %v2081
      %v2083 = vmul.f32 %v1902, %v2082
      %v2084 = vmul.f32 %v1907, %v2082
      %v2085 = vmul.f32 %v1912, %v2082
      %v2086 = vmul.f32 %v1917, %v2082
      %v2087 = vmul.f32 %v1922, %v2082
      %v2088 = vmul.f32 %v1927, %v2082
      %v2089 = vmul.f32 %v1932, %v2082
      %v2090 = vmul.f32 %v1937, %v2082
      %v2091 = vmul.f32 %v1942, %v2082
      %v2092 = vmul.f32 %v1947, %v2082
      %v2093 = vmul.f32 %v1952, %v2082
      %v2094 = vmul.f32 %v1957, %v2082
      %v2095 = vmul.f32 %v1962, %v2082
      %v2096 = vmul.f32 %v1967, %v2082
      %v2097 = vmul.f32 %v1972, %v2082
      %v2098 = vmul.f32 %v1977, %v2082
      %v2099 = vmul.f32 %v1982, %v2082
      %v2100 = vmul.f32 %v1987, %v2082
      %v2101 = vmul.f32 %v1992, %v2082
      %v2102 = vmul.f32 %v1997, %v2082
      %v2103 = vmul.f32 %v2002, %v2082
      %v2104 = vmul.f32 %v2007, %v2082
      %v2105 = vmul.f32 %v2012, %v2082
      %v2106 = vmul.f32 %v2017, %v2082
      %v2107 = vmul.f32 %v2022, %v2082
      %v2108 = vmul.f32 %v2027, %v2082
      %v2109 = vmul.f32 %v2032, %v2082
      %v2110 = vmul.f32 %v2037, %v2082
      %v2111 = vmul.f32 %v2042, %v2082
      %v2112 = vmul.f32 %v2047, %v2082
      %v2113 = vmul.f32 %v2052, %v2082
      %v2114 = vmul.f32 %v2057, %v2082
      %v2115 = vmul.f32 %v2062, %v2082
      %v2116 = vmul.f32 %v2067, %v2082
      %v2117 = vmul.f32 %v2072, %v2082
      %v2118 = vmul.f32 %v2077, %v2082
      %v2119 = vadd.f32 %v1826, %v2083
      %v2120 = vadd.f32 %v1827, %v2084
      %v2121 = vadd.f32 %v1828, %v2085
      %v2122 = vadd.f32 %v1829, %v2086
      %v2123 = vadd.f32 %v1830, %v2087
      %v2124 = vadd.f32 %v1831, %v2088
      %v2125 = vadd.f32 %v1832, %v2089
      %v2126 = vadd.f32 %v1833, %v2090
      %v2127 = vadd.f32 %v1834, %v2091
      %v2128 = vadd.f32 %v1835, %v2092
      %v2129 = vadd.f32 %v1836, %v2093
      %v2130 = vadd.f32 %v1837, %v2094
      %v2131 = vadd.f32 %v1838, %v2095
      %v2132 = vadd.f32 %v1839, %v2096
      %v2133 = vadd.f32 %v1840, %v2097
      %v2134 = vadd.f32 %v1841, %v2098
      %v2135 = vadd.f32 %v1842, %v2099
      %v2136 = vadd.f32 %v1843, %v2100
      %v2137 = vadd.f32 %v1844, %v2101
      %v2138 = vadd.f32 %v1845, %v2102
      %v2139 = vadd.f32 %v1846, %v2103
      %v2140 = vadd.f32 %v1847, %v2104
      %v2141 = vadd.f32 %v1848, %v2105
      %v2142 = vadd.f32 %v1849, %v2106
      %v2143 = vadd.f32 %v1850, %v2107
      %v2144 = vadd.f32 %v1851, %v2108
      %v2145 = vadd.f32 %v1852, %v2109
      %v2146 = vadd.f32 %v1853, %v2110
      %v2147 = vadd.f32 %v1854, %v2111
      %v2148 = vadd.f32 %v1855, %v2112
      %v2149 = vadd.f32 %v1856, %v2113
      %v2150 = vadd.f32 %v1857, %v2114
      %v2151 = vadd.f32 %v1858, %v2115
      %v2152 = vadd.f32 %v1859, %v2116
      %v2153 = vadd.f32 %v1860, %v2117
      %v2154 = vadd.f32 %v1861, %v2118
      %v2155 = vld [vmem:[%s327 + $0x24] sm:$0xff]
      %v2156 = vld [vmem:[%s327 + $0x2c] sm:$0xff]
      %v2157 = vld [vmem:[%s327 + $0x34] sm:$0xff]
      %v2158 = vld [vmem:[%s327 + $0x3c] sm:$0xff]
      %v2159 = vld [vmem:[%s327 + $0x44] sm:$0xff]
      %v2160 = vld [vmem:[%s327 + $0x4c] sm:$0xff]
      %v2161 = vld [vmem:[%s327 + $0x54] sm:$0xff]
      %v2162 = vld [vmem:[%s327 + $0x5c] sm:$0xff]
      %v2163 = vld [vmem:[%s327 + $0x64] sm:$0xff]
      %v2164 = vld [vmem:[%s327 + $0x6c] sm:$0xff]
      %v2165 = vld [vmem:[%s327 + $0x74] sm:$0xff]
      %v2166 = vld [vmem:[%s327 + $0x7c] sm:$0xff]
      %v2167 = vld [vmem:[%s327 + $0x84] sm:$0xff]
      %v2168 = vld [vmem:[%s327 + $0x8c] sm:$0xff]
      %v2169 = vld [vmem:[%s327 + $0x94] sm:$0xff]
      %v2170 = vld [vmem:[%s327 + $0x9c] sm:$0xff]
      %v2171 = vld [vmem:[%s327 + $0xa4] sm:$0xff]
      %v2172 = vld [vmem:[%s327 + $0xac] sm:$0xff]
      %v2173 = vld [vmem:[%s327 + $0xb4] sm:$0xff]
      %v2174 = vld [vmem:[%s327 + $0xbc] sm:$0xff]
      %v2175 = vld [vmem:[%s327 + $0xc4] sm:$0xff]
      %v2176 = vld [vmem:[%s327 + $0xcc] sm:$0xff]
      %v2177 = vld [vmem:[%s327 + $0xd4] sm:$0xff]
      %v2178 = vld [vmem:[%s327 + $0xdc] sm:$0xff]
      %v2179 = vld [vmem:[%s327 + $0xe4] sm:$0xff]
      %v2180 = vld [vmem:[%s327 + $0xec] sm:$0xff]
      %v2181 = vld [vmem:[%s327 + $0xf4] sm:$0xff]
      %v2182 = vld [vmem:[%s327 + $0xfc] sm:$0xff]
      %v2183 = vld [vmem:[%s327 + $0x104] sm:$0xff]
      %v2184 = vld [vmem:[%s327 + $0x10c] sm:$0xff]
      %v2185 = vld [vmem:[%s327 + $0x114] sm:$0xff]
      %v2186 = vld [vmem:[%s327 + $0x11c] sm:$0xff]
      %v2187 = vld [vmem:[%s327 + $0x124] sm:$0xff]
      %v2188 = vld [vmem:[%s327 + $0x12c] sm:$0xff]
      %v2189 = vld [vmem:[%s327 + $0x134] sm:$0xff]
      %v2190 = vld [vmem:[%s327 + $0x13c] sm:$0x3f]
      %v2191 = vld [vmem:[%s1 + $0x6] sm:$0x1]
      %2193 = vset.pattern.permute.xlu0 0
      %2194 = vperm.xlu0 %2193, %v2155
      %v2195 = vpop.permute.xlu0 %2194
      %2198 = vset.pattern.permute.xlu0 0
      %2199 = vperm.xlu0 %2198, %v2156
      %v2200 = vpop.permute.xlu0 %2199
      %2203 = vset.pattern.permute.xlu0 0
      %2204 = vperm.xlu0 %2203, %v2157
      %v2205 = vpop.permute.xlu0 %2204
      %2208 = vset.pattern.permute.xlu0 0
      %2209 = vperm.xlu0 %2208, %v2158
      %v2210 = vpop.permute.xlu0 %2209
      %2213 = vset.pattern.permute.xlu0 0
      %2214 = vperm.xlu0 %2213, %v2159
      %v2215 = vpop.permute.xlu0 %2214
      %2218 = vset.pattern.permute.xlu0 0
      %2219 = vperm.xlu0 %2218, %v2160
      %v2220 = vpop.permute.xlu0 %2219
      %2223 = vset.pattern.permute.xlu0 0
      %2224 = vperm.xlu0 %2223, %v2161
      %v2225 = vpop.permute.xlu0 %2224
      %2228 = vset.pattern.permute.xlu0 0
      %2229 = vperm.xlu0 %2228, %v2162
      %v2230 = vpop.permute.xlu0 %2229
      %2233 = vset.pattern.permute.xlu0 0
      %2234 = vperm.xlu0 %2233, %v2163
      %v2235 = vpop.permute.xlu0 %2234
      %2238 = vset.pattern.permute.xlu0 0
      %2239 = vperm.xlu0 %2238, %v2164
      %v2240 = vpop.permute.xlu0 %2239
      %2243 = vset.pattern.permute.xlu0 0
      %2244 = vperm.xlu0 %2243, %v2165
      %v2245 = vpop.permute.xlu0 %2244
      %2248 = vset.pattern.permute.xlu0 0
      %2249 = vperm.xlu0 %2248, %v2166
      %v2250 = vpop.permute.xlu0 %2249
      %2253 = vset.pattern.permute.xlu0 0
      %2254 = vperm.xlu0 %2253, %v2167
      %v2255 = vpop.permute.xlu0 %2254
      %2258 = vset.pattern.permute.xlu0 0
      %2259 = vperm.xlu0 %2258, %v2168
      %v2260 = vpop.permute.xlu0 %2259
      %2263 = vset.pattern.permute.xlu0 0
      %2264 = vperm.xlu0 %2263, %v2169
      %v2265 = vpop.permute.xlu0 %2264
      %2268 = vset.pattern.permute.xlu0 0
      %2269 = vperm.xlu0 %2268, %v2170
      %v2270 = vpop.permute.xlu0 %2269
      %2273 = vset.pattern.permute.xlu0 0
      %2274 = vperm.xlu0 %2273, %v2171
      %v2275 = vpop.permute.xlu0 %2274
      %2278 = vset.pattern.permute.xlu0 0
      %2279 = vperm.xlu0 %2278, %v2172
      %v2280 = vpop.permute.xlu0 %2279
      %2283 = vset.pattern.permute.xlu0 0
      %2284 = vperm.xlu0 %2283, %v2173
      %v2285 = vpop.permute.xlu0 %2284
      %2288 = vset.pattern.permute.xlu0 0
      %2289 = vperm.xlu0 %2288, %v2174
      %v2290 = vpop.permute.xlu0 %2289
      %2293 = vset.pattern.permute.xlu0 0
      %2294 = vperm.xlu0 %2293, %v2175
      %v2295 = vpop.permute.xlu0 %2294
      %2298 = vset.pattern.permute.xlu0 0
      %2299 = vperm.xlu0 %2298, %v2176
      %v2300 = vpop.permute.xlu0 %2299
      %2303 = vset.pattern.permute.xlu0 0
      %2304 = vperm.xlu0 %2303, %v2177
      %v2305 = vpop.permute.xlu0 %2304
      %2308 = vset.pattern.permute.xlu0 0
      %2309 = vperm.xlu0 %2308, %v2178
      %v2310 = vpop.permute.xlu0 %2309
      %2313 = vset.pattern.permute.xlu0 0
      %2314 = vperm.xlu0 %2313, %v2179
      %v2315 = vpop.permute.xlu0 %2314
      %2318 = vset.pattern.permute.xlu0 0
      %2319 = vperm.xlu0 %2318, %v2180
      %v2320 = vpop.permute.xlu0 %2319
      %2323 = vset.pattern.permute.xlu0 0
      %2324 = vperm.xlu0 %2323, %v2181
      %v2325 = vpop.permute.xlu0 %2324
      %2328 = vset.pattern.permute.xlu0 0
      %2329 = vperm.xlu0 %2328, %v2182
      %v2330 = vpop.permute.xlu0 %2329
      %2333 = vset.pattern.permute.xlu0 0
      %2334 = vperm.xlu0 %2333, %v2183
      %v2335 = vpop.permute.xlu0 %2334
      %2338 = vset.pattern.permute.xlu0 0
      %2339 = vperm.xlu0 %2338, %v2184
      %v2340 = vpop.permute.xlu0 %2339
      %2343 = vset.pattern.permute.xlu0 0
      %2344 = vperm.xlu0 %2343, %v2185
      %v2345 = vpop.permute.xlu0 %2344
      %2348 = vset.pattern.permute.xlu0 0
      %2349 = vperm.xlu0 %2348, %v2186
      %v2350 = vpop.permute.xlu0 %2349
      %2353 = vset.pattern.permute.xlu0 0
      %2354 = vperm.xlu0 %2353, %v2187
      %v2355 = vpop.permute.xlu0 %2354
      %2358 = vset.pattern.permute.xlu0 0
      %2359 = vperm.xlu0 %2358, %v2188
      %v2360 = vpop.permute.xlu0 %2359
      %2363 = vset.pattern.permute.xlu0 0
      %2364 = vperm.xlu0 %2363, %v2189
      %v2365 = vpop.permute.xlu0 %2364
      %2368 = vset.pattern.permute.xlu0 0
      %2369 = vperm.xlu0 %2368, %v2190
      %v2370 = vpop.permute.xlu0 %2369
      %v2372 = vlaneseq
      %v2373 = vshrl.u32 %v2372, 7
      %v2374 = vsub.s32 0, %v2373
      %v2375 = vrot.slane %v2191, %v2374
      %v2376 = vmul.f32 %v2195, %v2375
      %v2377 = vmul.f32 %v2200, %v2375
      %v2378 = vmul.f32 %v2205, %v2375
      %v2379 = vmul.f32 %v2210, %v2375
      %v2380 = vmul.f32 %v2215, %v2375
      %v2381 = vmul.f32 %v2220, %v2375
      %v2382 = vmul.f32 %v2225, %v2375
      %v2383 = vmul.f32 %v2230, %v2375
      %v2384 = vmul.f32 %v2235, %v2375
      %v2385 = vmul.f32 %v2240, %v2375
      %v2386 = vmul.f32 %v2245, %v2375
      %v2387 = vmul.f32 %v2250, %v2375
      %v2388 = vmul.f32 %v2255, %v2375
      %v2389 = vmul.f32 %v2260, %v2375
      %v2390 = vmul.f32 %v2265, %v2375
      %v2391 = vmul.f32 %v2270, %v2375
      %v2392 = vmul.f32 %v2275, %v2375
      %v2393 = vmul.f32 %v2280, %v2375
      %v2394 = vmul.f32 %v2285, %v2375
      %v2395 = vmul.f32 %v2290, %v2375
      %v2396 = vmul.f32 %v2295, %v2375
      %v2397 = vmul.f32 %v2300, %v2375
      %v2398 = vmul.f32 %v2305, %v2375
      %v2399 = vmul.f32 %v2310, %v2375
      %v2400 = vmul.f32 %v2315, %v2375
      %v2401 = vmul.f32 %v2320, %v2375
      %v2402 = vmul.f32 %v2325, %v2375
      %v2403 = vmul.f32 %v2330, %v2375
      %v2404 = vmul.f32 %v2335, %v2375
      %v2405 = vmul.f32 %v2340, %v2375
      %v2406 = vmul.f32 %v2345, %v2375
      %v2407 = vmul.f32 %v2350, %v2375
      %v2408 = vmul.f32 %v2355, %v2375
      %v2409 = vmul.f32 %v2360, %v2375
      %v2410 = vmul.f32 %v2365, %v2375
      %v2411 = vmul.f32 %v2370, %v2375
      %v2412 = vadd.f32 %v2119, %v2376
      %v2413 = vadd.f32 %v2120, %v2377
      %v2414 = vadd.f32 %v2121, %v2378
      %v2415 = vadd.f32 %v2122, %v2379
      %v2416 = vadd.f32 %v2123, %v2380
      %v2417 = vadd.f32 %v2124, %v2381
      %v2418 = vadd.f32 %v2125, %v2382
      %v2419 = vadd.f32 %v2126, %v2383
      %v2420 = vadd.f32 %v2127, %v2384
      %v2421 = vadd.f32 %v2128, %v2385
      %v2422 = vadd.f32 %v2129, %v2386
      %v2423 = vadd.f32 %v2130, %v2387
      %v2424 = vadd.f32 %v2131, %v2388
      %v2425 = vadd.f32 %v2132, %v2389
      %v2426 = vadd.f32 %v2133, %v2390
      %v2427 = vadd.f32 %v2134, %v2391
      %v2428 = vadd.f32 %v2135, %v2392
      %v2429 = vadd.f32 %v2136, %v2393
      %v2430 = vadd.f32 %v2137, %v2394
      %v2431 = vadd.f32 %v2138, %v2395
      %v2432 = vadd.f32 %v2139, %v2396
      %v2433 = vadd.f32 %v2140, %v2397
      %v2434 = vadd.f32 %v2141, %v2398
      %v2435 = vadd.f32 %v2142, %v2399
      %v2436 = vadd.f32 %v2143, %v2400
      %v2437 = vadd.f32 %v2144, %v2401
      %v2438 = vadd.f32 %v2145, %v2402
      %v2439 = vadd.f32 %v2146, %v2403
      %v2440 = vadd.f32 %v2147, %v2404
      %v2441 = vadd.f32 %v2148, %v2405
      %v2442 = vadd.f32 %v2149, %v2406
      %v2443 = vadd.f32 %v2150, %v2407
      %v2444 = vadd.f32 %v2151, %v2408
      %v2445 = vadd.f32 %v2152, %v2409
      %v2446 = vadd.f32 %v2153, %v2410
      %v2447 = vadd.f32 %v2154, %v2411
      %v2448 = vld [vmem:[%s327 + $0x25] sm:$0xff]
      %v2449 = vld [vmem:[%s327 + $0x2d] sm:$0xff]
      %v2450 = vld [vmem:[%s327 + $0x35] sm:$0xff]
      %v2451 = vld [vmem:[%s327 + $0x3d] sm:$0xff]
      %v2452 = vld [vmem:[%s327 + $0x45] sm:$0xff]
      %v2453 = vld [vmem:[%s327 + $0x4d] sm:$0xff]
      %v2454 = vld [vmem:[%s327 + $0x55] sm:$0xff]
      %v2455 = vld [vmem:[%s327 + $0x5d] sm:$0xff]
      %v2456 = vld [vmem:[%s327 + $0x65] sm:$0xff]
      %v2457 = vld [vmem:[%s327 + $0x6d] sm:$0xff]
      %v2458 = vld [vmem:[%s327 + $0x75] sm:$0xff]
      %v2459 = vld [vmem:[%s327 + $0x7d] sm:$0xff]
      %v2460 = vld [vmem:[%s327 + $0x85] sm:$0xff]
      %v2461 = vld [vmem:[%s327 + $0x8d] sm:$0xff]
      %v2462 = vld [vmem:[%s327 + $0x95] sm:$0xff]
      %v2463 = vld [vmem:[%s327 + $0x9d] sm:$0xff]
      %v2464 = vld [vmem:[%s327 + $0xa5] sm:$0xff]
      %v2465 = vld [vmem:[%s327 + $0xad] sm:$0xff]
      %v2466 = vld [vmem:[%s327 + $0xb5] sm:$0xff]
      %v2467 = vld [vmem:[%s327 + $0xbd] sm:$0xff]
      %v2468 = vld [vmem:[%s327 + $0xc5] sm:$0xff]
      %v2469 = vld [vmem:[%s327 + $0xcd] sm:$0xff]
      %v2470 = vld [vmem:[%s327 + $0xd5] sm:$0xff]
      %v2471 = vld [vmem:[%s327 + $0xdd] sm:$0xff]
      %v2472 = vld [vmem:[%s327 + $0xe5] sm:$0xff]
      %v2473 = vld [vmem:[%s327 + $0xed] sm:$0xff]
      %v2474 = vld [vmem:[%s327 + $0xf5] sm:$0xff]
      %v2475 = vld [vmem:[%s327 + $0xfd] sm:$0xff]
      %v2476 = vld [vmem:[%s327 + $0x105] sm:$0xff]
      %v2477 = vld [vmem:[%s327 + $0x10d] sm:$0xff]
      %v2478 = vld [vmem:[%s327 + $0x115] sm:$0xff]
      %v2479 = vld [vmem:[%s327 + $0x11d] sm:$0xff]
      %v2480 = vld [vmem:[%s327 + $0x125] sm:$0xff]
      %v2481 = vld [vmem:[%s327 + $0x12d] sm:$0xff]
      %v2482 = vld [vmem:[%s327 + $0x135] sm:$0xff]
      %v2483 = vld [vmem:[%s327 + $0x13d] sm:$0x3f]
      %v2484 = vld [vmem:[%s1 + $0x7] sm:$0x1]
      %2486 = vset.pattern.permute.xlu0 0
      %2487 = vperm.xlu0 %2486, %v2448
      %v2488 = vpop.permute.xlu0 %2487
      %2491 = vset.pattern.permute.xlu0 0
      %2492 = vperm.xlu0 %2491, %v2449
      %v2493 = vpop.permute.xlu0 %2492
      %2496 = vset.pattern.permute.xlu0 0
      %2497 = vperm.xlu0 %2496, %v2450
      %v2498 = vpop.permute.xlu0 %2497
      %2501 = vset.pattern.permute.xlu0 0
      %2502 = vperm.xlu0 %2501, %v2451
      %v2503 = vpop.permute.xlu0 %2502
      %2506 = vset.pattern.permute.xlu0 0
      %2507 = vperm.xlu0 %2506, %v2452
      %v2508 = vpop.permute.xlu0 %2507
      %2511 = vset.pattern.permute.xlu0 0
      %2512 = vperm.xlu0 %2511, %v2453
      %v2513 = vpop.permute.xlu0 %2512
      %2516 = vset.pattern.permute.xlu0 0
      %2517 = vperm.xlu0 %2516, %v2454
      %v2518 = vpop.permute.xlu0 %2517
      %2521 = vset.pattern.permute.xlu0 0
      %2522 = vperm.xlu0 %2521, %v2455
      %v2523 = vpop.permute.xlu0 %2522
      %2526 = vset.pattern.permute.xlu0 0
      %2527 = vperm.xlu0 %2526, %v2456
      %v2528 = vpop.permute.xlu0 %2527
      %2531 = vset.pattern.permute.xlu0 0
      %2532 = vperm.xlu0 %2531, %v2457
      %v2533 = vpop.permute.xlu0 %2532
      %2536 = vset.pattern.permute.xlu0 0
      %2537 = vperm.xlu0 %2536, %v2458
      %v2538 = vpop.permute.xlu0 %2537
      %2541 = vset.pattern.permute.xlu0 0
      %2542 = vperm.xlu0 %2541, %v2459
      %v2543 = vpop.permute.xlu0 %2542
      %2546 = vset.pattern.permute.xlu0 0
      %2547 = vperm.xlu0 %2546, %v2460
      %v2548 = vpop.permute.xlu0 %2547
      %2551 = vset.pattern.permute.xlu0 0
      %2552 = vperm.xlu0 %2551, %v2461
      %v2553 = vpop.permute.xlu0 %2552
      %2556 = vset.pattern.permute.xlu0 0
      %2557 = vperm.xlu0 %2556, %v2462
      %v2558 = vpop.permute.xlu0 %2557
      %2561 = vset.pattern.permute.xlu0 0
      %2562 = vperm.xlu0 %2561, %v2463
      %v2563 = vpop.permute.xlu0 %2562
      %2566 = vset.pattern.permute.xlu0 0
      %2567 = vperm.xlu0 %2566, %v2464
      %v2568 = vpop.permute.xlu0 %2567
      %2571 = vset.pattern.permute.xlu0 0
      %2572 = vperm.xlu0 %2571, %v2465
      %v2573 = vpop.permute.xlu0 %2572
      %2576 = vset.pattern.permute.xlu0 0
      %2577 = vperm.xlu0 %2576, %v2466
      %v2578 = vpop.permute.xlu0 %2577
      %2581 = vset.pattern.permute.xlu0 0
      %2582 = vperm.xlu0 %2581, %v2467
      %v2583 = vpop.permute.xlu0 %2582
      %2586 = vset.pattern.permute.xlu0 0
      %2587 = vperm.xlu0 %2586, %v2468
      %v2588 = vpop.permute.xlu0 %2587
      %2591 = vset.pattern.permute.xlu0 0
      %2592 = vperm.xlu0 %2591, %v2469
      %v2593 = vpop.permute.xlu0 %2592
      %2596 = vset.pattern.permute.xlu0 0
      %2597 = vperm.xlu0 %2596, %v2470
      %v2598 = vpop.permute.xlu0 %2597
      %2601 = vset.pattern.permute.xlu0 0
      %2602 = vperm.xlu0 %2601, %v2471
      %v2603 = vpop.permute.xlu0 %2602
      %2606 = vset.pattern.permute.xlu0 0
      %2607 = vperm.xlu0 %2606, %v2472
      %v2608 = vpop.permute.xlu0 %2607
      %2611 = vset.pattern.permute.xlu0 0
      %2612 = vperm.xlu0 %2611, %v2473
      %v2613 = vpop.permute.xlu0 %2612
      %2616 = vset.pattern.permute.xlu0 0
      %2617 = vperm.xlu0 %2616, %v2474
      %v2618 = vpop.permute.xlu0 %2617
      %2621 = vset.pattern.permute.xlu0 0
      %2622 = vperm.xlu0 %2621, %v2475
      %v2623 = vpop.permute.xlu0 %2622
      %2626 = vset.pattern.permute.xlu0 0
      %2627 = vperm.xlu0 %2626, %v2476
      %v2628 = vpop.permute.xlu0 %2627
      %2631 = vset.pattern.permute.xlu0 0
      %2632 = vperm.xlu0 %2631, %v2477
      %v2633 = vpop.permute.xlu0 %2632
      %2636 = vset.pattern.permute.xlu0 0
      %2637 = vperm.xlu0 %2636, %v2478
      %v2638 = vpop.permute.xlu0 %2637
      %2641 = vset.pattern.permute.xlu0 0
      %2642 = vperm.xlu0 %2641, %v2479
      %v2643 = vpop.permute.xlu0 %2642
      %2646 = vset.pattern.permute.xlu0 0
      %2647 = vperm.xlu0 %2646, %v2480
      %v2648 = vpop.permute.xlu0 %2647
      %2651 = vset.pattern.permute.xlu0 0
      %2652 = vperm.xlu0 %2651, %v2481
      %v2653 = vpop.permute.xlu0 %2652
      %2656 = vset.pattern.permute.xlu0 0
      %2657 = vperm.xlu0 %2656, %v2482
      %v2658 = vpop.permute.xlu0 %2657
      %2661 = vset.pattern.permute.xlu0 0
      %2662 = vperm.xlu0 %2661, %v2483
      %v2663 = vpop.permute.xlu0 %2662
      %v2665 = vlaneseq
      %v2666 = vshrl.u32 %v2665, 7
      %v2667 = vsub.s32 0, %v2666
      %v2668 = vrot.slane %v2484, %v2667
      %v2669 = vmul.f32 %v2488, %v2668
      %v2670 = vmul.f32 %v2493, %v2668
      %v2671 = vmul.f32 %v2498, %v2668
      %v2672 = vmul.f32 %v2503, %v2668
      %v2673 = vmul.f32 %v2508, %v2668
      %v2674 = vmul.f32 %v2513, %v2668
      %v2675 = vmul.f32 %v2518, %v2668
      %v2676 = vmul.f32 %v2523, %v2668
      %v2677 = vmul.f32 %v2528, %v2668
      %v2678 = vmul.f32 %v2533, %v2668
      %v2679 = vmul.f32 %v2538, %v2668
      %v2680 = vmul.f32 %v2543, %v2668
      %v2681 = vmul.f32 %v2548, %v2668
      %v2682 = vmul.f32 %v2553, %v2668
      %v2683 = vmul.f32 %v2558, %v2668
      %v2684 = vmul.f32 %v2563, %v2668
      %v2685 = vmul.f32 %v2568, %v2668
      %v2686 = vmul.f32 %v2573, %v2668
      %v2687 = vmul.f32 %v2578, %v2668
      %v2688 = vmul.f32 %v2583, %v2668
      %v2689 = vmul.f32 %v2588, %v2668
      %v2690 = vmul.f32 %v2593, %v2668
      %v2691 = vmul.f32 %v2598, %v2668
      %v2692 = vmul.f32 %v2603, %v2668
      %v2693 = vmul.f32 %v2608, %v2668
      %v2694 = vmul.f32 %v2613, %v2668
      %v2695 = vmul.f32 %v2618, %v2668
      %v2696 = vmul.f32 %v2623, %v2668
      %v2697 = vmul.f32 %v2628, %v2668
      %v2698 = vmul.f32 %v2633, %v2668
      %v2699 = vmul.f32 %v2638, %v2668
      %v2700 = vmul.f32 %v2643, %v2668
      %v2701 = vmul.f32 %v2648, %v2668
      %v2702 = vmul.f32 %v2653, %v2668
      %v2703 = vmul.f32 %v2658, %v2668
      %v2704 = vmul.f32 %v2663, %v2668
      %v2705 = vadd.f32 %v2412, %v2669
      %v2706 = vadd.f32 %v2413, %v2670
      %v2707 = vadd.f32 %v2414, %v2671
      %v2708 = vadd.f32 %v2415, %v2672
      %v2709 = vadd.f32 %v2416, %v2673
      %v2710 = vadd.f32 %v2417, %v2674
      %v2711 = vadd.f32 %v2418, %v2675
      %v2712 = vadd.f32 %v2419, %v2676
      %v2713 = vadd.f32 %v2420, %v2677
      %v2714 = vadd.f32 %v2421, %v2678
      %v2715 = vadd.f32 %v2422, %v2679
      %v2716 = vadd.f32 %v2423, %v2680
      %v2717 = vadd.f32 %v2424, %v2681
      %v2718 = vadd.f32 %v2425, %v2682
      %v2719 = vadd.f32 %v2426, %v2683
      %v2720 = vadd.f32 %v2427, %v2684
      %v2721 = vadd.f32 %v2428, %v2685
      %v2722 = vadd.f32 %v2429, %v2686
      %v2723 = vadd.f32 %v2430, %v2687
      %v2724 = vadd.f32 %v2431, %v2688
      %v2725 = vadd.f32 %v2432, %v2689
      %v2726 = vadd.f32 %v2433, %v2690
      %v2727 = vadd.f32 %v2434, %v2691
      %v2728 = vadd.f32 %v2435, %v2692
      %v2729 = vadd.f32 %v2436, %v2693
      %v2730 = vadd.f32 %v2437, %v2694
      %v2731 = vadd.f32 %v2438, %v2695
      %v2732 = vadd.f32 %v2439, %v2696
      %v2733 = vadd.f32 %v2440, %v2697
      %v2734 = vadd.f32 %v2441, %v2698
      %v2735 = vadd.f32 %v2442, %v2699
      %v2736 = vadd.f32 %v2443, %v2700
      %v2737 = vadd.f32 %v2444, %v2701
      %v2738 = vadd.f32 %v2445, %v2702
      %v2739 = vadd.f32 %v2446, %v2703
      %v2740 = vadd.f32 %v2447, %v2704
      %v2741 = vld [vmem:[%s327 + $0x26] sm:$0xff]
      %v2742 = vld [vmem:[%s327 + $0x2e] sm:$0xff]
      %v2743 = vld [vmem:[%s327 + $0x36] sm:$0xff]
      %v2744 = vld [vmem:[%s327 + $0x3e] sm:$0xff]
      %v2745 = vld [vmem:[%s327 + $0x46] sm:$0xff]
      %v2746 = vld [vmem:[%s327 + $0x4e] sm:$0xff]
      %v2747 = vld [vmem:[%s327 + $0x56] sm:$0xff]
      %v2748 = vld [vmem:[%s327 + $0x5e] sm:$0xff]
      %v2749 = vld [vmem:[%s327 + $0x66] sm:$0xff]
      %v2750 = vld [vmem:[%s327 + $0x6e] sm:$0xff]
      %v2751 = vld [vmem:[%s327 + $0x76] sm:$0xff]
      %v2752 = vld [vmem:[%s327 + $0x7e] sm:$0xff]
      %v2753 = vld [vmem:[%s327 + $0x86] sm:$0xff]
      %v2754 = vld [vmem:[%s327 + $0x8e] sm:$0xff]
      %v2755 = vld [vmem:[%s327 + $0x96] sm:$0xff]
      %v2756 = vld [vmem:[%s327 + $0x9e] sm:$0xff]
      %v2757 = vld [vmem:[%s327 + $0xa6] sm:$0xff]
      %v2758 = vld [vmem:[%s327 + $0xae] sm:$0xff]
      %v2759 = vld [vmem:[%s327 + $0xb6] sm:$0xff]
      %v2760 = vld [vmem:[%s327 + $0xbe] sm:$0xff]
      %v2761 = vld [vmem:[%s327 + $0xc6] sm:$0xff]
      %v2762 = vld [vmem:[%s327 + $0xce] sm:$0xff]
      %v2763 = vld [vmem:[%s327 + $0xd6] sm:$0xff]
      %v2764 = vld [vmem:[%s327 + $0xde] sm:$0xff]
      %v2765 = vld [vmem:[%s327 + $0xe6] sm:$0xff]
      %v2766 = vld [vmem:[%s327 + $0xee] sm:$0xff]
      %v2767 = vld [vmem:[%s327 + $0xf6] sm:$0xff]
      %v2768 = vld [vmem:[%s327 + $0xfe] sm:$0xff]
      %v2769 = vld [vmem:[%s327 + $0x106] sm:$0xff]
      %v2770 = vld [vmem:[%s327 + $0x10e] sm:$0xff]
      %v2771 = vld [vmem:[%s327 + $0x116] sm:$0xff]
      %v2772 = vld [vmem:[%s327 + $0x11e] sm:$0xff]
      %v2773 = vld [vmem:[%s327 + $0x126] sm:$0xff]
      %v2774 = vld [vmem:[%s327 + $0x12e] sm:$0xff]
      %v2775 = vld [vmem:[%s327 + $0x136] sm:$0xff]
      %v2776 = vld [vmem:[%s327 + $0x13e] sm:$0x3f]
      %v2777 = vld [vmem:[%s1 + $0x8] sm:$0x1]
      %2779 = vset.pattern.permute.xlu0 0
      %2780 = vperm.xlu0 %2779, %v2741
      %v2781 = vpop.permute.xlu0 %2780
      %2784 = vset.pattern.permute.xlu0 0
      %2785 = vperm.xlu0 %2784, %v2742
      %v2786 = vpop.permute.xlu0 %2785
      %2789 = vset.pattern.permute.xlu0 0
      %2790 = vperm.xlu0 %2789, %v2743
      %v2791 = vpop.permute.xlu0 %2790
      %2794 = vset.pattern.permute.xlu0 0
      %2795 = vperm.xlu0 %2794, %v2744
      %v2796 = vpop.permute.xlu0 %2795
      %2799 = vset.pattern.permute.xlu0 0
      %2800 = vperm.xlu0 %2799, %v2745
      %v2801 = vpop.permute.xlu0 %2800
      %2804 = vset.pattern.permute.xlu0 0
      %2805 = vperm.xlu0 %2804, %v2746
      %v2806 = vpop.permute.xlu0 %2805
      %2809 = vset.pattern.permute.xlu0 0
      %2810 = vperm.xlu0 %2809, %v2747
      %v2811 = vpop.permute.xlu0 %2810
      %2814 = vset.pattern.permute.xlu0 0
      %2815 = vperm.xlu0 %2814, %v2748
      %v2816 = vpop.permute.xlu0 %2815
      %2819 = vset.pattern.permute.xlu0 0
      %2820 = vperm.xlu0 %2819, %v2749
      %v2821 = vpop.permute.xlu0 %2820
      %2824 = vset.pattern.permute.xlu0 0
      %2825 = vperm.xlu0 %2824, %v2750
      %v2826 = vpop.permute.xlu0 %2825
      %2829 = vset.pattern.permute.xlu0 0
      %2830 = vperm.xlu0 %2829, %v2751
      %v2831 = vpop.permute.xlu0 %2830
      %2834 = vset.pattern.permute.xlu0 0
      %2835 = vperm.xlu0 %2834, %v2752
      %v2836 = vpop.permute.xlu0 %2835
      %2839 = vset.pattern.permute.xlu0 0
      %2840 = vperm.xlu0 %2839, %v2753
      %v2841 = vpop.permute.xlu0 %2840
      %2844 = vset.pattern.permute.xlu0 0
      %2845 = vperm.xlu0 %2844, %v2754
      %v2846 = vpop.permute.xlu0 %2845
      %2849 = vset.pattern.permute.xlu0 0
      %2850 = vperm.xlu0 %2849, %v2755
      %v2851 = vpop.permute.xlu0 %2850
      %2854 = vset.pattern.permute.xlu0 0
      %2855 = vperm.xlu0 %2854, %v2756
      %v2856 = vpop.permute.xlu0 %2855
      %2859 = vset.pattern.permute.xlu0 0
      %2860 = vperm.xlu0 %2859, %v2757
      %v2861 = vpop.permute.xlu0 %2860
      %2864 = vset.pattern.permute.xlu0 0
      %2865 = vperm.xlu0 %2864, %v2758
      %v2866 = vpop.permute.xlu0 %2865
      %2869 = vset.pattern.permute.xlu0 0
      %2870 = vperm.xlu0 %2869, %v2759
      %v2871 = vpop.permute.xlu0 %2870
      %2874 = vset.pattern.permute.xlu0 0
      %2875 = vperm.xlu0 %2874, %v2760
      %v2876 = vpop.permute.xlu0 %2875
      %2879 = vset.pattern.permute.xlu0 0
      %2880 = vperm.xlu0 %2879, %v2761
      %v2881 = vpop.permute.xlu0 %2880
      %2884 = vset.pattern.permute.xlu0 0
      %2885 = vperm.xlu0 %2884, %v2762
      %v2886 = vpop.permute.xlu0 %2885
      %2889 = vset.pattern.permute.xlu0 0
      %2890 = vperm.xlu0 %2889, %v2763
      %v2891 = vpop.permute.xlu0 %2890
      %2894 = vset.pattern.permute.xlu0 0
      %2895 = vperm.xlu0 %2894, %v2764
      %v2896 = vpop.permute.xlu0 %2895
      %2899 = vset.pattern.permute.xlu0 0
      %2900 = vperm.xlu0 %2899, %v2765
      %v2901 = vpop.permute.xlu0 %2900
      %2904 = vset.pattern.permute.xlu0 0
      %2905 = vperm.xlu0 %2904, %v2766
      %v2906 = vpop.permute.xlu0 %2905
      %2909 = vset.pattern.permute.xlu0 0
      %2910 = vperm.xlu0 %2909, %v2767
      %v2911 = vpop.permute.xlu0 %2910
      %2914 = vset.pattern.permute.xlu0 0
      %2915 = vperm.xlu0 %2914, %v2768
      %v2916 = vpop.permute.xlu0 %2915
      %2919 = vset.pattern.permute.xlu0 0
      %2920 = vperm.xlu0 %2919, %v2769
      %v2921 = vpop.permute.xlu0 %2920
      %2924 = vset.pattern.permute.xlu0 0
      %2925 = vperm.xlu0 %2924, %v2770
      %v2926 = vpop.permute.xlu0 %2925
      %2929 = vset.pattern.permute.xlu0 0
      %2930 = vperm.xlu0 %2929, %v2771
      %v2931 = vpop.permute.xlu0 %2930
      %2934 = vset.pattern.permute.xlu0 0
      %2935 = vperm.xlu0 %2934, %v2772
      %v2936 = vpop.permute.xlu0 %2935
      %2939 = vset.pattern.permute.xlu0 0
      %2940 = vperm.xlu0 %2939, %v2773
      %v2941 = vpop.permute.xlu0 %2940
      %2944 = vset.pattern.permute.xlu0 0
      %2945 = vperm.xlu0 %2944, %v2774
      %v2946 = vpop.permute.xlu0 %2945
      %2949 = vset.pattern.permute.xlu0 0
      %2950 = vperm.xlu0 %2949, %v2775
      %v2951 = vpop.permute.xlu0 %2950
      %2954 = vset.pattern.permute.xlu0 0
      %2955 = vperm.xlu0 %2954, %v2776
      %v2956 = vpop.permute.xlu0 %2955
      %v2958 = vlaneseq
      %v2959 = vshrl.u32 %v2958, 7
      %v2960 = vsub.s32 0, %v2959
      %v2961 = vrot.slane %v2777, %v2960
      %v2962 = vmul.f32 %v2781, %v2961
      %v2963 = vmul.f32 %v2786, %v2961
      %v2964 = vmul.f32 %v2791, %v2961
      %v2965 = vmul.f32 %v2796, %v2961
      %v2966 = vmul.f32 %v2801, %v2961
      %v2967 = vmul.f32 %v2806, %v2961
      %v2968 = vmul.f32 %v2811, %v2961
      %v2969 = vmul.f32 %v2816, %v2961
      %v2970 = vmul.f32 %v2821, %v2961
      %v2971 = vmul.f32 %v2826, %v2961
      %v2972 = vmul.f32 %v2831, %v2961
      %v2973 = vmul.f32 %v2836, %v2961
      %v2974 = vmul.f32 %v2841, %v2961
      %v2975 = vmul.f32 %v2846, %v2961
      %v2976 = vmul.f32 %v2851, %v2961
      %v2977 = vmul.f32 %v2856, %v2961
      %v2978 = vmul.f32 %v2861, %v2961
      %v2979 = vmul.f32 %v2866, %v2961
      %v2980 = vmul.f32 %v2871, %v2961
      %v2981 = vmul.f32 %v2876, %v2961
      %v2982 = vmul.f32 %v2881, %v2961
      %v2983 = vmul.f32 %v2886, %v2961
      %v2984 = vmul.f32 %v2891, %v2961
      %v2985 = vmul.f32 %v2896, %v2961
      %v2986 = vmul.f32 %v2901, %v2961
      %v2987 = vmul.f32 %v2906, %v2961
      %v2988 = vmul.f32 %v2911, %v2961
      %v2989 = vmul.f32 %v2916, %v2961
      %v2990 = vmul.f32 %v2921, %v2961
      %v2991 = vmul.f32 %v2926, %v2961
      %v2992 = vmul.f32 %v2931, %v2961
      %v2993 = vmul.f32 %v2936, %v2961
      %v2994 = vmul.f32 %v2941, %v2961
      %v2995 = vmul.f32 %v2946, %v2961
      %v2996 = vmul.f32 %v2951, %v2961
      %v2997 = vmul.f32 %v2956, %v2961
      %v2998 = vadd.f32 %v2705, %v2962
      %v2999 = vadd.f32 %v2706, %v2963
      %v3000 = vadd.f32 %v2707, %v2964
      %v3001 = vadd.f32 %v2708, %v2965
      %v3002 = vadd.f32 %v2709, %v2966
      %v3003 = vadd.f32 %v2710, %v2967
      %v3004 = vadd.f32 %v2711, %v2968
      %v3005 = vadd.f32 %v2712, %v2969
      %v3006 = vadd.f32 %v2713, %v2970
      %v3007 = vadd.f32 %v2714, %v2971
      %v3008 = vadd.f32 %v2715, %v2972
      %v3009 = vadd.f32 %v2716, %v2973
      %v3010 = vadd.f32 %v2717, %v2974
      %v3011 = vadd.f32 %v2718, %v2975
      %v3012 = vadd.f32 %v2719, %v2976
      %v3013 = vadd.f32 %v2720, %v2977
      %v3014 = vadd.f32 %v2721, %v2978
      %v3015 = vadd.f32 %v2722, %v2979
      %v3016 = vadd.f32 %v2723, %v2980
      %v3017 = vadd.f32 %v2724, %v2981
      %v3018 = vadd.f32 %v2725, %v2982
      %v3019 = vadd.f32 %v2726, %v2983
      %v3020 = vadd.f32 %v2727, %v2984
      %v3021 = vadd.f32 %v2728, %v2985
      %v3022 = vadd.f32 %v2729, %v2986
      %v3023 = vadd.f32 %v2730, %v2987
      %v3024 = vadd.f32 %v2731, %v2988
      %v3025 = vadd.f32 %v2732, %v2989
      %v3026 = vadd.f32 %v2733, %v2990
      %v3027 = vadd.f32 %v2734, %v2991
      %v3028 = vadd.f32 %v2735, %v2992
      %v3029 = vadd.f32 %v2736, %v2993
      %v3030 = vadd.f32 %v2737, %v2994
      %v3031 = vadd.f32 %v2738, %v2995
      %v3032 = vadd.f32 %v2739, %v2996
      %v3033 = vadd.f32 %v2740, %v2997
      %v3034 = vld [vmem:[%s2] sm:$0x1]
      %v3036 = vlaneseq
      %v3037 = vshrl.u32 %v3036, 7
      %v3038 = vsub.s32 0, %v3037
      %v3039 = vrot.slane %v3034, %v3038
      %v3041 = vadd.f32 %v2998, %v3039
      %v3042 = vadd.f32 %v2999, %v3039
      %v3043 = vadd.f32 %v3000, %v3039
      %v3044 = vadd.f32 %v3001, %v3039
      %v3045 = vadd.f32 %v3002, %v3039
      %v3046 = vadd.f32 %v3003, %v3039
      %v3047 = vadd.f32 %v3004, %v3039
      %v3048 = vadd.f32 %v3005, %v3039
      %v3049 = vadd.f32 %v3006, %v3039
      %v3050 = vadd.f32 %v3007, %v3039
      %v3051 = vadd.f32 %v3008, %v3039
      %v3052 = vadd.f32 %v3009, %v3039
      %v3053 = vadd.f32 %v3010, %v3039
      %v3054 = vadd.f32 %v3011, %v3039
      %v3055 = vadd.f32 %v3012, %v3039
      %v3056 = vadd.f32 %v3013, %v3039
      %v3057 = vadd.f32 %v3014, %v3039
      %v3058 = vadd.f32 %v3015, %v3039
      %v3059 = vadd.f32 %v3016, %v3039
      %v3060 = vadd.f32 %v3017, %v3039
      %v3061 = vadd.f32 %v3018, %v3039
      %v3062 = vadd.f32 %v3019, %v3039
      %v3063 = vadd.f32 %v3020, %v3039
      %v3064 = vadd.f32 %v3021, %v3039
      %v3065 = vadd.f32 %v3022, %v3039
      %v3066 = vadd.f32 %v3023, %v3039
      %v3067 = vadd.f32 %v3024, %v3039
      %v3068 = vadd.f32 %v3025, %v3039
      %v3069 = vadd.f32 %v3026, %v3039
      %v3070 = vadd.f32 %v3027, %v3039
      %v3071 = vadd.f32 %v3028, %v3039
      %v3072 = vadd.f32 %v3029, %v3039
      %v3073 = vadd.f32 %v3030, %v3039
      %v3074 = vadd.f32 %v3031, %v3039
      %v3075 = vadd.f32 %v3032, %v3039
      %v3076 = vadd.f32 %v3033, %v3039
      %vm3077 = vcmp.ge.f32.partialorder %v3041, 0.0
      %vm3078 = vcmp.ge.f32.partialorder %v3042, 0.0
      %vm3079 = vcmp.ge.f32.partialorder %v3043, 0.0
      %vm3080 = vcmp.ge.f32.partialorder %v3044, 0.0
      %vm3081 = vcmp.ge.f32.partialorder %v3045, 0.0
      %vm3082 = vcmp.ge.f32.partialorder %v3046, 0.0
      %vm3083 = vcmp.ge.f32.partialorder %v3047, 0.0
      %vm3084 = vcmp.ge.f32.partialorder %v3048, 0.0
      %vm3085 = vcmp.ge.f32.partialorder %v3049, 0.0
      %vm3086 = vcmp.ge.f32.partialorder %v3050, 0.0
      %vm3087 = vcmp.ge.f32.partialorder %v3051, 0.0
      %vm3088 = vcmp.ge.f32.partialorder %v3052, 0.0
      %vm3089 = vcmp.ge.f32.partialorder %v3053, 0.0
      %vm3090 = vcmp.ge.f32.partialorder %v3054, 0.0
      %vm3091 = vcmp.ge.f32.partialorder %v3055, 0.0
      %vm3092 = vcmp.ge.f32.partialorder %v3056, 0.0
      %vm3093 = vcmp.ge.f32.partialorder %v3057, 0.0
      %vm3094 = vcmp.ge.f32.partialorder %v3058, 0.0
      %vm3095 = vcmp.ge.f32.partialorder %v3059, 0.0
      %vm3096 = vcmp.ge.f32.partialorder %v3060, 0.0
      %vm3097 = vcmp.ge.f32.partialorder %v3061, 0.0
      %vm3098 = vcmp.ge.f32.partialorder %v3062, 0.0
      %vm3099 = vcmp.ge.f32.partialorder %v3063, 0.0
      %vm3100 = vcmp.ge.f32.partialorder %v3064, 0.0
      %vm3101 = vcmp.ge.f32.partialorder %v3065, 0.0
      %vm3102 = vcmp.ge.f32.partialorder %v3066, 0.0
      %vm3103 = vcmp.ge.f32.partialorder %v3067, 0.0
      %vm3104 = vcmp.ge.f32.partialorder %v3068, 0.0
      %vm3105 = vcmp.ge.f32.partialorder %v3069, 0.0
      %vm3106 = vcmp.ge.f32.partialorder %v3070, 0.0
      %vm3107 = vcmp.ge.f32.partialorder %v3071, 0.0
      %vm3108 = vcmp.ge.f32.partialorder %v3072, 0.0
      %vm3109 = vcmp.ge.f32.partialorder %v3073, 0.0
      %vm3110 = vcmp.ge.f32.partialorder %v3074, 0.0
      %vm3111 = vcmp.ge.f32.partialorder %v3075, 0.0
      %vm3112 = vcmp.ge.f32.partialorder %v3076, 0.0
      %v3113 = vmul.f32 %v3041, 0.01
      %v3114 = vmul.f32 %v3042, 0.01
      %v3115 = vmul.f32 %v3043, 0.01
      %v3116 = vmul.f32 %v3044, 0.01
      %v3117 = vmul.f32 %v3045, 0.01
      %v3118 = vmul.f32 %v3046, 0.01
      %v3119 = vmul.f32 %v3047, 0.01
      %v3120 = vmul.f32 %v3048, 0.01
      %v3121 = vmul.f32 %v3049, 0.01
      %v3122 = vmul.f32 %v3050, 0.01
      %v3123 = vmul.f32 %v3051, 0.01
      %v3124 = vmul.f32 %v3052, 0.01
      %v3125 = vmul.f32 %v3053, 0.01
      %v3126 = vmul.f32 %v3054, 0.01
      %v3127 = vmul.f32 %v3055, 0.01
      %v3128 = vmul.f32 %v3056, 0.01
      %v3129 = vmul.f32 %v3057, 0.01
      %v3130 = vmul.f32 %v3058, 0.01
      %v3131 = vmul.f32 %v3059, 0.01
      %v3132 = vmul.f32 %v3060, 0.01
      %v3133 = vmul.f32 %v3061, 0.01
      %v3134 = vmul.f32 %v3062, 0.01
      %v3135 = vmul.f32 %v3063, 0.01
      %v3136 = vmul.f32 %v3064, 0.01
      %v3137 = vmul.f32 %v3065, 0.01
      %v3138 = vmul.f32 %v3066, 0.01
      %v3139 = vmul.f32 %v3067, 0.01
      %v3140 = vmul.f32 %v3068, 0.01
      %v3141 = vmul.f32 %v3069, 0.01
      %v3142 = vmul.f32 %v3070, 0.01
      %v3143 = vmul.f32 %v3071, 0.01
      %v3144 = vmul.f32 %v3072, 0.01
      %v3145 = vmul.f32 %v3073, 0.01
      %v3146 = vmul.f32 %v3074, 0.01
      %v3147 = vmul.f32 %v3075, 0.01
      %v3148 = vmul.f32 %v3076, 0.01
      %v3149 = vsel %vm3077, %v3041, %v3113
      %v3150 = vsel %vm3078, %v3042, %v3114
      %v3151 = vsel %vm3079, %v3043, %v3115
      %v3152 = vsel %vm3080, %v3044, %v3116
      %v3153 = vsel %vm3081, %v3045, %v3117
      %v3154 = vsel %vm3082, %v3046, %v3118
      %v3155 = vsel %vm3083, %v3047, %v3119
      %v3156 = vsel %vm3084, %v3048, %v3120
      %v3157 = vsel %vm3085, %v3049, %v3121
      %v3158 = vsel %vm3086, %v3050, %v3122
      %v3159 = vsel %vm3087, %v3051, %v3123
      %v3160 = vsel %vm3088, %v3052, %v3124
      %v3161 = vsel %vm3089, %v3053, %v3125
      %v3162 = vsel %vm3090, %v3054, %v3126
      %v3163 = vsel %vm3091, %v3055, %v3127
      %v3164 = vsel %vm3092, %v3056, %v3128
      %v3165 = vsel %vm3093, %v3057, %v3129
      %v3166 = vsel %vm3094, %v3058, %v3130
      %v3167 = vsel %vm3095, %v3059, %v3131
      %v3168 = vsel %vm3096, %v3060, %v3132
      %v3169 = vsel %vm3097, %v3061, %v3133
      %v3170 = vsel %vm3098, %v3062, %v3134
      %v3171 = vsel %vm3099, %v3063, %v3135
      %v3172 = vsel %vm3100, %v3064, %v3136
      %v3173 = vsel %vm3101, %v3065, %v3137
      %v3174 = vsel %vm3102, %v3066, %v3138
      %v3175 = vsel %vm3103, %v3067, %v3139
      %v3176 = vsel %vm3104, %v3068, %v3140
      %v3177 = vsel %vm3105, %v3069, %v3141
      %v3178 = vsel %vm3106, %v3070, %v3142
      %v3179 = vsel %vm3107, %v3071, %v3143
      %v3180 = vsel %vm3108, %v3072, %v3144
      %v3181 = vsel %vm3109, %v3073, %v3145
      %v3182 = vsel %vm3110, %v3074, %v3146
      %v3183 = vsel %vm3111, %v3075, %v3147
      %v3184 = vsel %vm3112, %v3076, %v3148
      %3185 = vst.msk [vmem:[#allocation2 + $0x13] sm:$0xff] %vm334, %v3149
      %3186 = vst.msk [vmem:[#allocation2 + $0x1b] sm:$0xff] %vm334, %v3150
      %vm3187 = vcmask 261122
      %3188 = vst.msk [vmem:[#allocation2 + $0x23] sm:$0xfc] %vm3187, %v3151
      %3189 = vst.msk [vmem:[#allocation2 + $0x2b] sm:$0xff] %vm334, %v3152
      %vm3190 = vcmask 254976
      %3191 = vst.msk [vmem:[#allocation2 + $0x33] sm:$0x3] %vm3190, %v3153
      %vm3192 = vcmask 261124
      %3193 = vst.msk [vmem:[#allocation2 + $0x33] sm:$0xf0] %vm3192, %v3153
      %3194 = vst.msk [vmem:[#allocation2 + $0x3b] sm:$0xff] %vm334, %v3154
      %3195 = vst.msk [vmem:[#allocation2 + $0x43] sm:$0xf] %vm375, %v3155
      %vm3196 = vcmask 261126
      %3197 = vst.msk [vmem:[#allocation2 + $0x43] sm:$0xc0] %vm3196, %v3155
      %3198 = vst.msk [vmem:[#allocation2 + $0x4b] sm:$0xff] %vm334, %v3156
      %vm3199 = vcmask 259072
      %3200 = vst.msk [vmem:[#allocation2 + $0x53] sm:$0x3f] %vm3199, %v3157
      %3201 = vst.msk [vmem:[#allocation2 + $0x5b] sm:$0xff] %vm334, %v3158
      %3202 = vst.msk [vmem:[#allocation2 + $0x63] sm:$0xff] %vm334, %v3159
      %3203 = vst.msk [vmem:[#allocation2 + $0x6b] sm:$0xfc] %vm3187, %v3160
      %3204 = vst.msk [vmem:[#allocation2 + $0x73] sm:$0xff] %vm334, %v3161
      %3205 = vst.msk [vmem:[#allocation2 + $0x7b] sm:$0x3] %vm3190, %v3162
      %3206 = vst.msk [vmem:[#allocation2 + $0x7b] sm:$0xf0] %vm3192, %v3162
      %3207 = vst.msk [vmem:[#allocation2 + $0x83] sm:$0xff] %vm334, %v3163
      %3208 = vst.msk [vmem:[#allocation2 + $0x8b] sm:$0xf] %vm375, %v3164
      %3209 = vst.msk [vmem:[#allocation2 + $0x8b] sm:$0xc0] %vm3196, %v3164
      %3210 = vst.msk [vmem:[#allocation2 + $0x93] sm:$0xff] %vm334, %v3165
      %3211 = vst.msk [vmem:[#allocation2 + $0x9b] sm:$0x3f] %vm3199, %v3166
      %3212 = vst.msk [vmem:[#allocation2 + $0xa3] sm:$0xff] %vm334, %v3167
      %3213 = vst.msk [vmem:[#allocation2 + $0xab] sm:$0xff] %vm334, %v3168
      %3214 = vst.msk [vmem:[#allocation2 + $0xb3] sm:$0xfc] %vm3187, %v3169
      %3215 = vst.msk [vmem:[#allocation2 + $0xbb] sm:$0xff] %vm334, %v3170
      %3216 = vst.msk [vmem:[#allocation2 + $0xc3] sm:$0x3] %vm3190, %v3171
      %3217 = vst.msk [vmem:[#allocation2 + $0xc3] sm:$0xf0] %vm3192, %v3171
      %3218 = vst.msk [vmem:[#allocation2 + $0xcb] sm:$0xff] %vm334, %v3172
      %3219 = vst.msk [vmem:[#allocation2 + $0xd3] sm:$0xf] %vm375, %v3173
      %3220 = vst.msk [vmem:[#allocation2 + $0xd3] sm:$0xc0] %vm3196, %v3173
      %3221 = vst.msk [vmem:[#allocation2 + $0xdb] sm:$0xff] %vm334, %v3174
      %3222 = vst.msk [vmem:[#allocation2 + $0xe3] sm:$0x3f] %vm3199, %v3175
      %3223 = vst.msk [vmem:[#allocation2 + $0xeb] sm:$0xff] %vm334, %v3176
      %3224 = vst.msk [vmem:[#allocation2 + $0xf3] sm:$0xff] %vm334, %v3177
      %3225 = vst.msk [vmem:[#allocation2 + $0xfb] sm:$0xfc] %vm3187, %v3178
      %3226 = vst.msk [vmem:[#allocation2 + $0x103] sm:$0xff] %vm334, %v3179
      %3227 = vst.msk [vmem:[#allocation2 + $0x10b] sm:$0x3] %vm3190, %v3180
      %3228 = vst.msk [vmem:[#allocation2 + $0x10b] sm:$0xf0] %vm3192, %v3180
      %3229 = vst.msk [vmem:[#allocation2 + $0x113] sm:$0xff] %vm334, %v3181
      %3230 = vst.msk [vmem:[#allocation2 + $0x11b] sm:$0xf] %vm375, %v3182
      %3231 = vst.msk [vmem:[#allocation2 + $0x11b] sm:$0xc0] %vm3196, %v3182
      %3232 = vst.msk [vmem:[#allocation2 + $0x123] sm:$0xff] %vm334, %v3183
      %3233 = vst.msk [vmem:[#allocation2 + $0x12b] sm:$0x3f] %vm3199, %v3184
      %v3234 = vld [vmem:[#allocation2] ss:$2 sm:$0xff]
      %s3235 = scalar_lea.vmem [#allocation2], 16
      %v3236 = vld [vmem:[%s3235] ss:$2 sm:$0xff]
      %s3237 = scalar_lea.vmem [#allocation2], 32
      %v3238 = vld [vmem:[%s3237] ss:$2 sm:$0xff]
      %s3239 = scalar_lea.vmem [#allocation2], 48
      %v3240 = vld [vmem:[%s3239] ss:$2 sm:$0xff]
      %s3241 = scalar_lea.vmem [#allocation2], 64
      %v3242 = vld [vmem:[%s3241] ss:$2 sm:$0xff]
      %s3243 = scalar_lea.vmem [#allocation2], 80
      %v3244 = vld [vmem:[%s3243] ss:$2 sm:$0xff]
      %s3245 = scalar_lea.vmem [#allocation2], 96
      %v3246 = vld [vmem:[%s3245] ss:$2 sm:$0xff]
      %s3247 = scalar_lea.vmem [#allocation2], 112
      %v3248 = vld [vmem:[%s3247] ss:$2 sm:$0xff]
      %s3249 = scalar_lea.vmem [#allocation2], 128
      %v3250 = vld [vmem:[%s3249] ss:$2 sm:$0xff]
      %s3251 = scalar_lea.vmem [#allocation2], 144
      %v3252 = vld [vmem:[%s3251] ss:$2 sm:$0xff]
      %s3253 = scalar_lea.vmem [#allocation2], 160
      %v3254 = vld [vmem:[%s3253] ss:$2 sm:$0xff]
      %s3255 = scalar_lea.vmem [#allocation2], 176
      %v3256 = vld [vmem:[%s3255] ss:$2 sm:$0xff]
      %s3257 = scalar_lea.vmem [#allocation2], 192
      %v3258 = vld [vmem:[%s3257] ss:$2 sm:$0xff]
      %s3259 = scalar_lea.vmem [#allocation2], 208
      %v3260 = vld [vmem:[%s3259] ss:$2 sm:$0xff]
      %s3261 = scalar_lea.vmem [#allocation2], 224
      %v3262 = vld [vmem:[%s3261] ss:$2 sm:$0xff]
      %s3263 = scalar_lea.vmem [#allocation2], 240
      %v3264 = vld [vmem:[%s3263] ss:$2 sm:$0xff]
      %s3265 = scalar_lea.vmem [#allocation2], 256
      %v3266 = vld [vmem:[%s3265] ss:$2 sm:$0x3f]
      %v3267 = vpack.c.bf16 %v3236, %v3234
      %v3268 = vpack.c.bf16 %v3240, %v3238
      %v3269 = vpack.c.bf16 %v3244, %v3242
      %v3270 = vpack.c.bf16 %v3248, %v3246
      %v3271 = vpack.c.bf16 %v3252, %v3250
      %v3272 = vpack.c.bf16 %v3256, %v3254
      %v3273 = vpack.c.bf16 %v3260, %v3258
      %v3274 = vpack.c.bf16 %v3264, %v3262
      %v3275 = vpack.c.bf16 %v3266, %v3266
      %v3276 = vld [vmem:[%s3] sm:$0xf]
      %v3277 = vld [vmem:[%s3 + $0x4] sm:$0xf]
      %v3278 = vld [vmem:[%s3 + $0x8] sm:$0xf]
      %v3279 = vld [vmem:[%s3 + $0xc] sm:$0xf]
      %s3280 = scalar_lea.vmem [#allocation2], 1
      %v3281 = vld [vmem:[%s3280] ss:$2 sm:$0xff]
      %s3282 = scalar_lea.vmem [#allocation2], 17
      %v3283 = vld [vmem:[%s3282] ss:$2 sm:$0xff]
      %s3284 = scalar_lea.vmem [#allocation2], 33
      %v3285 = vld [vmem:[%s3284] ss:$2 sm:$0xff]
      %s3286 = scalar_lea.vmem [#allocation2], 49
      %v3287 = vld [vmem:[%s3286] ss:$2 sm:$0xff]
      %s3288 = scalar_lea.vmem [#allocation2], 65
      %v3289 = vld [vmem:[%s3288] ss:$2 sm:$0xff]
      %s3290 = scalar_lea.vmem [#allocation2], 81
      %v3291 = vld [vmem:[%s3290] ss:$2 sm:$0xff]
      %s3292 = scalar_lea.vmem [#allocation2], 97
      %v3293 = vld [vmem:[%s3292] ss:$2 sm:$0xff]
      %s3294 = scalar_lea.vmem [#allocation2], 113
      %v3295 = vld [vmem:[%s3294] ss:$2 sm:$0xff]
      %s3296 = scalar_lea.vmem [#allocation2], 129
      %v3297 = vld [vmem:[%s3296] ss:$2 sm:$0xff]
      %s3298 = scalar_lea.vmem [#allocation2], 145
      %v3299 = vld [vmem:[%s3298] ss:$2 sm:$0xff]
      %s3300 = scalar_lea.vmem [#allocation2], 161
      %v3301 = vld [vmem:[%s3300] ss:$2 sm:$0xff]
      %s3302 = scalar_lea.vmem [#allocation2], 177
      %v3303 = vld [vmem:[%s3302] ss:$2 sm:$0xff]
      %s3304 = scalar_lea.vmem [#allocation2], 193
      %v3305 = vld [vmem:[%s3304] ss:$2 sm:$0xff]
      %s3306 = scalar_lea.vmem [#allocation2], 209
      %v3307 = vld [vmem:[%s3306] ss:$2 sm:$0xff]
      %s3308 = scalar_lea.vmem [#allocation2], 225
      %v3309 = vld [vmem:[%s3308] ss:$2 sm:$0xff]
      %s3310 = scalar_lea.vmem [#allocation2], 241
      %v3311 = vld [vmem:[%s3310] ss:$2 sm:$0xff]
      %s3312 = scalar_lea.vmem [#allocation2], 257
      %v3313 = vld [vmem:[%s3312] ss:$2 sm:$0x3f]
      %v3314 = vpack.c.bf16 %v3283, %v3281
      %v3315 = vpack.c.bf16 %v3287, %v3285
      %v3316 = vpack.c.bf16 %v3291, %v3289
      %v3317 = vpack.c.bf16 %v3295, %v3293
      %v3318 = vpack.c.bf16 %v3299, %v3297
      %v3319 = vpack.c.bf16 %v3303, %v3301
      %v3320 = vpack.c.bf16 %v3307, %v3305
      %v3321 = vpack.c.bf16 %v3311, %v3309
      %v3322 = vpack.c.bf16 %v3313, %v3313
      %s3323 = scalar_lea.vmem %s3, 16
      %v3324 = vld [vmem:[%s3323] sm:$0xf]
      %v3325 = vld [vmem:[%s3323 + $0x4] sm:$0xf]
      %v3326 = vld [vmem:[%s3323 + $0x8] sm:$0xf]
      %v3327 = vld [vmem:[%s3323 + $0xc] sm:$0xf]
      %v3332 = vunpack.c.l.b16 %v3324
      %v3333 = vunpack.c.l.b16 %v3325
      %v3334 = vunpack.c.l.b16 %v3326
      %v3335 = vunpack.c.l.b16 %v3327
      %v3336 = vpack.c.b16 %v3333, %v3332
      %v3337 = vpack.c.b16 %v3335, %v3334
      %v3341 = vsel %vm334, %v3314, 0
      %v3344 = vsel %vm334, %v3315, 0
      %v3347 = vsel %vm334, %v3316, 0
      %v3350 = vsel %vm334, %v3317, 0
      %v3353 = vsel %vm334, %v3318, 0
      %v3356 = vsel %vm334, %v3319, 0
      %v3359 = vsel %vm334, %v3320, 0
      %v3362 = vsel %vm334, %v3321, 0
      %v3365 = vsel %vm334, %v3322, 0
      %3367 = vmatprep.subr.bf16.mxu0 0
      %3368 = vmatpush1.bf16.msra.mxu0 %v3336
      %3369 = vmatprep.subr.bf16.mxu0 0
      %3370 = vmatpush1.bf16.msra.mxu0 %v3337
      %3371 = vmatprep.subr.bf16.mxu0 0
      %3372 = vmatpush1.bf16.msra.mxu0 0
      %3373 = vmatprep.subr.bf16.mxu0 0
      %3374 = vmatpush1.bf16.msra.mxu0 0
      %3375 = vmatprep.subr.bf16.mxu0 0
      %3376 = vmatpush1.bf16.msra.mxu0 0
      %3377 = vmatprep.subr.bf16.mxu0 0
      %3378 = vmatpush1.bf16.msra.mxu0 0
      %3379 = vmatprep.subr.bf16.mxu0 0
      %3380 = vmatpush1.bf16.msra.mxu0 0
      %3381 = vmatprep.subr.bf16.mxu0 0
      %3382 = vmatpush1.bf16.msra.mxu0 0
      %3383 = vmatprep.subr.bf16.mxu0 0
      %3384 = vmatpush1.bf16.msra.mxu0 0
      %3385 = vmatprep.subr.bf16.mxu0 0
      %3386 = vmatpush1.bf16.msra.mxu0 0
      %3387 = vmatprep.subr.bf16.mxu0 0
      %3388 = vmatpush1.bf16.msra.mxu0 0
      %3389 = vmatprep.subr.bf16.mxu0 0
      %3390 = vmatpush1.bf16.msra.mxu0 0
      %3391 = vmatprep.subr.bf16.mxu0 0
      %3392 = vmatpush1.bf16.msra.mxu0 0
      %3393 = vmatprep.subr.bf16.mxu0 0
      %3394 = vmatpush1.bf16.msra.mxu0 0
      %3395 = vmatprep.subr.bf16.mxu0 0
      %3396 = vmatpush1.bf16.msra.mxu0 0
      %3397 = vmatprep.subr.bf16.mxu0 0
      %3398 = vmatpush1.bf16.msra.mxu0 0
      %3399 = vmatprep.mubr.bf16.mxu0 0
      %3400 = vmatmul.mubr.bf16.gmra.mrb[0].mxu0 %v3341
      %v3401 = vpop.f32.mrb[0].mxu0
      %v3402 = vadd.f32 0.0, %v3401
      %v3403 = vpop.f32.mrb[0].mxu0
      %v3404 = vpop.f32.mrb[0].mxu0
      %v3405 = vpop.f32.mrb[0].mxu0
      %3406 = vmatprep.mubr.bf16.mxu0 0
      %3407 = vmatmul.mubr.bf16.gmra.mrb[0].mxu0 %v3344
      %v3408 = vpop.f32.mrb[0].mxu0
      %v3409 = vadd.f32 0.0, %v3408
      %v3410 = vpop.f32.mrb[0].mxu0
      %v3411 = vpop.f32.mrb[0].mxu0
      %v3412 = vadd.f32 0.0, %v3411
      %v3413 = vpop.f32.mrb[0].mxu0
      %3414 = vmatprep.mubr.bf16.mxu0 0
      %3415 = vmatmul.mubr.bf16.gmra.mrb[0].mxu0 %v3347
      %v3416 = vpop.f32.mrb[0].mxu0
      %v3417 = vadd.f32 0.0, %v3416
      %v3418 = vpop.f32.mrb[0].mxu0
      %v3419 = vpop.f32.mrb[0].mxu0
      %v3420 = vadd.f32 0.0, %v3419
      %v3421 = vpop.f32.mrb[0].mxu0
      %3422 = vmatprep.mubr.bf16.mxu0 0
      %3423 = vmatmul.mubr.bf16.gmra.mrb[0].mxu0 %v3350
      %v3424 = vpop.f32.mrb[0].mxu0
      %v3425 = vadd.f32 0.0, %v3424
      %v3426 = vpop.f32.mrb[0].mxu0
      %v3427 = vpop.f32.mrb[0].mxu0
      %v3428 = vadd.f32 0.0, %v3427
      %v3429 = vpop.f32.mrb[0].mxu0
      %3430 = vmatprep.mubr.bf16.mxu0 0
      %3431 = vmatmul.mubr.bf16.gmra.mrb[0].mxu0 %v3353
      %v3432 = vpop.f32.mrb[0].mxu0
      %v3433 = vpop.f32.mrb[0].mxu0
      %v3434 = vpop.f32.mrb[0].mxu0
      %v3435 = vadd.f32 0.0, %v3434
      %v3436 = vpop.f32.mrb[0].mxu0
      %3437 = vmatprep.mubr.bf16.mxu0 0
      %3438 = vmatmul.mubr.bf16.gmra.mrb[0].mxu0 %v3356
      %v3439 = vpop.f32.mrb[0].mxu0
      %v3440 = vpop.f32.mrb[0].mxu0
      %v3441 = vpop.f32.mrb[0].mxu0
      %v3442 = vadd.f32 0.0, %v3441
      %v3443 = vpop.f32.mrb[0].mxu0
      %3444 = vmatprep.mubr.bf16.mxu0 0
      %3445 = vmatmul.mubr.bf16.gmra.mrb[0].mxu0 %v3359
      %v3446 = vpop.f32.mrb[0].mxu0
      %v3447 = vadd.f32 0.0, %v3446
      %v3448 = vpop.f32.mrb[0].mxu0
      %v3449 = vpop.f32.mrb[0].mxu0
      %v3450 = vadd.f32 0.0, %v3449
      %v3451 = vpop.f32.mrb[0].mxu0
      %3452 = vmatprep.mubr.bf16.mxu0 0
      %3453 = vmatmul.mubr.bf16.gmra.mrb[0].mxu0 %v3362
      %v3454 = vpop.f32.mrb[0].mxu0
      %v3455 = vadd.f32 0.0, %v3454
      %v3456 = vpop.f32.mrb[0].mxu0
      %v3457 = vpop.f32.mrb[0].mxu0
      %v3458 = vadd.f32 0.0, %v3457
      %v3459 = vpop.f32.mrb[0].mxu0
      %3460 = vmatprep.mubr.bf16.mxu0 0
      %3461 = vmatmul.mubr.bf16.gmra.mrb[0].mxu0 %v3365
      %v3462 = vpop.f32.mrb[0].mxu0
      %v3463 = vadd.f32 0.0, %v3462
      %v3464 = vpop.f32.mrb[0].mxu0
      %v3465 = vpop.f32.mrb[0].mxu0
      %v3466 = vpop.f32.mrb[0].mxu0
      %3467 = vdwg.mxu0
      %v3472 = vunpack.c.l.b16 %v3276
      %v3473 = vunpack.c.l.b16 %v3277
      %v3474 = vunpack.c.l.b16 %v3278
      %v3475 = vunpack.c.l.b16 %v3279
      %v3476 = vpack.c.b16 %v3473, %v3472
      %v3477 = vpack.c.b16 %v3475, %v3474
      %v3481 = vsel %vm334, %v3267, 0
      %v3484 = vsel %vm334, %v3268, 0
      %v3487 = vsel %vm334, %v3269, 0
      %v3490 = vsel %vm334, %v3270, 0
      %v3493 = vsel %vm334, %v3271, 0
      %v3496 = vsel %vm334, %v3272, 0
      %v3499 = vsel %vm334, %v3273, 0
      %v3502 = vsel %vm334, %v3274, 0
      %v3505 = vsel %vm334, %v3275, 0
      %3507 = vmatprep.subr.bf16.mxu0 0
      %3508 = vmatpush1.bf16.msra.mxu0 %v3476
      %3509 = vmatprep.subr.bf16.mxu0 0
      %3510 = vmatpush1.bf16.msra.mxu0 %v3477
      %3511 = vmatprep.subr.bf16.mxu0 0
      %3512 = vmatpush1.bf16.msra.mxu0 0
      %3513 = vmatprep.subr.bf16.mxu0 0
      %3514 = vmatpush1.bf16.msra.mxu0 0
      %3515 = vmatprep.subr.bf16.mxu0 0
      %3516 = vmatpush1.bf16.msra.mxu0 0
      %3517 = vmatprep.subr.bf16.mxu0 0
      %3518 = vmatpush1.bf16.msra.mxu0 0
      %3519 = vmatprep.subr.bf16.mxu0 0
      %3520 = vmatpush1.bf16.msra.mxu0 0
      %3521 = vmatprep.subr.bf16.mxu0 0
      %3522 = vmatpush1.bf16.msra.mxu0 0
      %3523 = vmatprep.subr.bf16.mxu0 0
      %3524 = vmatpush1.bf16.msra.mxu0 0
      %3525 = vmatprep.subr.bf16.mxu0 0
      %3526 = vmatpush1.bf16.msra.mxu0 0
      %3527 = vmatprep.subr.bf16.mxu0 0
      %3528 = vmatpush1.bf16.msra.mxu0 0
      %3529 = vmatprep.subr.bf16.mxu0 0
      %3530 = vmatpush1.bf16.msra.mxu0 0
      %3531 = vmatprep.subr.bf16.mxu0 0
      %3532 = vmatpush1.bf16.msra.mxu0 0
      %3533 = vmatprep.subr.bf16.mxu0 0
      %3534 = vmatpush1.bf16.msra.mxu0 0
      %3535 = vmatprep.subr.bf16.mxu0 0
      %3536 = vmatpush1.bf16.msra.mxu0 0
      %3537 = vmatprep.subr.bf16.mxu0 0
      %3538 = vmatpush1.bf16.msra.mxu0 0
      %3539 = vmatprep.mubr.bf16.mxu0 0
      %3540 = vmatmul.mubr.bf16.gmra.mrb[0].mxu0 %v3481
      %v3541 = vpop.f32.mrb[0].mxu0
      %v3542 = vadd.f32 %v3402, %v3541
      %v3543 = vpop.f32.mrb[0].mxu0
      %v3544 = vpop.f32.mrb[0].mxu0
      %v3545 = vpop.f32.mrb[0].mxu0
      %3546 = vmatprep.mubr.bf16.mxu0 0
      %3547 = vmatmul.mubr.bf16.gmra.mrb[0].mxu0 %v3484
      %v3548 = vpop.f32.mrb[0].mxu0
      %v3549 = vadd.f32 %v3409, %v3548
      %v3550 = vpop.f32.mrb[0].mxu0
      %v3551 = vpop.f32.mrb[0].mxu0
      %v3552 = vadd.f32 %v3412, %v3551
      %v3553 = vpop.f32.mrb[0].mxu0
      %3554 = vmatprep.mubr.bf16.mxu0 0
      %3555 = vmatmul.mubr.bf16.gmra.mrb[0].mxu0 %v3487
      %v3556 = vpop.f32.mrb[0].mxu0
      %v3557 = vadd.f32 %v3417, %v3556
      %v3558 = vpop.f32.mrb[0].mxu0
      %v3559 = vpop.f32.mrb[0].mxu0
      %v3560 = vadd.f32 %v3420, %v3559
      %v3561 = vpop.f32.mrb[0].mxu0
      %3562 = vmatprep.mubr.bf16.mxu0 0
      %3563 = vmatmul.mubr.bf16.gmra.mrb[0].mxu0 %v3490
      %v3564 = vpop.f32.mrb[0].mxu0
      %v3565 = vadd.f32 %v3425, %v3564
      %v3566 = vpop.f32.mrb[0].mxu0
      %v3567 = vpop.f32.mrb[0].mxu0
      %v3568 = vadd.f32 %v3428, %v3567
      %v3569 = vpop.f32.mrb[0].mxu0
      %3570 = vmatprep.mubr.bf16.mxu0 0
      %3571 = vmatmul.mubr.bf16.gmra.mrb[0].mxu0 %v3493
      %v3572 = vpop.f32.mrb[0].mxu0
      %v3573 = vpop.f32.mrb[0].mxu0
      %v3574 = vpop.f32.mrb[0].mxu0
      %v3575 = vadd.f32 %v3435, %v3574
      %v3576 = vpop.f32.mrb[0].mxu0
      %3577 = vmatprep.mubr.bf16.mxu0 0
      %3578 = vmatmul.mubr.bf16.gmra.mrb[0].mxu0 %v3496
      %v3579 = vpop.f32.mrb[0].mxu0
      %v3580 = vpop.f32.mrb[0].mxu0
      %v3581 = vpop.f32.mrb[0].mxu0
      %v3582 = vadd.f32 %v3442, %v3581
      %v3583 = vpop.f32.mrb[0].mxu0
      %3584 = vmatprep.mubr.bf16.mxu0 0
      %3585 = vmatmul.mubr.bf16.gmra.mrb[0].mxu0 %v3499
      %v3586 = vpop.f32.mrb[0].mxu0
      %v3587 = vadd.f32 %v3447, %v3586
      %v3588 = vpop.f32.mrb[0].mxu0
      %v3589 = vpop.f32.mrb[0].mxu0
      %v3590 = vadd.f32 %v3450, %v3589
      %v3591 = vpop.f32.mrb[0].mxu0
      %3592 = vmatprep.mubr.bf16.mxu0 0
      %3593 = vmatmul.mubr.bf16.gmra.mrb[0].mxu0 %v3502
      %v3594 = vpop.f32.mrb[0].mxu0
      %v3595 = vadd.f32 %v3455, %v3594
      %v3596 = vpop.f32.mrb[0].mxu0
      %v3597 = vpop.f32.mrb[0].mxu0
      %v3598 = vadd.f32 %v3458, %v3597
      %v3599 = vpop.f32.mrb[0].mxu0
      %3600 = vmatprep.mubr.bf16.mxu0 0
      %3601 = vmatmul.mubr.bf16.gmra.mrb[0].mxu0 %v3505
      %v3602 = vpop.f32.mrb[0].mxu0
      %v3603 = vadd.f32 %v3463, %v3602
      %v3604 = vpop.f32.mrb[0].mxu0
      %v3605 = vpop.f32.mrb[0].mxu0
      %v3606 = vpop.f32.mrb[0].mxu0
      %3607 = vdwg.mxu0
      %s3608 = scalar_lea.vmem [#allocation2], 2
      %v3609 = vld [vmem:[%s3608] ss:$2 sm:$0xff]
      %s3610 = scalar_lea.vmem [#allocation2], 18
      %v3611 = vld [vmem:[%s3610] ss:$2 sm:$0xff]
      %s3612 = scalar_lea.vmem [#allocation2], 34
      %v3613 = vld [vmem:[%s3612] ss:$2 sm:$0xff]
      %s3614 = scalar_lea.vmem [#allocation2], 50
      %v3615 = vld [vmem:[%s3614] ss:$2 sm:$0xff]
      %s3616 = scalar_lea.vmem [#allocation2], 66
      %v3617 = vld [vmem:[%s3616] ss:$2 sm:$0xff]
      %s3618 = scalar_lea.vmem [#allocation2], 82
      %v3619 = vld [vmem:[%s3618] ss:$2 sm:$0xff]
      %s3620 = scalar_lea.vmem [#allocation2], 98
      %v3621 = vld [vmem:[%s3620] ss:$2 sm:$0xff]
      %s3622 = scalar_lea.vmem [#allocation2], 114
      %v3623 = vld [vmem:[%s3622] ss:$2 sm:$0xff]
      %s3624 = scalar_lea.vmem [#allocation2], 130
      %v3625 = vld [vmem:[%s3624] ss:$2 sm:$0xff]
      %s3626 = scalar_lea.vmem [#allocation2], 146
      %v3627 = vld [vmem:[%s3626] ss:$2 sm:$0xff]
      %s3628 = scalar_lea.vmem [#allocation2], 162
      %v3629 = vld [vmem:[%s3628] ss:$2 sm:$0xff]
      %s3630 = scalar_lea.vmem [#allocation2], 178
      %v3631 = vld [vmem:[%s3630] ss:$2 sm:$0xff]
      %s3632 = scalar_lea.vmem [#allocation2], 194
      %v3633 = vld [vmem:[%s3632] ss:$2 sm:$0xff]
      %s3634 = scalar_lea.vmem [#allocation2], 210
      %v3635 = vld [vmem:[%s3634] ss:$2 sm:$0xff]
      %s3636 = scalar_lea.vmem [#allocation2], 226
      %v3637 = vld [vmem:[%s3636] ss:$2 sm:$0xff]
      %s3638 = scalar_lea.vmem [#allocation2], 242
      %v3639 = vld [vmem:[%s3638] ss:$2 sm:$0xff]
      %s3640 = scalar_lea.vmem [#allocation2], 258
      %v3641 = vld [vmem:[%s3640] ss:$2 sm:$0x3f]
      %v3642 = vpack.c.bf16 %v3611, %v3609
      %v3643 = vpack.c.bf16 %v3615, %v3613
      %v3644 = vpack.c.bf16 %v3619, %v3617
      %v3645 = vpack.c.bf16 %v3623, %v3621
      %v3646 = vpack.c.bf16 %v3627, %v3625
      %v3647 = vpack.c.bf16 %v3631, %v3629
      %v3648 = vpack.c.bf16 %v3635, %v3633
      %v3649 = vpack.c.bf16 %v3639, %v3637
      %v3650 = vpack.c.bf16 %v3641, %v3641
      %s3651 = scalar_lea.vmem %s3, 32
      %v3652 = vld [vmem:[%s3651] sm:$0xf]
      %v3653 = vld [vmem:[%s3651 + $0x4] sm:$0xf]
      %v3654 = vld [vmem:[%s3651 + $0x8] sm:$0xf]
      %v3655 = vld [vmem:[%s3651 + $0xc] sm:$0xf]
      %v3660 = vunpack.c.l.b16 %v3652
      %v3661 = vunpack.c.l.b16 %v3653
      %v3662 = vunpack.c.l.b16 %v3654
      %v3663 = vunpack.c.l.b16 %v3655
      %v3664 = vpack.c.b16 %v3661, %v3660
      %v3665 = vpack.c.b16 %v3663, %v3662
      %v3669 = vsel %vm334, %v3642, 0
      %v3672 = vsel %vm334, %v3643, 0
      %v3675 = vsel %vm334, %v3644, 0
      %v3678 = vsel %vm334, %v3645, 0
      %v3681 = vsel %vm334, %v3646, 0
      %v3684 = vsel %vm334, %v3647, 0
      %v3687 = vsel %vm334, %v3648, 0
      %v3690 = vsel %vm334, %v3649, 0
      %v3693 = vsel %vm334, %v3650, 0
      %3695 = vmatprep.subr.bf16.mxu0 0
      %3696 = vmatpush1.bf16.msra.mxu0 %v3664
      %3697 = vmatprep.subr.bf16.mxu0 0
      %3698 = vmatpush1.bf16.msra.mxu0 %v3665
      %3699 = vmatprep.subr.bf16.mxu0 0
      %3700 = vmatpush1.bf16.msra.mxu0 0
      %3701 = vmatprep.subr.bf16.mxu0 0
      %3702 = vmatpush1.bf16.msra.mxu0 0
      %3703 = vmatprep.subr.bf16.mxu0 0
      %3704 = vmatpush1.bf16.msra.mxu0 0
      %3705 = vmatprep.subr.bf16.mxu0 0
      %3706 = vmatpush1.bf16.msra.mxu0 0
      %3707 = vmatprep.subr.bf16.mxu0 0
      %3708 = vmatpush1.bf16.msra.mxu0 0
      %3709 = vmatprep.subr.bf16.mxu0 0
      %3710 = vmatpush1.bf16.msra.mxu0 0
      %3711 = vmatprep.subr.bf16.mxu0 0
      %3712 = vmatpush1.bf16.msra.mxu0 0
      %3713 = vmatprep.subr.bf16.mxu0 0
      %3714 = vmatpush1.bf16.msra.mxu0 0
      %3715 = vmatprep.subr.bf16.mxu0 0
      %3716 = vmatpush1.bf16.msra.mxu0 0
      %3717 = vmatprep.subr.bf16.mxu0 0
      %3718 = vmatpush1.bf16.msra.mxu0 0
      %3719 = vmatprep.subr.bf16.mxu0 0
      %3720 = vmatpush1.bf16.msra.mxu0 0
      %3721 = vmatprep.subr.bf16.mxu0 0
      %3722 = vmatpush1.bf16.msra.mxu0 0
      %3723 = vmatprep.subr.bf16.mxu0 0
      %3724 = vmatpush1.bf16.msra.mxu0 0
      %3725 = vmatprep.subr.bf16.mxu0 0
      %3726 = vmatpush1.bf16.msra.mxu0 0
      %3727 = vmatprep.mubr.bf16.mxu0 0
      %3728 = vmatmul.mubr.bf16.gmra.mrb[0].mxu0 %v3669
      %v3729 = vpop.f32.mrb[0].mxu0
      %v3730 = vadd.f32 0.0, %v3729
      %v3731 = vpop.f32.mrb[0].mxu0
      %v3732 = vpop.f32.mrb[0].mxu0
      %v3733 = vpop.f32.mrb[0].mxu0
      %3734 = vmatprep.mubr.bf16.mxu0 0
      %3735 = vmatmul.mubr.bf16.gmra.mrb[0].mxu0 %v3672
      %v3736 = vpop.f32.mrb[0].mxu0
      %v3737 = vadd.f32 0.0, %v3736
      %v3738 = vpop.f32.mrb[0].mxu0
      %v3739 = vpop.f32.mrb[0].mxu0
      %v3740 = vadd.f32 0.0, %v3739
      %v3741 = vpop.f32.mrb[0].mxu0
      %3742 = vmatprep.mubr.bf16.mxu0 0
      %3743 = vmatmul.mubr.bf16.gmra.mrb[0].mxu0 %v3675
      %v3744 = vpop.f32.mrb[0].mxu0
      %v3745 = vadd.f32 0.0, %v3744
      %v3746 = vpop.f32.mrb[0].mxu0
      %v3747 = vpop.f32.mrb[0].mxu0
      %v3748 = vadd.f32 0.0, %v3747
      %v3749 = vpop.f32.mrb[0].mxu0
      %3750 = vmatprep.mubr.bf16.mxu0 0
      %3751 = vmatmul.mubr.bf16.gmra.mrb[0].mxu0 %v3678
      %v3752 = vpop.f32.mrb[0].mxu0
      %v3753 = vadd.f32 0.0, %v3752
      %v3754 = vpop.f32.mrb[0].mxu0
      %v3755 = vpop.f32.mrb[0].mxu0
      %v3756 = vadd.f32 0.0, %v3755
      %v3757 = vpop.f32.mrb[0].mxu0
      %3758 = vmatprep.mubr.bf16.mxu0 0
      %3759 = vmatmul.mubr.bf16.gmra.mrb[0].mxu0 %v3681
      %v3760 = vpop.f32.mrb[0].mxu0
      %v3761 = vpop.f32.mrb[0].mxu0
      %v3762 = vpop.f32.mrb[0].mxu0
      %v3763 = vadd.f32 0.0, %v3762
      %v3764 = vpop.f32.mrb[0].mxu0
      %3765 = vmatprep.mubr.bf16.mxu0 0
      %3766 = vmatmul.mubr.bf16.gmra.mrb[0].mxu0 %v3684
      %v3767 = vpop.f32.mrb[0].mxu0
      %v3768 = vpop.f32.mrb[0].mxu0
      %v3769 = vpop.f32.mrb[0].mxu0
      %v3770 = vadd.f32 0.0, %v3769
      %v3771 = vpop.f32.mrb[0].mxu0
      %3772 = vmatprep.mubr.bf16.mxu0 0
      %3773 = vmatmul.mubr.bf16.gmra.mrb[0].mxu0 %v3687
      %v3774 = vpop.f32.mrb[0].mxu0
      %v3775 = vadd.f32 0.0, %v3774
      %v3776 = vpop.f32.mrb[0].mxu0
      %v3777 = vpop.f32.mrb[0].mxu0
      %v3778 = vadd.f32 0.0, %v3777
      %v3779 = vpop.f32.mrb[0].mxu0
      %3780 = vmatprep.mubr.bf16.mxu0 0
      %3781 = vmatmul.mubr.bf16.gmra.mrb[0].mxu0 %v3690
      %v3782 = vpop.f32.mrb[0].mxu0
      %v3783 = vadd.f32 0.0, %v3782
      %v3784 = vpop.f32.mrb[0].mxu0
      %v3785 = vpop.f32.mrb[0].mxu0
      %v3786 = vadd.f32 0.0, %v3785
      %v3787 = vpop.f32.mrb[0].mxu0
      %3788 = vmatprep.mubr.bf16.mxu0 0
      %3789 = vmatmul.mubr.bf16.gmra.mrb[0].mxu0 %v3693
      %v3790 = vpop.f32.mrb[0].mxu0
      %v3791 = vadd.f32 0.0, %v3790
      %v3792 = vpop.f32.mrb[0].mxu0
      %v3793 = vpop.f32.mrb[0].mxu0
      %v3794 = vpop.f32.mrb[0].mxu0
      %3795 = vdwg.mxu0
      %v3796 = vadd.f32 %v3542, %v3730
      %v3797 = vadd.f32 %v3549, %v3737
      %v3798 = vadd.f32 %v3552, %v3740
      %v3799 = vadd.f32 %v3557, %v3745
      %v3800 = vadd.f32 %v3560, %v3748
      %v3801 = vadd.f32 %v3565, %v3753
      %v3802 = vadd.f32 %v3568, %v3756
      %v3803 = vadd.f32 %v3575, %v3763
      %v3804 = vadd.f32 %v3582, %v3770
      %v3805 = vadd.f32 %v3587, %v3775
      %v3806 = vadd.f32 %v3590, %v3778
      %v3807 = vadd.f32 %v3595, %v3783
      %v3808 = vadd.f32 %v3598, %v3786
      %v3809 = vadd.f32 %v3603, %v3791
      %v3810 = vld [vmem:[%s3610] ss:$2 sm:$0xff]
      %v3811 = vld [vmem:[%s3612] ss:$2 sm:$0xff]
      %v3812 = vld [vmem:[%s3614] ss:$2 sm:$0xff]
      %v3813 = vld [vmem:[%s3616] ss:$2 sm:$0xff]
      %v3814 = vld [vmem:[%s3618] ss:$2 sm:$0xff]
      %v3815 = vld [vmem:[%s3620] ss:$2 sm:$0xff]
      %v3816 = vld [vmem:[%s3622] ss:$2 sm:$0xff]
      %v3817 = vld [vmem:[%s3624] ss:$2 sm:$0xff]
      %v3818 = vld [vmem:[%s3626] ss:$2 sm:$0xff]
      %v3819 = vld [vmem:[%s3628] ss:$2 sm:$0xff]
      %v3820 = vld [vmem:[%s3630] ss:$2 sm:$0xff]
      %v3821 = vld [vmem:[%s3632] ss:$2 sm:$0xff]
      %v3822 = vld [vmem:[%s3634] ss:$2 sm:$0xff]
      %v3823 = vld [vmem:[%s3636] ss:$2 sm:$0xff]
      %v3824 = vld [vmem:[%s3638] ss:$2 sm:$0xff]
      %v3825 = vld [vmem:[%s3640] ss:$2 sm:$0xff]
      %s3826 = scalar_lea.vmem [#allocation2], 274
      %v3827 = vld [vmem:[%s3826] ss:$2 sm:$0x3f]
      %v3828 = vpack.c.bf16 %v3811, %v3810
      %v3829 = vpack.c.bf16 %v3813, %v3812
      %v3830 = vpack.c.bf16 %v3815, %v3814
      %v3831 = vpack.c.bf16 %v3817, %v3816
      %v3832 = vpack.c.bf16 %v3819, %v3818
      %v3833 = vpack.c.bf16 %v3821, %v3820
      %v3834 = vpack.c.bf16 %v3823, %v3822
      %v3835 = vpack.c.bf16 %v3825, %v3824
      %v3836 = vpack.c.bf16 %v3827, %v3827
      %s3837 = scalar_lea.vmem %s3, 48
      %v3838 = vld [vmem:[%s3837] sm:$0xf]
      %v3839 = vld [vmem:[%s3837 + $0x4] sm:$0xf]
      %v3840 = vld [vmem:[%s3837 + $0x8] sm:$0xf]
      %v3841 = vld [vmem:[%s3837 + $0xc] sm:$0xf]
      %v3846 = vunpack.c.l.b16 %v3838
      %v3847 = vunpack.c.l.b16 %v3839
      %v3848 = vunpack.c.l.b16 %v3840
      %v3849 = vunpack.c.l.b16 %v3841
      %v3850 = vpack.c.b16 %v3847, %v3846
      %v3851 = vpack.c.b16 %v3849, %v3848
      %v3855 = vsel %vm334, %v3828, 0
      %v3858 = vsel %vm334, %v3829, 0
      %v3861 = vsel %vm334, %v3830, 0
      %v3864 = vsel %vm334, %v3831, 0
      %v3867 = vsel %vm334, %v3832, 0
      %v3870 = vsel %vm334, %v3833, 0
      %v3873 = vsel %vm334, %v3834, 0
      %v3876 = vsel %vm334, %v3835, 0
      %v3879 = vsel %vm334, %v3836, 0
      %3881 = vmatprep.subr.bf16.mxu0 0
      %3882 = vmatpush1.bf16.msra.mxu0 %v3850
      %3883 = vmatprep.subr.bf16.mxu0 0
      %3884 = vmatpush1.bf16.msra.mxu0 %v3851
      %3885 = vmatprep.subr.bf16.mxu0 0
      %3886 = vmatpush1.bf16.msra.mxu0 0
      %3887 = vmatprep.subr.bf16.mxu0 0
      %3888 = vmatpush1.bf16.msra.mxu0 0
      %3889 = vmatprep.subr.bf16.mxu0 0
      %3890 = vmatpush1.bf16.msra.mxu0 0
      %3891 = vmatprep.subr.bf16.mxu0 0
      %3892 = vmatpush1.bf16.msra.mxu0 0
      %3893 = vmatprep.subr.bf16.mxu0 0
      %3894 = vmatpush1.bf16.msra.mxu0 0
      %3895 = vmatprep.subr.bf16.mxu0 0
      %3896 = vmatpush1.bf16.msra.mxu0 0
      %3897 = vmatprep.subr.bf16.mxu0 0
      %3898 = vmatpush1.bf16.msra.mxu0 0
      %3899 = vmatprep.subr.bf16.mxu0 0
      %3900 = vmatpush1.bf16.msra.mxu0 0
      %3901 = vmatprep.subr.bf16.mxu0 0
      %3902 = vmatpush1.bf16.msra.mxu0 0
      %3903 = vmatprep.subr.bf16.mxu0 0
      %3904 = vmatpush1.bf16.msra.mxu0 0
      %3905 = vmatprep.subr.bf16.mxu0 0
      %3906 = vmatpush1.bf16.msra.mxu0 0
      %3907 = vmatprep.subr.bf16.mxu0 0
      %3908 = vmatpush1.bf16.msra.mxu0 0
      %3909 = vmatprep.subr.bf16.mxu0 0
      %3910 = vmatpush1.bf16.msra.mxu0 0
      %3911 = vmatprep.subr.bf16.mxu0 0
      %3912 = vmatpush1.bf16.msra.mxu0 0
      %3913 = vmatprep.mubr.bf16.mxu0 0
      %3914 = vmatmul.mubr.bf16.gmra.mrb[0].mxu0 %v3855
      %v3915 = vpop.f32.mrb[0].mxu0
      %v3916 = vadd.f32 0.0, %v3915
      %v3917 = vpop.f32.mrb[0].mxu0
      %v3918 = vpop.f32.mrb[0].mxu0
      %v3919 = vpop.f32.mrb[0].mxu0
      %3920 = vmatprep.mubr.bf16.mxu0 0
      %3921 = vmatmul.mubr.bf16.gmra.mrb[0].mxu0 %v3858
      %v3922 = vpop.f32.mrb[0].mxu0
      %v3923 = vadd.f32 0.0, %v3922
      %v3924 = vpop.f32.mrb[0].mxu0
      %v3925 = vpop.f32.mrb[0].mxu0
      %v3926 = vadd.f32 0.0, %v3925
      %v3927 = vpop.f32.mrb[0].mxu0
      %3928 = vmatprep.mubr.bf16.mxu0 0
      %3929 = vmatmul.mubr.bf16.gmra.mrb[0].mxu0 %v3861
      %v3930 = vpop.f32.mrb[0].mxu0
      %v3931 = vadd.f32 0.0, %v3930
      %v3932 = vpop.f32.mrb[0].mxu0
      %v3933 = vpop.f32.mrb[0].mxu0
      %v3934 = vadd.f32 0.0, %v3933
      %v3935 = vpop.f32.mrb[0].mxu0
      %3936 = vmatprep.mubr.bf16.mxu0 0
      %3937 = vmatmul.mubr.bf16.gmra.mrb[0].mxu0 %v3864
      %v3938 = vpop.f32.mrb[0].mxu0
      %v3939 = vadd.f32 0.0, %v3938
      %v3940 = vpop.f32.mrb[0].mxu0
      %v3941 = vpop.f32.mrb[0].mxu0
      %v3942 = vadd.f32 0.0, %v3941
      %v3943 = vpop.f32.mrb[0].mxu0
      %3944 = vmatprep.mubr.bf16.mxu0 0
      %3945 = vmatmul.mubr.bf16.gmra.mrb[0].mxu0 %v3867
      %v3946 = vpop.f32.mrb[0].mxu0
      %v3947 = vpop.f32.mrb[0].mxu0
      %v3948 = vpop.f32.mrb[0].mxu0
      %v3949 = vadd.f32 0.0, %v3948
      %v3950 = vpop.f32.mrb[0].mxu0
      %3951 = vmatprep.mubr.bf16.mxu0 0
      %3952 = vmatmul.mubr.bf16.gmra.mrb[0].mxu0 %v3870
      %v3953 = vpop.f32.mrb[0].mxu0
      %v3954 = vpop.f32.mrb[0].mxu0
      %v3955 = vpop.f32.mrb[0].mxu0
      %v3956 = vadd.f32 0.0, %v3955
      %v3957 = vpop.f32.mrb[0].mxu0
      %3958 = vmatprep.mubr.bf16.mxu0 0
      %3959 = vmatmul.mubr.bf16.gmra.mrb[0].mxu0 %v3873
      %v3960 = vpop.f32.mrb[0].mxu0
      %v3961 = vadd.f32 0.0, %v3960
      %v3962 = vpop.f32.mrb[0].mxu0
      %v3963 = vpop.f32.mrb[0].mxu0
      %v3964 = vadd.f32 0.0, %v3963
      %v3965 = vpop.f32.mrb[0].mxu0
      %3966 = vmatprep.mubr.bf16.mxu0 0
      %3967 = vmatmul.mubr.bf16.gmra.mrb[0].mxu0 %v3876
      %v3968 = vpop.f32.mrb[0].mxu0
      %v3969 = vadd.f32 0.0, %v3968
      %v3970 = vpop.f32.mrb[0].mxu0
      %v3971 = vpop.f32.mrb[0].mxu0
      %v3972 = vadd.f32 0.0, %v3971
      %v3973 = vpop.f32.mrb[0].mxu0
      %3974 = vmatprep.mubr.bf16.mxu0 0
      %3975 = vmatmul.mubr.bf16.gmra.mrb[0].mxu0 %v3879
      %v3976 = vpop.f32.mrb[0].mxu0
      %v3977 = vadd.f32 0.0, %v3976
      %v3978 = vpop.f32.mrb[0].mxu0
      %v3979 = vpop.f32.mrb[0].mxu0
      %v3980 = vpop.f32.mrb[0].mxu0
      %3981 = vdwg.mxu0
      %v3982 = vadd.f32 %v3796, %v3916
      %v3983 = vadd.f32 %v3797, %v3923
      %v3984 = vadd.f32 %v3798, %v3926
      %v3985 = vadd.f32 %v3799, %v3931
      %v3986 = vadd.f32 %v3800, %v3934
      %v3987 = vadd.f32 %v3801, %v3939
      %v3988 = vadd.f32 %v3802, %v3942
      %v3989 = vadd.f32 %v3803, %v3949
      %v3990 = vadd.f32 %v3804, %v3956
      %v3991 = vadd.f32 %v3805, %v3961
      %v3992 = vadd.f32 %v3806, %v3964
      %v3993 = vadd.f32 %v3807, %v3969
      %v3994 = vadd.f32 %v3808, %v3972
      %v3995 = vadd.f32 %v3809, %v3977
      %s3996 = scalar_lea.vmem [#allocation2], 19
      %v3997 = vld [vmem:[%s3996] ss:$2 sm:$0xff]
      %s3998 = scalar_lea.vmem [#allocation2], 35
      %v3999 = vld [vmem:[%s3998] ss:$2 sm:$0xff]
      %s4000 = scalar_lea.vmem [#allocation2], 51
      %v4001 = vld [vmem:[%s4000] ss:$2 sm:$0xff]
      %s4002 = scalar_lea.vmem [#allocation2], 67
      %v4003 = vld [vmem:[%s4002] ss:$2 sm:$0xff]
      %s4004 = scalar_lea.vmem [#allocation2], 83
      %v4005 = vld [vmem:[%s4004] ss:$2 sm:$0xff]
      %s4006 = scalar_lea.vmem [#allocation2], 99
      %v4007 = vld [vmem:[%s4006] ss:$2 sm:$0xff]
      %s4008 = scalar_lea.vmem [#allocation2], 115
      %v4009 = vld [vmem:[%s4008] ss:$2 sm:$0xff]
      %s4010 = scalar_lea.vmem [#allocation2], 131
      %v4011 = vld [vmem:[%s4010] ss:$2 sm:$0xff]
      %s4012 = scalar_lea.vmem [#allocation2], 147
      %v4013 = vld [vmem:[%s4012] ss:$2 sm:$0xff]
      %s4014 = scalar_lea.vmem [#allocation2], 163
      %v4015 = vld [vmem:[%s4014] ss:$2 sm:$0xff]
      %s4016 = scalar_lea.vmem [#allocation2], 179
      %v4017 = vld [vmem:[%s4016] ss:$2 sm:$0xff]
      %s4018 = scalar_lea.vmem [#allocation2], 195
      %v4019 = vld [vmem:[%s4018] ss:$2 sm:$0xff]
      %s4020 = scalar_lea.vmem [#allocation2], 211
      %v4021 = vld [vmem:[%s4020] ss:$2 sm:$0xff]
      %s4022 = scalar_lea.vmem [#allocation2], 227
      %v4023 = vld [vmem:[%s4022] ss:$2 sm:$0xff]
      %s4024 = scalar_lea.vmem [#allocation2], 243
      %v4025 = vld [vmem:[%s4024] ss:$2 sm:$0xff]
      %s4026 = scalar_lea.vmem [#allocation2], 259
      %v4027 = vld [vmem:[%s4026] ss:$2 sm:$0xff]
      %s4028 = scalar_lea.vmem [#allocation2], 275
      %v4029 = vld [vmem:[%s4028] ss:$2 sm:$0x3f]
      %v4030 = vpack.c.bf16 %v3999, %v3997
      %v4031 = vpack.c.bf16 %v4003, %v4001
      %v4032 = vpack.c.bf16 %v4007, %v4005
      %v4033 = vpack.c.bf16 %v4011, %v4009
      %v4034 = vpack.c.bf16 %v4015, %v4013
      %v4035 = vpack.c.bf16 %v4019, %v4017
      %v4036 = vpack.c.bf16 %v4023, %v4021
      %v4037 = vpack.c.bf16 %v4027, %v4025
      %v4038 = vpack.c.bf16 %v4029, %v4029
      %s4039 = scalar_lea.vmem %s3, 64
      %v4040 = vld [vmem:[%s4039] sm:$0xf]
      %v4041 = vld [vmem:[%s4039 + $0x4] sm:$0xf]
      %v4042 = vld [vmem:[%s4039 + $0x8] sm:$0xf]
      %v4043 = vld [vmem:[%s4039 + $0xc] sm:$0xf]
      %v4048 = vunpack.c.l.b16 %v4040
      %v4049 = vunpack.c.l.b16 %v4041
      %v4050 = vunpack.c.l.b16 %v4042
      %v4051 = vunpack.c.l.b16 %v4043
      %v4052 = vpack.c.b16 %v4049, %v4048
      %v4053 = vpack.c.b16 %v4051, %v4050
      %v4057 = vsel %vm334, %v4030, 0
      %v4060 = vsel %vm334, %v4031, 0
      %v4063 = vsel %vm334, %v4032, 0
      %v4066 = vsel %vm334, %v4033, 0
      %v4069 = vsel %vm334, %v4034, 0
      %v4072 = vsel %vm334, %v4035, 0
      %v4075 = vsel %vm334, %v4036, 0
      %v4078 = vsel %vm334, %v4037, 0
      %v4081 = vsel %vm334, %v4038, 0
      %4083 = vmatprep.subr.bf16.mxu0 0
      %4084 = vmatpush1.bf16.msra.mxu0 %v4052
      %4085 = vmatprep.subr.bf16.mxu0 0
      %4086 = vmatpush1.bf16.msra.mxu0 %v4053
      %4087 = vmatprep.subr.bf16.mxu0 0
      %4088 = vmatpush1.bf16.msra.mxu0 0
      %4089 = vmatprep.subr.bf16.mxu0 0
      %4090 = vmatpush1.bf16.msra.mxu0 0
      %4091 = vmatprep.subr.bf16.mxu0 0
      %4092 = vmatpush1.bf16.msra.mxu0 0
      %4093 = vmatprep.subr.bf16.mxu0 0
      %4094 = vmatpush1.bf16.msra.mxu0 0
      %4095 = vmatprep.subr.bf16.mxu0 0
      %4096 = vmatpush1.bf16.msra.mxu0 0
      %4097 = vmatprep.subr.bf16.mxu0 0
      %4098 = vmatpush1.bf16.msra.mxu0 0
      %4099 = vmatprep.subr.bf16.mxu0 0
      %4100 = vmatpush1.bf16.msra.mxu0 0
      %4101 = vmatprep.subr.bf16.mxu0 0
      %4102 = vmatpush1.bf16.msra.mxu0 0
      %4103 = vmatprep.subr.bf16.mxu0 0
      %4104 = vmatpush1.bf16.msra.mxu0 0
      %4105 = vmatprep.subr.bf16.mxu0 0
      %4106 = vmatpush1.bf16.msra.mxu0 0
      %4107 = vmatprep.subr.bf16.mxu0 0
      %4108 = vmatpush1.bf16.msra.mxu0 0
      %4109 = vmatprep.subr.bf16.mxu0 0
      %4110 = vmatpush1.bf16.msra.mxu0 0
      %4111 = vmatprep.subr.bf16.mxu0 0
      %4112 = vmatpush1.bf16.msra.mxu0 0
      %4113 = vmatprep.subr.bf16.mxu0 0
      %4114 = vmatpush1.bf16.msra.mxu0 0
      %4115 = vmatprep.mubr.bf16.mxu0 0
      %4116 = vmatmul.mubr.bf16.gmra.mrb[0].mxu0 %v4057
      %v4117 = vpop.f32.mrb[0].mxu0
      %v4118 = vadd.f32 0.0, %v4117
      %v4119 = vpop.f32.mrb[0].mxu0
      %v4120 = vpop.f32.mrb[0].mxu0
      %v4121 = vpop.f32.mrb[0].mxu0
      %4122 = vmatprep.mubr.bf16.mxu0 0
      %4123 = vmatmul.mubr.bf16.gmra.mrb[0].mxu0 %v4060
      %v4124 = vpop.f32.mrb[0].mxu0
      %v4125 = vadd.f32 0.0, %v4124
      %v4126 = vpop.f32.mrb[0].mxu0
      %v4127 = vpop.f32.mrb[0].mxu0
      %v4128 = vadd.f32 0.0, %v4127
      %v4129 = vpop.f32.mrb[0].mxu0
      %4130 = vmatprep.mubr.bf16.mxu0 0
      %4131 = vmatmul.mubr.bf16.gmra.mrb[0].mxu0 %v4063
      %v4132 = vpop.f32.mrb[0].mxu0
      %v4133 = vadd.f32 0.0, %v4132
      %v4134 = vpop.f32.mrb[0].mxu0
      %v4135 = vpop.f32.mrb[0].mxu0
      %v4136 = vadd.f32 0.0, %v4135
      %v4137 = vpop.f32.mrb[0].mxu0
      %4138 = vmatprep.mubr.bf16.mxu0 0
      %4139 = vmatmul.mubr.bf16.gmra.mrb[0].mxu0 %v4066
      %v4140 = vpop.f32.mrb[0].mxu0
      %v4141 = vadd.f32 0.0, %v4140
      %v4142 = vpop.f32.mrb[0].mxu0
      %v4143 = vpop.f32.mrb[0].mxu0
      %v4144 = vadd.f32 0.0, %v4143
      %v4145 = vpop.f32.mrb[0].mxu0
      %4146 = vmatprep.mubr.bf16.mxu0 0
      %4147 = vmatmul.mubr.bf16.gmra.mrb[0].mxu0 %v4069
      %v4148 = vpop.f32.mrb[0].mxu0
      %v4149 = vpop.f32.mrb[0].mxu0
      %v4150 = vpop.f32.mrb[0].mxu0
      %v4151 = vadd.f32 0.0, %v4150
      %v4152 = vpop.f32.mrb[0].mxu0
      %4153 = vmatprep.mubr.bf16.mxu0 0
      %4154 = vmatmul.mubr.bf16.gmra.mrb[0].mxu0 %v4072
      %v4155 = vpop.f32.mrb[0].mxu0
      %v4156 = vpop.f32.mrb[0].mxu0
      %v4157 = vpop.f32.mrb[0].mxu0
      %v4158 = vadd.f32 0.0, %v4157
      %v4159 = vpop.f32.mrb[0].mxu0
      %4160 = vmatprep.mubr.bf16.mxu0 0
      %4161 = vmatmul.mubr.bf16.gmra.mrb[0].mxu0 %v4075
      %v4162 = vpop.f32.mrb[0].mxu0
      %v4163 = vadd.f32 0.0, %v4162
      %v4164 = vpop.f32.mrb[0].mxu0
      %v4165 = vpop.f32.mrb[0].mxu0
      %v4166 = vadd.f32 0.0, %v4165
      %v4167 = vpop.f32.mrb[0].mxu0
      %4168 = vmatprep.mubr.bf16.mxu0 0
      %4169 = vmatmul.mubr.bf16.gmra.mrb[0].mxu0 %v4078
      %v4170 = vpop.f32.mrb[0].mxu0
      %v4171 = vadd.f32 0.0, %v4170
      %v4172 = vpop.f32.mrb[0].mxu0
      %v4173 = vpop.f32.mrb[0].mxu0
      %v4174 = vadd.f32 0.0, %v4173
      %v4175 = vpop.f32.mrb[0].mxu0
      %4176 = vmatprep.mubr.bf16.mxu0 0
      %4177 = vmatmul.mubr.bf16.gmra.mrb[0].mxu0 %v4081
      %v4178 = vpop.f32.mrb[0].mxu0
      %v4179 = vadd.f32 0.0, %v4178
      %v4180 = vpop.f32.mrb[0].mxu0
      %v4181 = vpop.f32.mrb[0].mxu0
      %v4182 = vpop.f32.mrb[0].mxu0
      %4183 = vdwg.mxu0
      %v4184 = vadd.f32 %v3982, %v4118
      %v4185 = vadd.f32 %v3983, %v4125
      %v4186 = vadd.f32 %v3984, %v4128
      %v4187 = vadd.f32 %v3985, %v4133
      %v4188 = vadd.f32 %v3986, %v4136
      %v4189 = vadd.f32 %v3987, %v4141
      %v4190 = vadd.f32 %v3988, %v4144
      %v4191 = vadd.f32 %v3989, %v4151
      %v4192 = vadd.f32 %v3990, %v4158
      %v4193 = vadd.f32 %v3991, %v4163
      %v4194 = vadd.f32 %v3992, %v4166
      %v4195 = vadd.f32 %v3993, %v4171
      %v4196 = vadd.f32 %v3994, %v4174
      %v4197 = vadd.f32 %v3995, %v4179
      %s4198 = scalar_lea.vmem [#allocation2], 20
      %v4199 = vld [vmem:[%s4198] ss:$2 sm:$0xff]
      %s4200 = scalar_lea.vmem [#allocation2], 36
      %v4201 = vld [vmem:[%s4200] ss:$2 sm:$0xff]
      %s4202 = scalar_lea.vmem [#allocation2], 52
      %v4203 = vld [vmem:[%s4202] ss:$2 sm:$0xff]
      %s4204 = scalar_lea.vmem [#allocation2], 68
      %v4205 = vld [vmem:[%s4204] ss:$2 sm:$0xff]
      %s4206 = scalar_lea.vmem [#allocation2], 84
      %v4207 = vld [vmem:[%s4206] ss:$2 sm:$0xff]
      %s4208 = scalar_lea.vmem [#allocation2], 100
      %v4209 = vld [vmem:[%s4208] ss:$2 sm:$0xff]
      %s4210 = scalar_lea.vmem [#allocation2], 116
      %v4211 = vld [vmem:[%s4210] ss:$2 sm:$0xff]
      %s4212 = scalar_lea.vmem [#allocation2], 132
      %v4213 = vld [vmem:[%s4212] ss:$2 sm:$0xff]
      %s4214 = scalar_lea.vmem [#allocation2], 148
      %v4215 = vld [vmem:[%s4214] ss:$2 sm:$0xff]
      %s4216 = scalar_lea.vmem [#allocation2], 164
      %v4217 = vld [vmem:[%s4216] ss:$2 sm:$0xff]
      %s4218 = scalar_lea.vmem [#allocation2], 180
      %v4219 = vld [vmem:[%s4218] ss:$2 sm:$0xff]
      %s4220 = scalar_lea.vmem [#allocation2], 196
      %v4221 = vld [vmem:[%s4220] ss:$2 sm:$0xff]
      %s4222 = scalar_lea.vmem [#allocation2], 212
      %v4223 = vld [vmem:[%s4222] ss:$2 sm:$0xff]
      %s4224 = scalar_lea.vmem [#allocation2], 228
      %v4225 = vld [vmem:[%s4224] ss:$2 sm:$0xff]
      %s4226 = scalar_lea.vmem [#allocation2], 244
      %v4227 = vld [vmem:[%s4226] ss:$2 sm:$0xff]
      %s4228 = scalar_lea.vmem [#allocation2], 260
      %v4229 = vld [vmem:[%s4228] ss:$2 sm:$0xff]
      %s4230 = scalar_lea.vmem [#allocation2], 276
      %v4231 = vld [vmem:[%s4230] ss:$2 sm:$0x3f]
      %v4232 = vpack.c.bf16 %v4201, %v4199
      %v4233 = vpack.c.bf16 %v4205, %v4203
      %v4234 = vpack.c.bf16 %v4209, %v4207
      %v4235 = vpack.c.bf16 %v4213, %v4211
      %v4236 = vpack.c.bf16 %v4217, %v4215
      %v4237 = vpack.c.bf16 %v4221, %v4219
      %v4238 = vpack.c.bf16 %v4225, %v4223
      %v4239 = vpack.c.bf16 %v4229, %v4227
      %v4240 = vpack.c.bf16 %v4231, %v4231
      %s4241 = scalar_lea.vmem %s3, 80
      %v4242 = vld [vmem:[%s4241] sm:$0xf]
      %v4243 = vld [vmem:[%s4241 + $0x4] sm:$0xf]
      %v4244 = vld [vmem:[%s4241 + $0x8] sm:$0xf]
      %v4245 = vld [vmem:[%s4241 + $0xc] sm:$0xf]
      %v4250 = vunpack.c.l.b16 %v4242
      %v4251 = vunpack.c.l.b16 %v4243
      %v4252 = vunpack.c.l.b16 %v4244
      %v4253 = vunpack.c.l.b16 %v4245
      %v4254 = vpack.c.b16 %v4251, %v4250
      %v4255 = vpack.c.b16 %v4253, %v4252
      %v4259 = vsel %vm334, %v4232, 0
      %v4262 = vsel %vm334, %v4233, 0
      %v4265 = vsel %vm334, %v4234, 0
      %v4268 = vsel %vm334, %v4235, 0
      %v4271 = vsel %vm334, %v4236, 0
      %v4274 = vsel %vm334, %v4237, 0
      %v4277 = vsel %vm334, %v4238, 0
      %v4280 = vsel %vm334, %v4239, 0
      %v4283 = vsel %vm334, %v4240, 0
      %4285 = vmatprep.subr.bf16.mxu0 0
      %4286 = vmatpush1.bf16.msra.mxu0 %v4254
      %4287 = vmatprep.subr.bf16.mxu0 0
      %4288 = vmatpush1.bf16.msra.mxu0 %v4255
      %4289 = vmatprep.subr.bf16.mxu0 0
      %4290 = vmatpush1.bf16.msra.mxu0 0
      %4291 = vmatprep.subr.bf16.mxu0 0
      %4292 = vmatpush1.bf16.msra.mxu0 0
      %4293 = vmatprep.subr.bf16.mxu0 0
      %4294 = vmatpush1.bf16.msra.mxu0 0
      %4295 = vmatprep.subr.bf16.mxu0 0
      %4296 = vmatpush1.bf16.msra.mxu0 0
      %4297 = vmatprep.subr.bf16.mxu0 0
      %4298 = vmatpush1.bf16.msra.mxu0 0
      %4299 = vmatprep.subr.bf16.mxu0 0
      %4300 = vmatpush1.bf16.msra.mxu0 0
      %4301 = vmatprep.subr.bf16.mxu0 0
      %4302 = vmatpush1.bf16.msra.mxu0 0
      %4303 = vmatprep.subr.bf16.mxu0 0
      %4304 = vmatpush1.bf16.msra.mxu0 0
      %4305 = vmatprep.subr.bf16.mxu0 0
      %4306 = vmatpush1.bf16.msra.mxu0 0
      %4307 = vmatprep.subr.bf16.mxu0 0
      %4308 = vmatpush1.bf16.msra.mxu0 0
      %4309 = vmatprep.subr.bf16.mxu0 0
      %4310 = vmatpush1.bf16.msra.mxu0 0
      %4311 = vmatprep.subr.bf16.mxu0 0
      %4312 = vmatpush1.bf16.msra.mxu0 0
      %4313 = vmatprep.subr.bf16.mxu0 0
      %4314 = vmatpush1.bf16.msra.mxu0 0
      %4315 = vmatprep.subr.bf16.mxu0 0
      %4316 = vmatpush1.bf16.msra.mxu0 0
      %4317 = vmatprep.mubr.bf16.mxu0 0
      %4318 = vmatmul.mubr.bf16.gmra.mrb[0].mxu0 %v4259
      %v4319 = vpop.f32.mrb[0].mxu0
      %v4320 = vadd.f32 0.0, %v4319
      %v4321 = vpop.f32.mrb[0].mxu0
      %v4322 = vpop.f32.mrb[0].mxu0
      %v4323 = vpop.f32.mrb[0].mxu0
      %4324 = vmatprep.mubr.bf16.mxu0 0
      %4325 = vmatmul.mubr.bf16.gmra.mrb[0].mxu0 %v4262
      %v4326 = vpop.f32.mrb[0].mxu0
      %v4327 = vadd.f32 0.0, %v4326
      %v4328 = vpop.f32.mrb[0].mxu0
      %v4329 = vpop.f32.mrb[0].mxu0
      %v4330 = vadd.f32 0.0, %v4329
      %v4331 = vpop.f32.mrb[0].mxu0
      %4332 = vmatprep.mubr.bf16.mxu0 0
      %4333 = vmatmul.mubr.bf16.gmra.mrb[0].mxu0 %v4265
      %v4334 = vpop.f32.mrb[0].mxu0
      %v4335 = vadd.f32 0.0, %v4334
      %v4336 = vpop.f32.mrb[0].mxu0
      %v4337 = vpop.f32.mrb[0].mxu0
      %v4338 = vadd.f32 0.0, %v4337
      %v4339 = vpop.f32.mrb[0].mxu0
      %4340 = vmatprep.mubr.bf16.mxu0 0
      %4341 = vmatmul.mubr.bf16.gmra.mrb[0].mxu0 %v4268
      %v4342 = vpop.f32.mrb[0].mxu0
      %v4343 = vadd.f32 0.0, %v4342
      %v4344 = vpop.f32.mrb[0].mxu0
      %v4345 = vpop.f32.mrb[0].mxu0
      %v4346 = vadd.f32 0.0, %v4345
      %v4347 = vpop.f32.mrb[0].mxu0
      %4348 = vmatprep.mubr.bf16.mxu0 0
      %4349 = vmatmul.mubr.bf16.gmra.mrb[0].mxu0 %v4271
      %v4350 = vpop.f32.mrb[0].mxu0
      %v4351 = vpop.f32.mrb[0].mxu0
      %v4352 = vpop.f32.mrb[0].mxu0
      %v4353 = vadd.f32 0.0, %v4352
      %v4354 = vpop.f32.mrb[0].mxu0
      %4355 = vmatprep.mubr.bf16.mxu0 0
      %4356 = vmatmul.mubr.bf16.gmra.mrb[0].mxu0 %v4274
      %v4357 = vpop.f32.mrb[0].mxu0
      %v4358 = vpop.f32.mrb[0].mxu0
      %v4359 = vpop.f32.mrb[0].mxu0
      %v4360 = vadd.f32 0.0, %v4359
      %v4361 = vpop.f32.mrb[0].mxu0
      %4362 = vmatprep.mubr.bf16.mxu0 0
      %4363 = vmatmul.mubr.bf16.gmra.mrb[0].mxu0 %v4277
      %v4364 = vpop.f32.mrb[0].mxu0
      %v4365 = vadd.f32 0.0, %v4364
      %v4366 = vpop.f32.mrb[0].mxu0
      %v4367 = vpop.f32.mrb[0].mxu0
      %v4368 = vadd.f32 0.0, %v4367
      %v4369 = vpop.f32.mrb[0].mxu0
      %4370 = vmatprep.mubr.bf16.mxu0 0
      %4371 = vmatmul.mubr.bf16.gmra.mrb[0].mxu0 %v4280
      %v4372 = vpop.f32.mrb[0].mxu0
      %v4373 = vadd.f32 0.0, %v4372
      %v4374 = vpop.f32.mrb[0].mxu0
      %v4375 = vpop.f32.mrb[0].mxu0
      %v4376 = vadd.f32 0.0, %v4375
      %v4377 = vpop.f32.mrb[0].mxu0
      %4378 = vmatprep.mubr.bf16.mxu0 0
      %4379 = vmatmul.mubr.bf16.gmra.mrb[0].mxu0 %v4283
      %v4380 = vpop.f32.mrb[0].mxu0
      %v4381 = vadd.f32 0.0, %v4380
      %v4382 = vpop.f32.mrb[0].mxu0
      %v4383 = vpop.f32.mrb[0].mxu0
      %v4384 = vpop.f32.mrb[0].mxu0
      %4385 = vdwg.mxu0
      %v4386 = vadd.f32 %v4184, %v4320
      %v4387 = vadd.f32 %v4185, %v4327
      %v4388 = vadd.f32 %v4186, %v4330
      %v4389 = vadd.f32 %v4187, %v4335
      %v4390 = vadd.f32 %v4188, %v4338
      %v4391 = vadd.f32 %v4189, %v4343
      %v4392 = vadd.f32 %v4190, %v4346
      %v4393 = vadd.f32 %v4191, %v4353
      %v4394 = vadd.f32 %v4192, %v4360
      %v4395 = vadd.f32 %v4193, %v4365
      %v4396 = vadd.f32 %v4194, %v4368
      %v4397 = vadd.f32 %v4195, %v4373
      %v4398 = vadd.f32 %v4196, %v4376
      %v4399 = vadd.f32 %v4197, %v4381
      %v4400 = vld [vmem:[%s4200] ss:$2 sm:$0xff]
      %v4401 = vld [vmem:[%s4202] ss:$2 sm:$0xff]
      %v4402 = vld [vmem:[%s4204] ss:$2 sm:$0xff]
      %v4403 = vld [vmem:[%s4206] ss:$2 sm:$0xff]
      %v4404 = vld [vmem:[%s4208] ss:$2 sm:$0xff]
      %v4405 = vld [vmem:[%s4210] ss:$2 sm:$0xff]
      %v4406 = vld [vmem:[%s4212] ss:$2 sm:$0xff]
      %v4407 = vld [vmem:[%s4214] ss:$2 sm:$0xff]
      %v4408 = vld [vmem:[%s4216] ss:$2 sm:$0xff]
      %v4409 = vld [vmem:[%s4218] ss:$2 sm:$0xff]
      %v4410 = vld [vmem:[%s4220] ss:$2 sm:$0xff]
      %v4411 = vld [vmem:[%s4222] ss:$2 sm:$0xff]
      %v4412 = vld [vmem:[%s4224] ss:$2 sm:$0xff]
      %v4413 = vld [vmem:[%s4226] ss:$2 sm:$0xff]
      %v4414 = vld [vmem:[%s4228] ss:$2 sm:$0xff]
      %v4415 = vld [vmem:[%s4230] ss:$2 sm:$0xff]
      %s4416 = scalar_lea.vmem [#allocation2], 292
      %v4417 = vld [vmem:[%s4416] ss:$2 sm:$0x3f]
      %v4418 = vpack.c.bf16 %v4401, %v4400
      %v4419 = vpack.c.bf16 %v4403, %v4402
      %v4420 = vpack.c.bf16 %v4405, %v4404
      %v4421 = vpack.c.bf16 %v4407, %v4406
      %v4422 = vpack.c.bf16 %v4409, %v4408
      %v4423 = vpack.c.bf16 %v4411, %v4410
      %v4424 = vpack.c.bf16 %v4413, %v4412
      %v4425 = vpack.c.bf16 %v4415, %v4414
      %v4426 = vpack.c.bf16 %v4417, %v4417
      %s4427 = scalar_lea.vmem %s3, 96
      %v4428 = vld [vmem:[%s4427] sm:$0xf]
      %v4429 = vld [vmem:[%s4427 + $0x4] sm:$0xf]
      %v4430 = vld [vmem:[%s4427 + $0x8] sm:$0xf]
      %v4431 = vld [vmem:[%s4427 + $0xc] sm:$0xf]
      %v4436 = vunpack.c.l.b16 %v4428
      %v4437 = vunpack.c.l.b16 %v4429
      %v4438 = vunpack.c.l.b16 %v4430
      %v4439 = vunpack.c.l.b16 %v4431
      %v4440 = vpack.c.b16 %v4437, %v4436
      %v4441 = vpack.c.b16 %v4439, %v4438
      %v4445 = vsel %vm334, %v4418, 0
      %v4448 = vsel %vm334, %v4419, 0
      %v4451 = vsel %vm334, %v4420, 0
      %v4454 = vsel %vm334, %v4421, 0
      %v4457 = vsel %vm334, %v4422, 0
      %v4460 = vsel %vm334, %v4423, 0
      %v4463 = vsel %vm334, %v4424, 0
      %v4466 = vsel %vm334, %v4425, 0
      %v4469 = vsel %vm334, %v4426, 0
      %4471 = vmatprep.subr.bf16.mxu0 0
      %4472 = vmatpush1.bf16.msra.mxu0 %v4440
      %4473 = vmatprep.subr.bf16.mxu0 0
      %4474 = vmatpush1.bf16.msra.mxu0 %v4441
      %4475 = vmatprep.subr.bf16.mxu0 0
      %4476 = vmatpush1.bf16.msra.mxu0 0
      %4477 = vmatprep.subr.bf16.mxu0 0
      %4478 = vmatpush1.bf16.msra.mxu0 0
      %4479 = vmatprep.subr.bf16.mxu0 0
      %4480 = vmatpush1.bf16.msra.mxu0 0
      %4481 = vmatprep.subr.bf16.mxu0 0
      %4482 = vmatpush1.bf16.msra.mxu0 0
      %4483 = vmatprep.subr.bf16.mxu0 0
      %4484 = vmatpush1.bf16.msra.mxu0 0
      %4485 = vmatprep.subr.bf16.mxu0 0
      %4486 = vmatpush1.bf16.msra.mxu0 0
      %4487 = vmatprep.subr.bf16.mxu0 0
      %4488 = vmatpush1.bf16.msra.mxu0 0
      %4489 = vmatprep.subr.bf16.mxu0 0
      %4490 = vmatpush1.bf16.msra.mxu0 0
      %4491 = vmatprep.subr.bf16.mxu0 0
      %4492 = vmatpush1.bf16.msra.mxu0 0
      %4493 = vmatprep.subr.bf16.mxu0 0
      %4494 = vmatpush1.bf16.msra.mxu0 0
      %4495 = vmatprep.subr.bf16.mxu0 0
      %4496 = vmatpush1.bf16.msra.mxu0 0
      %4497 = vmatprep.subr.bf16.mxu0 0
      %4498 = vmatpush1.bf16.msra.mxu0 0
      %4499 = vmatprep.subr.bf16.mxu0 0
      %4500 = vmatpush1.bf16.msra.mxu0 0
      %4501 = vmatprep.subr.bf16.mxu0 0
      %4502 = vmatpush1.bf16.msra.mxu0 0
      %4503 = vmatprep.mubr.bf16.mxu0 0
      %4504 = vmatmul.mubr.bf16.gmra.mrb[0].mxu0 %v4445
      %v4505 = vpop.f32.mrb[0].mxu0
      %v4506 = vadd.f32 0.0, %v4505
      %v4507 = vpop.f32.mrb[0].mxu0
      %v4508 = vpop.f32.mrb[0].mxu0
      %v4509 = vpop.f32.mrb[0].mxu0
      %4510 = vmatprep.mubr.bf16.mxu0 0
      %4511 = vmatmul.mubr.bf16.gmra.mrb[0].mxu0 %v4448
      %v4512 = vpop.f32.mrb[0].mxu0
      %v4513 = vadd.f32 0.0, %v4512
      %v4514 = vpop.f32.mrb[0].mxu0
      %v4515 = vpop.f32.mrb[0].mxu0
      %v4516 = vadd.f32 0.0, %v4515
      %v4517 = vpop.f32.mrb[0].mxu0
      %4518 = vmatprep.mubr.bf16.mxu0 0
      %4519 = vmatmul.mubr.bf16.gmra.mrb[0].mxu0 %v4451
      %v4520 = vpop.f32.mrb[0].mxu0
      %v4521 = vadd.f32 0.0, %v4520
      %v4522 = vpop.f32.mrb[0].mxu0
      %v4523 = vpop.f32.mrb[0].mxu0
      %v4524 = vadd.f32 0.0, %v4523
      %v4525 = vpop.f32.mrb[0].mxu0
      %4526 = vmatprep.mubr.bf16.mxu0 0
      %4527 = vmatmul.mubr.bf16.gmra.mrb[0].mxu0 %v4454
      %v4528 = vpop.f32.mrb[0].mxu0
      %v4529 = vadd.f32 0.0, %v4528
      %v4530 = vpop.f32.mrb[0].mxu0
      %v4531 = vpop.f32.mrb[0].mxu0
      %v4532 = vadd.f32 0.0, %v4531
      %v4533 = vpop.f32.mrb[0].mxu0
      %4534 = vmatprep.mubr.bf16.mxu0 0
      %4535 = vmatmul.mubr.bf16.gmra.mrb[0].mxu0 %v4457
      %v4536 = vpop.f32.mrb[0].mxu0
      %v4537 = vpop.f32.mrb[0].mxu0
      %v4538 = vpop.f32.mrb[0].mxu0
      %v4539 = vadd.f32 0.0, %v4538
      %v4540 = vpop.f32.mrb[0].mxu0
      %4541 = vmatprep.mubr.bf16.mxu0 0
      %4542 = vmatmul.mubr.bf16.gmra.mrb[0].mxu0 %v4460
      %v4543 = vpop.f32.mrb[0].mxu0
      %v4544 = vpop.f32.mrb[0].mxu0
      %v4545 = vpop.f32.mrb[0].mxu0
      %v4546 = vadd.f32 0.0, %v4545
      %v4547 = vpop.f32.mrb[0].mxu0
      %4548 = vmatprep.mubr.bf16.mxu0 0
      %4549 = vmatmul.mubr.bf16.gmra.mrb[0].mxu0 %v4463
      %v4550 = vpop.f32.mrb[0].mxu0
      %v4551 = vadd.f32 0.0, %v4550
      %v4552 = vpop.f32.mrb[0].mxu0
      %v4553 = vpop.f32.mrb[0].mxu0
      %v4554 = vadd.f32 0.0, %v4553
      %v4555 = vpop.f32.mrb[0].mxu0
      %4556 = vmatprep.mubr.bf16.mxu0 0
      %4557 = vmatmul.mubr.bf16.gmra.mrb[0].mxu0 %v4466
      %v4558 = vpop.f32.mrb[0].mxu0
      %v4559 = vadd.f32 0.0, %v4558
      %v4560 = vpop.f32.mrb[0].mxu0
      %v4561 = vpop.f32.mrb[0].mxu0
      %v4562 = vadd.f32 0.0, %v4561
      %v4563 = vpop.f32.mrb[0].mxu0
      %4564 = vmatprep.mubr.bf16.mxu0 0
      %4565 = vmatmul.mubr.bf16.gmra.mrb[0].mxu0 %v4469
      %v4566 = vpop.f32.mrb[0].mxu0
      %v4567 = vadd.f32 0.0, %v4566
      %v4568 = vpop.f32.mrb[0].mxu0
      %v4569 = vpop.f32.mrb[0].mxu0
      %v4570 = vpop.f32.mrb[0].mxu0
      %4571 = vdwg.mxu0
      %v4572 = vadd.f32 %v4386, %v4506
      %v4573 = vadd.f32 %v4387, %v4513
      %v4574 = vadd.f32 %v4388, %v4516
      %v4575 = vadd.f32 %v4389, %v4521
      %v4576 = vadd.f32 %v4390, %v4524
      %v4577 = vadd.f32 %v4391, %v4529
      %v4578 = vadd.f32 %v4392, %v4532
      %v4579 = vadd.f32 %v4393, %v4539
      %v4580 = vadd.f32 %v4394, %v4546
      %v4581 = vadd.f32 %v4395, %v4551
      %v4582 = vadd.f32 %v4396, %v4554
      %v4583 = vadd.f32 %v4397, %v4559
      %v4584 = vadd.f32 %v4398, %v4562
      %v4585 = vadd.f32 %v4399, %v4567
      %s4586 = scalar_lea.vmem [#allocation2], 37
      %v4587 = vld [vmem:[%s4586] ss:$2 sm:$0xff]
      %s4588 = scalar_lea.vmem [#allocation2], 53
      %v4589 = vld [vmem:[%s4588] ss:$2 sm:$0xff]
      %s4590 = scalar_lea.vmem [#allocation2], 69
      %v4591 = vld [vmem:[%s4590] ss:$2 sm:$0xff]
      %s4592 = scalar_lea.vmem [#allocation2], 85
      %v4593 = vld [vmem:[%s4592] ss:$2 sm:$0xff]
      %s4594 = scalar_lea.vmem [#allocation2], 101
      %v4595 = vld [vmem:[%s4594] ss:$2 sm:$0xff]
      %s4596 = scalar_lea.vmem [#allocation2], 117
      %v4597 = vld [vmem:[%s4596] ss:$2 sm:$0xff]
      %s4598 = scalar_lea.vmem [#allocation2], 133
      %v4599 = vld [vmem:[%s4598] ss:$2 sm:$0xff]
      %s4600 = scalar_lea.vmem [#allocation2], 149
      %v4601 = vld [vmem:[%s4600] ss:$2 sm:$0xff]
      %s4602 = scalar_lea.vmem [#allocation2], 165
      %v4603 = vld [vmem:[%s4602] ss:$2 sm:$0xff]
      %s4604 = scalar_lea.vmem [#allocation2], 181
      %v4605 = vld [vmem:[%s4604] ss:$2 sm:$0xff]
      %s4606 = scalar_lea.vmem [#allocation2], 197
      %v4607 = vld [vmem:[%s4606] ss:$2 sm:$0xff]
      %s4608 = scalar_lea.vmem [#allocation2], 213
      %v4609 = vld [vmem:[%s4608] ss:$2 sm:$0xff]
      %s4610 = scalar_lea.vmem [#allocation2], 229
      %v4611 = vld [vmem:[%s4610] ss:$2 sm:$0xff]
      %s4612 = scalar_lea.vmem [#allocation2], 245
      %v4613 = vld [vmem:[%s4612] ss:$2 sm:$0xff]
      %s4614 = scalar_lea.vmem [#allocation2], 261
      %v4615 = vld [vmem:[%s4614] ss:$2 sm:$0xff]
      %s4616 = scalar_lea.vmem [#allocation2], 277
      %v4617 = vld [vmem:[%s4616] ss:$2 sm:$0xff]
      %s4618 = scalar_lea.vmem [#allocation2], 293
      %v4619 = vld [vmem:[%s4618] ss:$2 sm:$0x3f]
      %v4620 = vpack.c.bf16 %v4589, %v4587
      %v4621 = vpack.c.bf16 %v4593, %v4591
      %v4622 = vpack.c.bf16 %v4597, %v4595
      %v4623 = vpack.c.bf16 %v4601, %v4599
      %v4624 = vpack.c.bf16 %v4605, %v4603
      %v4625 = vpack.c.bf16 %v4609, %v4607
      %v4626 = vpack.c.bf16 %v4613, %v4611
      %v4627 = vpack.c.bf16 %v4617, %v4615
      %v4628 = vpack.c.bf16 %v4619, %v4619
      %s4629 = scalar_lea.vmem %s3, 112
      %v4630 = vld [vmem:[%s4629] sm:$0xf]
      %v4631 = vld [vmem:[%s4629 + $0x4] sm:$0xf]
      %v4632 = vld [vmem:[%s4629 + $0x8] sm:$0xf]
      %v4633 = vld [vmem:[%s4629 + $0xc] sm:$0xf]
      %v4638 = vunpack.c.l.b16 %v4630
      %v4639 = vunpack.c.l.b16 %v4631
      %v4640 = vunpack.c.l.b16 %v4632
      %v4641 = vunpack.c.l.b16 %v4633
      %v4642 = vpack.c.b16 %v4639, %v4638
      %v4643 = vpack.c.b16 %v4641, %v4640
      %v4647 = vsel %vm334, %v4620, 0
      %v4650 = vsel %vm334, %v4621, 0
      %v4653 = vsel %vm334, %v4622, 0
      %v4656 = vsel %vm334, %v4623, 0
      %v4659 = vsel %vm334, %v4624, 0
      %v4662 = vsel %vm334, %v4625, 0
      %v4665 = vsel %vm334, %v4626, 0
      %v4668 = vsel %vm334, %v4627, 0
      %v4671 = vsel %vm334, %v4628, 0
      %4673 = vmatprep.subr.bf16.mxu0 0
      %4674 = vmatpush1.bf16.msra.mxu0 %v4642
      %4675 = vmatprep.subr.bf16.mxu0 0
      %4676 = vmatpush1.bf16.msra.mxu0 %v4643
      %4677 = vmatprep.subr.bf16.mxu0 0
      %4678 = vmatpush1.bf16.msra.mxu0 0
      %4679 = vmatprep.subr.bf16.mxu0 0
      %4680 = vmatpush1.bf16.msra.mxu0 0
      %4681 = vmatprep.subr.bf16.mxu0 0
      %4682 = vmatpush1.bf16.msra.mxu0 0
      %4683 = vmatprep.subr.bf16.mxu0 0
      %4684 = vmatpush1.bf16.msra.mxu0 0
      %4685 = vmatprep.subr.bf16.mxu0 0
      %4686 = vmatpush1.bf16.msra.mxu0 0
      %4687 = vmatprep.subr.bf16.mxu0 0
      %4688 = vmatpush1.bf16.msra.mxu0 0
      %4689 = vmatprep.subr.bf16.mxu0 0
      %4690 = vmatpush1.bf16.msra.mxu0 0
      %4691 = vmatprep.subr.bf16.mxu0 0
      %4692 = vmatpush1.bf16.msra.mxu0 0
      %4693 = vmatprep.subr.bf16.mxu0 0
      %4694 = vmatpush1.bf16.msra.mxu0 0
      %4695 = vmatprep.subr.bf16.mxu0 0
      %4696 = vmatpush1.bf16.msra.mxu0 0
      %4697 = vmatprep.subr.bf16.mxu0 0
      %4698 = vmatpush1.bf16.msra.mxu0 0
      %4699 = vmatprep.subr.bf16.mxu0 0
      %4700 = vmatpush1.bf16.msra.mxu0 0
      %4701 = vmatprep.subr.bf16.mxu0 0
      %4702 = vmatpush1.bf16.msra.mxu0 0
      %4703 = vmatprep.subr.bf16.mxu0 0
      %4704 = vmatpush1.bf16.msra.mxu0 0
      %4705 = vmatprep.mubr.bf16.mxu0 0
      %4706 = vmatmul.mubr.bf16.gmra.mrb[0].mxu0 %v4647
      %v4707 = vpop.f32.mrb[0].mxu0
      %v4708 = vadd.f32 0.0, %v4707
      %v4709 = vpop.f32.mrb[0].mxu0
      %v4710 = vpop.f32.mrb[0].mxu0
      %v4711 = vpop.f32.mrb[0].mxu0
      %4712 = vmatprep.mubr.bf16.mxu0 0
      %4713 = vmatmul.mubr.bf16.gmra.mrb[0].mxu0 %v4650
      %v4714 = vpop.f32.mrb[0].mxu0
      %v4715 = vadd.f32 0.0, %v4714
      %v4716 = vpop.f32.mrb[0].mxu0
      %v4717 = vpop.f32.mrb[0].mxu0
      %v4718 = vadd.f32 0.0, %v4717
      %v4719 = vpop.f32.mrb[0].mxu0
      %4720 = vmatprep.mubr.bf16.mxu0 0
      %4721 = vmatmul.mubr.bf16.gmra.mrb[0].mxu0 %v4653
      %v4722 = vpop.f32.mrb[0].mxu0
      %v4723 = vadd.f32 0.0, %v4722
      %v4724 = vpop.f32.mrb[0].mxu0
      %v4725 = vpop.f32.mrb[0].mxu0
      %v4726 = vadd.f32 0.0, %v4725
      %v4727 = vpop.f32.mrb[0].mxu0
      %4728 = vmatprep.mubr.bf16.mxu0 0
      %4729 = vmatmul.mubr.bf16.gmra.mrb[0].mxu0 %v4656
      %v4730 = vpop.f32.mrb[0].mxu0
      %v4731 = vadd.f32 0.0, %v4730
      %v4732 = vpop.f32.mrb[0].mxu0
      %v4733 = vpop.f32.mrb[0].mxu0
      %v4734 = vadd.f32 0.0, %v4733
      %v4735 = vpop.f32.mrb[0].mxu0
      %4736 = vmatprep.mubr.bf16.mxu0 0
      %4737 = vmatmul.mubr.bf16.gmra.mrb[0].mxu0 %v4659
      %v4738 = vpop.f32.mrb[0].mxu0
      %v4739 = vpop.f32.mrb[0].mxu0
      %v4740 = vpop.f32.mrb[0].mxu0
      %v4741 = vadd.f32 0.0, %v4740
      %v4742 = vpop.f32.mrb[0].mxu0
      %4743 = vmatprep.mubr.bf16.mxu0 0
      %4744 = vmatmul.mubr.bf16.gmra.mrb[0].mxu0 %v4662
      %v4745 = vpop.f32.mrb[0].mxu0
      %v4746 = vpop.f32.mrb[0].mxu0
      %v4747 = vpop.f32.mrb[0].mxu0
      %v4748 = vadd.f32 0.0, %v4747
      %v4749 = vpop.f32.mrb[0].mxu0
      %4750 = vmatprep.mubr.bf16.mxu0 0
      %4751 = vmatmul.mubr.bf16.gmra.mrb[0].mxu0 %v4665
      %v4752 = vpop.f32.mrb[0].mxu0
      %v4753 = vadd.f32 0.0, %v4752
      %v4754 = vpop.f32.mrb[0].mxu0
      %v4755 = vpop.f32.mrb[0].mxu0
      %v4756 = vadd.f32 0.0, %v4755
      %v4757 = vpop.f32.mrb[0].mxu0
      %4758 = vmatprep.mubr.bf16.mxu0 0
      %4759 = vmatmul.mubr.bf16.gmra.mrb[0].mxu0 %v4668
      %v4760 = vpop.f32.mrb[0].mxu0
      %v4761 = vadd.f32 0.0, %v4760
      %v4762 = vpop.f32.mrb[0].mxu0
      %v4763 = vpop.f32.mrb[0].mxu0
      %v4764 = vadd.f32 0.0, %v4763
      %v4765 = vpop.f32.mrb[0].mxu0
      %4766 = vmatprep.mubr.bf16.mxu0 0
      %4767 = vmatmul.mubr.bf16.gmra.mrb[0].mxu0 %v4671
      %v4768 = vpop.f32.mrb[0].mxu0
      %v4769 = vadd.f32 0.0, %v4768
      %v4770 = vpop.f32.mrb[0].mxu0
      %v4771 = vpop.f32.mrb[0].mxu0
      %v4772 = vpop.f32.mrb[0].mxu0
      %4773 = vdwg.mxu0
      %v4774 = vadd.f32 %v4572, %v4708
      %v4775 = vadd.f32 %v4573, %v4715
      %v4776 = vadd.f32 %v4574, %v4718
      %v4777 = vadd.f32 %v4575, %v4723
      %v4778 = vadd.f32 %v4576, %v4726
      %v4779 = vadd.f32 %v4577, %v4731
      %v4780 = vadd.f32 %v4578, %v4734
      %v4781 = vadd.f32 %v4579, %v4741
      %v4782 = vadd.f32 %v4580, %v4748
      %v4783 = vadd.f32 %v4581, %v4753
      %v4784 = vadd.f32 %v4582, %v4756
      %v4785 = vadd.f32 %v4583, %v4761
      %v4786 = vadd.f32 %v4584, %v4764
      %v4787 = vadd.f32 %v4585, %v4769
      %s4788 = scalar_lea.vmem [#allocation2], 38
      %v4789 = vld [vmem:[%s4788] ss:$2 sm:$0xff]
      %s4790 = scalar_lea.vmem [#allocation2], 54
      %v4791 = vld [vmem:[%s4790] ss:$2 sm:$0xff]
      %s4792 = scalar_lea.vmem [#allocation2], 70
      %v4793 = vld [vmem:[%s4792] ss:$2 sm:$0xff]
      %s4794 = scalar_lea.vmem [#allocation2], 86
      %v4795 = vld [vmem:[%s4794] ss:$2 sm:$0xff]
      %s4796 = scalar_lea.vmem [#allocation2], 102
      %v4797 = vld [vmem:[%s4796] ss:$2 sm:$0xff]
      %s4798 = scalar_lea.vmem [#allocation2], 118
      %v4799 = vld [vmem:[%s4798] ss:$2 sm:$0xff]
      %s4800 = scalar_lea.vmem [#allocation2], 134
      %v4801 = vld [vmem:[%s4800] ss:$2 sm:$0xff]
      %s4802 = scalar_lea.vmem [#allocation2], 150
      %v4803 = vld [vmem:[%s4802] ss:$2 sm:$0xff]
      %s4804 = scalar_lea.vmem [#allocation2], 166
      %v4805 = vld [vmem:[%s4804] ss:$2 sm:$0xff]
      %s4806 = scalar_lea.vmem [#allocation2], 182
      %v4807 = vld [vmem:[%s4806] ss:$2 sm:$0xff]
      %s4808 = scalar_lea.vmem [#allocation2], 198
      %v4809 = vld [vmem:[%s4808] ss:$2 sm:$0xff]
      %s4810 = scalar_lea.vmem [#allocation2], 214
      %v4811 = vld [vmem:[%s4810] ss:$2 sm:$0xff]
      %s4812 = scalar_lea.vmem [#allocation2], 230
      %v4813 = vld [vmem:[%s4812] ss:$2 sm:$0xff]
      %s4814 = scalar_lea.vmem [#allocation2], 246
      %v4815 = vld [vmem:[%s4814] ss:$2 sm:$0xff]
      %s4816 = scalar_lea.vmem [#allocation2], 262
      %v4817 = vld [vmem:[%s4816] ss:$2 sm:$0xff]
      %s4818 = scalar_lea.vmem [#allocation2], 278
      %v4819 = vld [vmem:[%s4818] ss:$2 sm:$0xff]
      %s4820 = scalar_lea.vmem [#allocation2], 294
      %v4821 = vld [vmem:[%s4820] ss:$2 sm:$0x3f]
      %v4822 = vpack.c.bf16 %v4791, %v4789
      %v4823 = vpack.c.bf16 %v4795, %v4793
      %v4824 = vpack.c.bf16 %v4799, %v4797
      %v4825 = vpack.c.bf16 %v4803, %v4801
      %v4826 = vpack.c.bf16 %v4807, %v4805
      %v4827 = vpack.c.bf16 %v4811, %v4809
      %v4828 = vpack.c.bf16 %v4815, %v4813
      %v4829 = vpack.c.bf16 %v4819, %v4817
      %v4830 = vpack.c.bf16 %v4821, %v4821
      %s4831 = scalar_lea.vmem %s3, 128
      %v4832 = vld [vmem:[%s4831] sm:$0xf]
      %v4833 = vld [vmem:[%s4831 + $0x4] sm:$0xf]
      %v4834 = vld [vmem:[%s4831 + $0x8] sm:$0xf]
      %v4835 = vld [vmem:[%s4831 + $0xc] sm:$0xf]
      %v4840 = vunpack.c.l.b16 %v4832
      %v4841 = vunpack.c.l.b16 %v4833
      %v4842 = vunpack.c.l.b16 %v4834
      %v4843 = vunpack.c.l.b16 %v4835
      %v4844 = vpack.c.b16 %v4841, %v4840
      %v4845 = vpack.c.b16 %v4843, %v4842
      %v4849 = vsel %vm334, %v4822, 0
      %v4852 = vsel %vm334, %v4823, 0
      %v4855 = vsel %vm334, %v4824, 0
      %v4858 = vsel %vm334, %v4825, 0
      %v4861 = vsel %vm334, %v4826, 0
      %v4864 = vsel %vm334, %v4827, 0
      %v4867 = vsel %vm334, %v4828, 0
      %v4870 = vsel %vm334, %v4829, 0
      %v4873 = vsel %vm334, %v4830, 0
      %4875 = vmatprep.subr.bf16.mxu0 0
      %4876 = vmatpush1.bf16.msra.mxu0 %v4844
      %4877 = vmatprep.subr.bf16.mxu0 0
      %4878 = vmatpush1.bf16.msra.mxu0 %v4845
      %4879 = vmatprep.subr.bf16.mxu0 0
      %4880 = vmatpush1.bf16.msra.mxu0 0
      %4881 = vmatprep.subr.bf16.mxu0 0
      %4882 = vmatpush1.bf16.msra.mxu0 0
      %4883 = vmatprep.subr.bf16.mxu0 0
      %4884 = vmatpush1.bf16.msra.mxu0 0
      %4885 = vmatprep.subr.bf16.mxu0 0
      %4886 = vmatpush1.bf16.msra.mxu0 0
      %4887 = vmatprep.subr.bf16.mxu0 0
      %4888 = vmatpush1.bf16.msra.mxu0 0
      %4889 = vmatprep.subr.bf16.mxu0 0
      %4890 = vmatpush1.bf16.msra.mxu0 0
      %4891 = vmatprep.subr.bf16.mxu0 0
      %4892 = vmatpush1.bf16.msra.mxu0 0
      %4893 = vmatprep.subr.bf16.mxu0 0
      %4894 = vmatpush1.bf16.msra.mxu0 0
      %4895 = vmatprep.subr.bf16.mxu0 0
      %4896 = vmatpush1.bf16.msra.mxu0 0
      %4897 = vmatprep.subr.bf16.mxu0 0
      %4898 = vmatpush1.bf16.msra.mxu0 0
      %4899 = vmatprep.subr.bf16.mxu0 0
      %4900 = vmatpush1.bf16.msra.mxu0 0
      %4901 = vmatprep.subr.bf16.mxu0 0
      %4902 = vmatpush1.bf16.msra.mxu0 0
      %4903 = vmatprep.subr.bf16.mxu0 0
      %4904 = vmatpush1.bf16.msra.mxu0 0
      %4905 = vmatprep.subr.bf16.mxu0 0
      %4906 = vmatpush1.bf16.msra.mxu0 0
      %4907 = vmatprep.mubr.bf16.mxu0 0
      %4908 = vmatmul.mubr.bf16.gmra.mrb[0].mxu0 %v4849
      %v4909 = vpop.f32.mrb[0].mxu0
      %v4910 = vadd.f32 0.0, %v4909
      %v4911 = vpop.f32.mrb[0].mxu0
      %v4912 = vpop.f32.mrb[0].mxu0
      %v4913 = vpop.f32.mrb[0].mxu0
      %4914 = vmatprep.mubr.bf16.mxu0 0
      %4915 = vmatmul.mubr.bf16.gmra.mrb[0].mxu0 %v4852
      %v4916 = vpop.f32.mrb[0].mxu0
      %v4917 = vadd.f32 0.0, %v4916
      %v4918 = vpop.f32.mrb[0].mxu0
      %v4919 = vpop.f32.mrb[0].mxu0
      %v4920 = vadd.f32 0.0, %v4919
      %v4921 = vpop.f32.mrb[0].mxu0
      %4922 = vmatprep.mubr.bf16.mxu0 0
      %4923 = vmatmul.mubr.bf16.gmra.mrb[0].mxu0 %v4855
      %v4924 = vpop.f32.mrb[0].mxu0
      %v4925 = vadd.f32 0.0, %v4924
      %v4926 = vpop.f32.mrb[0].mxu0
      %v4927 = vpop.f32.mrb[0].mxu0
      %v4928 = vadd.f32 0.0, %v4927
      %v4929 = vpop.f32.mrb[0].mxu0
      %4930 = vmatprep.mubr.bf16.mxu0 0
      %4931 = vmatmul.mubr.bf16.gmra.mrb[0].mxu0 %v4858
      %v4932 = vpop.f32.mrb[0].mxu0
      %v4933 = vadd.f32 0.0, %v4932
      %v4934 = vpop.f32.mrb[0].mxu0
      %v4935 = vpop.f32.mrb[0].mxu0
      %v4936 = vadd.f32 0.0, %v4935
      %v4937 = vpop.f32.mrb[0].mxu0
      %4938 = vmatprep.mubr.bf16.mxu0 0
      %4939 = vmatmul.mubr.bf16.gmra.mrb[0].mxu0 %v4861
      %v4940 = vpop.f32.mrb[0].mxu0
      %v4941 = vpop.f32.mrb[0].mxu0
      %v4942 = vpop.f32.mrb[0].mxu0
      %v4943 = vadd.f32 0.0, %v4942
      %v4944 = vpop.f32.mrb[0].mxu0
      %4945 = vmatprep.mubr.bf16.mxu0 0
      %4946 = vmatmul.mubr.bf16.gmra.mrb[0].mxu0 %v4864
      %v4947 = vpop.f32.mrb[0].mxu0
      %v4948 = vpop.f32.mrb[0].mxu0
      %v4949 = vpop.f32.mrb[0].mxu0
      %v4950 = vadd.f32 0.0, %v4949
      %v4951 = vpop.f32.mrb[0].mxu0
      %4952 = vmatprep.mubr.bf16.mxu0 0
      %4953 = vmatmul.mubr.bf16.gmra.mrb[0].mxu0 %v4867
      %v4954 = vpop.f32.mrb[0].mxu0
      %v4955 = vadd.f32 0.0, %v4954
      %v4956 = vpop.f32.mrb[0].mxu0
      %v4957 = vpop.f32.mrb[0].mxu0
      %v4958 = vadd.f32 0.0, %v4957
      %v4959 = vpop.f32.mrb[0].mxu0
      %4960 = vmatprep.mubr.bf16.mxu0 0
      %4961 = vmatmul.mubr.bf16.gmra.mrb[0].mxu0 %v4870
      %v4962 = vpop.f32.mrb[0].mxu0
      %v4963 = vadd.f32 0.0, %v4962
      %v4964 = vpop.f32.mrb[0].mxu0
      %v4965 = vpop.f32.mrb[0].mxu0
      %v4966 = vadd.f32 0.0, %v4965
      %v4967 = vpop.f32.mrb[0].mxu0
      %4968 = vmatprep.mubr.bf16.mxu0 0
      %4969 = vmatmul.mubr.bf16.gmra.mrb[0].mxu0 %v4873
      %v4970 = vpop.f32.mrb[0].mxu0
      %v4971 = vadd.f32 0.0, %v4970
      %v4972 = vpop.f32.mrb[0].mxu0
      %v4973 = vpop.f32.mrb[0].mxu0
      %v4974 = vpop.f32.mrb[0].mxu0
      %4975 = vdwg.mxu0
      %v4976 = vadd.f32 %v4774, %v4910
      %v4977 = vadd.f32 %v4775, %v4917
      %v4978 = vadd.f32 %v4776, %v4920
      %v4979 = vadd.f32 %v4777, %v4925
      %v4980 = vadd.f32 %v4778, %v4928
      %v4981 = vadd.f32 %v4779, %v4933
      %v4982 = vadd.f32 %v4780, %v4936
      %v4983 = vadd.f32 %v4781, %v4943
      %v4984 = vadd.f32 %v4782, %v4950
      %v4985 = vadd.f32 %v4783, %v4955
      %v4986 = vadd.f32 %v4784, %v4958
      %v4987 = vadd.f32 %v4785, %v4963
      %v4988 = vadd.f32 %v4786, %v4966
      %v4989 = vadd.f32 %v4787, %v4971
      %v4990 = vld [vmem:[%s4] sm:$0x1]
      %v4992 = vlaneseq
      %v4993 = vshrl.u32 %v4992, 7
      %v4994 = vsub.s32 0, %v4993
      %v4995 = vrot.slane %v4990, %v4994
      %v4997 = vadd.f32 %v4976, %v4995
      %v4998 = vadd.f32 %v4977, %v4995
      %v4999 = vadd.f32 %v4978, %v4995
      %v5000 = vadd.f32 %v4979, %v4995
      %v5001 = vadd.f32 %v4980, %v4995
      %v5002 = vadd.f32 %v4981, %v4995
      %v5003 = vadd.f32 %v4982, %v4995
      %v5004 = vadd.f32 %v4983, %v4995
      %v5005 = vadd.f32 %v4984, %v4995
      %v5006 = vadd.f32 %v4985, %v4995
      %v5007 = vadd.f32 %v4986, %v4995
      %v5008 = vadd.f32 %v4987, %v4995
      %v5009 = vadd.f32 %v4988, %v4995
      %v5010 = vadd.f32 %v4989, %v4995
      %vm5011 = vcmp.ge.f32.partialorder %v4997, 0.0
      %vm5012 = vcmp.ge.f32.partialorder %v4998, 0.0
      %vm5013 = vcmp.ge.f32.partialorder %v4999, 0.0
      %vm5014 = vcmp.ge.f32.partialorder %v5000, 0.0
      %vm5015 = vcmp.ge.f32.partialorder %v5001, 0.0
      %vm5016 = vcmp.ge.f32.partialorder %v5002, 0.0
      %vm5017 = vcmp.ge.f32.partialorder %v5003, 0.0
      %vm5018 = vcmp.ge.f32.partialorder %v5004, 0.0
      %vm5019 = vcmp.ge.f32.partialorder %v5005, 0.0
      %vm5020 = vcmp.ge.f32.partialorder %v5006, 0.0
      %vm5021 = vcmp.ge.f32.partialorder %v5007, 0.0
      %vm5022 = vcmp.ge.f32.partialorder %v5008, 0.0
      %vm5023 = vcmp.ge.f32.partialorder %v5009, 0.0
      %vm5024 = vcmp.ge.f32.partialorder %v5010, 0.0
      %v5025 = vmul.f32 %v4997, 0.01
      %v5026 = vmul.f32 %v4998, 0.01
      %v5027 = vmul.f32 %v4999, 0.01
      %v5028 = vmul.f32 %v5000, 0.01
      %v5029 = vmul.f32 %v5001, 0.01
      %v5030 = vmul.f32 %v5002, 0.01
      %v5031 = vmul.f32 %v5003, 0.01
      %v5032 = vmul.f32 %v5004, 0.01
      %v5033 = vmul.f32 %v5005, 0.01
      %v5034 = vmul.f32 %v5006, 0.01
      %v5035 = vmul.f32 %v5007, 0.01
      %v5036 = vmul.f32 %v5008, 0.01
      %v5037 = vmul.f32 %v5009, 0.01
      %v5038 = vmul.f32 %v5010, 0.01
      %v5039 = vsel %vm5011, %v4997, %v5025
      %v5040 = vsel %vm5012, %v4998, %v5026
      %v5041 = vsel %vm5013, %v4999, %v5027
      %v5042 = vsel %vm5014, %v5000, %v5028
      %v5043 = vsel %vm5015, %v5001, %v5029
      %v5044 = vsel %vm5016, %v5002, %v5030
      %v5045 = vsel %vm5017, %v5003, %v5031
      %v5046 = vsel %vm5018, %v5004, %v5032
      %v5047 = vsel %vm5019, %v5005, %v5033
      %v5048 = vsel %vm5020, %v5006, %v5034
      %v5049 = vsel %vm5021, %v5007, %v5035
      %v5050 = vsel %vm5022, %v5008, %v5036
      %v5051 = vsel %vm5023, %v5009, %v5037
      %v5052 = vsel %vm5024, %v5010, %v5038
      %5053 = vst.msk [vmem:[#allocation3 + $0xb] sm:$0xff] %vm377, %v5039
      %vm5054 = vcmask 523266
      %5055 = vst.msk [vmem:[#allocation3 + $0x13] sm:$0xfc] %vm5054, %v5040
      %vm5056 = vcmask 517120
      %5057 = vst.msk [vmem:[#allocation3 + $0x1b] sm:$0x3] %vm5056, %v5041
      %vm5058 = vcmask 523268
      %5059 = vst.msk [vmem:[#allocation3 + $0x1b] sm:$0xf0] %vm5058, %v5042
      %5060 = vst.msk [vmem:[#allocation3 + $0x23] sm:$0xf] %vm390, %v5043
      %vm5061 = vcmask 523270
      %5062 = vst.msk [vmem:[#allocation3 + $0x23] sm:$0xc0] %vm5061, %v5044
      %vm5063 = vcmask 521216
      %5064 = vst.msk [vmem:[#allocation3 + $0x2b] sm:$0x3f] %vm5063, %v5045
      %5065 = vst.msk [vmem:[#allocation3 + $0x33] sm:$0xff] %vm377, %v5046
      %5066 = vst.msk [vmem:[#allocation3 + $0x3b] sm:$0xfc] %vm5054, %v5047
      %5067 = vst.msk [vmem:[#allocation3 + $0x43] sm:$0x3] %vm5056, %v5048
      %5068 = vst.msk [vmem:[#allocation3 + $0x43] sm:$0xf0] %vm5058, %v5049
      %5069 = vst.msk [vmem:[#allocation3 + $0x4b] sm:$0xf] %vm390, %v5050
      %5070 = vst.msk [vmem:[#allocation3 + $0x4b] sm:$0xc0] %vm5061, %v5051
      %5071 = vst.msk [vmem:[#allocation3 + $0x53] sm:$0x3f] %vm5063, %v5052
      %v5072 = vld [vmem:[#allocation3] ss:$2 sm:$0xff]
      %s5073 = scalar_lea.vmem [#allocation3], 16
      %v5074 = vld [vmem:[%s5073] ss:$2 sm:$0xff]
      %s5075 = scalar_lea.vmem [#allocation3], 32
      %v5076 = vld [vmem:[%s5075] ss:$2 sm:$0xff]
      %s5077 = scalar_lea.vmem [#allocation3], 48
      %v5078 = vld [vmem:[%s5077] ss:$2 sm:$0xff]
      %s5079 = scalar_lea.vmem [#allocation3], 64
      %v5080 = vld [vmem:[%s5079] ss:$2 sm:$0x3]
      %v5081 = vpack.c.bf16 %v5074, %v5072
      %v5082 = vpack.c.bf16 %v5078, %v5076
      %v5083 = vpack.c.bf16 %v5080, %v5080
      %v5084 = vld [vmem:[%s5] sm:$0xf]
      %v5085 = vld [vmem:[%s5 + $0x4] sm:$0xf]
      %v5086 = vld [vmem:[%s5 + $0x8] sm:$0xf]
      %v5087 = vld [vmem:[%s5 + $0xc] sm:$0xf]
      %v5088 = vld [vmem:[%s5 + $0x10] sm:$0xf]
      %v5089 = vld [vmem:[%s5 + $0x14] sm:$0xf]
      %v5090 = vld [vmem:[%s5 + $0x18] sm:$0xf]
      %v5091 = vld [vmem:[%s5 + $0x1c] sm:$0xf]
      %s5092 = scalar_lea.vmem [#allocation3], 1
      %v5093 = vld [vmem:[%s5092] ss:$2 sm:$0xff]
      %s5094 = scalar_lea.vmem [#allocation3], 17
      %v5095 = vld [vmem:[%s5094] ss:$2 sm:$0xff]
      %s5096 = scalar_lea.vmem [#allocation3], 33
      %v5097 = vld [vmem:[%s5096] ss:$2 sm:$0xff]
      %s5098 = scalar_lea.vmem [#allocation3], 49
      %v5099 = vld [vmem:[%s5098] ss:$2 sm:$0xff]
      %s5100 = scalar_lea.vmem [#allocation3], 65
      %v5101 = vld [vmem:[%s5100] ss:$2 sm:$0x3]
      %v5102 = vpack.c.bf16 %v5095, %v5093
      %v5103 = vpack.c.bf16 %v5099, %v5097
      %v5104 = vpack.c.bf16 %v5101, %v5101
      %s5105 = scalar_lea.vmem %s5, 32
      %v5106 = vld [vmem:[%s5105] sm:$0xf]
      %v5107 = vld [vmem:[%s5105 + $0x4] sm:$0xf]
      %v5108 = vld [vmem:[%s5105 + $0x8] sm:$0xf]
      %v5109 = vld [vmem:[%s5105 + $0xc] sm:$0xf]
      %v5110 = vld [vmem:[%s5105 + $0x10] sm:$0xf]
      %v5111 = vld [vmem:[%s5105 + $0x14] sm:$0xf]
      %v5112 = vld [vmem:[%s5105 + $0x18] sm:$0xf]
      %v5113 = vld [vmem:[%s5105 + $0x1c] sm:$0xf]
      %v5122 = vunpack.c.l.b16 %v5106
      %v5123 = vunpack.c.l.b16 %v5107
      %v5124 = vunpack.c.l.b16 %v5108
      %v5125 = vunpack.c.l.b16 %v5109
      %v5126 = vunpack.c.l.b16 %v5110
      %v5127 = vunpack.c.l.b16 %v5111
      %v5128 = vunpack.c.l.b16 %v5112
      %v5129 = vunpack.c.l.b16 %v5113
      %v5130 = vpack.c.b16 %v5123, %v5122
      %v5131 = vpack.c.b16 %v5125, %v5124
      %v5132 = vpack.c.b16 %v5127, %v5126
      %v5133 = vpack.c.b16 %v5129, %v5128
      %v5139 = vsel %vm377, %v5102, 0
      %v5142 = vsel %vm377, %v5103, 0
      %v5145 = vsel %vm377, %v5104, 0
      %5147 = vmatprep.subr.bf16.mxu0 0
      %5148 = vmatpush1.bf16.msra.mxu0 %v5130
      %5149 = vmatprep.subr.bf16.mxu0 0
      %5150 = vmatpush1.bf16.msra.mxu0 %v5131
      %5151 = vmatprep.subr.bf16.mxu0 0
      %5152 = vmatpush1.bf16.msra.mxu0 %v5132
      %5153 = vmatprep.subr.bf16.mxu0 0
      %5154 = vmatpush1.bf16.msra.mxu0 %v5133
      %5155 = vmatprep.subr.bf16.mxu0 0
      %5156 = vmatpush1.bf16.msra.mxu0 0
      %5157 = vmatprep.subr.bf16.mxu0 0
      %5158 = vmatpush1.bf16.msra.mxu0 0
      %5159 = vmatprep.subr.bf16.mxu0 0
      %5160 = vmatpush1.bf16.msra.mxu0 0
      %5161 = vmatprep.subr.bf16.mxu0 0
      %5162 = vmatpush1.bf16.msra.mxu0 0
      %5163 = vmatprep.subr.bf16.mxu0 0
      %5164 = vmatpush1.bf16.msra.mxu0 0
      %5165 = vmatprep.subr.bf16.mxu0 0
      %5166 = vmatpush1.bf16.msra.mxu0 0
      %5167 = vmatprep.subr.bf16.mxu0 0
      %5168 = vmatpush1.bf16.msra.mxu0 0
      %5169 = vmatprep.subr.bf16.mxu0 0
      %5170 = vmatpush1.bf16.msra.mxu0 0
      %5171 = vmatprep.subr.bf16.mxu0 0
      %5172 = vmatpush1.bf16.msra.mxu0 0
      %5173 = vmatprep.subr.bf16.mxu0 0
      %5174 = vmatpush1.bf16.msra.mxu0 0
      %5175 = vmatprep.subr.bf16.mxu0 0
      %5176 = vmatpush1.bf16.msra.mxu0 0
      %5177 = vmatprep.subr.bf16.mxu0 0
      %5178 = vmatpush1.bf16.msra.mxu0 0
      %5179 = vmatprep.mubr.bf16.mxu0 0
      %5180 = vmatmul.mubr.bf16.gmra.mrb[0].mxu0 %v5139
      %v5181 = vpop.f32.mrb[0].mxu0
      %v5182 = vadd.f32 0.0, %v5181
      %v5183 = vpop.f32.mrb[0].mxu0
      %v5184 = vpop.f32.mrb[0].mxu0
      %v5185 = vadd.f32 0.0, %v5184
      %v5186 = vpop.f32.mrb[0].mxu0
      %5187 = vmatprep.mubr.bf16.mxu0 0
      %5188 = vmatmul.mubr.bf16.gmra.mrb[0].mxu0 %v5142
      %v5189 = vpop.f32.mrb[0].mxu0
      %v5190 = vadd.f32 0.0, %v5189
      %v5191 = vpop.f32.mrb[0].mxu0
      %v5192 = vpop.f32.mrb[0].mxu0
      %v5193 = vadd.f32 0.0, %v5192
      %v5194 = vpop.f32.mrb[0].mxu0
      %5195 = vmatprep.mubr.bf16.mxu0 0
      %5196 = vmatmul.mubr.bf16.gmra.mrb[0].mxu0 %v5145
      %v5197 = vpop.f32.mrb[0].mxu0
      %v5198 = vadd.f32 0.0, %v5197
      %v5199 = vpop.f32.mrb[0].mxu0
      %v5200 = vpop.f32.mrb[0].mxu0
      %v5201 = vpop.f32.mrb[0].mxu0
      %5202 = vdwg.mxu0
      %v5211 = vunpack.c.l.b16 %v5084
      %v5212 = vunpack.c.l.b16 %v5085
      %v5213 = vunpack.c.l.b16 %v5086
      %v5214 = vunpack.c.l.b16 %v5087
      %v5215 = vunpack.c.l.b16 %v5088
      %v5216 = vunpack.c.l.b16 %v5089
      %v5217 = vunpack.c.l.b16 %v5090
      %v5218 = vunpack.c.l.b16 %v5091
      %v5219 = vpack.c.b16 %v5212, %v5211
      %v5220 = vpack.c.b16 %v5214, %v5213
      %v5221 = vpack.c.b16 %v5216, %v5215
      %v5222 = vpack.c.b16 %v5218, %v5217
      %v5228 = vsel %vm377, %v5081, 0
      %v5231 = vsel %vm377, %v5082, 0
      %v5234 = vsel %vm377, %v5083, 0
      %5236 = vmatprep.subr.bf16.mxu0 0
      %5237 = vmatpush1.bf16.msra.mxu0 %v5219
      %5238 = vmatprep.subr.bf16.mxu0 0
      %5239 = vmatpush1.bf16.msra.mxu0 %v5220
      %5240 = vmatprep.subr.bf16.mxu0 0
      %5241 = vmatpush1.bf16.msra.mxu0 %v5221
      %5242 = vmatprep.subr.bf16.mxu0 0
      %5243 = vmatpush1.bf16.msra.mxu0 %v5222
      %5244 = vmatprep.subr.bf16.mxu0 0
      %5245 = vmatpush1.bf16.msra.mxu0 0
      %5246 = vmatprep.subr.bf16.mxu0 0
      %5247 = vmatpush1.bf16.msra.mxu0 0
      %5248 = vmatprep.subr.bf16.mxu0 0
      %5249 = vmatpush1.bf16.msra.mxu0 0
      %5250 = vmatprep.subr.bf16.mxu0 0
      %5251 = vmatpush1.bf16.msra.mxu0 0
      %5252 = vmatprep.subr.bf16.mxu0 0
      %5253 = vmatpush1.bf16.msra.mxu0 0
      %5254 = vmatprep.subr.bf16.mxu0 0
      %5255 = vmatpush1.bf16.msra.mxu0 0
      %5256 = vmatprep.subr.bf16.mxu0 0
      %5257 = vmatpush1.bf16.msra.mxu0 0
      %5258 = vmatprep.subr.bf16.mxu0 0
      %5259 = vmatpush1.bf16.msra.mxu0 0
      %5260 = vmatprep.subr.bf16.mxu0 0
      %5261 = vmatpush1.bf16.msra.mxu0 0
      %5262 = vmatprep.subr.bf16.mxu0 0
      %5263 = vmatpush1.bf16.msra.mxu0 0
      %5264 = vmatprep.subr.bf16.mxu0 0
      %5265 = vmatpush1.bf16.msra.mxu0 0
      %5266 = vmatprep.subr.bf16.mxu0 0
      %5267 = vmatpush1.bf16.msra.mxu0 0
      %5268 = vmatprep.mubr.bf16.mxu0 0
      %5269 = vmatmul.mubr.bf16.gmra.mrb[0].mxu0 %v5228
      %v5270 = vpop.f32.mrb[0].mxu0
      %v5271 = vadd.f32 %v5182, %v5270
      %v5272 = vpop.f32.mrb[0].mxu0
      %v5273 = vpop.f32.mrb[0].mxu0
      %v5274 = vadd.f32 %v5185, %v5273
      %v5275 = vpop.f32.mrb[0].mxu0
      %5276 = vmatprep.mubr.bf16.mxu0 0
      %5277 = vmatmul.mubr.bf16.gmra.mrb[0].mxu0 %v5231
      %v5278 = vpop.f32.mrb[0].mxu0
      %v5279 = vadd.f32 %v5190, %v5278
      %v5280 = vpop.f32.mrb[0].mxu0
      %v5281 = vpop.f32.mrb[0].mxu0
      %v5282 = vadd.f32 %v5193, %v5281
      %v5283 = vpop.f32.mrb[0].mxu0
      %5284 = vmatprep.mubr.bf16.mxu0 0
      %5285 = vmatmul.mubr.bf16.gmra.mrb[0].mxu0 %v5234
      %v5286 = vpop.f32.mrb[0].mxu0
      %v5287 = vadd.f32 %v5198, %v5286
      %v5288 = vpop.f32.mrb[0].mxu0
      %v5289 = vpop.f32.mrb[0].mxu0
      %v5290 = vpop.f32.mrb[0].mxu0
      %5291 = vdwg.mxu0
      %s5292 = scalar_lea.vmem [#allocation3], 2
      %v5293 = vld [vmem:[%s5292] ss:$2 sm:$0xff]
      %s5294 = scalar_lea.vmem [#allocation3], 18
      %v5295 = vld [vmem:[%s5294] ss:$2 sm:$0xff]
      %s5296 = scalar_lea.vmem [#allocation3], 34
      %v5297 = vld [vmem:[%s5296] ss:$2 sm:$0xff]
      %s5298 = scalar_lea.vmem [#allocation3], 50
      %v5299 = vld [vmem:[%s5298] ss:$2 sm:$0xff]
      %s5300 = scalar_lea.vmem [#allocation3], 66
      %v5301 = vld [vmem:[%s5300] ss:$2 sm:$0x3]
      %v5302 = vpack.c.bf16 %v5295, %v5293
      %v5303 = vpack.c.bf16 %v5299, %v5297
      %v5304 = vpack.c.bf16 %v5301, %v5301
      %s5305 = scalar_lea.vmem %s5, 64
      %v5306 = vld [vmem:[%s5305] sm:$0xf]
      %v5307 = vld [vmem:[%s5305 + $0x4] sm:$0xf]
      %v5308 = vld [vmem:[%s5305 + $0x8] sm:$0xf]
      %v5309 = vld [vmem:[%s5305 + $0xc] sm:$0xf]
      %v5310 = vld [vmem:[%s5305 + $0x10] sm:$0xf]
      %v5311 = vld [vmem:[%s5305 + $0x14] sm:$0xf]
      %v5312 = vld [vmem:[%s5305 + $0x18] sm:$0xf]
      %v5313 = vld [vmem:[%s5305 + $0x1c] sm:$0xf]
      %v5322 = vunpack.c.l.b16 %v5306
      %v5323 = vunpack.c.l.b16 %v5307
      %v5324 = vunpack.c.l.b16 %v5308
      %v5325 = vunpack.c.l.b16 %v5309
      %v5326 = vunpack.c.l.b16 %v5310
      %v5327 = vunpack.c.l.b16 %v5311
      %v5328 = vunpack.c.l.b16 %v5312
      %v5329 = vunpack.c.l.b16 %v5313
      %v5330 = vpack.c.b16 %v5323, %v5322
      %v5331 = vpack.c.b16 %v5325, %v5324
      %v5332 = vpack.c.b16 %v5327, %v5326
      %v5333 = vpack.c.b16 %v5329, %v5328
      %v5339 = vsel %vm377, %v5302, 0
      %v5342 = vsel %vm377, %v5303, 0
      %v5345 = vsel %vm377, %v5304, 0
      %5347 = vmatprep.subr.bf16.mxu0 0
      %5348 = vmatpush1.bf16.msra.mxu0 %v5330
      %5349 = vmatprep.subr.bf16.mxu0 0
      %5350 = vmatpush1.bf16.msra.mxu0 %v5331
      %5351 = vmatprep.subr.bf16.mxu0 0
      %5352 = vmatpush1.bf16.msra.mxu0 %v5332
      %5353 = vmatprep.subr.bf16.mxu0 0
      %5354 = vmatpush1.bf16.msra.mxu0 %v5333
      %5355 = vmatprep.subr.bf16.mxu0 0
      %5356 = vmatpush1.bf16.msra.mxu0 0
      %5357 = vmatprep.subr.bf16.mxu0 0
      %5358 = vmatpush1.bf16.msra.mxu0 0
      %5359 = vmatprep.subr.bf16.mxu0 0
      %5360 = vmatpush1.bf16.msra.mxu0 0
      %5361 = vmatprep.subr.bf16.mxu0 0
      %5362 = vmatpush1.bf16.msra.mxu0 0
      %5363 = vmatprep.subr.bf16.mxu0 0
      %5364 = vmatpush1.bf16.msra.mxu0 0
      %5365 = vmatprep.subr.bf16.mxu0 0
      %5366 = vmatpush1.bf16.msra.mxu0 0
      %5367 = vmatprep.subr.bf16.mxu0 0
      %5368 = vmatpush1.bf16.msra.mxu0 0
      %5369 = vmatprep.subr.bf16.mxu0 0
      %5370 = vmatpush1.bf16.msra.mxu0 0
      %5371 = vmatprep.subr.bf16.mxu0 0
      %5372 = vmatpush1.bf16.msra.mxu0 0
      %5373 = vmatprep.subr.bf16.mxu0 0
      %5374 = vmatpush1.bf16.msra.mxu0 0
      %5375 = vmatprep.subr.bf16.mxu0 0
      %5376 = vmatpush1.bf16.msra.mxu0 0
      %5377 = vmatprep.subr.bf16.mxu0 0
      %5378 = vmatpush1.bf16.msra.mxu0 0
      %5379 = vmatprep.mubr.bf16.mxu0 0
      %5380 = vmatmul.mubr.bf16.gmra.mrb[0].mxu0 %v5339
      %v5381 = vpop.f32.mrb[0].mxu0
      %v5382 = vadd.f32 0.0, %v5381
      %v5383 = vpop.f32.mrb[0].mxu0
      %v5384 = vpop.f32.mrb[0].mxu0
      %v5385 = vadd.f32 0.0, %v5384
      %v5386 = vpop.f32.mrb[0].mxu0
      %5387 = vmatprep.mubr.bf16.mxu0 0
      %5388 = vmatmul.mubr.bf16.gmra.mrb[0].mxu0 %v5342
      %v5389 = vpop.f32.mrb[0].mxu0
      %v5390 = vadd.f32 0.0, %v5389
      %v5391 = vpop.f32.mrb[0].mxu0
      %v5392 = vpop.f32.mrb[0].mxu0
      %v5393 = vadd.f32 0.0, %v5392
      %v5394 = vpop.f32.mrb[0].mxu0
      %5395 = vmatprep.mubr.bf16.mxu0 0
      %5396 = vmatmul.mubr.bf16.gmra.mrb[0].mxu0 %v5345
      %v5397 = vpop.f32.mrb[0].mxu0
      %v5398 = vadd.f32 0.0, %v5397
      %v5399 = vpop.f32.mrb[0].mxu0
      %v5400 = vpop.f32.mrb[0].mxu0
      %v5401 = vpop.f32.mrb[0].mxu0
      %5402 = vdwg.mxu0
      %v5403 = vadd.f32 %v5271, %v5382
      %v5404 = vadd.f32 %v5274, %v5385
      %v5405 = vadd.f32 %v5279, %v5390
      %v5406 = vadd.f32 %v5282, %v5393
      %v5407 = vadd.f32 %v5287, %v5398
      %s5408 = scalar_lea.vmem [#allocation3], 10
      %v5409 = vld [vmem:[%s5408] ss:$2 sm:$0xff]
      %s5410 = scalar_lea.vmem [#allocation3], 26
      %v5411 = vld [vmem:[%s5410] ss:$2 sm:$0xff]
      %s5412 = scalar_lea.vmem [#allocation3], 42
      %v5413 = vld [vmem:[%s5412] ss:$2 sm:$0xff]
      %s5414 = scalar_lea.vmem [#allocation3], 58
      %v5415 = vld [vmem:[%s5414] ss:$2 sm:$0xff]
      %s5416 = scalar_lea.vmem [#allocation3], 74
      %v5417 = vld [vmem:[%s5416] ss:$2 sm:$0x3]
      %v5418 = vpack.c.bf16 %v5411, %v5409
      %v5419 = vpack.c.bf16 %v5415, %v5413
      %v5420 = vpack.c.bf16 %v5417, %v5417
      %s5421 = scalar_lea.vmem %s5, 96
      %v5422 = vld [vmem:[%s5421] sm:$0xf]
      %v5423 = vld [vmem:[%s5421 + $0x4] sm:$0xf]
      %v5424 = vld [vmem:[%s5421 + $0x8] sm:$0xf]
      %v5425 = vld [vmem:[%s5421 + $0xc] sm:$0xf]
      %v5426 = vld [vmem:[%s5421 + $0x10] sm:$0xf]
      %v5427 = vld [vmem:[%s5421 + $0x14] sm:$0xf]
      %v5428 = vld [vmem:[%s5421 + $0x18] sm:$0xf]
      %v5429 = vld [vmem:[%s5421 + $0x1c] sm:$0xf]
      %v5438 = vunpack.c.l.b16 %v5422
      %v5439 = vunpack.c.l.b16 %v5423
      %v5440 = vunpack.c.l.b16 %v5424
      %v5441 = vunpack.c.l.b16 %v5425
      %v5442 = vunpack.c.l.b16 %v5426
      %v5443 = vunpack.c.l.b16 %v5427
      %v5444 = vunpack.c.l.b16 %v5428
      %v5445 = vunpack.c.l.b16 %v5429
      %v5446 = vpack.c.b16 %v5439, %v5438
      %v5447 = vpack.c.b16 %v5441, %v5440
      %v5448 = vpack.c.b16 %v5443, %v5442
      %v5449 = vpack.c.b16 %v5445, %v5444
      %v5455 = vsel %vm377, %v5418, 0
      %v5458 = vsel %vm377, %v5419, 0
      %v5461 = vsel %vm377, %v5420, 0
      %5463 = vmatprep.subr.bf16.mxu0 0
      %5464 = vmatpush1.bf16.msra.mxu0 %v5446
      %5465 = vmatprep.subr.bf16.mxu0 0
      %5466 = vmatpush1.bf16.msra.mxu0 %v5447
      %5467 = vmatprep.subr.bf16.mxu0 0
      %5468 = vmatpush1.bf16.msra.mxu0 %v5448
      %5469 = vmatprep.subr.bf16.mxu0 0
      %5470 = vmatpush1.bf16.msra.mxu0 %v5449
      %5471 = vmatprep.subr.bf16.mxu0 0
      %5472 = vmatpush1.bf16.msra.mxu0 0
      %5473 = vmatprep.subr.bf16.mxu0 0
      %5474 = vmatpush1.bf16.msra.mxu0 0
      %5475 = vmatprep.subr.bf16.mxu0 0
      %5476 = vmatpush1.bf16.msra.mxu0 0
      %5477 = vmatprep.subr.bf16.mxu0 0
      %5478 = vmatpush1.bf16.msra.mxu0 0
      %5479 = vmatprep.subr.bf16.mxu0 0
      %5480 = vmatpush1.bf16.msra.mxu0 0
      %5481 = vmatprep.subr.bf16.mxu0 0
      %5482 = vmatpush1.bf16.msra.mxu0 0
      %5483 = vmatprep.subr.bf16.mxu0 0
      %5484 = vmatpush1.bf16.msra.mxu0 0
      %5485 = vmatprep.subr.bf16.mxu0 0
      %5486 = vmatpush1.bf16.msra.mxu0 0
      %5487 = vmatprep.subr.bf16.mxu0 0
      %5488 = vmatpush1.bf16.msra.mxu0 0
      %5489 = vmatprep.subr.bf16.mxu0 0
      %5490 = vmatpush1.bf16.msra.mxu0 0
      %5491 = vmatprep.subr.bf16.mxu0 0
      %5492 = vmatpush1.bf16.msra.mxu0 0
      %5493 = vmatprep.subr.bf16.mxu0 0
      %5494 = vmatpush1.bf16.msra.mxu0 0
      %5495 = vmatprep.mubr.bf16.mxu0 0
      %5496 = vmatmul.mubr.bf16.gmra.mrb[0].mxu0 %v5455
      %v5497 = vpop.f32.mrb[0].mxu0
      %v5498 = vadd.f32 0.0, %v5497
      %v5499 = vpop.f32.mrb[0].mxu0
      %v5500 = vpop.f32.mrb[0].mxu0
      %v5501 = vadd.f32 0.0, %v5500
      %v5502 = vpop.f32.mrb[0].mxu0
      %5503 = vmatprep.mubr.bf16.mxu0 0
      %5504 = vmatmul.mubr.bf16.gmra.mrb[0].mxu0 %v5458
      %v5505 = vpop.f32.mrb[0].mxu0
      %v5506 = vadd.f32 0.0, %v5505
      %v5507 = vpop.f32.mrb[0].mxu0
      %v5508 = vpop.f32.mrb[0].mxu0
      %v5509 = vadd.f32 0.0, %v5508
      %v5510 = vpop.f32.mrb[0].mxu0
      %5511 = vmatprep.mubr.bf16.mxu0 0
      %5512 = vmatmul.mubr.bf16.gmra.mrb[0].mxu0 %v5461
      %v5513 = vpop.f32.mrb[0].mxu0
      %v5514 = vadd.f32 0.0, %v5513
      %v5515 = vpop.f32.mrb[0].mxu0
      %v5516 = vpop.f32.mrb[0].mxu0
      %v5517 = vpop.f32.mrb[0].mxu0
      %5518 = vdwg.mxu0
      %v5519 = vadd.f32 %v5403, %v5498
      %v5520 = vadd.f32 %v5404, %v5501
      %v5521 = vadd.f32 %v5405, %v5506
      %v5522 = vadd.f32 %v5406, %v5509
      %v5523 = vadd.f32 %v5407, %v5514
      %s5524 = scalar_lea.vmem [#allocation3], 11
      %v5525 = vld [vmem:[%s5524] ss:$2 sm:$0xff]
      %s5526 = scalar_lea.vmem [#allocation3], 27
      %v5527 = vld [vmem:[%s5526] ss:$2 sm:$0xff]
      %s5528 = scalar_lea.vmem [#allocation3], 43
      %v5529 = vld [vmem:[%s5528] ss:$2 sm:$0xff]
      %s5530 = scalar_lea.vmem [#allocation3], 59
      %v5531 = vld [vmem:[%s5530] ss:$2 sm:$0xff]
      %s5532 = scalar_lea.vmem [#allocation3], 75
      %v5533 = vld [vmem:[%s5532] ss:$2 sm:$0x3]
      %v5534 = vpack.c.bf16 %v5527, %v5525
      %v5535 = vpack.c.bf16 %v5531, %v5529
      %v5536 = vpack.c.bf16 %v5533, %v5533
      %s5537 = scalar_lea.vmem %s5, 128
      %v5538 = vld [vmem:[%s5537] sm:$0xf]
      %v5539 = vld [vmem:[%s5537 + $0x4] sm:$0xf]
      %v5540 = vld [vmem:[%s5537 + $0x8] sm:$0xf]
      %v5541 = vld [vmem:[%s5537 + $0xc] sm:$0xf]
      %v5542 = vld [vmem:[%s5537 + $0x10] sm:$0xf]
      %v5543 = vld [vmem:[%s5537 + $0x14] sm:$0xf]
      %v5544 = vld [vmem:[%s5537 + $0x18] sm:$0xf]
      %v5545 = vld [vmem:[%s5537 + $0x1c] sm:$0xf]
      %v5554 = vunpack.c.l.b16 %v5538
      %v5555 = vunpack.c.l.b16 %v5539
      %v5556 = vunpack.c.l.b16 %v5540
      %v5557 = vunpack.c.l.b16 %v5541
      %v5558 = vunpack.c.l.b16 %v5542
      %v5559 = vunpack.c.l.b16 %v5543
      %v5560 = vunpack.c.l.b16 %v5544
      %v5561 = vunpack.c.l.b16 %v5545
      %v5562 = vpack.c.b16 %v5555, %v5554
      %v5563 = vpack.c.b16 %v5557, %v5556
      %v5564 = vpack.c.b16 %v5559, %v5558
      %v5565 = vpack.c.b16 %v5561, %v5560
      %v5571 = vsel %vm377, %v5534, 0
      %v5574 = vsel %vm377, %v5535, 0
      %v5577 = vsel %vm377, %v5536, 0
      %5579 = vmatprep.subr.bf16.mxu0 0
      %5580 = vmatpush1.bf16.msra.mxu0 %v5562
      %5581 = vmatprep.subr.bf16.mxu0 0
      %5582 = vmatpush1.bf16.msra.mxu0 %v5563
      %5583 = vmatprep.subr.bf16.mxu0 0
      %5584 = vmatpush1.bf16.msra.mxu0 %v5564
      %5585 = vmatprep.subr.bf16.mxu0 0
      %5586 = vmatpush1.bf16.msra.mxu0 %v5565
      %5587 = vmatprep.subr.bf16.mxu0 0
      %5588 = vmatpush1.bf16.msra.mxu0 0
      %5589 = vmatprep.subr.bf16.mxu0 0
      %5590 = vmatpush1.bf16.msra.mxu0 0
      %5591 = vmatprep.subr.bf16.mxu0 0
      %5592 = vmatpush1.bf16.msra.mxu0 0
      %5593 = vmatprep.subr.bf16.mxu0 0
      %5594 = vmatpush1.bf16.msra.mxu0 0
      %5595 = vmatprep.subr.bf16.mxu0 0
      %5596 = vmatpush1.bf16.msra.mxu0 0
      %5597 = vmatprep.subr.bf16.mxu0 0
      %5598 = vmatpush1.bf16.msra.mxu0 0
      %5599 = vmatprep.subr.bf16.mxu0 0
      %5600 = vmatpush1.bf16.msra.mxu0 0
      %5601 = vmatprep.subr.bf16.mxu0 0
      %5602 = vmatpush1.bf16.msra.mxu0 0
      %5603 = vmatprep.subr.bf16.mxu0 0
      %5604 = vmatpush1.bf16.msra.mxu0 0
      %5605 = vmatprep.subr.bf16.mxu0 0
      %5606 = vmatpush1.bf16.msra.mxu0 0
      %5607 = vmatprep.subr.bf16.mxu0 0
      %5608 = vmatpush1.bf16.msra.mxu0 0
      %5609 = vmatprep.subr.bf16.mxu0 0
      %5610 = vmatpush1.bf16.msra.mxu0 0
      %5611 = vmatprep.mubr.bf16.mxu0 0
      %5612 = vmatmul.mubr.bf16.gmra.mrb[0].mxu0 %v5571
      %v5613 = vpop.f32.mrb[0].mxu0
      %v5614 = vadd.f32 0.0, %v5613
      %v5615 = vpop.f32.mrb[0].mxu0
      %v5616 = vpop.f32.mrb[0].mxu0
      %v5617 = vadd.f32 0.0, %v5616
      %v5618 = vpop.f32.mrb[0].mxu0
      %5619 = vmatprep.mubr.bf16.mxu0 0
      %5620 = vmatmul.mubr.bf16.gmra.mrb[0].mxu0 %v5574
      %v5621 = vpop.f32.mrb[0].mxu0
      %v5622 = vadd.f32 0.0, %v5621
      %v5623 = vpop.f32.mrb[0].mxu0
      %v5624 = vpop.f32.mrb[0].mxu0
      %v5625 = vadd.f32 0.0, %v5624
      %v5626 = vpop.f32.mrb[0].mxu0
      %5627 = vmatprep.mubr.bf16.mxu0 0
      %5628 = vmatmul.mubr.bf16.gmra.mrb[0].mxu0 %v5577
      %v5629 = vpop.f32.mrb[0].mxu0
      %v5630 = vadd.f32 0.0, %v5629
      %v5631 = vpop.f32.mrb[0].mxu0
      %v5632 = vpop.f32.mrb[0].mxu0
      %v5633 = vpop.f32.mrb[0].mxu0
      %5634 = vdwg.mxu0
      %v5635 = vadd.f32 %v5519, %v5614
      %v5636 = vadd.f32 %v5520, %v5617
      %v5637 = vadd.f32 %v5521, %v5622
      %v5638 = vadd.f32 %v5522, %v5625
      %v5639 = vadd.f32 %v5523, %v5630
      %s5640 = scalar_lea.vmem [#allocation3], 12
      %v5641 = vld [vmem:[%s5640] ss:$2 sm:$0xff]
      %s5642 = scalar_lea.vmem [#allocation3], 28
      %v5643 = vld [vmem:[%s5642] ss:$2 sm:$0xff]
      %s5644 = scalar_lea.vmem [#allocation3], 44
      %v5645 = vld [vmem:[%s5644] ss:$2 sm:$0xff]
      %s5646 = scalar_lea.vmem [#allocation3], 60
      %v5647 = vld [vmem:[%s5646] ss:$2 sm:$0xff]
      %s5648 = scalar_lea.vmem [#allocation3], 76
      %v5649 = vld [vmem:[%s5648] ss:$2 sm:$0x3]
      %v5650 = vpack.c.bf16 %v5643, %v5641
      %v5651 = vpack.c.bf16 %v5647, %v5645
      %v5652 = vpack.c.bf16 %v5649, %v5649
      %s5653 = scalar_lea.vmem %s5, 160
      %v5654 = vld [vmem:[%s5653] sm:$0xf]
      %v5655 = vld [vmem:[%s5653 + $0x4] sm:$0xf]
      %v5656 = vld [vmem:[%s5653 + $0x8] sm:$0xf]
      %v5657 = vld [vmem:[%s5653 + $0xc] sm:$0xf]
      %v5658 = vld [vmem:[%s5653 + $0x10] sm:$0xf]
      %v5659 = vld [vmem:[%s5653 + $0x14] sm:$0xf]
      %v5660 = vld [vmem:[%s5653 + $0x18] sm:$0xf]
      %v5661 = vld [vmem:[%s5653 + $0x1c] sm:$0xf]
      %v5670 = vunpack.c.l.b16 %v5654
      %v5671 = vunpack.c.l.b16 %v5655
      %v5672 = vunpack.c.l.b16 %v5656
      %v5673 = vunpack.c.l.b16 %v5657
      %v5674 = vunpack.c.l.b16 %v5658
      %v5675 = vunpack.c.l.b16 %v5659
      %v5676 = vunpack.c.l.b16 %v5660
      %v5677 = vunpack.c.l.b16 %v5661
      %v5678 = vpack.c.b16 %v5671, %v5670
      %v5679 = vpack.c.b16 %v5673, %v5672
      %v5680 = vpack.c.b16 %v5675, %v5674
      %v5681 = vpack.c.b16 %v5677, %v5676
      %v5687 = vsel %vm377, %v5650, 0
      %v5690 = vsel %vm377, %v5651, 0
      %v5693 = vsel %vm377, %v5652, 0
      %5695 = vmatprep.subr.bf16.mxu0 0
      %5696 = vmatpush1.bf16.msra.mxu0 %v5678
      %5697 = vmatprep.subr.bf16.mxu0 0
      %5698 = vmatpush1.bf16.msra.mxu0 %v5679
      %5699 = vmatprep.subr.bf16.mxu0 0
      %5700 = vmatpush1.bf16.msra.mxu0 %v5680
      %5701 = vmatprep.subr.bf16.mxu0 0
      %5702 = vmatpush1.bf16.msra.mxu0 %v5681
      %5703 = vmatprep.subr.bf16.mxu0 0
      %5704 = vmatpush1.bf16.msra.mxu0 0
      %5705 = vmatprep.subr.bf16.mxu0 0
      %5706 = vmatpush1.bf16.msra.mxu0 0
      %5707 = vmatprep.subr.bf16.mxu0 0
      %5708 = vmatpush1.bf16.msra.mxu0 0
      %5709 = vmatprep.subr.bf16.mxu0 0
      %5710 = vmatpush1.bf16.msra.mxu0 0
      %5711 = vmatprep.subr.bf16.mxu0 0
      %5712 = vmatpush1.bf16.msra.mxu0 0
      %5713 = vmatprep.subr.bf16.mxu0 0
      %5714 = vmatpush1.bf16.msra.mxu0 0
      %5715 = vmatprep.subr.bf16.mxu0 0
      %5716 = vmatpush1.bf16.msra.mxu0 0
      %5717 = vmatprep.subr.bf16.mxu0 0
      %5718 = vmatpush1.bf16.msra.mxu0 0
      %5719 = vmatprep.subr.bf16.mxu0 0
      %5720 = vmatpush1.bf16.msra.mxu0 0
      %5721 = vmatprep.subr.bf16.mxu0 0
      %5722 = vmatpush1.bf16.msra.mxu0 0
      %5723 = vmatprep.subr.bf16.mxu0 0
      %5724 = vmatpush1.bf16.msra.mxu0 0
      %5725 = vmatprep.subr.bf16.mxu0 0
      %5726 = vmatpush1.bf16.msra.mxu0 0
      %5727 = vmatprep.mubr.bf16.mxu0 0
      %5728 = vmatmul.mubr.bf16.gmra.mrb[0].mxu0 %v5687
      %v5729 = vpop.f32.mrb[0].mxu0
      %v5730 = vadd.f32 0.0, %v5729
      %v5731 = vpop.f32.mrb[0].mxu0
      %v5732 = vpop.f32.mrb[0].mxu0
      %v5733 = vadd.f32 0.0, %v5732
      %v5734 = vpop.f32.mrb[0].mxu0
      %5735 = vmatprep.mubr.bf16.mxu0 0
      %5736 = vmatmul.mubr.bf16.gmra.mrb[0].mxu0 %v5690
      %v5737 = vpop.f32.mrb[0].mxu0
      %v5738 = vadd.f32 0.0, %v5737
      %v5739 = vpop.f32.mrb[0].mxu0
      %v5740 = vpop.f32.mrb[0].mxu0
      %v5741 = vadd.f32 0.0, %v5740
      %v5742 = vpop.f32.mrb[0].mxu0
      %5743 = vmatprep.mubr.bf16.mxu0 0
      %5744 = vmatmul.mubr.bf16.gmra.mrb[0].mxu0 %v5693
      %v5745 = vpop.f32.mrb[0].mxu0
      %v5746 = vadd.f32 0.0, %v5745
      %v5747 = vpop.f32.mrb[0].mxu0
      %v5748 = vpop.f32.mrb[0].mxu0
      %v5749 = vpop.f32.mrb[0].mxu0
      %5750 = vdwg.mxu0
      %v5751 = vadd.f32 %v5635, %v5730
      %v5752 = vadd.f32 %v5636, %v5733
      %v5753 = vadd.f32 %v5637, %v5738
      %v5754 = vadd.f32 %v5638, %v5741
      %v5755 = vadd.f32 %v5639, %v5746
      %s5756 = scalar_lea.vmem [#allocation3], 20
      %v5757 = vld [vmem:[%s5756] ss:$2 sm:$0xff]
      %s5758 = scalar_lea.vmem [#allocation3], 36
      %v5759 = vld [vmem:[%s5758] ss:$2 sm:$0xff]
      %s5760 = scalar_lea.vmem [#allocation3], 52
      %v5761 = vld [vmem:[%s5760] ss:$2 sm:$0xff]
      %s5762 = scalar_lea.vmem [#allocation3], 68
      %v5763 = vld [vmem:[%s5762] ss:$2 sm:$0xff]
      %s5764 = scalar_lea.vmem [#allocation3], 84
      %v5765 = vld [vmem:[%s5764] ss:$2 sm:$0x3]
      %v5766 = vpack.c.bf16 %v5759, %v5757
      %v5767 = vpack.c.bf16 %v5763, %v5761
      %v5768 = vpack.c.bf16 %v5765, %v5765
      %s5769 = scalar_lea.vmem %s5, 192
      %v5770 = vld [vmem:[%s5769] sm:$0xf]
      %v5771 = vld [vmem:[%s5769 + $0x4] sm:$0xf]
      %v5772 = vld [vmem:[%s5769 + $0x8] sm:$0xf]
      %v5773 = vld [vmem:[%s5769 + $0xc] sm:$0xf]
      %v5774 = vld [vmem:[%s5769 + $0x10] sm:$0xf]
      %v5775 = vld [vmem:[%s5769 + $0x14] sm:$0xf]
      %v5776 = vld [vmem:[%s5769 + $0x18] sm:$0xf]
      %v5777 = vld [vmem:[%s5769 + $0x1c] sm:$0xf]
      %v5786 = vunpack.c.l.b16 %v5770
      %v5787 = vunpack.c.l.b16 %v5771
      %v5788 = vunpack.c.l.b16 %v5772
      %v5789 = vunpack.c.l.b16 %v5773
      %v5790 = vunpack.c.l.b16 %v5774
      %v5791 = vunpack.c.l.b16 %v5775
      %v5792 = vunpack.c.l.b16 %v5776
      %v5793 = vunpack.c.l.b16 %v5777
      %v5794 = vpack.c.b16 %v5787, %v5786
      %v5795 = vpack.c.b16 %v5789, %v5788
      %v5796 = vpack.c.b16 %v5791, %v5790
      %v5797 = vpack.c.b16 %v5793, %v5792
      %v5803 = vsel %vm377, %v5766, 0
      %v5806 = vsel %vm377, %v5767, 0
      %v5809 = vsel %vm377, %v5768, 0
      %5811 = vmatprep.subr.bf16.mxu0 0
      %5812 = vmatpush1.bf16.msra.mxu0 %v5794
      %5813 = vmatprep.subr.bf16.mxu0 0
      %5814 = vmatpush1.bf16.msra.mxu0 %v5795
      %5815 = vmatprep.subr.bf16.mxu0 0
      %5816 = vmatpush1.bf16.msra.mxu0 %v5796
      %5817 = vmatprep.subr.bf16.mxu0 0
      %5818 = vmatpush1.bf16.msra.mxu0 %v5797
      %5819 = vmatprep.subr.bf16.mxu0 0
      %5820 = vmatpush1.bf16.msra.mxu0 0
      %5821 = vmatprep.subr.bf16.mxu0 0
      %5822 = vmatpush1.bf16.msra.mxu0 0
      %5823 = vmatprep.subr.bf16.mxu0 0
      %5824 = vmatpush1.bf16.msra.mxu0 0
      %5825 = vmatprep.subr.bf16.mxu0 0
      %5826 = vmatpush1.bf16.msra.mxu0 0
      %5827 = vmatprep.subr.bf16.mxu0 0
      %5828 = vmatpush1.bf16.msra.mxu0 0
      %5829 = vmatprep.subr.bf16.mxu0 0
      %5830 = vmatpush1.bf16.msra.mxu0 0
      %5831 = vmatprep.subr.bf16.mxu0 0
      %5832 = vmatpush1.bf16.msra.mxu0 0
      %5833 = vmatprep.subr.bf16.mxu0 0
      %5834 = vmatpush1.bf16.msra.mxu0 0
      %5835 = vmatprep.subr.bf16.mxu0 0
      %5836 = vmatpush1.bf16.msra.mxu0 0
      %5837 = vmatprep.subr.bf16.mxu0 0
      %5838 = vmatpush1.bf16.msra.mxu0 0
      %5839 = vmatprep.subr.bf16.mxu0 0
      %5840 = vmatpush1.bf16.msra.mxu0 0
      %5841 = vmatprep.subr.bf16.mxu0 0
      %5842 = vmatpush1.bf16.msra.mxu0 0
      %5843 = vmatprep.mubr.bf16.mxu0 0
      %5844 = vmatmul.mubr.bf16.gmra.mrb[0].mxu0 %v5803
      %v5845 = vpop.f32.mrb[0].mxu0
      %v5846 = vadd.f32 0.0, %v5845
      %v5847 = vpop.f32.mrb[0].mxu0
      %v5848 = vpop.f32.mrb[0].mxu0
      %v5849 = vadd.f32 0.0, %v5848
      %v5850 = vpop.f32.mrb[0].mxu0
      %5851 = vmatprep.mubr.bf16.mxu0 0
      %5852 = vmatmul.mubr.bf16.gmra.mrb[0].mxu0 %v5806
      %v5853 = vpop.f32.mrb[0].mxu0
      %v5854 = vadd.f32 0.0, %v5853
      %v5855 = vpop.f32.mrb[0].mxu0
      %v5856 = vpop.f32.mrb[0].mxu0
      %v5857 = vadd.f32 0.0, %v5856
      %v5858 = vpop.f32.mrb[0].mxu0
      %5859 = vmatprep.mubr.bf16.mxu0 0
      %5860 = vmatmul.mubr.bf16.gmra.mrb[0].mxu0 %v5809
      %v5861 = vpop.f32.mrb[0].mxu0
      %v5862 = vadd.f32 0.0, %v5861
      %v5863 = vpop.f32.mrb[0].mxu0
      %v5864 = vpop.f32.mrb[0].mxu0
      %v5865 = vpop.f32.mrb[0].mxu0
      %5866 = vdwg.mxu0
      %v5867 = vadd.f32 %v5751, %v5846
      %v5868 = vadd.f32 %v5752, %v5849
      %v5869 = vadd.f32 %v5753, %v5854
      %v5870 = vadd.f32 %v5754, %v5857
      %v5871 = vadd.f32 %v5755, %v5862
      %s5872 = scalar_lea.vmem [#allocation3], 21
      %v5873 = vld [vmem:[%s5872] ss:$2 sm:$0xff]
      %s5874 = scalar_lea.vmem [#allocation3], 37
      %v5875 = vld [vmem:[%s5874] ss:$2 sm:$0xff]
      %s5876 = scalar_lea.vmem [#allocation3], 53
      %v5877 = vld [vmem:[%s5876] ss:$2 sm:$0xff]
      %s5878 = scalar_lea.vmem [#allocation3], 69
      %v5879 = vld [vmem:[%s5878] ss:$2 sm:$0xff]
      %s5880 = scalar_lea.vmem [#allocation3], 85
      %v5881 = vld [vmem:[%s5880] ss:$2 sm:$0x3]
      %v5882 = vpack.c.bf16 %v5875, %v5873
      %v5883 = vpack.c.bf16 %v5879, %v5877
      %v5884 = vpack.c.bf16 %v5881, %v5881
      %s5885 = scalar_lea.vmem %s5, 224
      %v5886 = vld [vmem:[%s5885] sm:$0xf]
      %v5887 = vld [vmem:[%s5885 + $0x4] sm:$0xf]
      %v5888 = vld [vmem:[%s5885 + $0x8] sm:$0xf]
      %v5889 = vld [vmem:[%s5885 + $0xc] sm:$0xf]
      %v5890 = vld [vmem:[%s5885 + $0x10] sm:$0xf]
      %v5891 = vld [vmem:[%s5885 + $0x14] sm:$0xf]
      %v5892 = vld [vmem:[%s5885 + $0x18] sm:$0xf]
      %v5893 = vld [vmem:[%s5885 + $0x1c] sm:$0xf]
      %v5902 = vunpack.c.l.b16 %v5886
      %v5903 = vunpack.c.l.b16 %v5887
      %v5904 = vunpack.c.l.b16 %v5888
      %v5905 = vunpack.c.l.b16 %v5889
      %v5906 = vunpack.c.l.b16 %v5890
      %v5907 = vunpack.c.l.b16 %v5891
      %v5908 = vunpack.c.l.b16 %v5892
      %v5909 = vunpack.c.l.b16 %v5893
      %v5910 = vpack.c.b16 %v5903, %v5902
      %v5911 = vpack.c.b16 %v5905, %v5904
      %v5912 = vpack.c.b16 %v5907, %v5906
      %v5913 = vpack.c.b16 %v5909, %v5908
      %v5919 = vsel %vm377, %v5882, 0
      %v5922 = vsel %vm377, %v5883, 0
      %v5925 = vsel %vm377, %v5884, 0
      %5927 = vmatprep.subr.bf16.mxu0 0
      %5928 = vmatpush1.bf16.msra.mxu0 %v5910
      %5929 = vmatprep.subr.bf16.mxu0 0
      %5930 = vmatpush1.bf16.msra.mxu0 %v5911
      %5931 = vmatprep.subr.bf16.mxu0 0
      %5932 = vmatpush1.bf16.msra.mxu0 %v5912
      %5933 = vmatprep.subr.bf16.mxu0 0
      %5934 = vmatpush1.bf16.msra.mxu0 %v5913
      %5935 = vmatprep.subr.bf16.mxu0 0
      %5936 = vmatpush1.bf16.msra.mxu0 0
      %5937 = vmatprep.subr.bf16.mxu0 0
      %5938 = vmatpush1.bf16.msra.mxu0 0
      %5939 = vmatprep.subr.bf16.mxu0 0
      %5940 = vmatpush1.bf16.msra.mxu0 0
      %5941 = vmatprep.subr.bf16.mxu0 0
      %5942 = vmatpush1.bf16.msra.mxu0 0
      %5943 = vmatprep.subr.bf16.mxu0 0
      %5944 = vmatpush1.bf16.msra.mxu0 0
      %5945 = vmatprep.subr.bf16.mxu0 0
      %5946 = vmatpush1.bf16.msra.mxu0 0
      %5947 = vmatprep.subr.bf16.mxu0 0
      %5948 = vmatpush1.bf16.msra.mxu0 0
      %5949 = vmatprep.subr.bf16.mxu0 0
      %5950 = vmatpush1.bf16.msra.mxu0 0
      %5951 = vmatprep.subr.bf16.mxu0 0
      %5952 = vmatpush1.bf16.msra.mxu0 0
      %5953 = vmatprep.subr.bf16.mxu0 0
      %5954 = vmatpush1.bf16.msra.mxu0 0
      %5955 = vmatprep.subr.bf16.mxu0 0
      %5956 = vmatpush1.bf16.msra.mxu0 0
      %5957 = vmatprep.subr.bf16.mxu0 0
      %5958 = vmatpush1.bf16.msra.mxu0 0
      %5959 = vmatprep.mubr.bf16.mxu0 0
      %5960 = vmatmul.mubr.bf16.gmra.mrb[0].mxu0 %v5919
      %v5961 = vpop.f32.mrb[0].mxu0
      %v5962 = vadd.f32 0.0, %v5961
      %v5963 = vpop.f32.mrb[0].mxu0
      %v5964 = vpop.f32.mrb[0].mxu0
      %v5965 = vadd.f32 0.0, %v5964
      %v5966 = vpop.f32.mrb[0].mxu0
      %5967 = vmatprep.mubr.bf16.mxu0 0
      %5968 = vmatmul.mubr.bf16.gmra.mrb[0].mxu0 %v5922
      %v5969 = vpop.f32.mrb[0].mxu0
      %v5970 = vadd.f32 0.0, %v5969
      %v5971 = vpop.f32.mrb[0].mxu0
      %v5972 = vpop.f32.mrb[0].mxu0
      %v5973 = vadd.f32 0.0, %v5972
      %v5974 = vpop.f32.mrb[0].mxu0
      %5975 = vmatprep.mubr.bf16.mxu0 0
      %5976 = vmatmul.mubr.bf16.gmra.mrb[0].mxu0 %v5925
      %v5977 = vpop.f32.mrb[0].mxu0
      %v5978 = vadd.f32 0.0, %v5977
      %v5979 = vpop.f32.mrb[0].mxu0
      %v5980 = vpop.f32.mrb[0].mxu0
      %v5981 = vpop.f32.mrb[0].mxu0
      %5982 = vdwg.mxu0
      %v5983 = vadd.f32 %v5867, %v5962
      %v5984 = vadd.f32 %v5868, %v5965
      %v5985 = vadd.f32 %v5869, %v5970
      %v5986 = vadd.f32 %v5870, %v5973
      %v5987 = vadd.f32 %v5871, %v5978
      %s5988 = scalar_lea.vmem [#allocation3], 22
      %v5989 = vld [vmem:[%s5988] ss:$2 sm:$0xff]
      %s5990 = scalar_lea.vmem [#allocation3], 38
      %v5991 = vld [vmem:[%s5990] ss:$2 sm:$0xff]
      %s5992 = scalar_lea.vmem [#allocation3], 54
      %v5993 = vld [vmem:[%s5992] ss:$2 sm:$0xff]
      %s5994 = scalar_lea.vmem [#allocation3], 70
      %v5995 = vld [vmem:[%s5994] ss:$2 sm:$0xff]
      %s5996 = scalar_lea.vmem [#allocation3], 86
      %v5997 = vld [vmem:[%s5996] ss:$2 sm:$0x3]
      %v5998 = vpack.c.bf16 %v5991, %v5989
      %v5999 = vpack.c.bf16 %v5995, %v5993
      %v6000 = vpack.c.bf16 %v5997, %v5997
      %s6001 = scalar_lea.vmem %s5, 256
      %v6002 = vld [vmem:[%s6001] sm:$0xf]
      %v6003 = vld [vmem:[%s6001 + $0x4] sm:$0xf]
      %v6004 = vld [vmem:[%s6001 + $0x8] sm:$0xf]
      %v6005 = vld [vmem:[%s6001 + $0xc] sm:$0xf]
      %v6006 = vld [vmem:[%s6001 + $0x10] sm:$0xf]
      %v6007 = vld [vmem:[%s6001 + $0x14] sm:$0xf]
      %v6008 = vld [vmem:[%s6001 + $0x18] sm:$0xf]
      %v6009 = vld [vmem:[%s6001 + $0x1c] sm:$0xf]
      %v6018 = vunpack.c.l.b16 %v6002
      %v6019 = vunpack.c.l.b16 %v6003
      %v6020 = vunpack.c.l.b16 %v6004
      %v6021 = vunpack.c.l.b16 %v6005
      %v6022 = vunpack.c.l.b16 %v6006
      %v6023 = vunpack.c.l.b16 %v6007
      %v6024 = vunpack.c.l.b16 %v6008
      %v6025 = vunpack.c.l.b16 %v6009
      %v6026 = vpack.c.b16 %v6019, %v6018
      %v6027 = vpack.c.b16 %v6021, %v6020
      %v6028 = vpack.c.b16 %v6023, %v6022
      %v6029 = vpack.c.b16 %v6025, %v6024
      %v6035 = vsel %vm377, %v5998, 0
      %v6038 = vsel %vm377, %v5999, 0
      %v6041 = vsel %vm377, %v6000, 0
      %6043 = vmatprep.subr.bf16.mxu0 0
      %6044 = vmatpush1.bf16.msra.mxu0 %v6026
      %6045 = vmatprep.subr.bf16.mxu0 0
      %6046 = vmatpush1.bf16.msra.mxu0 %v6027
      %6047 = vmatprep.subr.bf16.mxu0 0
      %6048 = vmatpush1.bf16.msra.mxu0 %v6028
      %6049 = vmatprep.subr.bf16.mxu0 0
      %6050 = vmatpush1.bf16.msra.mxu0 %v6029
      %6051 = vmatprep.subr.bf16.mxu0 0
      %6052 = vmatpush1.bf16.msra.mxu0 0
      %6053 = vmatprep.subr.bf16.mxu0 0
      %6054 = vmatpush1.bf16.msra.mxu0 0
      %6055 = vmatprep.subr.bf16.mxu0 0
      %6056 = vmatpush1.bf16.msra.mxu0 0
      %6057 = vmatprep.subr.bf16.mxu0 0
      %6058 = vmatpush1.bf16.msra.mxu0 0
      %6059 = vmatprep.subr.bf16.mxu0 0
      %6060 = vmatpush1.bf16.msra.mxu0 0
      %6061 = vmatprep.subr.bf16.mxu0 0
      %6062 = vmatpush1.bf16.msra.mxu0 0
      %6063 = vmatprep.subr.bf16.mxu0 0
      %6064 = vmatpush1.bf16.msra.mxu0 0
      %6065 = vmatprep.subr.bf16.mxu0 0
      %6066 = vmatpush1.bf16.msra.mxu0 0
      %6067 = vmatprep.subr.bf16.mxu0 0
      %6068 = vmatpush1.bf16.msra.mxu0 0
      %6069 = vmatprep.subr.bf16.mxu0 0
      %6070 = vmatpush1.bf16.msra.mxu0 0
      %6071 = vmatprep.subr.bf16.mxu0 0
      %6072 = vmatpush1.bf16.msra.mxu0 0
      %6073 = vmatprep.subr.bf16.mxu0 0
      %6074 = vmatpush1.bf16.msra.mxu0 0
      %6075 = vmatprep.mubr.bf16.mxu0 0
      %6076 = vmatmul.mubr.bf16.gmra.mrb[0].mxu0 %v6035
      %v6077 = vpop.f32.mrb[0].mxu0
      %v6078 = vadd.f32 0.0, %v6077
      %v6079 = vpop.f32.mrb[0].mxu0
      %v6080 = vpop.f32.mrb[0].mxu0
      %v6081 = vadd.f32 0.0, %v6080
      %v6082 = vpop.f32.mrb[0].mxu0
      %6083 = vmatprep.mubr.bf16.mxu0 0
      %6084 = vmatmul.mubr.bf16.gmra.mrb[0].mxu0 %v6038
      %v6085 = vpop.f32.mrb[0].mxu0
      %v6086 = vadd.f32 0.0, %v6085
      %v6087 = vpop.f32.mrb[0].mxu0
      %v6088 = vpop.f32.mrb[0].mxu0
      %v6089 = vadd.f32 0.0, %v6088
      %v6090 = vpop.f32.mrb[0].mxu0
      %6091 = vmatprep.mubr.bf16.mxu0 0
      %6092 = vmatmul.mubr.bf16.gmra.mrb[0].mxu0 %v6041
      %v6093 = vpop.f32.mrb[0].mxu0
      %v6094 = vadd.f32 0.0, %v6093
      %v6095 = vpop.f32.mrb[0].mxu0
      %v6096 = vpop.f32.mrb[0].mxu0
      %v6097 = vpop.f32.mrb[0].mxu0
      %6098 = vdwg.mxu0
      %v6099 = vadd.f32 %v5983, %v6078
      %v6100 = vadd.f32 %v5984, %v6081
      %v6101 = vadd.f32 %v5985, %v6086
      %v6102 = vadd.f32 %v5986, %v6089
      %v6103 = vadd.f32 %v5987, %v6094
      %v6104 = vld [vmem:[%s6] sm:$0x1]
      %v6106 = vlaneseq
      %v6107 = vshrl.u32 %v6106, 7
      %v6108 = vsub.s32 0, %v6107
      %v6109 = vrot.slane %v6104, %v6108
      %v6111 = vadd.f32 %v6099, %v6109
      %v6112 = vadd.f32 %v6100, %v6109
      %v6113 = vadd.f32 %v6101, %v6109
      %v6114 = vadd.f32 %v6102, %v6109
      %v6115 = vadd.f32 %v6103, %v6109
      %vm6116 = vcmp.ge.f32.partialorder %v6111, 0.0
      %vm6117 = vcmp.ge.f32.partialorder %v6112, 0.0
      %vm6118 = vcmp.ge.f32.partialorder %v6113, 0.0
      %vm6119 = vcmp.ge.f32.partialorder %v6114, 0.0
      %vm6120 = vcmp.ge.f32.partialorder %v6115, 0.0
      %v6121 = vmul.f32 %v6111, 0.01
      %v6122 = vmul.f32 %v6112, 0.01
      %v6123 = vmul.f32 %v6113, 0.01
      %v6124 = vmul.f32 %v6114, 0.01
      %v6125 = vmul.f32 %v6115, 0.01
      %v6126 = vsel %vm6116, %v6111, %v6121
      %v6127 = vsel %vm6117, %v6112, %v6122
      %v6128 = vsel %vm6118, %v6113, %v6123
      %v6129 = vsel %vm6119, %v6114, %v6124
      %v6130 = vsel %vm6120, %v6115, %v6125
      %6131 = vst.msk [vmem:[#allocation4 + $0x7] sm:$0xf] %vm390, %v6126
      %vm6132 = vcmask 521218
      %6133 = vst.msk [vmem:[#allocation4 + $0xb] sm:$0x3c] %vm6132, %v6127
      %6134 = vst.msk [vmem:[#allocation4 + $0xf] sm:$0xf0] %vm5058, %v6128
      %6135 = vst.msk [vmem:[#allocation4 + $0x13] sm:$0xc0] %vm5061, %v6129
      %6136 = vst.msk [vmem:[#allocation4 + $0x1b] sm:$0x3] %vm5056, %v6130
      %v6137 = vld [vmem:[#allocation4] sm:$0xff]
      %v6138 = vld [vmem:[#allocation4 + $0x8] sm:$0xff]
      %v6139 = vld [vmem:[#allocation4 + $0x10] sm:$0x3f]
      %v6140 = vpack.c.bf16 %v6138, %v6137
      %v6141 = vpack.c.bf16 %v6139, %v6139
      %v6142 = vld [vmem:[%s7] sm:$0xf]
      %v6143 = vld [vmem:[%s7 + $0x4] sm:$0xf]
      %v6144 = vld [vmem:[%s7 + $0x8] sm:$0xf]
      %v6145 = vld [vmem:[%s7 + $0xc] sm:$0xf]
      %v6146 = vld [vmem:[%s7 + $0x10] sm:$0xf]
      %v6147 = vld [vmem:[%s7 + $0x14] sm:$0xf]
      %v6148 = vld [vmem:[%s7 + $0x18] sm:$0xf]
      %v6149 = vld [vmem:[%s7 + $0x1c] sm:$0xf]
      %v6150 = vld [vmem:[#allocation4 + $0x1] sm:$0xff]
      %v6151 = vld [vmem:[#allocation4 + $0x9] sm:$0xff]
      %v6152 = vld [vmem:[#allocation4 + $0x11] sm:$0x3f]
      %v6153 = vpack.c.bf16 %v6151, %v6150
      %v6154 = vpack.c.bf16 %v6152, %v6152
      %s6155 = scalar_lea.vmem %s7, 32
      %v6156 = vld [vmem:[%s6155] sm:$0xf]
      %v6157 = vld [vmem:[%s6155 + $0x4] sm:$0xf]
      %v6158 = vld [vmem:[%s6155 + $0x8] sm:$0xf]
      %v6159 = vld [vmem:[%s6155 + $0xc] sm:$0xf]
      %v6160 = vld [vmem:[%s6155 + $0x10] sm:$0xf]
      %v6161 = vld [vmem:[%s6155 + $0x14] sm:$0xf]
      %v6162 = vld [vmem:[%s6155 + $0x18] sm:$0xf]
      %v6163 = vld [vmem:[%s6155 + $0x1c] sm:$0xf]
      %v6172 = vunpack.c.l.b16 %v6156
      %v6173 = vunpack.c.l.b16 %v6157
      %v6174 = vunpack.c.l.b16 %v6158
      %v6175 = vunpack.c.l.b16 %v6159
      %v6176 = vunpack.c.l.b16 %v6160
      %v6177 = vunpack.c.l.b16 %v6161
      %v6178 = vunpack.c.l.b16 %v6162
      %v6179 = vunpack.c.l.b16 %v6163
      %v6180 = vpack.c.b16 %v6173, %v6172
      %v6181 = vpack.c.b16 %v6175, %v6174
      %v6182 = vpack.c.b16 %v6177, %v6176
      %v6183 = vpack.c.b16 %v6179, %v6178
      %v6189 = vsel %vm377, %v6153, 0
      %v6192 = vsel %vm377, %v6154, 0
      %6194 = vmatprep.subr.bf16.mxu0 0
      %6195 = vmatpush1.bf16.msra.mxu0 %v6180
      %6196 = vmatprep.subr.bf16.mxu0 0
      %6197 = vmatpush1.bf16.msra.mxu0 %v6181
      %6198 = vmatprep.subr.bf16.mxu0 0
      %6199 = vmatpush1.bf16.msra.mxu0 %v6182
      %6200 = vmatprep.subr.bf16.mxu0 0
      %6201 = vmatpush1.bf16.msra.mxu0 %v6183
      %6202 = vmatprep.subr.bf16.mxu0 0
      %6203 = vmatpush1.bf16.msra.mxu0 0
      %6204 = vmatprep.subr.bf16.mxu0 0
      %6205 = vmatpush1.bf16.msra.mxu0 0
      %6206 = vmatprep.subr.bf16.mxu0 0
      %6207 = vmatpush1.bf16.msra.mxu0 0
      %6208 = vmatprep.subr.bf16.mxu0 0
      %6209 = vmatpush1.bf16.msra.mxu0 0
      %6210 = vmatprep.subr.bf16.mxu0 0
      %6211 = vmatpush1.bf16.msra.mxu0 0
      %6212 = vmatprep.subr.bf16.mxu0 0
      %6213 = vmatpush1.bf16.msra.mxu0 0
      %6214 = vmatprep.subr.bf16.mxu0 0
      %6215 = vmatpush1.bf16.msra.mxu0 0
      %6216 = vmatprep.subr.bf16.mxu0 0
      %6217 = vmatpush1.bf16.msra.mxu0 0
      %6218 = vmatprep.subr.bf16.mxu0 0
      %6219 = vmatpush1.bf16.msra.mxu0 0
      %6220 = vmatprep.subr.bf16.mxu0 0
      %6221 = vmatpush1.bf16.msra.mxu0 0
      %6222 = vmatprep.subr.bf16.mxu0 0
      %6223 = vmatpush1.bf16.msra.mxu0 0
      %6224 = vmatprep.subr.bf16.mxu0 0
      %6225 = vmatpush1.bf16.msra.mxu0 0
      %6226 = vmatprep.mubr.bf16.mxu0 0
      %6227 = vmatmul.mubr.bf16.gmra.mrb[0].mxu0 %v6189
      %v6228 = vpop.f32.mrb[0].mxu0
      %v6229 = vadd.f32 0.0, %v6228
      %v6230 = vpop.f32.mrb[0].mxu0
      %v6231 = vpop.f32.mrb[0].mxu0
      %v6232 = vadd.f32 0.0, %v6231
      %v6233 = vpop.f32.mrb[0].mxu0
      %6234 = vmatprep.mubr.bf16.mxu0 0
      %6235 = vmatmul.mubr.bf16.gmra.mrb[0].mxu0 %v6192
      %v6236 = vpop.f32.mrb[0].mxu0
      %v6237 = vadd.f32 0.0, %v6236
      %v6238 = vpop.f32.mrb[0].mxu0
      %v6239 = vpop.f32.mrb[0].mxu0
      %v6240 = vpop.f32.mrb[0].mxu0
      %6241 = vdwg.mxu0
      %v6250 = vunpack.c.l.b16 %v6142
      %v6251 = vunpack.c.l.b16 %v6143
      %v6252 = vunpack.c.l.b16 %v6144
      %v6253 = vunpack.c.l.b16 %v6145
      %v6254 = vunpack.c.l.b16 %v6146
      %v6255 = vunpack.c.l.b16 %v6147
      %v6256 = vunpack.c.l.b16 %v6148
      %v6257 = vunpack.c.l.b16 %v6149
      %v6258 = vpack.c.b16 %v6251, %v6250
      %v6259 = vpack.c.b16 %v6253, %v6252
      %v6260 = vpack.c.b16 %v6255, %v6254
      %v6261 = vpack.c.b16 %v6257, %v6256
      %v6267 = vsel %vm377, %v6140, 0
      %v6270 = vsel %vm377, %v6141, 0
      %6272 = vmatprep.subr.bf16.mxu0 0
      %6273 = vmatpush1.bf16.msra.mxu0 %v6258
      %6274 = vmatprep.subr.bf16.mxu0 0
      %6275 = vmatpush1.bf16.msra.mxu0 %v6259
      %6276 = vmatprep.subr.bf16.mxu0 0
      %6277 = vmatpush1.bf16.msra.mxu0 %v6260
      %6278 = vmatprep.subr.bf16.mxu0 0
      %6279 = vmatpush1.bf16.msra.mxu0 %v6261
      %6280 = vmatprep.subr.bf16.mxu0 0
      %6281 = vmatpush1.bf16.msra.mxu0 0
      %6282 = vmatprep.subr.bf16.mxu0 0
      %6283 = vmatpush1.bf16.msra.mxu0 0
      %6284 = vmatprep.subr.bf16.mxu0 0
      %6285 = vmatpush1.bf16.msra.mxu0 0
      %6286 = vmatprep.subr.bf16.mxu0 0
      %6287 = vmatpush1.bf16.msra.mxu0 0
      %6288 = vmatprep.subr.bf16.mxu0 0
      %6289 = vmatpush1.bf16.msra.mxu0 0
      %6290 = vmatprep.subr.bf16.mxu0 0
      %6291 = vmatpush1.bf16.msra.mxu0 0
      %6292 = vmatprep.subr.bf16.mxu0 0
      %6293 = vmatpush1.bf16.msra.mxu0 0
      %6294 = vmatprep.subr.bf16.mxu0 0
      %6295 = vmatpush1.bf16.msra.mxu0 0
      %6296 = vmatprep.subr.bf16.mxu0 0
      %6297 = vmatpush1.bf16.msra.mxu0 0
      %6298 = vmatprep.subr.bf16.mxu0 0
      %6299 = vmatpush1.bf16.msra.mxu0 0
      %6300 = vmatprep.subr.bf16.mxu0 0
      %6301 = vmatpush1.bf16.msra.mxu0 0
      %6302 = vmatprep.subr.bf16.mxu0 0
      %6303 = vmatpush1.bf16.msra.mxu0 0
      %6304 = vmatprep.mubr.bf16.mxu0 0
      %6305 = vmatmul.mubr.bf16.gmra.mrb[0].mxu0 %v6267
      %v6306 = vpop.f32.mrb[0].mxu0
      %v6307 = vadd.f32 %v6229, %v6306
      %v6308 = vpop.f32.mrb[0].mxu0
      %v6309 = vpop.f32.mrb[0].mxu0
      %v6310 = vadd.f32 %v6232, %v6309
      %v6311 = vpop.f32.mrb[0].mxu0
      %6312 = vmatprep.mubr.bf16.mxu0 0
      %6313 = vmatmul.mubr.bf16.gmra.mrb[0].mxu0 %v6270
      %v6314 = vpop.f32.mrb[0].mxu0
      %v6315 = vadd.f32 %v6237, %v6314
      %v6316 = vpop.f32.mrb[0].mxu0
      %v6317 = vpop.f32.mrb[0].mxu0
      %v6318 = vpop.f32.mrb[0].mxu0
      %6319 = vdwg.mxu0
      %v6320 = vld [vmem:[#allocation4 + $0x2] sm:$0xff]
      %v6321 = vld [vmem:[#allocation4 + $0xa] sm:$0xff]
      %v6322 = vld [vmem:[#allocation4 + $0x12] sm:$0x3f]
      %v6323 = vpack.c.bf16 %v6321, %v6320
      %v6324 = vpack.c.bf16 %v6322, %v6322
      %s6325 = scalar_lea.vmem %s7, 64
      %v6326 = vld [vmem:[%s6325] sm:$0xf]
      %v6327 = vld [vmem:[%s6325 + $0x4] sm:$0xf]
      %v6328 = vld [vmem:[%s6325 + $0x8] sm:$0xf]
      %v6329 = vld [vmem:[%s6325 + $0xc] sm:$0xf]
      %v6330 = vld [vmem:[%s6325 + $0x10] sm:$0xf]
      %v6331 = vld [vmem:[%s6325 + $0x14] sm:$0xf]
      %v6332 = vld [vmem:[%s6325 + $0x18] sm:$0xf]
      %v6333 = vld [vmem:[%s6325 + $0x1c] sm:$0xf]
      %v6342 = vunpack.c.l.b16 %v6326
      %v6343 = vunpack.c.l.b16 %v6327
      %v6344 = vunpack.c.l.b16 %v6328
      %v6345 = vunpack.c.l.b16 %v6329
      %v6346 = vunpack.c.l.b16 %v6330
      %v6347 = vunpack.c.l.b16 %v6331
      %v6348 = vunpack.c.l.b16 %v6332
      %v6349 = vunpack.c.l.b16 %v6333
      %v6350 = vpack.c.b16 %v6343, %v6342
      %v6351 = vpack.c.b16 %v6345, %v6344
      %v6352 = vpack.c.b16 %v6347, %v6346
      %v6353 = vpack.c.b16 %v6349, %v6348
      %v6359 = vsel %vm377, %v6323, 0
      %v6362 = vsel %vm377, %v6324, 0
      %6364 = vmatprep.subr.bf16.mxu0 0
      %6365 = vmatpush1.bf16.msra.mxu0 %v6350
      %6366 = vmatprep.subr.bf16.mxu0 0
      %6367 = vmatpush1.bf16.msra.mxu0 %v6351
      %6368 = vmatprep.subr.bf16.mxu0 0
      %6369 = vmatpush1.bf16.msra.mxu0 %v6352
      %6370 = vmatprep.subr.bf16.mxu0 0
      %6371 = vmatpush1.bf16.msra.mxu0 %v6353
      %6372 = vmatprep.subr.bf16.mxu0 0
      %6373 = vmatpush1.bf16.msra.mxu0 0
      %6374 = vmatprep.subr.bf16.mxu0 0
      %6375 = vmatpush1.bf16.msra.mxu0 0
      %6376 = vmatprep.subr.bf16.mxu0 0
      %6377 = vmatpush1.bf16.msra.mxu0 0
      %6378 = vmatprep.subr.bf16.mxu0 0
      %6379 = vmatpush1.bf16.msra.mxu0 0
      %6380 = vmatprep.subr.bf16.mxu0 0
      %6381 = vmatpush1.bf16.msra.mxu0 0
      %6382 = vmatprep.subr.bf16.mxu0 0
      %6383 = vmatpush1.bf16.msra.mxu0 0
      %6384 = vmatprep.subr.bf16.mxu0 0
      %6385 = vmatpush1.bf16.msra.mxu0 0
      %6386 = vmatprep.subr.bf16.mxu0 0
      %6387 = vmatpush1.bf16.msra.mxu0 0
      %6388 = vmatprep.subr.bf16.mxu0 0
      %6389 = vmatpush1.bf16.msra.mxu0 0
      %6390 = vmatprep.subr.bf16.mxu0 0
      %6391 = vmatpush1.bf16.msra.mxu0 0
      %6392 = vmatprep.subr.bf16.mxu0 0
      %6393 = vmatpush1.bf16.msra.mxu0 0
      %6394 = vmatprep.subr.bf16.mxu0 0
      %6395 = vmatpush1.bf16.msra.mxu0 0
      %6396 = vmatprep.mubr.bf16.mxu0 0
      %6397 = vmatmul.mubr.bf16.gmra.mrb[0].mxu0 %v6359
      %v6398 = vpop.f32.mrb[0].mxu0
      %v6399 = vadd.f32 0.0, %v6398
      %v6400 = vpop.f32.mrb[0].mxu0
      %v6401 = vpop.f32.mrb[0].mxu0
      %v6402 = vadd.f32 0.0, %v6401
      %v6403 = vpop.f32.mrb[0].mxu0
      %6404 = vmatprep.mubr.bf16.mxu0 0
      %6405 = vmatmul.mubr.bf16.gmra.mrb[0].mxu0 %v6362
      %v6406 = vpop.f32.mrb[0].mxu0
      %v6407 = vadd.f32 0.0, %v6406
      %v6408 = vpop.f32.mrb[0].mxu0
      %v6409 = vpop.f32.mrb[0].mxu0
      %v6410 = vpop.f32.mrb[0].mxu0
      %6411 = vdwg.mxu0
      %v6412 = vadd.f32 %v6307, %v6399
      %v6413 = vadd.f32 %v6310, %v6402
      %v6414 = vadd.f32 %v6315, %v6407
      %v6415 = vld [vmem:[#allocation4 + $0x6] sm:$0xff]
      %v6416 = vld [vmem:[#allocation4 + $0xe] sm:$0xff]
      %v6417 = vld [vmem:[#allocation4 + $0x16] sm:$0x3f]
      %v6418 = vpack.c.bf16 %v6416, %v6415
      %v6419 = vpack.c.bf16 %v6417, %v6417
      %s6420 = scalar_lea.vmem %s7, 96
      %v6421 = vld [vmem:[%s6420] sm:$0xf]
      %v6422 = vld [vmem:[%s6420 + $0x4] sm:$0xf]
      %v6423 = vld [vmem:[%s6420 + $0x8] sm:$0xf]
      %v6424 = vld [vmem:[%s6420 + $0xc] sm:$0xf]
      %v6425 = vld [vmem:[%s6420 + $0x10] sm:$0xf]
      %v6426 = vld [vmem:[%s6420 + $0x14] sm:$0xf]
      %v6427 = vld [vmem:[%s6420 + $0x18] sm:$0xf]
      %v6428 = vld [vmem:[%s6420 + $0x1c] sm:$0xf]
      %v6437 = vunpack.c.l.b16 %v6421
      %v6438 = vunpack.c.l.b16 %v6422
      %v6439 = vunpack.c.l.b16 %v6423
      %v6440 = vunpack.c.l.b16 %v6424
      %v6441 = vunpack.c.l.b16 %v6425
      %v6442 = vunpack.c.l.b16 %v6426
      %v6443 = vunpack.c.l.b16 %v6427
      %v6444 = vunpack.c.l.b16 %v6428
      %v6445 = vpack.c.b16 %v6438, %v6437
      %v6446 = vpack.c.b16 %v6440, %v6439
      %v6447 = vpack.c.b16 %v6442, %v6441
      %v6448 = vpack.c.b16 %v6444, %v6443
      %v6454 = vsel %vm377, %v6418, 0
      %v6457 = vsel %vm377, %v6419, 0
      %6459 = vmatprep.subr.bf16.mxu0 0
      %6460 = vmatpush1.bf16.msra.mxu0 %v6445
      %6461 = vmatprep.subr.bf16.mxu0 0
      %6462 = vmatpush1.bf16.msra.mxu0 %v6446
      %6463 = vmatprep.subr.bf16.mxu0 0
      %6464 = vmatpush1.bf16.msra.mxu0 %v6447
      %6465 = vmatprep.subr.bf16.mxu0 0
      %6466 = vmatpush1.bf16.msra.mxu0 %v6448
      %6467 = vmatprep.subr.bf16.mxu0 0
      %6468 = vmatpush1.bf16.msra.mxu0 0
      %6469 = vmatprep.subr.bf16.mxu0 0
      %6470 = vmatpush1.bf16.msra.mxu0 0
      %6471 = vmatprep.subr.bf16.mxu0 0
      %6472 = vmatpush1.bf16.msra.mxu0 0
      %6473 = vmatprep.subr.bf16.mxu0 0
      %6474 = vmatpush1.bf16.msra.mxu0 0
      %6475 = vmatprep.subr.bf16.mxu0 0
      %6476 = vmatpush1.bf16.msra.mxu0 0
      %6477 = vmatprep.subr.bf16.mxu0 0
      %6478 = vmatpush1.bf16.msra.mxu0 0
      %6479 = vmatprep.subr.bf16.mxu0 0
      %6480 = vmatpush1.bf16.msra.mxu0 0
      %6481 = vmatprep.subr.bf16.mxu0 0
      %6482 = vmatpush1.bf16.msra.mxu0 0
      %6483 = vmatprep.subr.bf16.mxu0 0
      %6484 = vmatpush1.bf16.msra.mxu0 0
      %6485 = vmatprep.subr.bf16.mxu0 0
      %6486 = vmatpush1.bf16.msra.mxu0 0
      %6487 = vmatprep.subr.bf16.mxu0 0
      %6488 = vmatpush1.bf16.msra.mxu0 0
      %6489 = vmatprep.subr.bf16.mxu0 0
      %6490 = vmatpush1.bf16.msra.mxu0 0
      %6491 = vmatprep.mubr.bf16.mxu0 0
      %6492 = vmatmul.mubr.bf16.gmra.mrb[0].mxu0 %v6454
      %v6493 = vpop.f32.mrb[0].mxu0
      %v6494 = vadd.f32 0.0, %v6493
      %v6495 = vpop.f32.mrb[0].mxu0
      %v6496 = vpop.f32.mrb[0].mxu0
      %v6497 = vadd.f32 0.0, %v6496
      %v6498 = vpop.f32.mrb[0].mxu0
      %6499 = vmatprep.mubr.bf16.mxu0 0
      %6500 = vmatmul.mubr.bf16.gmra.mrb[0].mxu0 %v6457
      %v6501 = vpop.f32.mrb[0].mxu0
      %v6502 = vadd.f32 0.0, %v6501
      %v6503 = vpop.f32.mrb[0].mxu0
      %v6504 = vpop.f32.mrb[0].mxu0
      %v6505 = vpop.f32.mrb[0].mxu0
      %6506 = vdwg.mxu0
      %v6507 = vadd.f32 %v6412, %v6494
      %v6508 = vadd.f32 %v6413, %v6497
      %v6509 = vadd.f32 %v6414, %v6502
      %v6510 = vld [vmem:[#allocation4 + $0x7] sm:$0xff]
      %v6511 = vld [vmem:[#allocation4 + $0xf] sm:$0xff]
      %v6512 = vld [vmem:[#allocation4 + $0x17] sm:$0x3f]
      %v6513 = vpack.c.bf16 %v6511, %v6510
      %v6514 = vpack.c.bf16 %v6512, %v6512
      %s6515 = scalar_lea.vmem %s7, 128
      %v6516 = vld [vmem:[%s6515] sm:$0xf]
      %v6517 = vld [vmem:[%s6515 + $0x4] sm:$0xf]
      %v6518 = vld [vmem:[%s6515 + $0x8] sm:$0xf]
      %v6519 = vld [vmem:[%s6515 + $0xc] sm:$0xf]
      %v6520 = vld [vmem:[%s6515 + $0x10] sm:$0xf]
      %v6521 = vld [vmem:[%s6515 + $0x14] sm:$0xf]
      %v6522 = vld [vmem:[%s6515 + $0x18] sm:$0xf]
      %v6523 = vld [vmem:[%s6515 + $0x1c] sm:$0xf]
      %v6532 = vunpack.c.l.b16 %v6516
      %v6533 = vunpack.c.l.b16 %v6517
      %v6534 = vunpack.c.l.b16 %v6518
      %v6535 = vunpack.c.l.b16 %v6519
      %v6536 = vunpack.c.l.b16 %v6520
      %v6537 = vunpack.c.l.b16 %v6521
      %v6538 = vunpack.c.l.b16 %v6522
      %v6539 = vunpack.c.l.b16 %v6523
      %v6540 = vpack.c.b16 %v6533, %v6532
      %v6541 = vpack.c.b16 %v6535, %v6534
      %v6542 = vpack.c.b16 %v6537, %v6536
      %v6543 = vpack.c.b16 %v6539, %v6538
      %v6549 = vsel %vm377, %v6513, 0
      %v6552 = vsel %vm377, %v6514, 0
      %6554 = vmatprep.subr.bf16.mxu0 0
      %6555 = vmatpush1.bf16.msra.mxu0 %v6540
      %6556 = vmatprep.subr.bf16.mxu0 0
      %6557 = vmatpush1.bf16.msra.mxu0 %v6541
      %6558 = vmatprep.subr.bf16.mxu0 0
      %6559 = vmatpush1.bf16.msra.mxu0 %v6542
      %6560 = vmatprep.subr.bf16.mxu0 0
      %6561 = vmatpush1.bf16.msra.mxu0 %v6543
      %6562 = vmatprep.subr.bf16.mxu0 0
      %6563 = vmatpush1.bf16.msra.mxu0 0
      %6564 = vmatprep.subr.bf16.mxu0 0
      %6565 = vmatpush1.bf16.msra.mxu0 0
      %6566 = vmatprep.subr.bf16.mxu0 0
      %6567 = vmatpush1.bf16.msra.mxu0 0
      %6568 = vmatprep.subr.bf16.mxu0 0
      %6569 = vmatpush1.bf16.msra.mxu0 0
      %6570 = vmatprep.subr.bf16.mxu0 0
      %6571 = vmatpush1.bf16.msra.mxu0 0
      %6572 = vmatprep.subr.bf16.mxu0 0
      %6573 = vmatpush1.bf16.msra.mxu0 0
      %6574 = vmatprep.subr.bf16.mxu0 0
      %6575 = vmatpush1.bf16.msra.mxu0 0
      %6576 = vmatprep.subr.bf16.mxu0 0
      %6577 = vmatpush1.bf16.msra.mxu0 0
      %6578 = vmatprep.subr.bf16.mxu0 0
      %6579 = vmatpush1.bf16.msra.mxu0 0
      %6580 = vmatprep.subr.bf16.mxu0 0
      %6581 = vmatpush1.bf16.msra.mxu0 0
      %6582 = vmatprep.subr.bf16.mxu0 0
      %6583 = vmatpush1.bf16.msra.mxu0 0
      %6584 = vmatprep.subr.bf16.mxu0 0
      %6585 = vmatpush1.bf16.msra.mxu0 0
      %6586 = vmatprep.mubr.bf16.mxu0 0
      %6587 = vmatmul.mubr.bf16.gmra.mrb[0].mxu0 %v6549
      %v6588 = vpop.f32.mrb[0].mxu0
      %v6589 = vadd.f32 0.0, %v6588
      %v6590 = vpop.f32.mrb[0].mxu0
      %v6591 = vpop.f32.mrb[0].mxu0
      %v6592 = vadd.f32 0.0, %v6591
      %v6593 = vpop.f32.mrb[0].mxu0
      %6594 = vmatprep.mubr.bf16.mxu0 0
      %6595 = vmatmul.mubr.bf16.gmra.mrb[0].mxu0 %v6552
      %v6596 = vpop.f32.mrb[0].mxu0
      %v6597 = vadd.f32 0.0, %v6596
      %v6598 = vpop.f32.mrb[0].mxu0
      %v6599 = vpop.f32.mrb[0].mxu0
      %v6600 = vpop.f32.mrb[0].mxu0
      %6601 = vdwg.mxu0
      %v6602 = vadd.f32 %v6507, %v6589
      %v6603 = vadd.f32 %v6508, %v6592
      %v6604 = vadd.f32 %v6509, %v6597
      %v6605 = vld [vmem:[#allocation4 + $0x8] sm:$0xff]
      %v6606 = vld [vmem:[#allocation4 + $0x10] sm:$0xff]
      %v6607 = vld [vmem:[#allocation4 + $0x18] sm:$0x3f]
      %v6608 = vpack.c.bf16 %v6606, %v6605
      %v6609 = vpack.c.bf16 %v6607, %v6607
      %s6610 = scalar_lea.vmem %s7, 160
      %v6611 = vld [vmem:[%s6610] sm:$0xf]
      %v6612 = vld [vmem:[%s6610 + $0x4] sm:$0xf]
      %v6613 = vld [vmem:[%s6610 + $0x8] sm:$0xf]
      %v6614 = vld [vmem:[%s6610 + $0xc] sm:$0xf]
      %v6615 = vld [vmem:[%s6610 + $0x10] sm:$0xf]
      %v6616 = vld [vmem:[%s6610 + $0x14] sm:$0xf]
      %v6617 = vld [vmem:[%s6610 + $0x18] sm:$0xf]
      %v6618 = vld [vmem:[%s6610 + $0x1c] sm:$0xf]
      %v6627 = vunpack.c.l.b16 %v6611
      %v6628 = vunpack.c.l.b16 %v6612
      %v6629 = vunpack.c.l.b16 %v6613
      %v6630 = vunpack.c.l.b16 %v6614
      %v6631 = vunpack.c.l.b16 %v6615
      %v6632 = vunpack.c.l.b16 %v6616
      %v6633 = vunpack.c.l.b16 %v6617
      %v6634 = vunpack.c.l.b16 %v6618
      %v6635 = vpack.c.b16 %v6628, %v6627
      %v6636 = vpack.c.b16 %v6630, %v6629
      %v6637 = vpack.c.b16 %v6632, %v6631
      %v6638 = vpack.c.b16 %v6634, %v6633
      %v6644 = vsel %vm377, %v6608, 0
      %v6647 = vsel %vm377, %v6609, 0
      %6649 = vmatprep.subr.bf16.mxu0 0
      %6650 = vmatpush1.bf16.msra.mxu0 %v6635
      %6651 = vmatprep.subr.bf16.mxu0 0
      %6652 = vmatpush1.bf16.msra.mxu0 %v6636
      %6653 = vmatprep.subr.bf16.mxu0 0
      %6654 = vmatpush1.bf16.msra.mxu0 %v6637
      %6655 = vmatprep.subr.bf16.mxu0 0
      %6656 = vmatpush1.bf16.msra.mxu0 %v6638
      %6657 = vmatprep.subr.bf16.mxu0 0
      %6658 = vmatpush1.bf16.msra.mxu0 0
      %6659 = vmatprep.subr.bf16.mxu0 0
      %6660 = vmatpush1.bf16.msra.mxu0 0
      %6661 = vmatprep.subr.bf16.mxu0 0
      %6662 = vmatpush1.bf16.msra.mxu0 0
      %6663 = vmatprep.subr.bf16.mxu0 0
      %6664 = vmatpush1.bf16.msra.mxu0 0
      %6665 = vmatprep.subr.bf16.mxu0 0
      %6666 = vmatpush1.bf16.msra.mxu0 0
      %6667 = vmatprep.subr.bf16.mxu0 0
      %6668 = vmatpush1.bf16.msra.mxu0 0
      %6669 = vmatprep.subr.bf16.mxu0 0
      %6670 = vmatpush1.bf16.msra.mxu0 0
      %6671 = vmatprep.subr.bf16.mxu0 0
      %6672 = vmatpush1.bf16.msra.mxu0 0
      %6673 = vmatprep.subr.bf16.mxu0 0
      %6674 = vmatpush1.bf16.msra.mxu0 0
      %6675 = vmatprep.subr.bf16.mxu0 0
      %6676 = vmatpush1.bf16.msra.mxu0 0
      %6677 = vmatprep.subr.bf16.mxu0 0
      %6678 = vmatpush1.bf16.msra.mxu0 0
      %6679 = vmatprep.subr.bf16.mxu0 0
      %6680 = vmatpush1.bf16.msra.mxu0 0
      %6681 = vmatprep.mubr.bf16.mxu0 0
      %6682 = vmatmul.mubr.bf16.gmra.mrb[0].mxu0 %v6644
      %v6683 = vpop.f32.mrb[0].mxu0
      %v6684 = vadd.f32 0.0, %v6683
      %v6685 = vpop.f32.mrb[0].mxu0
      %v6686 = vpop.f32.mrb[0].mxu0
      %v6687 = vadd.f32 0.0, %v6686
      %v6688 = vpop.f32.mrb[0].mxu0
      %6689 = vmatprep.mubr.bf16.mxu0 0
      %6690 = vmatmul.mubr.bf16.gmra.mrb[0].mxu0 %v6647
      %v6691 = vpop.f32.mrb[0].mxu0
      %v6692 = vadd.f32 0.0, %v6691
      %v6693 = vpop.f32.mrb[0].mxu0
      %v6694 = vpop.f32.mrb[0].mxu0
      %v6695 = vpop.f32.mrb[0].mxu0
      %6696 = vdwg.mxu0
      %v6697 = vadd.f32 %v6602, %v6684
      %v6698 = vadd.f32 %v6603, %v6687
      %v6699 = vadd.f32 %v6604, %v6692
      %v6700 = vld [vmem:[#allocation4 + $0xc] sm:$0xff]
      %v6701 = vld [vmem:[#allocation4 + $0x14] sm:$0xff]
      %v6702 = vld [vmem:[#allocation4 + $0x1c] sm:$0x3f]
      %v6703 = vpack.c.bf16 %v6701, %v6700
      %v6704 = vpack.c.bf16 %v6702, %v6702
      %s6705 = scalar_lea.vmem %s7, 192
      %v6706 = vld [vmem:[%s6705] sm:$0xf]
      %v6707 = vld [vmem:[%s6705 + $0x4] sm:$0xf]
      %v6708 = vld [vmem:[%s6705 + $0x8] sm:$0xf]
      %v6709 = vld [vmem:[%s6705 + $0xc] sm:$0xf]
      %v6710 = vld [vmem:[%s6705 + $0x10] sm:$0xf]
      %v6711 = vld [vmem:[%s6705 + $0x14] sm:$0xf]
      %v6712 = vld [vmem:[%s6705 + $0x18] sm:$0xf]
      %v6713 = vld [vmem:[%s6705 + $0x1c] sm:$0xf]
      %v6722 = vunpack.c.l.b16 %v6706
      %v6723 = vunpack.c.l.b16 %v6707
      %v6724 = vunpack.c.l.b16 %v6708
      %v6725 = vunpack.c.l.b16 %v6709
      %v6726 = vunpack.c.l.b16 %v6710
      %v6727 = vunpack.c.l.b16 %v6711
      %v6728 = vunpack.c.l.b16 %v6712
      %v6729 = vunpack.c.l.b16 %v6713
      %v6730 = vpack.c.b16 %v6723, %v6722
      %v6731 = vpack.c.b16 %v6725, %v6724
      %v6732 = vpack.c.b16 %v6727, %v6726
      %v6733 = vpack.c.b16 %v6729, %v6728
      %v6739 = vsel %vm377, %v6703, 0
      %v6742 = vsel %vm377, %v6704, 0
      %6744 = vmatprep.subr.bf16.mxu0 0
      %6745 = vmatpush1.bf16.msra.mxu0 %v6730
      %6746 = vmatprep.subr.bf16.mxu0 0
      %6747 = vmatpush1.bf16.msra.mxu0 %v6731
      %6748 = vmatprep.subr.bf16.mxu0 0
      %6749 = vmatpush1.bf16.msra.mxu0 %v6732
      %6750 = vmatprep.subr.bf16.mxu0 0
      %6751 = vmatpush1.bf16.msra.mxu0 %v6733
      %6752 = vmatprep.subr.bf16.mxu0 0
      %6753 = vmatpush1.bf16.msra.mxu0 0
      %6754 = vmatprep.subr.bf16.mxu0 0
      %6755 = vmatpush1.bf16.msra.mxu0 0
      %6756 = vmatprep.subr.bf16.mxu0 0
      %6757 = vmatpush1.bf16.msra.mxu0 0
      %6758 = vmatprep.subr.bf16.mxu0 0
      %6759 = vmatpush1.bf16.msra.mxu0 0
      %6760 = vmatprep.subr.bf16.mxu0 0
      %6761 = vmatpush1.bf16.msra.mxu0 0
      %6762 = vmatprep.subr.bf16.mxu0 0
      %6763 = vmatpush1.bf16.msra.mxu0 0
      %6764 = vmatprep.subr.bf16.mxu0 0
      %6765 = vmatpush1.bf16.msra.mxu0 0
      %6766 = vmatprep.subr.bf16.mxu0 0
      %6767 = vmatpush1.bf16.msra.mxu0 0
      %6768 = vmatprep.subr.bf16.mxu0 0
      %6769 = vmatpush1.bf16.msra.mxu0 0
      %6770 = vmatprep.subr.bf16.mxu0 0
      %6771 = vmatpush1.bf16.msra.mxu0 0
      %6772 = vmatprep.subr.bf16.mxu0 0
      %6773 = vmatpush1.bf16.msra.mxu0 0
      %6774 = vmatprep.subr.bf16.mxu0 0
      %6775 = vmatpush1.bf16.msra.mxu0 0
      %6776 = vmatprep.mubr.bf16.mxu0 0
      %6777 = vmatmul.mubr.bf16.gmra.mrb[0].mxu0 %v6739
      %v6778 = vpop.f32.mrb[0].mxu0
      %v6779 = vadd.f32 0.0, %v6778
      %v6780 = vpop.f32.mrb[0].mxu0
      %v6781 = vpop.f32.mrb[0].mxu0
      %v6782 = vadd.f32 0.0, %v6781
      %v6783 = vpop.f32.mrb[0].mxu0
      %6784 = vmatprep.mubr.bf16.mxu0 0
      %6785 = vmatmul.mubr.bf16.gmra.mrb[0].mxu0 %v6742
      %v6786 = vpop.f32.mrb[0].mxu0
      %v6787 = vadd.f32 0.0, %v6786
      %v6788 = vpop.f32.mrb[0].mxu0
      %v6789 = vpop.f32.mrb[0].mxu0
      %v6790 = vpop.f32.mrb[0].mxu0
      %6791 = vdwg.mxu0
      %v6792 = vadd.f32 %v6697, %v6779
      %v6793 = vadd.f32 %v6698, %v6782
      %v6794 = vadd.f32 %v6699, %v6787
      %v6795 = vld [vmem:[#allocation4 + $0xd] sm:$0xff]
      %v6796 = vld [vmem:[#allocation4 + $0x15] sm:$0xff]
      %v6797 = vld [vmem:[#allocation4 + $0x1d] sm:$0x3f]
      %v6798 = vpack.c.bf16 %v6796, %v6795
      %v6799 = vpack.c.bf16 %v6797, %v6797
      %s6800 = scalar_lea.vmem %s7, 224
      %v6801 = vld [vmem:[%s6800] sm:$0xf]
      %v6802 = vld [vmem:[%s6800 + $0x4] sm:$0xf]
      %v6803 = vld [vmem:[%s6800 + $0x8] sm:$0xf]
      %v6804 = vld [vmem:[%s6800 + $0xc] sm:$0xf]
      %v6805 = vld [vmem:[%s6800 + $0x10] sm:$0xf]
      %v6806 = vld [vmem:[%s6800 + $0x14] sm:$0xf]
      %v6807 = vld [vmem:[%s6800 + $0x18] sm:$0xf]
      %v6808 = vld [vmem:[%s6800 + $0x1c] sm:$0xf]
      %v6817 = vunpack.c.l.b16 %v6801
      %v6818 = vunpack.c.l.b16 %v6802
      %v6819 = vunpack.c.l.b16 %v6803
      %v6820 = vunpack.c.l.b16 %v6804
      %v6821 = vunpack.c.l.b16 %v6805
      %v6822 = vunpack.c.l.b16 %v6806
      %v6823 = vunpack.c.l.b16 %v6807
      %v6824 = vunpack.c.l.b16 %v6808
      %v6825 = vpack.c.b16 %v6818, %v6817
      %v6826 = vpack.c.b16 %v6820, %v6819
      %v6827 = vpack.c.b16 %v6822, %v6821
      %v6828 = vpack.c.b16 %v6824, %v6823
      %v6834 = vsel %vm377, %v6798, 0
      %v6837 = vsel %vm377, %v6799, 0
      %6839 = vmatprep.subr.bf16.mxu0 0
      %6840 = vmatpush1.bf16.msra.mxu0 %v6825
      %6841 = vmatprep.subr.bf16.mxu0 0
      %6842 = vmatpush1.bf16.msra.mxu0 %v6826
      %6843 = vmatprep.subr.bf16.mxu0 0
      %6844 = vmatpush1.bf16.msra.mxu0 %v6827
      %6845 = vmatprep.subr.bf16.mxu0 0
      %6846 = vmatpush1.bf16.msra.mxu0 %v6828
      %6847 = vmatprep.subr.bf16.mxu0 0
      %6848 = vmatpush1.bf16.msra.mxu0 0
      %6849 = vmatprep.subr.bf16.mxu0 0
      %6850 = vmatpush1.bf16.msra.mxu0 0
      %6851 = vmatprep.subr.bf16.mxu0 0
      %6852 = vmatpush1.bf16.msra.mxu0 0
      %6853 = vmatprep.subr.bf16.mxu0 0
      %6854 = vmatpush1.bf16.msra.mxu0 0
      %6855 = vmatprep.subr.bf16.mxu0 0
      %6856 = vmatpush1.bf16.msra.mxu0 0
      %6857 = vmatprep.subr.bf16.mxu0 0
      %6858 = vmatpush1.bf16.msra.mxu0 0
      %6859 = vmatprep.subr.bf16.mxu0 0
      %6860 = vmatpush1.bf16.msra.mxu0 0
      %6861 = vmatprep.subr.bf16.mxu0 0
      %6862 = vmatpush1.bf16.msra.mxu0 0
      %6863 = vmatprep.subr.bf16.mxu0 0
      %6864 = vmatpush1.bf16.msra.mxu0 0
      %6865 = vmatprep.subr.bf16.mxu0 0
      %6866 = vmatpush1.bf16.msra.mxu0 0
      %6867 = vmatprep.subr.bf16.mxu0 0
      %6868 = vmatpush1.bf16.msra.mxu0 0
      %6869 = vmatprep.subr.bf16.mxu0 0
      %6870 = vmatpush1.bf16.msra.mxu0 0
      %6871 = vmatprep.mubr.bf16.mxu0 0
      %6872 = vmatmul.mubr.bf16.gmra.mrb[0].mxu0 %v6834
      %v6873 = vpop.f32.mrb[0].mxu0
      %v6874 = vadd.f32 0.0, %v6873
      %v6875 = vpop.f32.mrb[0].mxu0
      %v6876 = vpop.f32.mrb[0].mxu0
      %v6877 = vadd.f32 0.0, %v6876
      %v6878 = vpop.f32.mrb[0].mxu0
      %6879 = vmatprep.mubr.bf16.mxu0 0
      %6880 = vmatmul.mubr.bf16.gmra.mrb[0].mxu0 %v6837
      %v6881 = vpop.f32.mrb[0].mxu0
      %v6882 = vadd.f32 0.0, %v6881
      %v6883 = vpop.f32.mrb[0].mxu0
      %v6884 = vpop.f32.mrb[0].mxu0
      %v6885 = vpop.f32.mrb[0].mxu0
      %6886 = vdwg.mxu0
      %v6887 = vadd.f32 %v6792, %v6874
      %v6888 = vadd.f32 %v6793, %v6877
      %v6889 = vadd.f32 %v6794, %v6882
      %v6890 = vld [vmem:[#allocation4 + $0xe] sm:$0xff]
      %v6891 = vld [vmem:[#allocation4 + $0x16] sm:$0xff]
      %v6892 = vld [vmem:[#allocation4 + $0x1e] sm:$0x3f]
      %v6893 = vpack.c.bf16 %v6891, %v6890
      %v6894 = vpack.c.bf16 %v6892, %v6892
      %s6895 = scalar_lea.vmem %s7, 256
      %v6896 = vld [vmem:[%s6895] sm:$0xf]
      %v6897 = vld [vmem:[%s6895 + $0x4] sm:$0xf]
      %v6898 = vld [vmem:[%s6895 + $0x8] sm:$0xf]
      %v6899 = vld [vmem:[%s6895 + $0xc] sm:$0xf]
      %v6900 = vld [vmem:[%s6895 + $0x10] sm:$0xf]
      %v6901 = vld [vmem:[%s6895 + $0x14] sm:$0xf]
      %v6902 = vld [vmem:[%s6895 + $0x18] sm:$0xf]
      %v6903 = vld [vmem:[%s6895 + $0x1c] sm:$0xf]
      %v6912 = vunpack.c.l.b16 %v6896
      %v6913 = vunpack.c.l.b16 %v6897
      %v6914 = vunpack.c.l.b16 %v6898
      %v6915 = vunpack.c.l.b16 %v6899
      %v6916 = vunpack.c.l.b16 %v6900
      %v6917 = vunpack.c.l.b16 %v6901
      %v6918 = vunpack.c.l.b16 %v6902
      %v6919 = vunpack.c.l.b16 %v6903
      %v6920 = vpack.c.b16 %v6913, %v6912
      %v6921 = vpack.c.b16 %v6915, %v6914
      %v6922 = vpack.c.b16 %v6917, %v6916
      %v6923 = vpack.c.b16 %v6919, %v6918
      %v6929 = vsel %vm377, %v6893, 0
      %v6932 = vsel %vm377, %v6894, 0
      %6934 = vmatprep.subr.bf16.mxu0 0
      %6935 = vmatpush1.bf16.msra.mxu0 %v6920
      %6936 = vmatprep.subr.bf16.mxu0 0
      %6937 = vmatpush1.bf16.msra.mxu0 %v6921
      %6938 = vmatprep.subr.bf16.mxu0 0
      %6939 = vmatpush1.bf16.msra.mxu0 %v6922
      %6940 = vmatprep.subr.bf16.mxu0 0
      %6941 = vmatpush1.bf16.msra.mxu0 %v6923
      %6942 = vmatprep.subr.bf16.mxu0 0
      %6943 = vmatpush1.bf16.msra.mxu0 0
      %6944 = vmatprep.subr.bf16.mxu0 0
      %6945 = vmatpush1.bf16.msra.mxu0 0
      %6946 = vmatprep.subr.bf16.mxu0 0
      %6947 = vmatpush1.bf16.msra.mxu0 0
      %6948 = vmatprep.subr.bf16.mxu0 0
      %6949 = vmatpush1.bf16.msra.mxu0 0
      %6950 = vmatprep.subr.bf16.mxu0 0
      %6951 = vmatpush1.bf16.msra.mxu0 0
      %6952 = vmatprep.subr.bf16.mxu0 0
      %6953 = vmatpush1.bf16.msra.mxu0 0
      %6954 = vmatprep.subr.bf16.mxu0 0
      %6955 = vmatpush1.bf16.msra.mxu0 0
      %6956 = vmatprep.subr.bf16.mxu0 0
      %6957 = vmatpush1.bf16.msra.mxu0 0
      %6958 = vmatprep.subr.bf16.mxu0 0
      %6959 = vmatpush1.bf16.msra.mxu0 0
      %6960 = vmatprep.subr.bf16.mxu0 0
      %6961 = vmatpush1.bf16.msra.mxu0 0
      %6962 = vmatprep.subr.bf16.mxu0 0
      %6963 = vmatpush1.bf16.msra.mxu0 0
      %6964 = vmatprep.subr.bf16.mxu0 0
      %6965 = vmatpush1.bf16.msra.mxu0 0
      %6966 = vmatprep.mubr.bf16.mxu0 0
      %6967 = vmatmul.mubr.bf16.gmra.mrb[0].mxu0 %v6929
      %v6968 = vpop.f32.mrb[0].mxu0
      %v6969 = vadd.f32 0.0, %v6968
      %v6970 = vpop.f32.mrb[0].mxu0
      %v6971 = vpop.f32.mrb[0].mxu0
      %v6972 = vadd.f32 0.0, %v6971
      %v6973 = vpop.f32.mrb[0].mxu0
      %6974 = vmatprep.mubr.bf16.mxu0 0
      %6975 = vmatmul.mubr.bf16.gmra.mrb[0].mxu0 %v6932
      %v6976 = vpop.f32.mrb[0].mxu0
      %v6977 = vadd.f32 0.0, %v6976
      %v6978 = vpop.f32.mrb[0].mxu0
      %v6979 = vpop.f32.mrb[0].mxu0
      %v6980 = vpop.f32.mrb[0].mxu0
      %6981 = vdwg.mxu0
      %v6982 = vadd.f32 %v6887, %v6969
      %v6983 = vadd.f32 %v6888, %v6972
      %v6984 = vadd.f32 %v6889, %v6977
      %v6985 = vld [vmem:[%s8] sm:$0x1]
      %v6987 = vlaneseq
      %v6988 = vshrl.u32 %v6987, 7
      %v6989 = vsub.s32 0, %v6988
      %v6990 = vrot.slane %v6985, %v6989
      %v6992 = vadd.f32 %v6982, %v6990
      %v6993 = vadd.f32 %v6983, %v6990
      %v6994 = vadd.f32 %v6984, %v6990
      %6995 = vst [vmem:[%s332] sm:$0xf] %v6992
      %6996 = vst [vmem:[%s332 - $0x2] sm:$0xc0] %v6992
      %6997 = vst [vmem:[%s332 + $0x6] sm:$0x3] %v6993
      %6998 = vst [vmem:[%s332 + $0x4] sm:$0xf0] %v6993
      %6999 = vst [vmem:[%s332 + $0xa] sm:$0x3c] %v6994
      %p7000 = scmp.lt.s32.totalorder %s20, 1
      %s7001 = scalar_select %p7000, %s20, 1
      %s7002 = smul.addr %s7001, 2
      %s7003 = smul.addr %s7002, 8
      %s7004 = scalar_lea.vmem %s9, %s7003
      // Predicated region
      $region57: #{encoder_forward.1} parent=55 // pred_check
        %p7005 = pneg %p232
      $region58: #{encoder_forward.1} parent=55 // pred_check_branch
        %7007 = sbr.rel (%p7005) target = $region60
      $region59: #{encoder_forward.1} parent=55 // pred_region
        _
      $region60: #{encoder_forward.1} parent=55 // pred_fallthru
        _
    $region56: #{encoder_forward.1} parent=5 // pred_fallthru
      _
    %p7008 = scmp.le.s32.totalorder 2, %s15
    // Predicated region
    $region61: #{encoder_forward.1} parent=5 // pred_check
      %p7009 = pneg %p7008
    $region62: #{encoder_forward.1} parent=5 // pred_check_branch
      %7011 = sbr.rel (%p7009) target = $region64
    $region63: #{encoder_forward.1} parent=5 // pred_region
      %s7012 = ssub.s32 %s15, 2
      // Predicated region
      $region65: #{encoder_forward.1} parent=63 // pred_check
        %p7013 = pneg %p238
      $region66: #{encoder_forward.1} parent=63 // pred_check_branch
        %7015 = sbr.rel (%p7013) target = $region68
      $region67: #{encoder_forward.1} parent=63 // pred_region
        %p7016 = scmp.lt.s32.totalorder %s21, 1
        %s7017 = scalar_select %p7016, %s21, 1
        %s7018 = smul.addr %s7017, 2
        %s7019 = smul.addr %s7018, 8
        %s7020 = scalar_lea.vmem %s9, %s7019
      $region68: #{encoder_forward.1} parent=63 // pred_fallthru
        _
    $region64: #{encoder_forward.1} parent=5 // pred_fallthru
      _
  $region6: #{encoder_forward.1} parent=0 // loop_footer
    %s19 = sadd.s32 1, %s15
  $region7: #{encoder_forward.1} parent=0 // loop_footer_branch
    %14 = sbr.rel target = $region3
  $region8: #{encoder_forward.1} parent=0 // loop_exit
    _

</llo_original>
